<compile_context>
chip_gen: v7x
topology: tpu7x:2x2x1
jax: 0.10.0
libtpu: 0.0.40
codegen_flags: <defaults>
</compile_context>

<pallas_src>
import math
from functools import partial

import jax
import jax.numpy as jnp
from jax.experimental import pallas as pl
from jax.experimental.pallas import tpu as pltpu


# ---------------------------------------------------------------------------
# Fused matmul kernel: [BN+ReLU prologue] -> bf16 MXU dot -> [BN+ReLU epilogue]
# ---------------------------------------------------------------------------

_M_TILE = 256  # cap on the M tile so VMEM stays bounded (v7x: 64 MiB)


def _round_up(v, m):
    return ((v + m - 1) // m) * m


def _fused_matmul_kernel(*refs, pro, epi):
    # refs = (a_ref, w_ref, [ps_ref, pb_ref], [es_ref, eb_ref], o_ref)
    a_ref, w_ref = refs[0], refs[1]
    o_ref = refs[-1]
    idx = 2
    a = a_ref[...]                                   # f32 (tm, K)
    if pro:
        # BatchNorm + ReLU on the input tile, f32 math (v5e VPU has no bf16).
        a = jnp.maximum(a * refs[idx][...] + refs[idx + 1][...], 0.0)
        idx += 2
    y = jnp.dot(a.astype(jnp.bfloat16), w_ref[...],
                preferred_element_type=jnp.float32)  # bf16 MXU, f32 accumulate
    if epi:
        # BatchNorm + ReLU on the output tile (per output channel).
        y = jnp.maximum(y * refs[idx][...] + refs[idx + 1][...], 0.0)
    o_ref[...] = y


def fused_matmul(a, w, prologue=None, epilogue=None):
    """(M, K) f32 @ (K, N) bf16 -> (M, N) f32 in a single K pass.

    prologue: (scale, bias), each (1, K): a := relu(a*scale+bias) before dot.
    epilogue: (scale, bias), each (1, N): y := relu(y*scale+bias) after dot.
    """
    a = a.astype(jnp.float32)
    M, K = a.shape
    K2, N = w.shape
    assert K == K2

    if M <= _M_TILE:
        tm = Mp = _round_up(M, 8)
    else:
        tm = _M_TILE
        Mp = _round_up(M, _M_TILE)
    if Mp != M:
        a = jnp.pad(a, ((0, Mp - M), (0, 0)))

    args = [a, w.astype(jnp.bfloat16)]
    in_specs = [pl.BlockSpec((tm, K), lambda i: (i, 0)),
                pl.BlockSpec((K, N), lambda i: (0, 0))]
    if prologue is not None:
        ps, pb = prologue
        args += [ps.reshape(1, K).astype(jnp.float32),
                 pb.reshape(1, K).astype(jnp.float32)]
        in_specs += [pl.BlockSpec((1, K), lambda i: (0, 0))] * 2
    if epilogue is not None:
        es, eb = epilogue
        args += [es.reshape(1, N).astype(jnp.float32),
                 eb.reshape(1, N).astype(jnp.float32)]
        in_specs += [pl.BlockSpec((1, N), lambda i: (0, 0))] * 2

    out = pl.pallas_call(
        partial(_fused_matmul_kernel,
                pro=prologue is not None, epi=epilogue is not None),
        out_shape=jax.ShapeDtypeStruct((Mp, N), jnp.float32),
        grid_spec=pltpu.PrefetchScalarGridSpec(
            num_scalar_prefetch=0,
            grid=(Mp // tm,),
            in_specs=in_specs,
            out_specs=pl.BlockSpec((tm, N), lambda i: (i, 0))),
        compiler_params=pltpu.CompilerParams(
            dimension_semantics=("parallel",)),
    )(*args)
    return out[:M] if Mp != M else out


# ---------------------------------------------------------------------------
# Fused classifier head kernel: BN+ReLU -> global avg pool -> Linear
# ---------------------------------------------------------------------------

def _head_kernel(x_ref, p_ref, s_ref, b_ref, w_ref, fb_ref, o_ref):
    x = jnp.maximum(x_ref[...] * s_ref[...] + b_ref[...], 0.0)      # (B*HW, C)
    pooled = jnp.dot(p_ref[...], x, preferred_element_type=jnp.float32)  # (B, C)
    o_ref[...] = (jnp.dot(pooled, w_ref[...],
                          preferred_element_type=jnp.float32) + fb_ref[...])


def classifier_head(scale, bias, w_t, fc_b, x):
    B, H, W, C = x.shape
    assert H == W                       # AdaAvgPool(size=0) asserts h == w
    hw = H * W
    x2d = x.reshape(B * hw, C).astype(jnp.float32)
    # (B, B*HW) block-diagonal mean-pooling matrix (tiny, constant-folded).
    pool = jnp.repeat(jnp.eye(B, dtype=jnp.float32), hw, axis=1) * (1.0 / hw)
    nclass = w_t.shape[1]
    return pl.pallas_call(
        _head_kernel,
        out_shape=jax.ShapeDtypeStruct((B, nclass), jnp.float32),
    )(x2d, pool, scale, bias, w_t, fc_b)


# ---------------------------------------------------------------------------
# im2col / padding / pooling glue (plain JAX; pooling is pure bandwidth)
# ---------------------------------------------------------------------------

def _pad_nhwc(x, ht, hb, wl, wr, pad_vals=None):
    """Spatial pad; pad_vals is a per-channel constant (maps to 0 after the
    fused BN+ReLU prologue), None means plain zero pad."""
    if ht == hb == wl == wr == 0:
        return x
    if pad_vals is None:
        return jnp.pad(x, ((0, 0), (ht, hb), (wl, wr), (0, 0)))
    B, H, W, C = x.shape
    full = jnp.broadcast_to(pad_vals.reshape(1, 1, 1, C).astype(x.dtype),
                            (B, H + ht + hb, W + wl + wr, C))
    return full.at[:, ht:ht + H, wl:wl + W, :].set(x)


def _extract_patches(x, kh, kw, stride):
    """(B, H, W, C) -> (B, Ho, Wo, kh*kw*C); columns are window-major,
    channel-minor (matches the tiled BN scale/bias vectors)."""
    B, H, W, C = x.shape
    ho = (H - kh) // stride + 1
    wo = (W - kw) // stride + 1
    cols = []
    for i in range(kh):
        for j in range(kw):
            cols.append(x[:, i:i + stride * (ho - 1) + 1:stride,
                          j:j + stride * (wo - 1) + 1:stride, :])
    return jnp.concatenate(cols, axis=-1), ho, wo


def conv2d_im2col(x, wm, kh, kw, stride, pad, pad_vals=None,
                  prologue=None, epilogue=None):
    B, H, W, C = x.shape
    cout = wm.shape[1]
    if kh == 1 and kw == 1 and stride == 1 and pad == 0:
        a = x.reshape(B * H * W, C)
        ho, wo = H, W
    else:
        xp = _pad_nhwc(x, pad, pad, pad, pad, pad_vals)
        patches, ho, wo = _extract_patches(xp, kh, kw, stride)
        a = patches.reshape(B * ho * wo, kh * kw * C)
    y = fused_matmul(a, wm, prologue=prologue, epilogue=epilogue)
    return y.reshape(B, ho, wo, cout)


def deconv_subpixel(x, w_big, prologue, pad_vals):
    """ConvTranspose2d(k=3, stride=2, pad=1, output_pad=1) via sub-pixel
    decomposition: one matmul on 2x2 patches of the UNDILATED input with a
    (4*Cin, 4*Cout) phase-packed weight, then a pixel-shuffle interleave."""
    B, H, W, Cin = x.shape
    cout = w_big.shape[1] // 4
    xp = _pad_nhwc(x, 0, 1, 0, 1, pad_vals)              # pad bottom/right by 1
    patches, _, _ = _extract_patches(xp, 2, 2, 1)        # (B, H, W, 4*Cin)
    a = patches.reshape(B * H * W, 4 * Cin)
    y = fused_matmul(a, w_big, prologue=prologue)        # (B*H*W, 4*Cout)
    y = y.reshape(B, H, W, 2, 2, cout)
    return jnp.transpose(y, (0, 1, 3, 2, 4, 5)).reshape(B, 2 * H, 2 * W, cout)


def max_pool2d(x, k, stride, pad):
    if pad:
        x = jnp.pad(x, ((0, 0), (pad, pad), (pad, pad), (0, 0)),
                    constant_values=-jnp.inf)
    B, H, W, C = x.shape
    ho = (H - k) // stride + 1
    wo = (W - k) // stride + 1
    out = None
    for i in range(k):
        for j in range(k):
            sl = x[:, i:i + stride * (ho - 1) + 1:stride,
                   j:j + stride * (wo - 1) + 1:stride, :]
            out = sl if out is None else jnp.maximum(out, sl)
    return out


def avg_pool2d(x, k):
    B, H, W, C = x.shape
    acc = None
    for i in range(k):
        for j in range(k):
            sl = x[:, i::k, j::k, :]
            acc = sl if acc is None else acc + sl
    return acc * (1.0 / (k * k))


# ---------------------------------------------------------------------------
# SwootNet blocks
# ---------------------------------------------------------------------------

def downup_block(p, x1, x2):
    # classify == 0 for all dense blocks in the default config -> out is None
    r1 = conv2d_im2col(x1, p["w1m"], 3, 3, 2, 1, pad_vals=p["pv1"],
                       prologue=(p["ps1"], p["pb1"]))
    res1 = jnp.concatenate([r1, x2], axis=-1)
    r2 = deconv_subpixel(res1, p["w2m"], (p["ps2"], p["pb2"]), p["pv2"])
    res2 = jnp.concatenate([r2, x1], axis=-1)
    return res2, res1


def trans_block(p, x1, x2):
    y1 = conv2d_im2col(x1, p["w1m"], 1, 1, 1, 0, prologue=(p["ps1"], p["pb1"]))
    y2 = conv2d_im2col(x2, p["w2m"], 1, 1, 1, 0, prologue=(p["ps2"], p["pb2"]))
    return avg_pool2d(y1, 2), avg_pool2d(y2, 2)


def swootnet_forward(ep, x_nchw):
    x = jnp.transpose(x_nchw, (0, 2, 3, 1)).astype(jnp.float32)  # NCHW -> NHWC

    # RockBlock (dataset='imagenet', branch=2): conv7x7/s2 + BN+ReLU epilogue
    l0 = ep["layer0"]
    x = conv2d_im2col(x, l0["wm"], 7, 7, 2, 3, epilogue=(l0["es"], l0["eb"]))
    x1 = max_pool2d(x, 3, 2, 1)
    x2 = max_pool2d(x1, 3, 2, 1)

    for p in ep["layer1"]:
        x1, x2 = downup_block(p, x1, x2)
    x1, x2 = trans_block(ep["trans1"], x1, x2)
    for p in ep["layer2"]:
        x1, x2 = downup_block(p, x1, x2)
    x1, x2 = trans_block(ep["trans2"], x1, x2)
    for p in ep["layer3"]:
        x1, x2 = downup_block(p, x1, x2)

    s = ep["summary"]
    logits_x1 = classifier_head(s["s1"], s["b1"], s["w1"], s["fb1"], x1)
    logits_x2 = classifier_head(s["s2"], s["b2"], s["w2"], s["fb2"], x2)
    # SumaryBlock classify==2: pred.extend([x2, x1]); DownUpBlock Nones filtered
    return [logits_x2, logits_x1]


# ---------------------------------------------------------------------------
# Parameter construction (PyTorch layouts) and one-time folding / reshaping
# ---------------------------------------------------------------------------

def build_params(depth=64, growth=12, reduction=0.5, layers=(2, 3, 3),
                 nclass=10, seed=0):
    key = jax.random.PRNGKey(seed)
    counter = [0]

    def nxt():
        counter[0] += 1
        return jax.random.fold_in(key, counter[0])

    def conv_w(cout, cin, kh, kw):
        fan_in = cin * kh * kw
        return (jax.random.normal(nxt(), (cout, cin, kh, kw), jnp.float32)
                * (1.0 / math.sqrt(fan_in)))

    def deconv_w(cin, cout, kh, kw):
        fan_in = cin * kh * kw
        return (jax.random.normal(nxt(), (cin, cout, kh, kw), jnp.float32)
                * (1.0 / math.sqrt(fan_in)))

    def bn_p(c):
        gamma = 1.0 + 0.1 * jax.random.normal(nxt(), (c,), jnp.float32)
        beta = 0.1 * jax.random.normal(nxt(), (c,), jnp.float32)
        mean = 0.1 * jax.random.normal(nxt(), (c,), jnp.float32)
        var = 0.5 + jax.random.uniform(nxt(), (c,), jnp.float32)
        return (gamma, beta, mean, var)

    def linear_p(cin, cout):
        w = (jax.random.normal(nxt(), (cout, cin), jnp.float32)
             * (1.0 / math.sqrt(cin)))
        b = 0.01 * jax.random.normal(nxt(), (cout,), jnp.float32)
        return (w, b)

    def dense_layer(nblocks, indepth):
        blocks = []
        for _ in range(nblocks):
            blocks.append({
                "bn1": bn_p(indepth),
                "conv1": conv_w(growth, indepth, 3, 3),
                "bn2": bn_p(indepth + growth),
                "deconv2": deconv_w(indepth + growth, growth, 3, 3),
            })
            indepth += growth
        return blocks, indepth

    params = {}
    params["layer0"] = {"conv": conv_w(depth, 3, 7, 7), "bn": bn_p(depth)}
    indepth = depth

    params["layer1"], indepth = dense_layer(layers[0], indepth)
    outdepth = int(math.floor(indepth * reduction))
    params["trans1"] = {"bn1": bn_p(indepth),
                        "conv1": conv_w(outdepth, indepth, 1, 1),
                        "bn2": bn_p(indepth),
                        "conv2": conv_w(outdepth, indepth, 1, 1)}
    indepth = outdepth

    params["layer2"], indepth = dense_layer(layers[1], indepth)
    outdepth = int(math.floor(indepth * reduction))
    params["trans2"] = {"bn1": bn_p(indepth),
                        "conv1": conv_w(outdepth, indepth, 1, 1),
                        "bn2": bn_p(indepth),
                        "conv2": conv_w(outdepth, indepth, 1, 1)}
    indepth = outdepth

    params["layer3"], indepth = dense_layer(layers[2], indepth)

    params["summary"] = {"bn1": bn_p(indepth), "fc1": linear_p(indepth, nclass),
                         "bn2": bn_p(indepth), "fc2": linear_p(indepth, nclass)}
    return params


def prepare_params(params, eps=1e-5):
    """One-time fold of BN into scale/bias and reshape of weights into im2col
    matrices (bf16); done once, outside the forward jit."""

    def fold_bn(bn):
        gamma, beta, mean, var = bn
        scale = gamma / jnp.sqrt(var + eps)
        bias = beta - mean * scale
        safe = jnp.where(jnp.abs(scale) < 1e-12, 1e-12, scale)
        pad_val = -bias / safe          # value that maps to 0 after BN+ReLU
        return (scale.astype(jnp.float32), bias.astype(jnp.float32),
                pad_val.astype(jnp.float32))

    def conv_mat(w):                     # (Cout, Cin, kh, kw) -> (kh*kw*Cin, Cout)
        cout, cin, kh, kw = w.shape
        return (jnp.transpose(w, (2, 3, 1, 0))
                .reshape(kh * kw * cin, cout).astype(jnp.bfloat16))

    def subpixel_deconv_mat(w):          # (Cin, Cout, 3, 3) -> (4*Cin, 4*Cout)
        cin, cout, kh, kw = w.shape
        wb = jnp.zeros((4 * cin, 4 * cout), jnp.float32)
        for dh in range(2):              # input tap x[m+dh, n+dw]
            for dw in range(2):
                for a in range(2):       # output phase (2m+a, 2n+b)
                    for b in range(2):
                        ki = a - 2 * dh + 1
                        kj = b - 2 * dw + 1
                        if 0 <= ki < kh and 0 <= kj < kw:
                            wb = wb.at[(dh * 2 + dw) * cin:(dh * 2 + dw + 1) * cin,
                                       (a * 2 + b) * cout:(a * 2 + b + 1) * cout
                                       ].set(w[:, :, ki, kj])
        return wb.astype(jnp.bfloat16)

    def vec(v):
        return v.reshape(1, -1).astype(jnp.float32)

    ep = {}
    l0 = params["layer0"]
    s0, b0, _ = fold_bn(l0["bn"])
    ep["layer0"] = {"wm": conv_mat(l0["conv"]), "es": vec(s0), "eb": vec(b0)}

    def prep_downup(p):
        s1, b1, pv1 = fold_bn(p["bn1"])
        s2, b2, pv2 = fold_bn(p["bn2"])
        return {
            "w1m": conv_mat(p["conv1"]),
            "ps1": vec(jnp.tile(s1, 9)), "pb1": vec(jnp.tile(b1, 9)), "pv1": pv1,
            "w2m": subpixel_deconv_mat(p["deconv2"]),
            "ps2": vec(jnp.tile(s2, 4)), "pb2": vec(jnp.tile(b2, 4)), "pv2": pv2,
        }

    def prep_trans(p):
        s1, b1, _ = fold_bn(p["bn1"])
        s2, b2, _ = fold_bn(p["bn2"])
        return {"w1m": conv_mat(p["conv1"]), "ps1": vec(s1), "pb1": vec(b1),
                "w2m": conv_mat(p["conv2"]), "ps2": vec(s2), "pb2": vec(b2)}

    ep["layer1"] = [prep_downup(p) for p in params["layer1"]]
    ep["trans1"] = prep_trans(params["trans1"])
    ep["layer2"] = [prep_downup(p) for p in params["layer2"]]
    ep["trans2"] = prep_trans(params["trans2"])
    ep["layer3"] = [prep_downup(p) for p in params["layer3"]]

    sm = params["summary"]
    s1, b1, _ = fold_bn(sm["bn1"])
    s2, b2, _ = fold_bn(sm["bn2"])
    w1, fb1 = sm["fc1"]
    w2, fb2 = sm["fc2"]
    ep["summary"] = {
        "s1": vec(s1), "b1": vec(b1),
        "w1": w1.T.astype(jnp.float32), "fb1": vec(fb1),
        "s2": vec(s2), "b2": vec(b2),
        "w2": w2.T.astype(jnp.float32), "fb2": vec(fb2),
    }
    return ep


# ---------------------------------------------------------------------------

if __name__ == "__main__":
    # Default CifarSwootNet hyper-params: depth=64, growth=12, layers=(2,3,3),
    # reduction=0.5, classify=(0,0,0,2), nclass=10, lastTrans=False.
    params = build_params(depth=64, growth=12, reduction=0.5,
                          layers=(2, 3, 3), nclass=10, seed=0)
    ep = prepare_params(params)          # one-time weight fold (hoisted)

    key = jax.random.PRNGKey(0)
    x = jax.random.normal(key, (2, 3, 32, 32), dtype=jnp.float32)  # NCHW input

    outs = jax.jit(swootnet_forward)(ep, x)
    outs = [jax.block_until_ready(o) for o in outs]

    assert len(outs) == 2
    assert outs[0].shape == (2, 10) and outs[1].shape == (2, 10)
    assert all(bool(jnp.all(jnp.isfinite(o))) for o in outs)
    print("KERNEL_OK")
</pallas_src>

<mosaic_0001>
module attributes {stable_mosaic.version = 11 : i64} {
  func.func @_fused_matmul_kernel(%arg0: i32, %arg1: memref<256x147xf32, #tpu.memory_space<vmem>>, %arg2: memref<147x64xbf16, #tpu.memory_space<vmem>>, %arg3: memref<1x64xf32, #tpu.memory_space<vmem>>, %arg4: memref<1x64xf32, #tpu.memory_space<vmem>>, %arg5: memref<256x64xf32, #tpu.memory_space<vmem>>) attributes {dimension_semantics = [#tpu.dimension_semantics<parallel>], iteration_bounds = array<i64: 2>, scalar_prefetch = 0 : i64, scratch_operands = 0 : i64, tpu.core_type = #tpu.core_type<tc>, window_params = [{transform_indices = @transform_0, window_bounds = array<i64: 256, 147>}, {pipeline_mode = #tpu.pipeline_mode<synchronous>, transform_indices = @transform_1, window_bounds = array<i64: 147, 64>}, {pipeline_mode = #tpu.pipeline_mode<synchronous>, transform_indices = @transform_2, window_bounds = array<i64: 1, 64>}, {pipeline_mode = #tpu.pipeline_mode<synchronous>, transform_indices = @transform_3, window_bounds = array<i64: 1, 64>}, {transform_indices = @transform_4, window_bounds = array<i64: 256, 64>}]} {
    %c0 = arith.constant 0 : index
    %c0_0 = arith.constant 0 : index
    %0 = vector.load %arg1[%c0, %c0_0] : memref<256x147xf32, #tpu.memory_space<vmem>>, vector<256x147xf32>
    %1 = arith.truncf %0 : vector<256x147xf32> to vector<256x147xbf16>
    %c0_1 = arith.constant 0 : index
    %c0_2 = arith.constant 0 : index
    %2 = vector.load %arg2[%c0_1, %c0_2] : memref<147x64xbf16, #tpu.memory_space<vmem>>, vector<147x64xbf16>
    %cst = arith.constant dense<0.000000e+00> : vector<256x64xf32>
    %3 = tpu.matmul %1, %2, %cst {dimension_numbers = #tpu.dot_dimension_numbers<[1], [0], [0], [1], [0, 0, 1, 1], [], []>} : vector<256x147xbf16>, vector<147x64xbf16>, vector<256x64xf32> -> vector<256x64xf32>
    %c0_3 = arith.constant 0 : index
    %c0_4 = arith.constant 0 : index
    %4 = vector.load %arg3[%c0_3, %c0_4] : memref<1x64xf32, #tpu.memory_space<vmem>>, vector<1x64xf32>
    %5 = vector.broadcast %4 : vector<1x64xf32> to vector<256x64xf32>
    %6 = arith.mulf %3, %5 : vector<256x64xf32>
    %c0_5 = arith.constant 0 : index
    %c0_6 = arith.constant 0 : index
    %7 = vector.load %arg4[%c0_5, %c0_6] : memref<1x64xf32, #tpu.memory_space<vmem>>, vector<1x64xf32>
    %8 = vector.broadcast %7 : vector<1x64xf32> to vector<256x64xf32>
    %9 = arith.addf %6, %8 : vector<256x64xf32>
    %cst_7 = arith.constant 0.000000e+00 : f32
    %10 = vector.broadcast %cst_7 : f32 to vector<256x64xf32>
    %11 = arith.maximumf %9, %10 : vector<256x64xf32>
    %c0_8 = arith.constant 0 : index
    %c0_9 = arith.constant 0 : index
    %12 = vector.load %arg5[%c0_8, %c0_9] : memref<256x64xf32, #tpu.memory_space<vmem>>, vector<256x64xf32>
    tpu.vector_store %arg5[%c0_8, %c0_9], %11 {strides = array<i32>} : memref<256x64xf32, #tpu.memory_space<vmem>>, vector<256x64xf32>,
    return
  }
  func.func @transform_0(%arg0: i32) -> (i32, i32) {
    %c0_i32 = arith.constant 0 : i32
    %c0_i32_0 = arith.constant 0 : i32
    return %arg0, %c0_i32 : i32, i32
  }
  func.func @transform_1(%arg0: i32) -> (i32, i32) {
    %c0_i32 = arith.constant 0 : i32
    %c0_i32_0 = arith.constant 0 : i32
    %c0_i32_1 = arith.constant 0 : i32
    return %c0_i32, %c0_i32_0 : i32, i32
  }
  func.func @transform_2(%arg0: i32) -> (i32, i32) {
    %c0_i32 = arith.constant 0 : i32
    %c0_i32_0 = arith.constant 0 : i32
    %c0_i32_1 = arith.constant 0 : i32
    return %c0_i32, %c0_i32_0 : i32, i32
  }
  func.func @transform_3(%arg0: i32) -> (i32, i32) {
    %c0_i32 = arith.constant 0 : i32
    %c0_i32_0 = arith.constant 0 : i32
    %c0_i32_1 = arith.constant 0 : i32
    return %c0_i32, %c0_i32_0 : i32, i32
  }
  func.func @transform_4(%arg0: i32) -> (i32, i32) {
    %c0_i32 = arith.constant 0 : i32
    %c0_i32_0 = arith.constant 0 : i32
    return %arg0, %c0_i32 : i32, i32
  }
}

module attributes {stable_mosaic.version = 11 : i64} {
  func.func @_fused_matmul_kernel(%arg0: i32, %arg1: memref<32x576xf32, #tpu.memory_space<vmem>>, %arg2: memref<576x12xbf16, #tpu.memory_space<vmem>>, %arg3: memref<1x576xf32, #tpu.memory_space<vmem>>, %arg4: memref<1x576xf32, #tpu.memory_space<vmem>>, %arg5: memref<32x12xf32, #tpu.memory_space<vmem>>) attributes {dimension_semantics = [#tpu.dimension_semantics<parallel>], iteration_bounds = array<i64: 1>, scalar_prefetch = 0 : i64, scratch_operands = 0 : i64, tpu.core_type = #tpu.core_type<tc>, window_params = [{transform_indices = @transform_0, window_bounds = array<i64: 32, 576>}, {pipeline_mode = #tpu.pipeline_mode<synchronous>, transform_indices = @transform_1, window_bounds = array<i64: 576, 12>}, {pipeline_mode = #tpu.pipeline_mode<synchronous>, transform_indices = @transform_2, window_bounds = array<i64: 1, 576>}, {pipeline_mode = #tpu.pipeline_mode<synchronous>, transform_indices = @transform_3, window_bounds = array<i64: 1, 576>}, {transform_indices = @transform_4, window_bounds = array<i64: 32, 12>}]} {
    %c0 = arith.constant 0 : index
    %c0_0 = arith.constant 0 : index
    %0 = vector.load %arg1[%c0, %c0_0] : memref<32x576xf32, #tpu.memory_space<vmem>>, vector<32x576xf32>
    %c0_1 = arith.constant 0 : index
    %c0_2 = arith.constant 0 : index
    %1 = vector.load %arg3[%c0_1, %c0_2] : memref<1x576xf32, #tpu.memory_space<vmem>>, vector<1x576xf32>
    %2 = vector.broadcast %1 : vector<1x576xf32> to vector<32x576xf32>
    %3 = arith.mulf %0, %2 : vector<32x576xf32>
    %c0_3 = arith.constant 0 : index
    %c0_4 = arith.constant 0 : index
    %4 = vector.load %arg4[%c0_3, %c0_4] : memref<1x576xf32, #tpu.memory_space<vmem>>, vector<1x576xf32>
    %5 = vector.broadcast %4 : vector<1x576xf32> to vector<32x576xf32>
    %6 = arith.addf %3, %5 : vector<32x576xf32>
    %cst = arith.constant 0.000000e+00 : f32
    %7 = vector.broadcast %cst : f32 to vector<32x576xf32>
    %8 = arith.maximumf %6, %7 : vector<32x576xf32>
    %9 = arith.truncf %8 : vector<32x576xf32> to vector<32x576xbf16>
    %c0_5 = arith.constant 0 : index
    %c0_6 = arith.constant 0 : index
    %10 = vector.load %arg2[%c0_5, %c0_6] : memref<576x12xbf16, #tpu.memory_space<vmem>>, vector<576x12xbf16>
    %cst_7 = arith.constant dense<0.000000e+00> : vector<32x12xf32>
    %11 = tpu.matmul %9, %10, %cst_7 {dimension_numbers = #tpu.dot_dimension_numbers<[1], [0], [0], [1], [0, 0, 1, 1], [], []>} : vector<32x576xbf16>, vector<576x12xbf16>, vector<32x12xf32> -> vector<32x12xf32>
    %c0_8 = arith.constant 0 : index
    %c0_9 = arith.constant 0 : index
    %12 = vector.load %arg5[%c0_8, %c0_9] : memref<32x12xf32, #tpu.memory_space<vmem>>, vector<32x12xf32>
    tpu.vector_store %arg5[%c0_8, %c0_9], %11 {strides = array<i32>} : memref<32x12xf32, #tpu.memory_space<vmem>>, vector<32x12xf32>,
    return
  }
  func.func @transform_0(%arg0: i32) -> (i32, i32) {
    %c0_i32 = arith.constant 0 : i32
    %c0_i32_0 = arith.constant 0 : i32
    return %arg0, %c0_i32 : i32, i32
  }
  func.func @transform_1(%arg0: i32) -> (i32, i32) {
    %c0_i32 = arith.constant 0 : i32
    %c0_i32_0 = arith.constant 0 : i32
    %c0_i32_1 = arith.constant 0 : i32
    return %c0_i32, %c0_i32_0 : i32, i32
  }
  func.func @transform_2(%arg0: i32) -> (i32, i32) {
    %c0_i32 = arith.constant 0 : i32
    %c0_i32_0 = arith.constant 0 : i32
    %c0_i32_1 = arith.constant 0 : i32
    return %c0_i32, %c0_i32_0 : i32, i32
  }
  func.func @transform_3(%arg0: i32) -> (i32, i32) {
    %c0_i32 = arith.constant 0 : i32
    %c0_i32_0 = arith.constant 0 : i32
    %c0_i32_1 = arith.constant 0 : i32
    return %c0_i32, %c0_i32_0 : i32, i32
  }
  func.func @transform_4(%arg0: i32) -> (i32, i32) {
    %c0_i32 = arith.constant 0 : i32
    %c0_i32_0 = arith.constant 0 : i32
    return %arg0, %c0_i32 : i32, i32
  }
}

module attributes {stable_mosaic.version = 11 : i64} {
  func.func @_fused_matmul_kernel(%arg0: i32, %arg1: memref<32x304xf32, #tpu.memory_space<vmem>>, %arg2: memref<304x48xbf16, #tpu.memory_space<vmem>>, %arg3: memref<1x304xf32, #tpu.memory_space<vmem>>, %arg4: memref<1x304xf32, #tpu.memory_space<vmem>>, %arg5: memref<32x48xf32, #tpu.memory_space<vmem>>) attributes {dimension_semantics = [#tpu.dimension_semantics<parallel>], iteration_bounds = array<i64: 1>, scalar_prefetch = 0 : i64, scratch_operands = 0 : i64, tpu.core_type = #tpu.core_type<tc>, window_params = [{transform_indices = @transform_0, window_bounds = array<i64: 32, 304>}, {pipeline_mode = #tpu.pipeline_mode<synchronous>, transform_indices = @transform_1, window_bounds = array<i64: 304, 48>}, {pipeline_mode = #tpu.pipeline_mode<synchronous>, transform_indices = @transform_2, window_bounds = array<i64: 1, 304>}, {pipeline_mode = #tpu.pipeline_mode<synchronous>, transform_indices = @transform_3, window_bounds = array<i64: 1, 304>}, {transform_indices = @transform_4, window_bounds = array<i64: 32, 48>}]} {
    %c0 = arith.constant 0 : index
    %c0_0 = arith.constant 0 : index
    %0 = vector.load %arg1[%c0, %c0_0] : memref<32x304xf32, #tpu.memory_space<vmem>>, vector<32x304xf32>
    %c0_1 = arith.constant 0 : index
    %c0_2 = arith.constant 0 : index
    %1 = vector.load %arg3[%c0_1, %c0_2] : memref<1x304xf32, #tpu.memory_space<vmem>>, vector<1x304xf32>
    %2 = vector.broadcast %1 : vector<1x304xf32> to vector<32x304xf32>
    %3 = arith.mulf %0, %2 : vector<32x304xf32>
    %c0_3 = arith.constant 0 : index
    %c0_4 = arith.constant 0 : index
    %4 = vector.load %arg4[%c0_3, %c0_4] : memref<1x304xf32, #tpu.memory_space<vmem>>, vector<1x304xf32>
    %5 = vector.broadcast %4 : vector<1x304xf32> to vector<32x304xf32>
    %6 = arith.addf %3, %5 : vector<32x304xf32>
    %cst = arith.constant 0.000000e+00 : f32
    %7 = vector.broadcast %cst : f32 to vector<32x304xf32>
    %8 = arith.maximumf %6, %7 : vector<32x304xf32>
    %9 = arith.truncf %8 : vector<32x304xf32> to vector<32x304xbf16>
    %c0_5 = arith.constant 0 : index
    %c0_6 = arith.constant 0 : index
    %10 = vector.load %arg2[%c0_5, %c0_6] : memref<304x48xbf16, #tpu.memory_space<vmem>>, vector<304x48xbf16>
    %cst_7 = arith.constant dense<0.000000e+00> : vector<32x48xf32>
    %11 = tpu.matmul %9, %10, %cst_7 {dimension_numbers = #tpu.dot_dimension_numbers<[1], [0], [0], [1], [0, 0, 1, 1], [], []>} : vector<32x304xbf16>, vector<304x48xbf16>, vector<32x48xf32> -> vector<32x48xf32>
    %c0_8 = arith.constant 0 : index
    %c0_9 = arith.constant 0 : index
    %12 = vector.load %arg5[%c0_8, %c0_9] : memref<32x48xf32, #tpu.memory_space<vmem>>, vector<32x48xf32>
    tpu.vector_store %arg5[%c0_8, %c0_9], %11 {strides = array<i32>} : memref<32x48xf32, #tpu.memory_space<vmem>>, vector<32x48xf32>,
    return
  }
  func.func @transform_0(%arg0: i32) -> (i32, i32) {
    %c0_i32 = arith.constant 0 : i32
    %c0_i32_0 = arith.constant 0 : i32
    return %arg0, %c0_i32 : i32, i32
  }
  func.func @transform_1(%arg0: i32) -> (i32, i32) {
    %c0_i32 = arith.constant 0 : i32
    %c0_i32_0 = arith.constant 0 : i32
    %c0_i32_1 = arith.constant 0 : i32
    return %c0_i32, %c0_i32_0 : i32, i32
  }
  func.func @transform_2(%arg0: i32) -> (i32, i32) {
    %c0_i32 = arith.constant 0 : i32
    %c0_i32_0 = arith.constant 0 : i32
    %c0_i32_1 = arith.constant 0 : i32
    return %c0_i32, %c0_i32_0 : i32, i32
  }
  func.func @transform_3(%arg0: i32) -> (i32, i32) {
    %c0_i32 = arith.constant 0 : i32
    %c0_i32_0 = arith.constant 0 : i32
    %c0_i32_1 = arith.constant 0 : i32
    return %c0_i32, %c0_i32_0 : i32, i32
  }
  func.func @transform_4(%arg0: i32) -> (i32, i32) {
    %c0_i32 = arith.constant 0 : i32
    %c0_i32_0 = arith.constant 0 : i32
    return %arg0, %c0_i32 : i32, i32
  }
}

module attributes {stable_mosaic.version = 11 : i64} {
  func.func @_fused_matmul_kernel(%arg0: i32, %arg1: memref<32x684xf32, #tpu.memory_space<vmem>>, %arg2: memref<684x12xbf16, #tpu.memory_space<vmem>>, %arg3: memref<1x684xf32, #tpu.memory_space<vmem>>, %arg4: memref<1x684xf32, #tpu.memory_space<vmem>>, %arg5: memref<32x12xf32, #tpu.memory_space<vmem>>) attributes {dimension_semantics = [#tpu.dimension_semantics<parallel>], iteration_bounds = array<i64: 1>, scalar_prefetch = 0 : i64, scratch_operands = 0 : i64, tpu.core_type = #tpu.core_type<tc>, window_params = [{transform_indices = @transform_0, window_bounds = array<i64: 32, 684>}, {pipeline_mode = #tpu.pipeline_mode<synchronous>, transform_indices = @transform_1, window_bounds = array<i64: 684, 12>}, {pipeline_mode = #tpu.pipeline_mode<synchronous>, transform_indices = @transform_2, window_bounds = array<i64: 1, 684>}, {pipeline_mode = #tpu.pipeline_mode<synchronous>, transform_indices = @transform_3, window_bounds = array<i64: 1, 684>}, {transform_indices = @transform_4, window_bounds = array<i64: 32, 12>}]} {
    %c0 = arith.constant 0 : index
    %c0_0 = arith.constant 0 : index
    %0 = vector.load %arg1[%c0, %c0_0] : memref<32x684xf32, #tpu.memory_space<vmem>>, vector<32x684xf32>
    %c0_1 = arith.constant 0 : index
    %c0_2 = arith.constant 0 : index
    %1 = vector.load %arg3[%c0_1, %c0_2] : memref<1x684xf32, #tpu.memory_space<vmem>>, vector<1x684xf32>
    %2 = vector.broadcast %1 : vector<1x684xf32> to vector<32x684xf32>
    %3 = arith.mulf %0, %2 : vector<32x684xf32>
    %c0_3 = arith.constant 0 : index
    %c0_4 = arith.constant 0 : index
    %4 = vector.load %arg4[%c0_3, %c0_4] : memref<1x684xf32, #tpu.memory_space<vmem>>, vector<1x684xf32>
    %5 = vector.broadcast %4 : vector<1x684xf32> to vector<32x684xf32>
    %6 = arith.addf %3, %5 : vector<32x684xf32>
    %cst = arith.constant 0.000000e+00 : f32
    %7 = vector.broadcast %cst : f32 to vector<32x684xf32>
    %8 = arith.maximumf %6, %7 : vector<32x684xf32>
    %9 = arith.truncf %8 : vector<32x684xf32> to vector<32x684xbf16>
    %c0_5 = arith.constant 0 : index
    %c0_6 = arith.constant 0 : index
    %10 = vector.load %arg2[%c0_5, %c0_6] : memref<684x12xbf16, #tpu.memory_space<vmem>>, vector<684x12xbf16>
    %cst_7 = arith.constant dense<0.000000e+00> : vector<32x12xf32>
    %11 = tpu.matmul %9, %10, %cst_7 {dimension_numbers = #tpu.dot_dimension_numbers<[1], [0], [0], [1], [0, 0, 1, 1], [], []>} : vector<32x684xbf16>, vector<684x12xbf16>, vector<32x12xf32> -> vector<32x12xf32>
    %c0_8 = arith.constant 0 : index
    %c0_9 = arith.constant 0 : index
    %12 = vector.load %arg5[%c0_8, %c0_9] : memref<32x12xf32, #tpu.memory_space<vmem>>, vector<32x12xf32>
    tpu.vector_store %arg5[%c0_8, %c0_9], %11 {strides = array<i32>} : memref<32x12xf32, #tpu.memory_space<vmem>>, vector<32x12xf32>,
    return
  }
  func.func @transform_0(%arg0: i32) -> (i32, i32) {
    %c0_i32 = arith.constant 0 : i32
    %c0_i32_0 = arith.constant 0 : i32
    return %arg0, %c0_i32 : i32, i32
  }
  func.func @transform_1(%arg0: i32) -> (i32, i32) {
    %c0_i32 = arith.constant 0 : i32
    %c0_i32_0 = arith.constant 0 : i32
    %c0_i32_1 = arith.constant 0 : i32
    return %c0_i32, %c0_i32_0 : i32, i32
  }
  func.func @transform_2(%arg0: i32) -> (i32, i32) {
    %c0_i32 = arith.constant 0 : i32
    %c0_i32_0 = arith.constant 0 : i32
    %c0_i32_1 = arith.constant 0 : i32
    return %c0_i32, %c0_i32_0 : i32, i32
  }
  func.func @transform_3(%arg0: i32) -> (i32, i32) {
    %c0_i32 = arith.constant 0 : i32
    %c0_i32_0 = arith.constant 0 : i32
    %c0_i32_1 = arith.constant 0 : i32
    return %c0_i32, %c0_i32_0 : i32, i32
  }
  func.func @transform_4(%arg0: i32) -> (i32, i32) {
    %c0_i32 = arith.constant 0 : i32
    %c0_i32_0 = arith.constant 0 : i32
    return %arg0, %c0_i32 : i32, i32
  }
}

module attributes {stable_mosaic.version = 11 : i64} {
  func.func @_fused_matmul_kernel(%arg0: i32, %arg1: memref<32x352xf32, #tpu.memory_space<vmem>>, %arg2: memref<352x48xbf16, #tpu.memory_space<vmem>>, %arg3: memref<1x352xf32, #tpu.memory_space<vmem>>, %arg4: memref<1x352xf32, #tpu.memory_space<vmem>>, %arg5: memref<32x48xf32, #tpu.memory_space<vmem>>) attributes {dimension_semantics = [#tpu.dimension_semantics<parallel>], iteration_bounds = array<i64: 1>, scalar_prefetch = 0 : i64, scratch_operands = 0 : i64, tpu.core_type = #tpu.core_type<tc>, window_params = [{transform_indices = @transform_0, window_bounds = array<i64: 32, 352>}, {pipeline_mode = #tpu.pipeline_mode<synchronous>, transform_indices = @transform_1, window_bounds = array<i64: 352, 48>}, {pipeline_mode = #tpu.pipeline_mode<synchronous>, transform_indices = @transform_2, window_bounds = array<i64: 1, 352>}, {pipeline_mode = #tpu.pipeline_mode<synchronous>, transform_indices = @transform_3, window_bounds = array<i64: 1, 352>}, {transform_indices = @transform_4, window_bounds = array<i64: 32, 48>}]} {
    %c0 = arith.constant 0 : index
    %c0_0 = arith.constant 0 : index
    %0 = vector.load %arg1[%c0, %c0_0] : memref<32x352xf32, #tpu.memory_space<vmem>>, vector<32x352xf32>
    %c0_1 = arith.constant 0 : index
    %c0_2 = arith.constant 0 : index
    %1 = vector.load %arg3[%c0_1, %c0_2] : memref<1x352xf32, #tpu.memory_space<vmem>>, vector<1x352xf32>
    %2 = vector.broadcast %1 : vector<1x352xf32> to vector<32x352xf32>
    %3 = arith.mulf %0, %2 : vector<32x352xf32>
    %c0_3 = arith.constant 0 : index
    %c0_4 = arith.constant 0 : index
    %4 = vector.load %arg4[%c0_3, %c0_4] : memref<1x352xf32, #tpu.memory_space<vmem>>, vector<1x352xf32>
    %5 = vector.broadcast %4 : vector<1x352xf32> to vector<32x352xf32>
    %6 = arith.addf %3, %5 : vector<32x352xf32>
    %cst = arith.constant 0.000000e+00 : f32
    %7 = vector.broadcast %cst : f32 to vector<32x352xf32>
    %8 = arith.maximumf %6, %7 : vector<32x352xf32>
    %9 = arith.truncf %8 : vector<32x352xf32> to vector<32x352xbf16>
    %c0_5 = arith.constant 0 : index
    %c0_6 = arith.constant 0 : index
    %10 = vector.load %arg2[%c0_5, %c0_6] : memref<352x48xbf16, #tpu.memory_space<vmem>>, vector<352x48xbf16>
    %cst_7 = arith.constant dense<0.000000e+00> : vector<32x48xf32>
    %11 = tpu.matmul %9, %10, %cst_7 {dimension_numbers = #tpu.dot_dimension_numbers<[1], [0], [0], [1], [0, 0, 1, 1], [], []>} : vector<32x352xbf16>, vector<352x48xbf16>, vector<32x48xf32> -> vector<32x48xf32>
    %c0_8 = arith.constant 0 : index
    %c0_9 = arith.constant 0 : index
    %12 = vector.load %arg5[%c0_8, %c0_9] : memref<32x48xf32, #tpu.memory_space<vmem>>, vector<32x48xf32>
    tpu.vector_store %arg5[%c0_8, %c0_9], %11 {strides = array<i32>} : memref<32x48xf32, #tpu.memory_space<vmem>>, vector<32x48xf32>,
    return
  }
  func.func @transform_0(%arg0: i32) -> (i32, i32) {
    %c0_i32 = arith.constant 0 : i32
    %c0_i32_0 = arith.constant 0 : i32
    return %arg0, %c0_i32 : i32, i32
  }
  func.func @transform_1(%arg0: i32) -> (i32, i32) {
    %c0_i32 = arith.constant 0 : i32
    %c0_i32_0 = arith.constant 0 : i32
    %c0_i32_1 = arith.constant 0 : i32
    return %c0_i32, %c0_i32_0 : i32, i32
  }
  func.func @transform_2(%arg0: i32) -> (i32, i32) {
    %c0_i32 = arith.constant 0 : i32
    %c0_i32_0 = arith.constant 0 : i32
    %c0_i32_1 = arith.constant 0 : i32
    return %c0_i32, %c0_i32_0 : i32, i32
  }
  func.func @transform_3(%arg0: i32) -> (i32, i32) {
    %c0_i32 = arith.constant 0 : i32
    %c0_i32_0 = arith.constant 0 : i32
    %c0_i32_1 = arith.constant 0 : i32
    return %c0_i32, %c0_i32_0 : i32, i32
  }
  func.func @transform_4(%arg0: i32) -> (i32, i32) {
    %c0_i32 = arith.constant 0 : i32
    %c0_i32_0 = arith.constant 0 : i32
    return %arg0, %c0_i32 : i32, i32
  }
}

module attributes {stable_mosaic.version = 11 : i64} {
  func.func @_fused_matmul_kernel(%arg0: i32, %arg1: memref<128x88xf32, #tpu.memory_space<vmem>>, %arg2: memref<88x44xbf16, #tpu.memory_space<vmem>>, %arg3: memref<1x88xf32, #tpu.memory_space<vmem>>, %arg4: memref<1x88xf32, #tpu.memory_space<vmem>>, %arg5: memref<128x44xf32, #tpu.memory_space<vmem>>) attributes {dimension_semantics = [#tpu.dimension_semantics<parallel>], iteration_bounds = array<i64: 1>, scalar_prefetch = 0 : i64, scratch_operands = 0 : i64, tpu.core_type = #tpu.core_type<tc>, window_params = [{transform_indices = @transform_0, window_bounds = array<i64: 128, 88>}, {pipeline_mode = #tpu.pipeline_mode<synchronous>, transform_indices = @transform_1, window_bounds = array<i64: 88, 44>}, {pipeline_mode = #tpu.pipeline_mode<synchronous>, transform_indices = @transform_2, window_bounds = array<i64: 1, 88>}, {pipeline_mode = #tpu.pipeline_mode<synchronous>, transform_indices = @transform_3, window_bounds = array<i64: 1, 88>}, {transform_indices = @transform_4, window_bounds = array<i64: 128, 44>}]} {
    %c0 = arith.constant 0 : index
    %c0_0 = arith.constant 0 : index
    %0 = vector.load %arg1[%c0, %c0_0] : memref<128x88xf32, #tpu.memory_space<vmem>>, vector<128x88xf32>
    %c0_1 = arith.constant 0 : index
    %c0_2 = arith.constant 0 : index
    %1 = vector.load %arg3[%c0_1, %c0_2] : memref<1x88xf32, #tpu.memory_space<vmem>>, vector<1x88xf32>
    %2 = vector.broadcast %1 : vector<1x88xf32> to vector<128x88xf32>
    %3 = arith.mulf %0, %2 : vector<128x88xf32>
    %c0_3 = arith.constant 0 : index
    %c0_4 = arith.constant 0 : index
    %4 = vector.load %arg4[%c0_3, %c0_4] : memref<1x88xf32, #tpu.memory_space<vmem>>, vector<1x88xf32>
    %5 = vector.broadcast %4 : vector<1x88xf32> to vector<128x88xf32>
    %6 = arith.addf %3, %5 : vector<128x88xf32>
    %cst = arith.constant 0.000000e+00 : f32
    %7 = vector.broadcast %cst : f32 to vector<128x88xf32>
    %8 = arith.maximumf %6, %7 : vector<128x88xf32>
    %9 = arith.truncf %8 : vector<128x88xf32> to vector<128x88xbf16>
    %c0_5 = arith.constant 0 : index
    %c0_6 = arith.constant 0 : index
    %10 = vector.load %arg2[%c0_5, %c0_6] : memref<88x44xbf16, #tpu.memory_space<vmem>>, vector<88x44xbf16>
    %cst_7 = arith.constant dense<0.000000e+00> : vector<128x44xf32>
    %11 = tpu.matmul %9, %10, %cst_7 {dimension_numbers = #tpu.dot_dimension_numbers<[1], [0], [0], [1], [0, 0, 1, 1], [], []>} : vector<128x88xbf16>, vector<88x44xbf16>, vector<128x44xf32> -> vector<128x44xf32>
    %c0_8 = arith.constant 0 : index
    %c0_9 = arith.constant 0 : index
    %12 = vector.load %arg5[%c0_8, %c0_9] : memref<128x44xf32, #tpu.memory_space<vmem>>, vector<128x44xf32>
    tpu.vector_store %arg5[%c0_8, %c0_9], %11 {strides = array<i32>} : memref<128x44xf32, #tpu.memory_space<vmem>>, vector<128x44xf32>,
    return
  }
  func.func @transform_0(%arg0: i32) -> (i32, i32) {
    %c0_i32 = arith.constant 0 : i32
    %c0_i32_0 = arith.constant 0 : i32
    return %arg0, %c0_i32 : i32, i32
  }
  func.func @transform_1(%arg0: i32) -> (i32, i32) {
    %c0_i32 = arith.constant 0 : i32
    %c0_i32_0 = arith.constant 0 : i32
    %c0_i32_1 = arith.constant 0 : i32
    return %c0_i32, %c0_i32_0 : i32, i32
  }
  func.func @transform_2(%arg0: i32) -> (i32, i32) {
    %c0_i32 = arith.constant 0 : i32
    %c0_i32_0 = arith.constant 0 : i32
    %c0_i32_1 = arith.constant 0 : i32
    return %c0_i32, %c0_i32_0 : i32, i32
  }
  func.func @transform_3(%arg0: i32) -> (i32, i32) {
    %c0_i32 = arith.constant 0 : i32
    %c0_i32_0 = arith.constant 0 : i32
    %c0_i32_1 = arith.constant 0 : i32
    return %c0_i32, %c0_i32_0 : i32, i32
  }
  func.func @transform_4(%arg0: i32) -> (i32, i32) {
    %c0_i32 = arith.constant 0 : i32
    %c0_i32_0 = arith.constant 0 : i32
    return %arg0, %c0_i32 : i32, i32
  }
}

module attributes {stable_mosaic.version = 11 : i64} {
  func.func @_fused_matmul_kernel(%arg0: i32, %arg1: memref<32x88xf32, #tpu.memory_space<vmem>>, %arg2: memref<88x44xbf16, #tpu.memory_space<vmem>>, %arg3: memref<1x88xf32, #tpu.memory_space<vmem>>, %arg4: memref<1x88xf32, #tpu.memory_space<vmem>>, %arg5: memref<32x44xf32, #tpu.memory_space<vmem>>) attributes {dimension_semantics = [#tpu.dimension_semantics<parallel>], iteration_bounds = array<i64: 1>, scalar_prefetch = 0 : i64, scratch_operands = 0 : i64, tpu.core_type = #tpu.core_type<tc>, window_params = [{transform_indices = @transform_0, window_bounds = array<i64: 32, 88>}, {pipeline_mode = #tpu.pipeline_mode<synchronous>, transform_indices = @transform_1, window_bounds = array<i64: 88, 44>}, {pipeline_mode = #tpu.pipeline_mode<synchronous>, transform_indices = @transform_2, window_bounds = array<i64: 1, 88>}, {pipeline_mode = #tpu.pipeline_mode<synchronous>, transform_indices = @transform_3, window_bounds = array<i64: 1, 88>}, {transform_indices = @transform_4, window_bounds = array<i64: 32, 44>}]} {
    %c0 = arith.constant 0 : index
    %c0_0 = arith.constant 0 : index
    %0 = vector.load %arg1[%c0, %c0_0] : memref<32x88xf32, #tpu.memory_space<vmem>>, vector<32x88xf32>
    %c0_1 = arith.constant 0 : index
    %c0_2 = arith.constant 0 : index
    %1 = vector.load %arg3[%c0_1, %c0_2] : memref<1x88xf32, #tpu.memory_space<vmem>>, vector<1x88xf32>
    %2 = vector.broadcast %1 : vector<1x88xf32> to vector<32x88xf32>
    %3 = arith.mulf %0, %2 : vector<32x88xf32>
    %c0_3 = arith.constant 0 : index
    %c0_4 = arith.constant 0 : index
    %4 = vector.load %arg4[%c0_3, %c0_4] : memref<1x88xf32, #tpu.memory_space<vmem>>, vector<1x88xf32>
    %5 = vector.broadcast %4 : vector<1x88xf32> to vector<32x88xf32>
    %6 = arith.addf %3, %5 : vector<32x88xf32>
    %cst = arith.constant 0.000000e+00 : f32
    %7 = vector.broadcast %cst : f32 to vector<32x88xf32>
    %8 = arith.maximumf %6, %7 : vector<32x88xf32>
    %9 = arith.truncf %8 : vector<32x88xf32> to vector<32x88xbf16>
    %c0_5 = arith.constant 0 : index
    %c0_6 = arith.constant 0 : index
    %10 = vector.load %arg2[%c0_5, %c0_6] : memref<88x44xbf16, #tpu.memory_space<vmem>>, vector<88x44xbf16>
    %cst_7 = arith.constant dense<0.000000e+00> : vector<32x44xf32>
    %11 = tpu.matmul %9, %10, %cst_7 {dimension_numbers = #tpu.dot_dimension_numbers<[1], [0], [0], [1], [0, 0, 1, 1], [], []>} : vector<32x88xbf16>, vector<88x44xbf16>, vector<32x44xf32> -> vector<32x44xf32>
    %c0_8 = arith.constant 0 : index
    %c0_9 = arith.constant 0 : index
    %12 = vector.load %arg5[%c0_8, %c0_9] : memref<32x44xf32, #tpu.memory_space<vmem>>, vector<32x44xf32>
    tpu.vector_store %arg5[%c0_8, %c0_9], %11 {strides = array<i32>} : memref<32x44xf32, #tpu.memory_space<vmem>>, vector<32x44xf32>,
    return
  }
  func.func @transform_0(%arg0: i32) -> (i32, i32) {
    %c0_i32 = arith.constant 0 : i32
    %c0_i32_0 = arith.constant 0 : i32
    return %arg0, %c0_i32 : i32, i32
  }
  func.func @transform_1(%arg0: i32) -> (i32, i32) {
    %c0_i32 = arith.constant 0 : i32
    %c0_i32_0 = arith.constant 0 : i32
    %c0_i32_1 = arith.constant 0 : i32
    return %c0_i32, %c0_i32_0 : i32, i32
  }
  func.func @transform_2(%arg0: i32) -> (i32, i32) {
    %c0_i32 = arith.constant 0 : i32
    %c0_i32_0 = arith.constant 0 : i32
    %c0_i32_1 = arith.constant 0 : i32
    return %c0_i32, %c0_i32_0 : i32, i32
  }
  func.func @transform_3(%arg0: i32) -> (i32, i32) {
    %c0_i32 = arith.constant 0 : i32
    %c0_i32_0 = arith.constant 0 : i32
    %c0_i32_1 = arith.constant 0 : i32
    return %c0_i32, %c0_i32_0 : i32, i32
  }
  func.func @transform_4(%arg0: i32) -> (i32, i32) {
    %c0_i32 = arith.constant 0 : i32
    %c0_i32_0 = arith.constant 0 : i32
    return %arg0, %c0_i32 : i32, i32
  }
}

module attributes {stable_mosaic.version = 11 : i64} {
  func.func @_fused_matmul_kernel(%arg0: i32, %arg1: memref<8x396xf32, #tpu.memory_space<vmem>>, %arg2: memref<396x12xbf16, #tpu.memory_space<vmem>>, %arg3: memref<1x396xf32, #tpu.memory_space<vmem>>, %arg4: memref<1x396xf32, #tpu.memory_space<vmem>>, %arg5: memref<8x12xf32, #tpu.memory_space<vmem>>) attributes {dimension_semantics = [#tpu.dimension_semantics<parallel>], iteration_bounds = array<i64: 1>, scalar_prefetch = 0 : i64, scratch_operands = 0 : i64, tpu.core_type = #tpu.core_type<tc>, window_params = [{transform_indices = @transform_0, window_bounds = array<i64: 8, 396>}, {pipeline_mode = #tpu.pipeline_mode<synchronous>, transform_indices = @transform_1, window_bounds = array<i64: 396, 12>}, {pipeline_mode = #tpu.pipeline_mode<synchronous>, transform_indices = @transform_2, window_bounds = array<i64: 1, 396>}, {pipeline_mode = #tpu.pipeline_mode<synchronous>, transform_indices = @transform_3, window_bounds = array<i64: 1, 396>}, {transform_indices = @transform_4, window_bounds = array<i64: 8, 12>}]} {
    %c0 = arith.constant 0 : index
    %c0_0 = arith.constant 0 : index
    %0 = vector.load %arg1[%c0, %c0_0] : memref<8x396xf32, #tpu.memory_space<vmem>>, vector<8x396xf32>
    %c0_1 = arith.constant 0 : index
    %c0_2 = arith.constant 0 : index
    %1 = vector.load %arg3[%c0_1, %c0_2] : memref<1x396xf32, #tpu.memory_space<vmem>>, vector<1x396xf32>
    %2 = vector.broadcast %1 : vector<1x396xf32> to vector<8x396xf32>
    %3 = arith.mulf %0, %2 : vector<8x396xf32>
    %c0_3 = arith.constant 0 : index
    %c0_4 = arith.constant 0 : index
    %4 = vector.load %arg4[%c0_3, %c0_4] : memref<1x396xf32, #tpu.memory_space<vmem>>, vector<1x396xf32>
    %5 = vector.broadcast %4 : vector<1x396xf32> to vector<8x396xf32>
    %6 = arith.addf %3, %5 : vector<8x396xf32>
    %cst = arith.constant 0.000000e+00 : f32
    %7 = vector.broadcast %cst : f32 to vector<8x396xf32>
    %8 = arith.maximumf %6, %7 : vector<8x396xf32>
    %9 = arith.truncf %8 : vector<8x396xf32> to vector<8x396xbf16>
    %c0_5 = arith.constant 0 : index
    %c0_6 = arith.constant 0 : index
    %10 = vector.load %arg2[%c0_5, %c0_6] : memref<396x12xbf16, #tpu.memory_space<vmem>>, vector<396x12xbf16>
    %cst_7 = arith.constant dense<0.000000e+00> : vector<8x12xf32>
    %11 = tpu.matmul %9, %10, %cst_7 {dimension_numbers = #tpu.dot_dimension_numbers<[1], [0], [0], [1], [0, 0, 1, 1], [], []>} : vector<8x396xbf16>, vector<396x12xbf16>, vector<8x12xf32> -> vector<8x12xf32>
    %c0_8 = arith.constant 0 : index
    %c0_9 = arith.constant 0 : index
    %12 = vector.load %arg5[%c0_8, %c0_9] : memref<8x12xf32, #tpu.memory_space<vmem>>, vector<8x12xf32>
    tpu.vector_store %arg5[%c0_8, %c0_9], %11 {strides = array<i32>} : memref<8x12xf32, #tpu.memory_space<vmem>>, vector<8x12xf32>,
    return
  }
  func.func @transform_0(%arg0: i32) -> (i32, i32) {
    %c0_i32 = arith.constant 0 : i32
    %c0_i32_0 = arith.constant 0 : i32
    return %arg0, %c0_i32 : i32, i32
  }
  func.func @transform_1(%arg0: i32) -> (i32, i32) {
    %c0_i32 = arith.constant 0 : i32
    %c0_i32_0 = arith.constant 0 : i32
    %c0_i32_1 = arith.constant 0 : i32
    return %c0_i32, %c0_i32_0 : i32, i32
  }
  func.func @transform_2(%arg0: i32) -> (i32, i32) {
    %c0_i32 = arith.constant 0 : i32
    %c0_i32_0 = arith.constant 0 : i32
    %c0_i32_1 = arith.constant 0 : i32
    return %c0_i32, %c0_i32_0 : i32, i32
  }
  func.func @transform_3(%arg0: i32) -> (i32, i32) {
    %c0_i32 = arith.constant 0 : i32
    %c0_i32_0 = arith.constant 0 : i32
    %c0_i32_1 = arith.constant 0 : i32
    return %c0_i32, %c0_i32_0 : i32, i32
  }
  func.func @transform_4(%arg0: i32) -> (i32, i32) {
    %c0_i32 = arith.constant 0 : i32
    %c0_i32_0 = arith.constant 0 : i32
    return %arg0, %c0_i32 : i32, i32
  }
}

module attributes {stable_mosaic.version = 11 : i64} {
  func.func @_fused_matmul_kernel(%arg0: i32, %arg1: memref<8x224xf32, #tpu.memory_space<vmem>>, %arg2: memref<224x48xbf16, #tpu.memory_space<vmem>>, %arg3: memref<1x224xf32, #tpu.memory_space<vmem>>, %arg4: memref<1x224xf32, #tpu.memory_space<vmem>>, %arg5: memref<8x48xf32, #tpu.memory_space<vmem>>) attributes {dimension_semantics = [#tpu.dimension_semantics<parallel>], iteration_bounds = array<i64: 1>, scalar_prefetch = 0 : i64, scratch_operands = 0 : i64, tpu.core_type = #tpu.core_type<tc>, window_params = [{transform_indices = @transform_0, window_bounds = array<i64: 8, 224>}, {pipeline_mode = #tpu.pipeline_mode<synchronous>, transform_indices = @transform_1, window_bounds = array<i64: 224, 48>}, {pipeline_mode = #tpu.pipeline_mode<synchronous>, transform_indices = @transform_2, window_bounds = array<i64: 1, 224>}, {pipeline_mode = #tpu.pipeline_mode<synchronous>, transform_indices = @transform_3, window_bounds = array<i64: 1, 224>}, {transform_indices = @transform_4, window_bounds = array<i64: 8, 48>}]} {
    %c0 = arith.constant 0 : index
    %c0_0 = arith.constant 0 : index
    %0 = vector.load %arg1[%c0, %c0_0] : memref<8x224xf32, #tpu.memory_space<vmem>>, vector<8x224xf32>
    %c0_1 = arith.constant 0 : index
    %c0_2 = arith.constant 0 : index
    %1 = vector.load %arg3[%c0_1, %c0_2] : memref<1x224xf32, #tpu.memory_space<vmem>>, vector<1x224xf32>
    %2 = vector.broadcast %1 : vector<1x224xf32> to vector<8x224xf32>
    %3 = arith.mulf %0, %2 : vector<8x224xf32>
    %c0_3 = arith.constant 0 : index
    %c0_4 = arith.constant 0 : index
    %4 = vector.load %arg4[%c0_3, %c0_4] : memref<1x224xf32, #tpu.memory_space<vmem>>, vector<1x224xf32>
    %5 = vector.broadcast %4 : vector<1x224xf32> to vector<8x224xf32>
    %6 = arith.addf %3, %5 : vector<8x224xf32>
    %cst = arith.constant 0.000000e+00 : f32
    %7 = vector.broadcast %cst : f32 to vector<8x224xf32>
    %8 = arith.maximumf %6, %7 : vector<8x224xf32>
    %9 = arith.truncf %8 : vector<8x224xf32> to vector<8x224xbf16>
    %c0_5 = arith.constant 0 : index
    %c0_6 = arith.constant 0 : index
    %10 = vector.load %arg2[%c0_5, %c0_6] : memref<224x48xbf16, #tpu.memory_space<vmem>>, vector<224x48xbf16>
    %cst_7 = arith.constant dense<0.000000e+00> : vector<8x48xf32>
    %11 = tpu.matmul %9, %10, %cst_7 {dimension_numbers = #tpu.dot_dimension_numbers<[1], [0], [0], [1], [0, 0, 1, 1], [], []>} : vector<8x224xbf16>, vector<224x48xbf16>, vector<8x48xf32> -> vector<8x48xf32>
    %c0_8 = arith.constant 0 : index
    %c0_9 = arith.constant 0 : index
    %12 = vector.load %arg5[%c0_8, %c0_9] : memref<8x48xf32, #tpu.memory_space<vmem>>, vector<8x48xf32>
    tpu.vector_store %arg5[%c0_8, %c0_9], %11 {strides = array<i32>} : memref<8x48xf32, #tpu.memory_space<vmem>>, vector<8x48xf32>,
    return
  }
  func.func @transform_0(%arg0: i32) -> (i32, i32) {
    %c0_i32 = arith.constant 0 : i32
    %c0_i32_0 = arith.constant 0 : i32
    return %arg0, %c0_i32 : i32, i32
  }
  func.func @transform_1(%arg0: i32) -> (i32, i32) {
    %c0_i32 = arith.constant 0 : i32
    %c0_i32_0 = arith.constant 0 : i32
    %c0_i32_1 = arith.constant 0 : i32
    return %c0_i32, %c0_i32_0 : i32, i32
  }
  func.func @transform_2(%arg0: i32) -> (i32, i32) {
    %c0_i32 = arith.constant 0 : i32
    %c0_i32_0 = arith.constant 0 : i32
    %c0_i32_1 = arith.constant 0 : i32
    return %c0_i32, %c0_i32_0 : i32, i32
  }
  func.func @transform_3(%arg0: i32) -> (i32, i32) {
    %c0_i32 = arith.constant 0 : i32
    %c0_i32_0 = arith.constant 0 : i32
    %c0_i32_1 = arith.constant 0 : i32
    return %c0_i32, %c0_i32_0 : i32, i32
  }
  func.func @transform_4(%arg0: i32) -> (i32, i32) {
    %c0_i32 = arith.constant 0 : i32
    %c0_i32_0 = arith.constant 0 : i32
    return %arg0, %c0_i32 : i32, i32
  }
}

module attributes {stable_mosaic.version = 11 : i64} {
  func.func @_fused_matmul_kernel(%arg0: i32, %arg1: memref<8x504xf32, #tpu.memory_space<vmem>>, %arg2: memref<504x12xbf16, #tpu.memory_space<vmem>>, %arg3: memref<1x504xf32, #tpu.memory_space<vmem>>, %arg4: memref<1x504xf32, #tpu.memory_space<vmem>>, %arg5: memref<8x12xf32, #tpu.memory_space<vmem>>) attributes {dimension_semantics = [#tpu.dimension_semantics<parallel>], iteration_bounds = array<i64: 1>, scalar_prefetch = 0 : i64, scratch_operands = 0 : i64, tpu.core_type = #tpu.core_type<tc>, window_params = [{transform_indices = @transform_0, window_bounds = array<i64: 8, 504>}, {pipeline_mode = #tpu.pipeline_mode<synchronous>, transform_indices = @transform_1, window_bounds = array<i64: 504, 12>}, {pipeline_mode = #tpu.pipeline_mode<synchronous>, transform_indices = @transform_2, window_bounds = array<i64: 1, 504>}, {pipeline_mode = #tpu.pipeline_mode<synchronous>, transform_indices = @transform_3, window_bounds = array<i64: 1, 504>}, {transform_indices = @transform_4, window_bounds = array<i64: 8, 12>}]} {
    %c0 = arith.constant 0 : index
    %c0_0 = arith.constant 0 : index
    %0 = vector.load %arg1[%c0, %c0_0] : memref<8x504xf32, #tpu.memory_space<vmem>>, vector<8x504xf32>
    %c0_1 = arith.constant 0 : index
    %c0_2 = arith.constant 0 : index
    %1 = vector.load %arg3[%c0_1, %c0_2] : memref<1x504xf32, #tpu.memory_space<vmem>>, vector<1x504xf32>
    %2 = vector.broadcast %1 : vector<1x504xf32> to vector<8x504xf32>
    %3 = arith.mulf %0, %2 : vector<8x504xf32>
    %c0_3 = arith.constant 0 : index
    %c0_4 = arith.constant 0 : index
    %4 = vector.load %arg4[%c0_3, %c0_4] : memref<1x504xf32, #tpu.memory_space<vmem>>, vector<1x504xf32>
    %5 = vector.broadcast %4 : vector<1x504xf32> to vector<8x504xf32>
    %6 = arith.addf %3, %5 : vector<8x504xf32>
    %cst = arith.constant 0.000000e+00 : f32
    %7 = vector.broadcast %cst : f32 to vector<8x504xf32>
    %8 = arith.maximumf %6, %7 : vector<8x504xf32>
    %9 = arith.truncf %8 : vector<8x504xf32> to vector<8x504xbf16>
    %c0_5 = arith.constant 0 : index
    %c0_6 = arith.constant 0 : index
    %10 = vector.load %arg2[%c0_5, %c0_6] : memref<504x12xbf16, #tpu.memory_space<vmem>>, vector<504x12xbf16>
    %cst_7 = arith.constant dense<0.000000e+00> : vector<8x12xf32>
    %11 = tpu.matmul %9, %10, %cst_7 {dimension_numbers = #tpu.dot_dimension_numbers<[1], [0], [0], [1], [0, 0, 1, 1], [], []>} : vector<8x504xbf16>, vector<504x12xbf16>, vector<8x12xf32> -> vector<8x12xf32>
    %c0_8 = arith.constant 0 : index
    %c0_9 = arith.constant 0 : index
    %12 = vector.load %arg5[%c0_8, %c0_9] : memref<8x12xf32, #tpu.memory_space<vmem>>, vector<8x12xf32>
    tpu.vector_store %arg5[%c0_8, %c0_9], %11 {strides = array<i32>} : memref<8x12xf32, #tpu.memory_space<vmem>>, vector<8x12xf32>,
    return
  }
  func.func @transform_0(%arg0: i32) -> (i32, i32) {
    %c0_i32 = arith.constant 0 : i32
    %c0_i32_0 = arith.constant 0 : i32
    return %arg0, %c0_i32 : i32, i32
  }
  func.func @transform_1(%arg0: i32) -> (i32, i32) {
    %c0_i32 = arith.constant 0 : i32
    %c0_i32_0 = arith.constant 0 : i32
    %c0_i32_1 = arith.constant 0 : i32
    return %c0_i32, %c0_i32_0 : i32, i32
  }
  func.func @transform_2(%arg0: i32) -> (i32, i32) {
    %c0_i32 = arith.constant 0 : i32
    %c0_i32_0 = arith.constant 0 : i32
    %c0_i32_1 = arith.constant 0 : i32
    return %c0_i32, %c0_i32_0 : i32, i32
  }
  func.func @transform_3(%arg0: i32) -> (i32, i32) {
    %c0_i32 = arith.constant 0 : i32
    %c0_i32_0 = arith.constant 0 : i32
    %c0_i32_1 = arith.constant 0 : i32
    return %c0_i32, %c0_i32_0 : i32, i32
  }
  func.func @transform_4(%arg0: i32) -> (i32, i32) {
    %c0_i32 = arith.constant 0 : i32
    %c0_i32_0 = arith.constant 0 : i32
    return %arg0, %c0_i32 : i32, i32
  }
}

module attributes {stable_mosaic.version = 11 : i64} {
  func.func @_fused_matmul_kernel(%arg0: i32, %arg1: memref<8x272xf32, #tpu.memory_space<vmem>>, %arg2: memref<272x48xbf16, #tpu.memory_space<vmem>>, %arg3: memref<1x272xf32, #tpu.memory_space<vmem>>, %arg4: memref<1x272xf32, #tpu.memory_space<vmem>>, %arg5: memref<8x48xf32, #tpu.memory_space<vmem>>) attributes {dimension_semantics = [#tpu.dimension_semantics<parallel>], iteration_bounds = array<i64: 1>, scalar_prefetch = 0 : i64, scratch_operands = 0 : i64, tpu.core_type = #tpu.core_type<tc>, window_params = [{transform_indices = @transform_0, window_bounds = array<i64: 8, 272>}, {pipeline_mode = #tpu.pipeline_mode<synchronous>, transform_indices = @transform_1, window_bounds = array<i64: 272, 48>}, {pipeline_mode = #tpu.pipeline_mode<synchronous>, transform_indices = @transform_2, window_bounds = array<i64: 1, 272>}, {pipeline_mode = #tpu.pipeline_mode<synchronous>, transform_indices = @transform_3, window_bounds = array<i64: 1, 272>}, {transform_indices = @transform_4, window_bounds = array<i64: 8, 48>}]} {
    %c0 = arith.constant 0 : index
    %c0_0 = arith.constant 0 : index
    %0 = vector.load %arg1[%c0, %c0_0] : memref<8x272xf32, #tpu.memory_space<vmem>>, vector<8x272xf32>
    %c0_1 = arith.constant 0 : index
    %c0_2 = arith.constant 0 : index
    %1 = vector.load %arg3[%c0_1, %c0_2] : memref<1x272xf32, #tpu.memory_space<vmem>>, vector<1x272xf32>
    %2 = vector.broadcast %1 : vector<1x272xf32> to vector<8x272xf32>
    %3 = arith.mulf %0, %2 : vector<8x272xf32>
    %c0_3 = arith.constant 0 : index
    %c0_4 = arith.constant 0 : index
    %4 = vector.load %arg4[%c0_3, %c0_4] : memref<1x272xf32, #tpu.memory_space<vmem>>, vector<1x272xf32>
    %5 = vector.broadcast %4 : vector<1x272xf32> to vector<8x272xf32>
    %6 = arith.addf %3, %5 : vector<8x272xf32>
    %cst = arith.constant 0.000000e+00 : f32
    %7 = vector.broadcast %cst : f32 to vector<8x272xf32>
    %8 = arith.maximumf %6, %7 : vector<8x272xf32>
    %9 = arith.truncf %8 : vector<8x272xf32> to vector<8x272xbf16>
    %c0_5 = arith.constant 0 : index
    %c0_6 = arith.constant 0 : index
    %10 = vector.load %arg2[%c0_5, %c0_6] : memref<272x48xbf16, #tpu.memory_space<vmem>>, vector<272x48xbf16>
    %cst_7 = arith.constant dense<0.000000e+00> : vector<8x48xf32>
    %11 = tpu.matmul %9, %10, %cst_7 {dimension_numbers = #tpu.dot_dimension_numbers<[1], [0], [0], [1], [0, 0, 1, 1], [], []>} : vector<8x272xbf16>, vector<272x48xbf16>, vector<8x48xf32> -> vector<8x48xf32>
    %c0_8 = arith.constant 0 : index
    %c0_9 = arith.constant 0 : index
    %12 = vector.load %arg5[%c0_8, %c0_9] : memref<8x48xf32, #tpu.memory_space<vmem>>, vector<8x48xf32>
    tpu.vector_store %arg5[%c0_8, %c0_9], %11 {strides = array<i32>} : memref<8x48xf32, #tpu.memory_space<vmem>>, vector<8x48xf32>,
    return
  }
  func.func @transform_0(%arg0: i32) -> (i32, i32) {
    %c0_i32 = arith.constant 0 : i32
    %c0_i32_0 = arith.constant 0 : i32
    return %arg0, %c0_i32 : i32, i32
  }
  func.func @transform_1(%arg0: i32) -> (i32, i32) {
    %c0_i32 = arith.constant 0 : i32
    %c0_i32_0 = arith.constant 0 : i32
    %c0_i32_1 = arith.constant 0 : i32
    return %c0_i32, %c0_i32_0 : i32, i32
  }
  func.func @transform_2(%arg0: i32) -> (i32, i32) {
    %c0_i32 = arith.constant 0 : i32
    %c0_i32_0 = arith.constant 0 : i32
    %c0_i32_1 = arith.constant 0 : i32
    return %c0_i32, %c0_i32_0 : i32, i32
  }
  func.func @transform_3(%arg0: i32) -> (i32, i32) {
    %c0_i32 = arith.constant 0 : i32
    %c0_i32_0 = arith.constant 0 : i32
    %c0_i32_1 = arith.constant 0 : i32
    return %c0_i32, %c0_i32_0 : i32, i32
  }
  func.func @transform_4(%arg0: i32) -> (i32, i32) {
    %c0_i32 = arith.constant 0 : i32
    %c0_i32_0 = arith.constant 0 : i32
    return %arg0, %c0_i32 : i32, i32
  }
}

module attributes {stable_mosaic.version = 11 : i64} {
  func.func @_fused_matmul_kernel(%arg0: i32, %arg1: memref<8x612xf32, #tpu.memory_space<vmem>>, %arg2: memref<612x12xbf16, #tpu.memory_space<vmem>>, %arg3: memref<1x612xf32, #tpu.memory_space<vmem>>, %arg4: memref<1x612xf32, #tpu.memory_space<vmem>>, %arg5: memref<8x12xf32, #tpu.memory_space<vmem>>) attributes {dimension_semantics = [#tpu.dimension_semantics<parallel>], iteration_bounds = array<i64: 1>, scalar_prefetch = 0 : i64, scratch_operands = 0 : i64, tpu.core_type = #tpu.core_type<tc>, window_params = [{transform_indices = @transform_0, window_bounds = array<i64: 8, 612>}, {pipeline_mode = #tpu.pipeline_mode<synchronous>, transform_indices = @transform_1, window_bounds = array<i64: 612, 12>}, {pipeline_mode = #tpu.pipeline_mode<synchronous>, transform_indices = @transform_2, window_bounds = array<i64: 1, 612>}, {pipeline_mode = #tpu.pipeline_mode<synchronous>, transform_indices = @transform_3, window_bounds = array<i64: 1, 612>}, {transform_indices = @transform_4, window_bounds = array<i64: 8, 12>}]} {
    %c0 = arith.constant 0 : index
    %c0_0 = arith.constant 0 : index
    %0 = vector.load %arg1[%c0, %c0_0] : memref<8x612xf32, #tpu.memory_space<vmem>>, vector<8x612xf32>
    %c0_1 = arith.constant 0 : index
    %c0_2 = arith.constant 0 : index
    %1 = vector.load %arg3[%c0_1, %c0_2] : memref<1x612xf32, #tpu.memory_space<vmem>>, vector<1x612xf32>
    %2 = vector.broadcast %1 : vector<1x612xf32> to vector<8x612xf32>
    %3 = arith.mulf %0, %2 : vector<8x612xf32>
    %c0_3 = arith.constant 0 : index
    %c0_4 = arith.constant 0 : index
    %4 = vector.load %arg4[%c0_3, %c0_4] : memref<1x612xf32, #tpu.memory_space<vmem>>, vector<1x612xf32>
    %5 = vector.broadcast %4 : vector<1x612xf32> to vector<8x612xf32>
    %6 = arith.addf %3, %5 : vector<8x612xf32>
    %cst = arith.constant 0.000000e+00 : f32
    %7 = vector.broadcast %cst : f32 to vector<8x612xf32>
    %8 = arith.maximumf %6, %7 : vector<8x612xf32>
    %9 = arith.truncf %8 : vector<8x612xf32> to vector<8x612xbf16>
    %c0_5 = arith.constant 0 : index
    %c0_6 = arith.constant 0 : index
    %10 = vector.load %arg2[%c0_5, %c0_6] : memref<612x12xbf16, #tpu.memory_space<vmem>>, vector<612x12xbf16>
    %cst_7 = arith.constant dense<0.000000e+00> : vector<8x12xf32>
    %11 = tpu.matmul %9, %10, %cst_7 {dimension_numbers = #tpu.dot_dimension_numbers<[1], [0], [0], [1], [0, 0, 1, 1], [], []>} : vector<8x612xbf16>, vector<612x12xbf16>, vector<8x12xf32> -> vector<8x12xf32>
    %c0_8 = arith.constant 0 : index
    %c0_9 = arith.constant 0 : index
    %12 = vector.load %arg5[%c0_8, %c0_9] : memref<8x12xf32, #tpu.memory_space<vmem>>, vector<8x12xf32>
    tpu.vector_store %arg5[%c0_8, %c0_9], %11 {strides = array<i32>} : memref<8x12xf32, #tpu.memory_space<vmem>>, vector<8x12xf32>,
    return
  }
  func.func @transform_0(%arg0: i32) -> (i32, i32) {
    %c0_i32 = arith.constant 0 : i32
    %c0_i32_0 = arith.constant 0 : i32
    return %arg0, %c0_i32 : i32, i32
  }
  func.func @transform_1(%arg0: i32) -> (i32, i32) {
    %c0_i32 = arith.constant 0 : i32
    %c0_i32_0 = arith.constant 0 : i32
    %c0_i32_1 = arith.constant 0 : i32
    return %c0_i32, %c0_i32_0 : i32, i32
  }
  func.func @transform_2(%arg0: i32) -> (i32, i32) {
    %c0_i32 = arith.constant 0 : i32
    %c0_i32_0 = arith.constant 0 : i32
    %c0_i32_1 = arith.constant 0 : i32
    return %c0_i32, %c0_i32_0 : i32, i32
  }
  func.func @transform_3(%arg0: i32) -> (i32, i32) {
    %c0_i32 = arith.constant 0 : i32
    %c0_i32_0 = arith.constant 0 : i32
    %c0_i32_1 = arith.constant 0 : i32
    return %c0_i32, %c0_i32_0 : i32, i32
  }
  func.func @transform_4(%arg0: i32) -> (i32, i32) {
    %c0_i32 = arith.constant 0 : i32
    %c0_i32_0 = arith.constant 0 : i32
    return %arg0, %c0_i32 : i32, i32
  }
}

module attributes {stable_mosaic.version = 11 : i64} {
  func.func @_fused_matmul_kernel(%arg0: i32, %arg1: memref<8x320xf32, #tpu.memory_space<vmem>>, %arg2: memref<320x48xbf16, #tpu.memory_space<vmem>>, %arg3: memref<1x320xf32, #tpu.memory_space<vmem>>, %arg4: memref<1x320xf32, #tpu.memory_space<vmem>>, %arg5: memref<8x48xf32, #tpu.memory_space<vmem>>) attributes {dimension_semantics = [#tpu.dimension_semantics<parallel>], iteration_bounds = array<i64: 1>, scalar_prefetch = 0 : i64, scratch_operands = 0 : i64, tpu.core_type = #tpu.core_type<tc>, window_params = [{transform_indices = @transform_0, window_bounds = array<i64: 8, 320>}, {pipeline_mode = #tpu.pipeline_mode<synchronous>, transform_indices = @transform_1, window_bounds = array<i64: 320, 48>}, {pipeline_mode = #tpu.pipeline_mode<synchronous>, transform_indices = @transform_2, window_bounds = array<i64: 1, 320>}, {pipeline_mode = #tpu.pipeline_mode<synchronous>, transform_indices = @transform_3, window_bounds = array<i64: 1, 320>}, {transform_indices = @transform_4, window_bounds = array<i64: 8, 48>}]} {
    %c0 = arith.constant 0 : index
    %c0_0 = arith.constant 0 : index
    %0 = vector.load %arg1[%c0, %c0_0] : memref<8x320xf32, #tpu.memory_space<vmem>>, vector<8x320xf32>
    %c0_1 = arith.constant 0 : index
    %c0_2 = arith.constant 0 : index
    %1 = vector.load %arg3[%c0_1, %c0_2] : memref<1x320xf32, #tpu.memory_space<vmem>>, vector<1x320xf32>
    %2 = vector.broadcast %1 : vector<1x320xf32> to vector<8x320xf32>
    %3 = arith.mulf %0, %2 : vector<8x320xf32>
    %c0_3 = arith.constant 0 : index
    %c0_4 = arith.constant 0 : index
    %4 = vector.load %arg4[%c0_3, %c0_4] : memref<1x320xf32, #tpu.memory_space<vmem>>, vector<1x320xf32>
    %5 = vector.broadcast %4 : vector<1x320xf32> to vector<8x320xf32>
    %6 = arith.addf %3, %5 : vector<8x320xf32>
    %cst = arith.constant 0.000000e+00 : f32
    %7 = vector.broadcast %cst : f32 to vector<8x320xf32>
    %8 = arith.maximumf %6, %7 : vector<8x320xf32>
    %9 = arith.truncf %8 : vector<8x320xf32> to vector<8x320xbf16>
    %c0_5 = arith.constant 0 : index
    %c0_6 = arith.constant 0 : index
    %10 = vector.load %arg2[%c0_5, %c0_6] : memref<320x48xbf16, #tpu.memory_space<vmem>>, vector<320x48xbf16>
    %cst_7 = arith.constant dense<0.000000e+00> : vector<8x48xf32>
    %11 = tpu.matmul %9, %10, %cst_7 {dimension_numbers = #tpu.dot_dimension_numbers<[1], [0], [0], [1], [0, 0, 1, 1], [], []>} : vector<8x320xbf16>, vector<320x48xbf16>, vector<8x48xf32> -> vector<8x48xf32>
    %c0_8 = arith.constant 0 : index
    %c0_9 = arith.constant 0 : index
    %12 = vector.load %arg5[%c0_8, %c0_9] : memref<8x48xf32, #tpu.memory_space<vmem>>, vector<8x48xf32>
    tpu.vector_store %arg5[%c0_8, %c0_9], %11 {strides = array<i32>} : memref<8x48xf32, #tpu.memory_space<vmem>>, vector<8x48xf32>,
    return
  }
  func.func @transform_0(%arg0: i32) -> (i32, i32) {
    %c0_i32 = arith.constant 0 : i32
    %c0_i32_0 = arith.constant 0 : i32
    return %arg0, %c0_i32 : i32, i32
  }
  func.func @transform_1(%arg0: i32) -> (i32, i32) {
    %c0_i32 = arith.constant 0 : i32
    %c0_i32_0 = arith.constant 0 : i32
    %c0_i32_1 = arith.constant 0 : i32
    return %c0_i32, %c0_i32_0 : i32, i32
  }
  func.func @transform_2(%arg0: i32) -> (i32, i32) {
    %c0_i32 = arith.constant 0 : i32
    %c0_i32_0 = arith.constant 0 : i32
    %c0_i32_1 = arith.constant 0 : i32
    return %c0_i32, %c0_i32_0 : i32, i32
  }
  func.func @transform_3(%arg0: i32) -> (i32, i32) {
    %c0_i32 = arith.constant 0 : i32
    %c0_i32_0 = arith.constant 0 : i32
    %c0_i32_1 = arith.constant 0 : i32
    return %c0_i32, %c0_i32_0 : i32, i32
  }
  func.func @transform_4(%arg0: i32) -> (i32, i32) {
    %c0_i32 = arith.constant 0 : i32
    %c0_i32_0 = arith.constant 0 : i32
    return %arg0, %c0_i32 : i32, i32
  }
}

module attributes {stable_mosaic.version = 11 : i64} {
  func.func @_fused_matmul_kernel(%arg0: i32, %arg1: memref<32x80xf32, #tpu.memory_space<vmem>>, %arg2: memref<80x40xbf16, #tpu.memory_space<vmem>>, %arg3: memref<1x80xf32, #tpu.memory_space<vmem>>, %arg4: memref<1x80xf32, #tpu.memory_space<vmem>>, %arg5: memref<32x40xf32, #tpu.memory_space<vmem>>) attributes {dimension_semantics = [#tpu.dimension_semantics<parallel>], iteration_bounds = array<i64: 1>, scalar_prefetch = 0 : i64, scratch_operands = 0 : i64, tpu.core_type = #tpu.core_type<tc>, window_params = [{transform_indices = @transform_0, window_bounds = array<i64: 32, 80>}, {pipeline_mode = #tpu.pipeline_mode<synchronous>, transform_indices = @transform_1, window_bounds = array<i64: 80, 40>}, {pipeline_mode = #tpu.pipeline_mode<synchronous>, transform_indices = @transform_2, window_bounds = array<i64: 1, 80>}, {pipeline_mode = #tpu.pipeline_mode<synchronous>, transform_indices = @transform_3, window_bounds = array<i64: 1, 80>}, {transform_indices = @transform_4, window_bounds = array<i64: 32, 40>}]} {
    %c0 = arith.constant 0 : index
    %c0_0 = arith.constant 0 : index
    %0 = vector.load %arg1[%c0, %c0_0] : memref<32x80xf32, #tpu.memory_space<vmem>>, vector<32x80xf32>
    %c0_1 = arith.constant 0 : index
    %c0_2 = arith.constant 0 : index
    %1 = vector.load %arg3[%c0_1, %c0_2] : memref<1x80xf32, #tpu.memory_space<vmem>>, vector<1x80xf32>
    %2 = vector.broadcast %1 : vector<1x80xf32> to vector<32x80xf32>
    %3 = arith.mulf %0, %2 : vector<32x80xf32>
    %c0_3 = arith.constant 0 : index
    %c0_4 = arith.constant 0 : index
    %4 = vector.load %arg4[%c0_3, %c0_4] : memref<1x80xf32, #tpu.memory_space<vmem>>, vector<1x80xf32>
    %5 = vector.broadcast %4 : vector<1x80xf32> to vector<32x80xf32>
    %6 = arith.addf %3, %5 : vector<32x80xf32>
    %cst = arith.constant 0.000000e+00 : f32
    %7 = vector.broadcast %cst : f32 to vector<32x80xf32>
    %8 = arith.maximumf %6, %7 : vector<32x80xf32>
    %9 = arith.truncf %8 : vector<32x80xf32> to vector<32x80xbf16>
    %c0_5 = arith.constant 0 : index
    %c0_6 = arith.constant 0 : index
    %10 = vector.load %arg2[%c0_5, %c0_6] : memref<80x40xbf16, #tpu.memory_space<vmem>>, vector<80x40xbf16>
    %cst_7 = arith.constant dense<0.000000e+00> : vector<32x40xf32>
    %11 = tpu.matmul %9, %10, %cst_7 {dimension_numbers = #tpu.dot_dimension_numbers<[1], [0], [0], [1], [0, 0, 1, 1], [], []>} : vector<32x80xbf16>, vector<80x40xbf16>, vector<32x40xf32> -> vector<32x40xf32>
    %c0_8 = arith.constant 0 : index
    %c0_9 = arith.constant 0 : index
    %12 = vector.load %arg5[%c0_8, %c0_9] : memref<32x40xf32, #tpu.memory_space<vmem>>, vector<32x40xf32>
    tpu.vector_store %arg5[%c0_8, %c0_9], %11 {strides = array<i32>} : memref<32x40xf32, #tpu.memory_space<vmem>>, vector<32x40xf32>,
    return
  }
  func.func @transform_0(%arg0: i32) -> (i32, i32) {
    %c0_i32 = arith.constant 0 : i32
    %c0_i32_0 = arith.constant 0 : i32
    return %arg0, %c0_i32 : i32, i32
  }
  func.func @transform_1(%arg0: i32) -> (i32, i32) {
    %c0_i32 = arith.constant 0 : i32
    %c0_i32_0 = arith.constant 0 : i32
    %c0_i32_1 = arith.constant 0 : i32
    return %c0_i32, %c0_i32_0 : i32, i32
  }
  func.func @transform_2(%arg0: i32) -> (i32, i32) {
    %c0_i32 = arith.constant 0 : i32
    %c0_i32_0 = arith.constant 0 : i32
    %c0_i32_1 = arith.constant 0 : i32
    return %c0_i32, %c0_i32_0 : i32, i32
  }
  func.func @transform_3(%arg0: i32) -> (i32, i32) {
    %c0_i32 = arith.constant 0 : i32
    %c0_i32_0 = arith.constant 0 : i32
    %c0_i32_1 = arith.constant 0 : i32
    return %c0_i32, %c0_i32_0 : i32, i32
  }
  func.func @transform_4(%arg0: i32) -> (i32, i32) {
    %c0_i32 = arith.constant 0 : i32
    %c0_i32_0 = arith.constant 0 : i32
    return %arg0, %c0_i32 : i32, i32
  }
}

module attributes {stable_mosaic.version = 11 : i64} {
  func.func @_fused_matmul_kernel(%arg0: i32, %arg1: memref<8x80xf32, #tpu.memory_space<vmem>>, %arg2: memref<80x40xbf16, #tpu.memory_space<vmem>>, %arg3: memref<1x80xf32, #tpu.memory_space<vmem>>, %arg4: memref<1x80xf32, #tpu.memory_space<vmem>>, %arg5: memref<8x40xf32, #tpu.memory_space<vmem>>) attributes {dimension_semantics = [#tpu.dimension_semantics<parallel>], iteration_bounds = array<i64: 1>, scalar_prefetch = 0 : i64, scratch_operands = 0 : i64, tpu.core_type = #tpu.core_type<tc>, window_params = [{transform_indices = @transform_0, window_bounds = array<i64: 8, 80>}, {pipeline_mode = #tpu.pipeline_mode<synchronous>, transform_indices = @transform_1, window_bounds = array<i64: 80, 40>}, {pipeline_mode = #tpu.pipeline_mode<synchronous>, transform_indices = @transform_2, window_bounds = array<i64: 1, 80>}, {pipeline_mode = #tpu.pipeline_mode<synchronous>, transform_indices = @transform_3, window_bounds = array<i64: 1, 80>}, {transform_indices = @transform_4, window_bounds = array<i64: 8, 40>}]} {
    %c0 = arith.constant 0 : index
    %c0_0 = arith.constant 0 : index
    %0 = vector.load %arg1[%c0, %c0_0] : memref<8x80xf32, #tpu.memory_space<vmem>>, vector<8x80xf32>
    %c0_1 = arith.constant 0 : index
    %c0_2 = arith.constant 0 : index
    %1 = vector.load %arg3[%c0_1, %c0_2] : memref<1x80xf32, #tpu.memory_space<vmem>>, vector<1x80xf32>
    %2 = vector.broadcast %1 : vector<1x80xf32> to vector<8x80xf32>
    %3 = arith.mulf %0, %2 : vector<8x80xf32>
    %c0_3 = arith.constant 0 : index
    %c0_4 = arith.constant 0 : index
    %4 = vector.load %arg4[%c0_3, %c0_4] : memref<1x80xf32, #tpu.memory_space<vmem>>, vector<1x80xf32>
    %5 = vector.broadcast %4 : vector<1x80xf32> to vector<8x80xf32>
    %6 = arith.addf %3, %5 : vector<8x80xf32>
    %cst = arith.constant 0.000000e+00 : f32
    %7 = vector.broadcast %cst : f32 to vector<8x80xf32>
    %8 = arith.maximumf %6, %7 : vector<8x80xf32>
    %9 = arith.truncf %8 : vector<8x80xf32> to vector<8x80xbf16>
    %c0_5 = arith.constant 0 : index
    %c0_6 = arith.constant 0 : index
    %10 = vector.load %arg2[%c0_5, %c0_6] : memref<80x40xbf16, #tpu.memory_space<vmem>>, vector<80x40xbf16>
    %cst_7 = arith.constant dense<0.000000e+00> : vector<8x40xf32>
    %11 = tpu.matmul %9, %10, %cst_7 {dimension_numbers = #tpu.dot_dimension_numbers<[1], [0], [0], [1], [0, 0, 1, 1], [], []>} : vector<8x80xbf16>, vector<80x40xbf16>, vector<8x40xf32> -> vector<8x40xf32>
    %c0_8 = arith.constant 0 : index
    %c0_9 = arith.constant 0 : index
    %12 = vector.load %arg5[%c0_8, %c0_9] : memref<8x40xf32, #tpu.memory_space<vmem>>, vector<8x40xf32>
    tpu.vector_store %arg5[%c0_8, %c0_9], %11 {strides = array<i32>} : memref<8x40xf32, #tpu.memory_space<vmem>>, vector<8x40xf32>,
    return
  }
  func.func @transform_0(%arg0: i32) -> (i32, i32) {
    %c0_i32 = arith.constant 0 : i32
    %c0_i32_0 = arith.constant 0 : i32
    return %arg0, %c0_i32 : i32, i32
  }
  func.func @transform_1(%arg0: i32) -> (i32, i32) {
    %c0_i32 = arith.constant 0 : i32
    %c0_i32_0 = arith.constant 0 : i32
    %c0_i32_1 = arith.constant 0 : i32
    return %c0_i32, %c0_i32_0 : i32, i32
  }
  func.func @transform_2(%arg0: i32) -> (i32, i32) {
    %c0_i32 = arith.constant 0 : i32
    %c0_i32_0 = arith.constant 0 : i32
    %c0_i32_1 = arith.constant 0 : i32
    return %c0_i32, %c0_i32_0 : i32, i32
  }
  func.func @transform_3(%arg0: i32) -> (i32, i32) {
    %c0_i32 = arith.constant 0 : i32
    %c0_i32_0 = arith.constant 0 : i32
    %c0_i32_1 = arith.constant 0 : i32
    return %c0_i32, %c0_i32_0 : i32, i32
  }
  func.func @transform_4(%arg0: i32) -> (i32, i32) {
    %c0_i32 = arith.constant 0 : i32
    %c0_i32_0 = arith.constant 0 : i32
    return %arg0, %c0_i32 : i32, i32
  }
}

module attributes {stable_mosaic.version = 11 : i64} {
  func.func @_fused_matmul_kernel(%arg0: i32, %arg1: memref<8x360xf32, #tpu.memory_space<vmem>>, %arg2: memref<360x12xbf16, #tpu.memory_space<vmem>>, %arg3: memref<1x360xf32, #tpu.memory_space<vmem>>, %arg4: memref<1x360xf32, #tpu.memory_space<vmem>>, %arg5: memref<8x12xf32, #tpu.memory_space<vmem>>) attributes {dimension_semantics = [#tpu.dimension_semantics<parallel>], iteration_bounds = array<i64: 1>, scalar_prefetch = 0 : i64, scratch_operands = 0 : i64, tpu.core_type = #tpu.core_type<tc>, window_params = [{transform_indices = @transform_0, window_bounds = array<i64: 8, 360>}, {pipeline_mode = #tpu.pipeline_mode<synchronous>, transform_indices = @transform_1, window_bounds = array<i64: 360, 12>}, {pipeline_mode = #tpu.pipeline_mode<synchronous>, transform_indices = @transform_2, window_bounds = array<i64: 1, 360>}, {pipeline_mode = #tpu.pipeline_mode<synchronous>, transform_indices = @transform_3, window_bounds = array<i64: 1, 360>}, {transform_indices = @transform_4, window_bounds = array<i64: 8, 12>}]} {
    %c0 = arith.constant 0 : index
    %c0_0 = arith.constant 0 : index
    %0 = vector.load %arg1[%c0, %c0_0] : memref<8x360xf32, #tpu.memory_space<vmem>>, vector<8x360xf32>
    %c0_1 = arith.constant 0 : index
    %c0_2 = arith.constant 0 : index
    %1 = vector.load %arg3[%c0_1, %c0_2] : memref<1x360xf32, #tpu.memory_space<vmem>>, vector<1x360xf32>
    %2 = vector.broadcast %1 : vector<1x360xf32> to vector<8x360xf32>
    %3 = arith.mulf %0, %2 : vector<8x360xf32>
    %c0_3 = arith.constant 0 : index
    %c0_4 = arith.constant 0 : index
    %4 = vector.load %arg4[%c0_3, %c0_4] : memref<1x360xf32, #tpu.memory_space<vmem>>, vector<1x360xf32>
    %5 = vector.broadcast %4 : vector<1x360xf32> to vector<8x360xf32>
    %6 = arith.addf %3, %5 : vector<8x360xf32>
    %cst = arith.constant 0.000000e+00 : f32
    %7 = vector.broadcast %cst : f32 to vector<8x360xf32>
    %8 = arith.maximumf %6, %7 : vector<8x360xf32>
    %9 = arith.truncf %8 : vector<8x360xf32> to vector<8x360xbf16>
    %c0_5 = arith.constant 0 : index
    %c0_6 = arith.constant 0 : index
    %10 = vector.load %arg2[%c0_5, %c0_6] : memref<360x12xbf16, #tpu.memory_space<vmem>>, vector<360x12xbf16>
    %cst_7 = arith.constant dense<0.000000e+00> : vector<8x12xf32>
    %11 = tpu.matmul %9, %10, %cst_7 {dimension_numbers = #tpu.dot_dimension_numbers<[1], [0], [0], [1], [0, 0, 1, 1], [], []>} : vector<8x360xbf16>, vector<360x12xbf16>, vector<8x12xf32> -> vector<8x12xf32>
    %c0_8 = arith.constant 0 : index
    %c0_9 = arith.constant 0 : index
    %12 = vector.load %arg5[%c0_8, %c0_9] : memref<8x12xf32, #tpu.memory_space<vmem>>, vector<8x12xf32>
    tpu.vector_store %arg5[%c0_8, %c0_9], %11 {strides = array<i32>} : memref<8x12xf32, #tpu.memory_space<vmem>>, vector<8x12xf32>,
    return
  }
  func.func @transform_0(%arg0: i32) -> (i32, i32) {
    %c0_i32 = arith.constant 0 : i32
    %c0_i32_0 = arith.constant 0 : i32
    return %arg0, %c0_i32 : i32, i32
  }
  func.func @transform_1(%arg0: i32) -> (i32, i32) {
    %c0_i32 = arith.constant 0 : i32
    %c0_i32_0 = arith.constant 0 : i32
    %c0_i32_1 = arith.constant 0 : i32
    return %c0_i32, %c0_i32_0 : i32, i32
  }
  func.func @transform_2(%arg0: i32) -> (i32, i32) {
    %c0_i32 = arith.constant 0 : i32
    %c0_i32_0 = arith.constant 0 : i32
    %c0_i32_1 = arith.constant 0 : i32
    return %c0_i32, %c0_i32_0 : i32, i32
  }
  func.func @transform_3(%arg0: i32) -> (i32, i32) {
    %c0_i32 = arith.constant 0 : i32
    %c0_i32_0 = arith.constant 0 : i32
    %c0_i32_1 = arith.constant 0 : i32
    return %c0_i32, %c0_i32_0 : i32, i32
  }
  func.func @transform_4(%arg0: i32) -> (i32, i32) {
    %c0_i32 = arith.constant 0 : i32
    %c0_i32_0 = arith.constant 0 : i32
    return %arg0, %c0_i32 : i32, i32
  }
}

module attributes {stable_mosaic.version = 11 : i64} {
  func.func @_fused_matmul_kernel(%arg0: i32, %arg1: memref<8x208xf32, #tpu.memory_space<vmem>>, %arg2: memref<208x48xbf16, #tpu.memory_space<vmem>>, %arg3: memref<1x208xf32, #tpu.memory_space<vmem>>, %arg4: memref<1x208xf32, #tpu.memory_space<vmem>>, %arg5: memref<8x48xf32, #tpu.memory_space<vmem>>) attributes {dimension_semantics = [#tpu.dimension_semantics<parallel>], iteration_bounds = array<i64: 1>, scalar_prefetch = 0 : i64, scratch_operands = 0 : i64, tpu.core_type = #tpu.core_type<tc>, window_params = [{transform_indices = @transform_0, window_bounds = array<i64: 8, 208>}, {pipeline_mode = #tpu.pipeline_mode<synchronous>, transform_indices = @transform_1, window_bounds = array<i64: 208, 48>}, {pipeline_mode = #tpu.pipeline_mode<synchronous>, transform_indices = @transform_2, window_bounds = array<i64: 1, 208>}, {pipeline_mode = #tpu.pipeline_mode<synchronous>, transform_indices = @transform_3, window_bounds = array<i64: 1, 208>}, {transform_indices = @transform_4, window_bounds = array<i64: 8, 48>}]} {
    %c0 = arith.constant 0 : index
    %c0_0 = arith.constant 0 : index
    %0 = vector.load %arg1[%c0, %c0_0] : memref<8x208xf32, #tpu.memory_space<vmem>>, vector<8x208xf32>
    %c0_1 = arith.constant 0 : index
    %c0_2 = arith.constant 0 : index
    %1 = vector.load %arg3[%c0_1, %c0_2] : memref<1x208xf32, #tpu.memory_space<vmem>>, vector<1x208xf32>
    %2 = vector.broadcast %1 : vector<1x208xf32> to vector<8x208xf32>
    %3 = arith.mulf %0, %2 : vector<8x208xf32>
    %c0_3 = arith.constant 0 : index
    %c0_4 = arith.constant 0 : index
    %4 = vector.load %arg4[%c0_3, %c0_4] : memref<1x208xf32, #tpu.memory_space<vmem>>, vector<1x208xf32>
    %5 = vector.broadcast %4 : vector<1x208xf32> to vector<8x208xf32>
    %6 = arith.addf %3, %5 : vector<8x208xf32>
    %cst = arith.constant 0.000000e+00 : f32
    %7 = vector.broadcast %cst : f32 to vector<8x208xf32>
    %8 = arith.maximumf %6, %7 : vector<8x208xf32>
    %9 = arith.truncf %8 : vector<8x208xf32> to vector<8x208xbf16>
    %c0_5 = arith.constant 0 : index
    %c0_6 = arith.constant 0 : index
    %10 = vector.load %arg2[%c0_5, %c0_6] : memref<208x48xbf16, #tpu.memory_space<vmem>>, vector<208x48xbf16>
    %cst_7 = arith.constant dense<0.000000e+00> : vector<8x48xf32>
    %11 = tpu.matmul %9, %10, %cst_7 {dimension_numbers = #tpu.dot_dimension_numbers<[1], [0], [0], [1], [0, 0, 1, 1], [], []>} : vector<8x208xbf16>, vector<208x48xbf16>, vector<8x48xf32> -> vector<8x48xf32>
    %c0_8 = arith.constant 0 : index
    %c0_9 = arith.constant 0 : index
    %12 = vector.load %arg5[%c0_8, %c0_9] : memref<8x48xf32, #tpu.memory_space<vmem>>, vector<8x48xf32>
    tpu.vector_store %arg5[%c0_8, %c0_9], %11 {strides = array<i32>} : memref<8x48xf32, #tpu.memory_space<vmem>>, vector<8x48xf32>,
    return
  }
  func.func @transform_0(%arg0: i32) -> (i32, i32) {
    %c0_i32 = arith.constant 0 : i32
    %c0_i32_0 = arith.constant 0 : i32
    return %arg0, %c0_i32 : i32, i32
  }
  func.func @transform_1(%arg0: i32) -> (i32, i32) {
    %c0_i32 = arith.constant 0 : i32
    %c0_i32_0 = arith.constant 0 : i32
    %c0_i32_1 = arith.constant 0 : i32
    return %c0_i32, %c0_i32_0 : i32, i32
  }
  func.func @transform_2(%arg0: i32) -> (i32, i32) {
    %c0_i32 = arith.constant 0 : i32
    %c0_i32_0 = arith.constant 0 : i32
    %c0_i32_1 = arith.constant 0 : i32
    return %c0_i32, %c0_i32_0 : i32, i32
  }
  func.func @transform_3(%arg0: i32) -> (i32, i32) {
    %c0_i32 = arith.constant 0 : i32
    %c0_i32_0 = arith.constant 0 : i32
    %c0_i32_1 = arith.constant 0 : i32
    return %c0_i32, %c0_i32_0 : i32, i32
  }
  func.func @transform_4(%arg0: i32) -> (i32, i32) {
    %c0_i32 = arith.constant 0 : i32
    %c0_i32_0 = arith.constant 0 : i32
    return %arg0, %c0_i32 : i32, i32
  }
}

module attributes {stable_mosaic.version = 11 : i64} {
  func.func @_fused_matmul_kernel(%arg0: i32, %arg1: memref<8x468xf32, #tpu.memory_space<vmem>>, %arg2: memref<468x12xbf16, #tpu.memory_space<vmem>>, %arg3: memref<1x468xf32, #tpu.memory_space<vmem>>, %arg4: memref<1x468xf32, #tpu.memory_space<vmem>>, %arg5: memref<8x12xf32, #tpu.memory_space<vmem>>) attributes {dimension_semantics = [#tpu.dimension_semantics<parallel>], iteration_bounds = array<i64: 1>, scalar_prefetch = 0 : i64, scratch_operands = 0 : i64, tpu.core_type = #tpu.core_type<tc>, window_params = [{transform_indices = @transform_0, window_bounds = array<i64: 8, 468>}, {pipeline_mode = #tpu.pipeline_mode<synchronous>, transform_indices = @transform_1, window_bounds = array<i64: 468, 12>}, {pipeline_mode = #tpu.pipeline_mode<synchronous>, transform_indices = @transform_2, window_bounds = array<i64: 1, 468>}, {pipeline_mode = #tpu.pipeline_mode<synchronous>, transform_indices = @transform_3, window_bounds = array<i64: 1, 468>}, {transform_indices = @transform_4, window_bounds = array<i64: 8, 12>}]} {
    %c0 = arith.constant 0 : index
    %c0_0 = arith.constant 0 : index
    %0 = vector.load %arg1[%c0, %c0_0] : memref<8x468xf32, #tpu.memory_space<vmem>>, vector<8x468xf32>
    %c0_1 = arith.constant 0 : index
    %c0_2 = arith.constant 0 : index
    %1 = vector.load %arg3[%c0_1, %c0_2] : memref<1x468xf32, #tpu.memory_space<vmem>>, vector<1x468xf32>
    %2 = vector.broadcast %1 : vector<1x468xf32> to vector<8x468xf32>
    %3 = arith.mulf %0, %2 : vector<8x468xf32>
    %c0_3 = arith.constant 0 : index
    %c0_4 = arith.constant 0 : index
    %4 = vector.load %arg4[%c0_3, %c0_4] : memref<1x468xf32, #tpu.memory_space<vmem>>, vector<1x468xf32>
    %5 = vector.broadcast %4 : vector<1x468xf32> to vector<8x468xf32>
    %6 = arith.addf %3, %5 : vector<8x468xf32>
    %cst = arith.constant 0.000000e+00 : f32
    %7 = vector.broadcast %cst : f32 to vector<8x468xf32>
    %8 = arith.maximumf %6, %7 : vector<8x468xf32>
    %9 = arith.truncf %8 : vector<8x468xf32> to vector<8x468xbf16>
    %c0_5 = arith.constant 0 : index
    %c0_6 = arith.constant 0 : index
    %10 = vector.load %arg2[%c0_5, %c0_6] : memref<468x12xbf16, #tpu.memory_space<vmem>>, vector<468x12xbf16>
    %cst_7 = arith.constant dense<0.000000e+00> : vector<8x12xf32>
    %11 = tpu.matmul %9, %10, %cst_7 {dimension_numbers = #tpu.dot_dimension_numbers<[1], [0], [0], [1], [0, 0, 1, 1], [], []>} : vector<8x468xbf16>, vector<468x12xbf16>, vector<8x12xf32> -> vector<8x12xf32>
    %c0_8 = arith.constant 0 : index
    %c0_9 = arith.constant 0 : index
    %12 = vector.load %arg5[%c0_8, %c0_9] : memref<8x12xf32, #tpu.memory_space<vmem>>, vector<8x12xf32>
    tpu.vector_store %arg5[%c0_8, %c0_9], %11 {strides = array<i32>} : memref<8x12xf32, #tpu.memory_space<vmem>>, vector<8x12xf32>,
    return
  }
  func.func @transform_0(%arg0: i32) -> (i32, i32) {
    %c0_i32 = arith.constant 0 : i32
    %c0_i32_0 = arith.constant 0 : i32
    return %arg0, %c0_i32 : i32, i32
  }
  func.func @transform_1(%arg0: i32) -> (i32, i32) {
    %c0_i32 = arith.constant 0 : i32
    %c0_i32_0 = arith.constant 0 : i32
    %c0_i32_1 = arith.constant 0 : i32
    return %c0_i32, %c0_i32_0 : i32, i32
  }
  func.func @transform_2(%arg0: i32) -> (i32, i32) {
    %c0_i32 = arith.constant 0 : i32
    %c0_i32_0 = arith.constant 0 : i32
    %c0_i32_1 = arith.constant 0 : i32
    return %c0_i32, %c0_i32_0 : i32, i32
  }
  func.func @transform_3(%arg0: i32) -> (i32, i32) {
    %c0_i32 = arith.constant 0 : i32
    %c0_i32_0 = arith.constant 0 : i32
    %c0_i32_1 = arith.constant 0 : i32
    return %c0_i32, %c0_i32_0 : i32, i32
  }
  func.func @transform_4(%arg0: i32) -> (i32, i32) {
    %c0_i32 = arith.constant 0 : i32
    %c0_i32_0 = arith.constant 0 : i32
    return %arg0, %c0_i32 : i32, i32
  }
}

module attributes {stable_mosaic.version = 11 : i64} {
  func.func @_fused_matmul_kernel(%arg0: i32, %arg1: memref<8x256xf32, #tpu.memory_space<vmem>>, %arg2: memref<256x48xbf16, #tpu.memory_space<vmem>>, %arg3: memref<1x256xf32, #tpu.memory_space<vmem>>, %arg4: memref<1x256xf32, #tpu.memory_space<vmem>>, %arg5: memref<8x48xf32, #tpu.memory_space<vmem>>) attributes {dimension_semantics = [#tpu.dimension_semantics<parallel>], iteration_bounds = array<i64: 1>, scalar_prefetch = 0 : i64, scratch_operands = 0 : i64, tpu.core_type = #tpu.core_type<tc>, window_params = [{transform_indices = @transform_0, window_bounds = array<i64: 8, 256>}, {pipeline_mode = #tpu.pipeline_mode<synchronous>, transform_indices = @transform_1, window_bounds = array<i64: 256, 48>}, {pipeline_mode = #tpu.pipeline_mode<synchronous>, transform_indices = @transform_2, window_bounds = array<i64: 1, 256>}, {pipeline_mode = #tpu.pipeline_mode<synchronous>, transform_indices = @transform_3, window_bounds = array<i64: 1, 256>}, {transform_indices = @transform_4, window_bounds = array<i64: 8, 48>}]} {
    %c0 = arith.constant 0 : index
    %c0_0 = arith.constant 0 : index
    %0 = vector.load %arg1[%c0, %c0_0] : memref<8x256xf32, #tpu.memory_space<vmem>>, vector<8x256xf32>
    %c0_1 = arith.constant 0 : index
    %c0_2 = arith.constant 0 : index
    %1 = vector.load %arg3[%c0_1, %c0_2] : memref<1x256xf32, #tpu.memory_space<vmem>>, vector<1x256xf32>
    %2 = vector.broadcast %1 : vector<1x256xf32> to vector<8x256xf32>
    %3 = arith.mulf %0, %2 : vector<8x256xf32>
    %c0_3 = arith.constant 0 : index
    %c0_4 = arith.constant 0 : index
    %4 = vector.load %arg4[%c0_3, %c0_4] : memref<1x256xf32, #tpu.memory_space<vmem>>, vector<1x256xf32>
    %5 = vector.broadcast %4 : vector<1x256xf32> to vector<8x256xf32>
    %6 = arith.addf %3, %5 : vector<8x256xf32>
    %cst = arith.constant 0.000000e+00 : f32
    %7 = vector.broadcast %cst : f32 to vector<8x256xf32>
    %8 = arith.maximumf %6, %7 : vector<8x256xf32>
    %9 = arith.truncf %8 : vector<8x256xf32> to vector<8x256xbf16>
    %c0_5 = arith.constant 0 : index
    %c0_6 = arith.constant 0 : index
    %10 = vector.load %arg2[%c0_5, %c0_6] : memref<256x48xbf16, #tpu.memory_space<vmem>>, vector<256x48xbf16>
    %cst_7 = arith.constant dense<0.000000e+00> : vector<8x48xf32>
    %11 = tpu.matmul %9, %10, %cst_7 {dimension_numbers = #tpu.dot_dimension_numbers<[1], [0], [0], [1], [0, 0, 1, 1], [], []>} : vector<8x256xbf16>, vector<256x48xbf16>, vector<8x48xf32> -> vector<8x48xf32>
    %c0_8 = arith.constant 0 : index
    %c0_9 = arith.constant 0 : index
    %12 = vector.load %arg5[%c0_8, %c0_9] : memref<8x48xf32, #tpu.memory_space<vmem>>, vector<8x48xf32>
    tpu.vector_store %arg5[%c0_8, %c0_9], %11 {strides = array<i32>} : memref<8x48xf32, #tpu.memory_space<vmem>>, vector<8x48xf32>,
    return
  }
  func.func @transform_0(%arg0: i32) -> (i32, i32) {
    %c0_i32 = arith.constant 0 : i32
    %c0_i32_0 = arith.constant 0 : i32
    return %arg0, %c0_i32 : i32, i32
  }
  func.func @transform_1(%arg0: i32) -> (i32, i32) {
    %c0_i32 = arith.constant 0 : i32
    %c0_i32_0 = arith.constant 0 : i32
    %c0_i32_1 = arith.constant 0 : i32
    return %c0_i32, %c0_i32_0 : i32, i32
  }
  func.func @transform_2(%arg0: i32) -> (i32, i32) {
    %c0_i32 = arith.constant 0 : i32
    %c0_i32_0 = arith.constant 0 : i32
    %c0_i32_1 = arith.constant 0 : i32
    return %c0_i32, %c0_i32_0 : i32, i32
  }
  func.func @transform_3(%arg0: i32) -> (i32, i32) {
    %c0_i32 = arith.constant 0 : i32
    %c0_i32_0 = arith.constant 0 : i32
    %c0_i32_1 = arith.constant 0 : i32
    return %c0_i32, %c0_i32_0 : i32, i32
  }
  func.func @transform_4(%arg0: i32) -> (i32, i32) {
    %c0_i32 = arith.constant 0 : i32
    %c0_i32_0 = arith.constant 0 : i32
    return %arg0, %c0_i32 : i32, i32
  }
}

module attributes {stable_mosaic.version = 11 : i64} {
  func.func @_fused_matmul_kernel(%arg0: i32, %arg1: memref<8x576xf32, #tpu.memory_space<vmem>>, %arg2: memref<576x12xbf16, #tpu.memory_space<vmem>>, %arg3: memref<1x576xf32, #tpu.memory_space<vmem>>, %arg4: memref<1x576xf32, #tpu.memory_space<vmem>>, %arg5: memref<8x12xf32, #tpu.memory_space<vmem>>) attributes {dimension_semantics = [#tpu.dimension_semantics<parallel>], iteration_bounds = array<i64: 1>, scalar_prefetch = 0 : i64, scratch_operands = 0 : i64, tpu.core_type = #tpu.core_type<tc>, window_params = [{transform_indices = @transform_0, window_bounds = array<i64: 8, 576>}, {pipeline_mode = #tpu.pipeline_mode<synchronous>, transform_indices = @transform_1, window_bounds = array<i64: 576, 12>}, {pipeline_mode = #tpu.pipeline_mode<synchronous>, transform_indices = @transform_2, window_bounds = array<i64: 1, 576>}, {pipeline_mode = #tpu.pipeline_mode<synchronous>, transform_indices = @transform_3, window_bounds = array<i64: 1, 576>}, {transform_indices = @transform_4, window_bounds = array<i64: 8, 12>}]} {
    %c0 = arith.constant 0 : index
    %c0_0 = arith.constant 0 : index
    %0 = vector.load %arg1[%c0, %c0_0] : memref<8x576xf32, #tpu.memory_space<vmem>>, vector<8x576xf32>
    %c0_1 = arith.constant 0 : index
    %c0_2 = arith.constant 0 : index
    %1 = vector.load %arg3[%c0_1, %c0_2] : memref<1x576xf32, #tpu.memory_space<vmem>>, vector<1x576xf32>
    %2 = vector.broadcast %1 : vector<1x576xf32> to vector<8x576xf32>
    %3 = arith.mulf %0, %2 : vector<8x576xf32>
    %c0_3 = arith.constant 0 : index
    %c0_4 = arith.constant 0 : index
    %4 = vector.load %arg4[%c0_3, %c0_4] : memref<1x576xf32, #tpu.memory_space<vmem>>, vector<1x576xf32>
    %5 = vector.broadcast %4 : vector<1x576xf32> to vector<8x576xf32>
    %6 = arith.addf %3, %5 : vector<8x576xf32>
    %cst = arith.constant 0.000000e+00 : f32
    %7 = vector.broadcast %cst : f32 to vector<8x576xf32>
    %8 = arith.maximumf %6, %7 : vector<8x576xf32>
    %9 = arith.truncf %8 : vector<8x576xf32> to vector<8x576xbf16>
    %c0_5 = arith.constant 0 : index
    %c0_6 = arith.constant 0 : index
    %10 = vector.load %arg2[%c0_5, %c0_6] : memref<576x12xbf16, #tpu.memory_space<vmem>>, vector<576x12xbf16>
    %cst_7 = arith.constant dense<0.000000e+00> : vector<8x12xf32>
    %11 = tpu.matmul %9, %10, %cst_7 {dimension_numbers = #tpu.dot_dimension_numbers<[1], [0], [0], [1], [0, 0, 1, 1], [], []>} : vector<8x576xbf16>, vector<576x12xbf16>, vector<8x12xf32> -> vector<8x12xf32>
    %c0_8 = arith.constant 0 : index
    %c0_9 = arith.constant 0 : index
    %12 = vector.load %arg5[%c0_8, %c0_9] : memref<8x12xf32, #tpu.memory_space<vmem>>, vector<8x12xf32>
    tpu.vector_store %arg5[%c0_8, %c0_9], %11 {strides = array<i32>} : memref<8x12xf32, #tpu.memory_space<vmem>>, vector<8x12xf32>,
    return
  }
  func.func @transform_0(%arg0: i32) -> (i32, i32) {
    %c0_i32 = arith.constant 0 : i32
    %c0_i32_0 = arith.constant 0 : i32
    return %arg0, %c0_i32 : i32, i32
  }
  func.func @transform_1(%arg0: i32) -> (i32, i32) {
    %c0_i32 = arith.constant 0 : i32
    %c0_i32_0 = arith.constant 0 : i32
    %c0_i32_1 = arith.constant 0 : i32
    return %c0_i32, %c0_i32_0 : i32, i32
  }
  func.func @transform_2(%arg0: i32) -> (i32, i32) {
    %c0_i32 = arith.constant 0 : i32
    %c0_i32_0 = arith.constant 0 : i32
    %c0_i32_1 = arith.constant 0 : i32
    return %c0_i32, %c0_i32_0 : i32, i32
  }
  func.func @transform_3(%arg0: i32) -> (i32, i32) {
    %c0_i32 = arith.constant 0 : i32
    %c0_i32_0 = arith.constant 0 : i32
    %c0_i32_1 = arith.constant 0 : i32
    return %c0_i32, %c0_i32_0 : i32, i32
  }
  func.func @transform_4(%arg0: i32) -> (i32, i32) {
    %c0_i32 = arith.constant 0 : i32
    %c0_i32_0 = arith.constant 0 : i32
    return %arg0, %c0_i32 : i32, i32
  }
}

module attributes {stable_mosaic.version = 11 : i64} {
  func.func @_fused_matmul_kernel(%arg0: i32, %arg1: memref<8x304xf32, #tpu.memory_space<vmem>>, %arg2: memref<304x48xbf16, #tpu.memory_space<vmem>>, %arg3: memref<1x304xf32, #tpu.memory_space<vmem>>, %arg4: memref<1x304xf32, #tpu.memory_space<vmem>>, %arg5: memref<8x48xf32, #tpu.memory_space<vmem>>) attributes {dimension_semantics = [#tpu.dimension_semantics<parallel>], iteration_bounds = array<i64: 1>, scalar_prefetch = 0 : i64, scratch_operands = 0 : i64, tpu.core_type = #tpu.core_type<tc>, window_params = [{transform_indices = @transform_0, window_bounds = array<i64: 8, 304>}, {pipeline_mode = #tpu.pipeline_mode<synchronous>, transform_indices = @transform_1, window_bounds = array<i64: 304, 48>}, {pipeline_mode = #tpu.pipeline_mode<synchronous>, transform_indices = @transform_2, window_bounds = array<i64: 1, 304>}, {pipeline_mode = #tpu.pipeline_mode<synchronous>, transform_indices = @transform_3, window_bounds = array<i64: 1, 304>}, {transform_indices = @transform_4, window_bounds = array<i64: 8, 48>}]} {
    %c0 = arith.constant 0 : index
    %c0_0 = arith.constant 0 : index
    %0 = vector.load %arg1[%c0, %c0_0] : memref<8x304xf32, #tpu.memory_space<vmem>>, vector<8x304xf32>
    %c0_1 = arith.constant 0 : index
    %c0_2 = arith.constant 0 : index
    %1 = vector.load %arg3[%c0_1, %c0_2] : memref<1x304xf32, #tpu.memory_space<vmem>>, vector<1x304xf32>
    %2 = vector.broadcast %1 : vector<1x304xf32> to vector<8x304xf32>
    %3 = arith.mulf %0, %2 : vector<8x304xf32>
    %c0_3 = arith.constant 0 : index
    %c0_4 = arith.constant 0 : index
    %4 = vector.load %arg4[%c0_3, %c0_4] : memref<1x304xf32, #tpu.memory_space<vmem>>, vector<1x304xf32>
    %5 = vector.broadcast %4 : vector<1x304xf32> to vector<8x304xf32>
    %6 = arith.addf %3, %5 : vector<8x304xf32>
    %cst = arith.constant 0.000000e+00 : f32
    %7 = vector.broadcast %cst : f32 to vector<8x304xf32>
    %8 = arith.maximumf %6, %7 : vector<8x304xf32>
    %9 = arith.truncf %8 : vector<8x304xf32> to vector<8x304xbf16>
    %c0_5 = arith.constant 0 : index
    %c0_6 = arith.constant 0 : index
    %10 = vector.load %arg2[%c0_5, %c0_6] : memref<304x48xbf16, #tpu.memory_space<vmem>>, vector<304x48xbf16>
    %cst_7 = arith.constant dense<0.000000e+00> : vector<8x48xf32>
    %11 = tpu.matmul %9, %10, %cst_7 {dimension_numbers = #tpu.dot_dimension_numbers<[1], [0], [0], [1], [0, 0, 1, 1], [], []>} : vector<8x304xbf16>, vector<304x48xbf16>, vector<8x48xf32> -> vector<8x48xf32>
    %c0_8 = arith.constant 0 : index
    %c0_9 = arith.constant 0 : index
    %12 = vector.load %arg5[%c0_8, %c0_9] : memref<8x48xf32, #tpu.memory_space<vmem>>, vector<8x48xf32>
    tpu.vector_store %arg5[%c0_8, %c0_9], %11 {strides = array<i32>} : memref<8x48xf32, #tpu.memory_space<vmem>>, vector<8x48xf32>,
    return
  }
  func.func @transform_0(%arg0: i32) -> (i32, i32) {
    %c0_i32 = arith.constant 0 : i32
    %c0_i32_0 = arith.constant 0 : i32
    return %arg0, %c0_i32 : i32, i32
  }
  func.func @transform_1(%arg0: i32) -> (i32, i32) {
    %c0_i32 = arith.constant 0 : i32
    %c0_i32_0 = arith.constant 0 : i32
    %c0_i32_1 = arith.constant 0 : i32
    return %c0_i32, %c0_i32_0 : i32, i32
  }
  func.func @transform_2(%arg0: i32) -> (i32, i32) {
    %c0_i32 = arith.constant 0 : i32
    %c0_i32_0 = arith.constant 0 : i32
    %c0_i32_1 = arith.constant 0 : i32
    return %c0_i32, %c0_i32_0 : i32, i32
  }
  func.func @transform_3(%arg0: i32) -> (i32, i32) {
    %c0_i32 = arith.constant 0 : i32
    %c0_i32_0 = arith.constant 0 : i32
    %c0_i32_1 = arith.constant 0 : i32
    return %c0_i32, %c0_i32_0 : i32, i32
  }
  func.func @transform_4(%arg0: i32) -> (i32, i32) {
    %c0_i32 = arith.constant 0 : i32
    %c0_i32_0 = arith.constant 0 : i32
    return %arg0, %c0_i32 : i32, i32
  }
}

module attributes {stable_mosaic.version = 11 : i64} {
  func.func @_head_kernel(%arg0: memref<2x76xf32, #tpu.memory_space<vmem>>, %arg1: memref<2x2xf32, #tpu.memory_space<vmem>>, %arg2: memref<1x76xf32, #tpu.memory_space<vmem>>, %arg3: memref<1x76xf32, #tpu.memory_space<vmem>>, %arg4: memref<76x10xf32, #tpu.memory_space<vmem>>, %arg5: memref<1x10xf32, #tpu.memory_space<vmem>>, %arg6: memref<2x10xf32, #tpu.memory_space<vmem>>) attributes {dimension_semantics = [], scalar_prefetch = 0 : i64, scratch_operands = 0 : i64, tpu.core_type = #tpu.core_type<tc>} {
    %c0 = arith.constant 0 : index
    %c0_0 = arith.constant 0 : index
    %0 = vector.load %arg0[%c0, %c0_0] : memref<2x76xf32, #tpu.memory_space<vmem>>, vector<2x76xf32>
    %c0_1 = arith.constant 0 : index
    %c0_2 = arith.constant 0 : index
    %1 = vector.load %arg2[%c0_1, %c0_2] : memref<1x76xf32, #tpu.memory_space<vmem>>, vector<1x76xf32>
    %2 = vector.broadcast %1 : vector<1x76xf32> to vector<2x76xf32>
    %3 = arith.mulf %0, %2 : vector<2x76xf32>
    %c0_3 = arith.constant 0 : index
    %c0_4 = arith.constant 0 : index
    %4 = vector.load %arg3[%c0_3, %c0_4] : memref<1x76xf32, #tpu.memory_space<vmem>>, vector<1x76xf32>
    %5 = vector.broadcast %4 : vector<1x76xf32> to vector<2x76xf32>
    %6 = arith.addf %3, %5 : vector<2x76xf32>
    %cst = arith.constant 0.000000e+00 : f32
    %7 = vector.broadcast %cst : f32 to vector<2x76xf32>
    %8 = arith.maximumf %6, %7 : vector<2x76xf32>
    %c0_5 = arith.constant 0 : index
    %c0_6 = arith.constant 0 : index
    %9 = vector.load %arg1[%c0_5, %c0_6] : memref<2x2xf32, #tpu.memory_space<vmem>>, vector<2x2xf32>
    %cst_7 = arith.constant dense<0.000000e+00> : vector<2x76xf32>
    %10 = tpu.matmul %9, %8, %cst_7 {dimension_numbers = #tpu.dot_dimension_numbers<[1], [0], [0], [1], [0, 0, 1, 1], [], []>} : vector<2x2xf32>, vector<2x76xf32>, vector<2x76xf32> -> vector<2x76xf32>
    %c0_8 = arith.constant 0 : index
    %c0_9 = arith.constant 0 : index
    %11 = vector.load %arg4[%c0_8, %c0_9] : memref<76x10xf32, #tpu.memory_space<vmem>>, vector<76x10xf32>
    %cst_10 = arith.constant dense<0.000000e+00> : vector<2x10xf32>
    %12 = tpu.matmul %10, %11, %cst_10 {dimension_numbers = #tpu.dot_dimension_numbers<[1], [0], [0], [1], [0, 0, 1, 1], [], []>} : vector<2x76xf32>, vector<76x10xf32>, vector<2x10xf32> -> vector<2x10xf32>
    %c0_11 = arith.constant 0 : index
    %c0_12 = arith.constant 0 : index
    %13 = vector.load %arg5[%c0_11, %c0_12] : memref<1x10xf32, #tpu.memory_space<vmem>>, vector<1x10xf32>
    %14 = vector.broadcast %13 : vector<1x10xf32> to vector<2x10xf32>
    %15 = arith.addf %12, %14 : vector<2x10xf32>
    %c0_13 = arith.constant 0 : index
    %c0_14 = arith.constant 0 : index
    %16 = vector.load %arg6[%c0_13, %c0_14] : memref<2x10xf32, #tpu.memory_space<vmem>>, vector<2x10xf32>
    tpu.vector_store %arg6[%c0_13, %c0_14], %15 {strides = array<i32>} : memref<2x10xf32, #tpu.memory_space<vmem>>, vector<2x10xf32>,
    return
  }
}

module attributes {stable_mosaic.version = 11 : i64} {
  func.func @_head_kernel(%arg0: memref<8x76xf32, #tpu.memory_space<vmem>>, %arg1: memref<2x8xf32, #tpu.memory_space<vmem>>, %arg2: memref<1x76xf32, #tpu.memory_space<vmem>>, %arg3: memref<1x76xf32, #tpu.memory_space<vmem>>, %arg4: memref<76x10xf32, #tpu.memory_space<vmem>>, %arg5: memref<1x10xf32, #tpu.memory_space<vmem>>, %arg6: memref<2x10xf32, #tpu.memory_space<vmem>>) attributes {dimension_semantics = [], scalar_prefetch = 0 : i64, scratch_operands = 0 : i64, tpu.core_type = #tpu.core_type<tc>} {
    %c0 = arith.constant 0 : index
    %c0_0 = arith.constant 0 : index
    %0 = vector.load %arg0[%c0, %c0_0] : memref<8x76xf32, #tpu.memory_space<vmem>>, vector<8x76xf32>
    %c0_1 = arith.constant 0 : index
    %c0_2 = arith.constant 0 : index
    %1 = vector.load %arg2[%c0_1, %c0_2] : memref<1x76xf32, #tpu.memory_space<vmem>>, vector<1x76xf32>
    %2 = vector.broadcast %1 : vector<1x76xf32> to vector<8x76xf32>
    %3 = arith.mulf %0, %2 : vector<8x76xf32>
    %c0_3 = arith.constant 0 : index
    %c0_4 = arith.constant 0 : index
    %4 = vector.load %arg3[%c0_3, %c0_4] : memref<1x76xf32, #tpu.memory_space<vmem>>, vector<1x76xf32>
    %5 = vector.broadcast %4 : vector<1x76xf32> to vector<8x76xf32>
    %6 = arith.addf %3, %5 : vector<8x76xf32>
    %cst = arith.constant 0.000000e+00 : f32
    %7 = vector.broadcast %cst : f32 to vector<8x76xf32>
    %8 = arith.maximumf %6, %7 : vector<8x76xf32>
    %c0_5 = arith.constant 0 : index
    %c0_6 = arith.constant 0 : index
    %9 = vector.load %arg1[%c0_5, %c0_6] : memref<2x8xf32, #tpu.memory_space<vmem>>, vector<2x8xf32>
    %cst_7 = arith.constant dense<0.000000e+00> : vector<2x76xf32>
    %10 = tpu.matmul %9, %8, %cst_7 {dimension_numbers = #tpu.dot_dimension_numbers<[1], [0], [0], [1], [0, 0, 1, 1], [], []>} : vector<2x8xf32>, vector<8x76xf32>, vector<2x76xf32> -> vector<2x76xf32>
    %c0_8 = arith.constant 0 : index
    %c0_9 = arith.constant 0 : index
    %11 = vector.load %arg4[%c0_8, %c0_9] : memref<76x10xf32, #tpu.memory_space<vmem>>, vector<76x10xf32>
    %cst_10 = arith.constant dense<0.000000e+00> : vector<2x10xf32>
    %12 = tpu.matmul %10, %11, %cst_10 {dimension_numbers = #tpu.dot_dimension_numbers<[1], [0], [0], [1], [0, 0, 1, 1], [], []>} : vector<2x76xf32>, vector<76x10xf32>, vector<2x10xf32> -> vector<2x10xf32>
    %c0_11 = arith.constant 0 : index
    %c0_12 = arith.constant 0 : index
    %13 = vector.load %arg5[%c0_11, %c0_12] : memref<1x10xf32, #tpu.memory_space<vmem>>, vector<1x10xf32>
    %14 = vector.broadcast %13 : vector<1x10xf32> to vector<2x10xf32>
    %15 = arith.addf %12, %14 : vector<2x10xf32>
    %c0_13 = arith.constant 0 : index
    %c0_14 = arith.constant 0 : index
    %16 = vector.load %arg6[%c0_13, %c0_14] : memref<2x10xf32, #tpu.memory_space<vmem>>, vector<2x10xf32>
    tpu.vector_store %arg6[%c0_13, %c0_14], %15 {strides = array<i32>} : memref<2x10xf32, #tpu.memory_space<vmem>>, vector<2x10xf32>,
    return
  }
}

</mosaic_0001>

<llo_original>
// kernel: swootnet_forward.23
$region0: #{swootnet_forward.23}
  #allocation0 [shape = 'u32[]', space=smem, size = 0x4, offset = 0x4, fixed_abs, tag = 'smem constant byte address 0x4 - core index']
  #allocation1 [shape = 'u32[144,128]{1,0:T(1,128)}', space=vmem, size = 0x12000, scoped, tag = 'internal scratch']
  %s0 = inlined_call_operand.vmem [shape: f32[512,147], index: 0, kind: input, shape index: {}]
  %s1 = inlined_call_operand.vmem [shape: bf16[147,64], index: 1, kind: input, shape index: {}]
  %s2 = inlined_call_operand.vmem [shape: f32[1,64], index: 2, kind: input, shape index: {}]
  %s3 = inlined_call_operand.vmem [shape: f32[1,64], index: 3, kind: input, shape index: {}]
  %s4 = inlined_call_operand.vmem [shape: f32[512,64], index: 4, kind: output, shape index: {}]
  %s5 = sld [smem:[#allocation0]]
  $region49: #{swootnet_forward.23} parent=0
    _
  %s7 = ssub.s32 1, %s5
  %s8 = scalar_select 0, %s7, %s5
  loop: start=0, step=1, limit=4
  $region2: #{swootnet_forward.23} parent=0 // loop_pre_header
    _
  $region3: #{swootnet_forward.23} parent=0 // loop_header
    %s10 = sphi 0, %s14
    %p11 = scmp.ge.s32.totalorder %s10, 4
    %s20 = sphi 0, %s22
    %s23 = sphi 0, %s20
    %s24 = sphi 0, %s23
    %s40 = sphi 0, %s24
    %s44 = sphi 0, %s44
    %s46 = sphi 0, %s44
    %s47 = sphi 0, %s46
    %s61 = sphi 0, %s47
    %s65 = sphi 0, %s65
    %s67 = sphi 0, %s65
    %s68 = sphi 0, %s67
    %s82 = sphi 0, %s68
    %s86 = sphi 0, %s86
    %s88 = sphi 0, %s86
    %s89 = sphi 0, %s88
    %s103 = sphi 0, %s89
    %s109 = sphi 0, %s111
    %s112 = sphi 0, %s109
    %s113 = sphi 0, %s112
    %s129 = sphi 0, %s113
  $region4: #{swootnet_forward.23} parent=0 // loop_header_branch
    %13 = sbr.rel (%p11) target = $region8
  $region5: #{swootnet_forward.23} parent=0 // loop_body
    %s15 = ssub.s32 %s10, 1
    %s16 = ssub.s32 %s10, 2
    %s17 = sadd.s32 %s10, 1
    %s18 = ssub.s32 %s10, %s17
    %p19 = scmp.eq.s32.totalorder %s18, 0
    %s21 = sadd.s32 %s20, 1
    %s22 = scalar_select %p19, %s20, %s21
    %p25 = pneg %p19
    %p26 = scmp.eq.s32.totalorder %s10, 1
    %p27 = por %p25, %p26
    %p28 = scmp.ne.s32.totalorder %s20, %s23
    %p29 = scmp.eq.s32.totalorder %s10, 0
    %p30 = por %p28, %p29
    %p31 = scmp.ne.s32.totalorder %s20, %s23
    %p32 = scmp.eq.s32.totalorder %s15, 1
    %p33 = por %p31, %p32
    %p34 = scmp.ne.s32.totalorder %s23, %s24
    %p35 = scmp.eq.s32.totalorder %s15, 0
    %p36 = por %p34, %p35
    %p37 = scmp.ne.s32.totalorder %s23, %s24
    %p38 = scmp.eq.s32.totalorder %s16, 1
    %p39 = por %p37, %p38
    %p41 = scmp.ne.s32.totalorder %s24, %s40
    %p42 = scmp.eq.s32.totalorder %s16, 0
    %p43 = por %p41, %p42
    %s45 = sadd.s32 %s44, 1
    %p48 = scmp.eq.s32.totalorder %s10, 1
    %p49 = scmp.ne.s32.totalorder %s44, %s46
    %p50 = scmp.eq.s32.totalorder %s10, 0
    %p51 = por %p49, %p50
    %p52 = scmp.ne.s32.totalorder %s44, %s46
    %p53 = scmp.eq.s32.totalorder %s15, 1
    %p54 = por %p52, %p53
    %p55 = scmp.ne.s32.totalorder %s46, %s47
    %p56 = scmp.eq.s32.totalorder %s15, 0
    %p57 = por %p55, %p56
    %p58 = scmp.ne.s32.totalorder %s46, %s47
    %p59 = scmp.eq.s32.totalorder %s16, 1
    %p60 = por %p58, %p59
    %p62 = scmp.ne.s32.totalorder %s47, %s61
    %p63 = scmp.eq.s32.totalorder %s16, 0
    %p64 = por %p62, %p63
    %s66 = sadd.s32 %s65, 1
    %p69 = scmp.eq.s32.totalorder %s10, 1
    %p70 = scmp.ne.s32.totalorder %s65, %s67
    %p71 = scmp.eq.s32.totalorder %s10, 0
    %p72 = por %p70, %p71
    %p73 = scmp.ne.s32.totalorder %s65, %s67
    %p74 = scmp.eq.s32.totalorder %s15, 1
    %p75 = por %p73, %p74
    %p76 = scmp.ne.s32.totalorder %s67, %s68
    %p77 = scmp.eq.s32.totalorder %s15, 0
    %p78 = por %p76, %p77
    %p79 = scmp.ne.s32.totalorder %s67, %s68
    %p80 = scmp.eq.s32.totalorder %s16, 1
    %p81 = por %p79, %p80
    %p83 = scmp.ne.s32.totalorder %s68, %s82
    %p84 = scmp.eq.s32.totalorder %s16, 0
    %p85 = por %p83, %p84
    %s87 = sadd.s32 %s86, 1
    %p90 = scmp.eq.s32.totalorder %s10, 1
    %p91 = scmp.ne.s32.totalorder %s86, %s88
    %p92 = scmp.eq.s32.totalorder %s10, 0
    %p93 = por %p91, %p92
    %p94 = scmp.ne.s32.totalorder %s86, %s88
    %p95 = scmp.eq.s32.totalorder %s15, 1
    %p96 = por %p94, %p95
    %p97 = scmp.ne.s32.totalorder %s88, %s89
    %p98 = scmp.eq.s32.totalorder %s15, 0
    %p99 = por %p97, %p98
    %p100 = scmp.ne.s32.totalorder %s88, %s89
    %p101 = scmp.eq.s32.totalorder %s16, 1
    %p102 = por %p100, %p101
    %p104 = scmp.ne.s32.totalorder %s89, %s103
    %p105 = scmp.eq.s32.totalorder %s16, 0
    %p106 = por %p104, %p105
    %s107 = ssub.s32 %s10, %s17
    %p108 = scmp.eq.s32.totalorder %s107, 0
    %s110 = sadd.s32 %s109, 1
    %s111 = scalar_select %p108, %s109, %s110
    %p114 = pneg %p108
    %p115 = scmp.eq.s32.totalorder %s10, 1
    %p116 = por %p114, %p115
    %p117 = scmp.ne.s32.totalorder %s109, %s112
    %p118 = scmp.eq.s32.totalorder %s10, 0
    %p119 = por %p117, %p118
    %p120 = scmp.ne.s32.totalorder %s109, %s112
    %p121 = scmp.eq.s32.totalorder %s15, 1
    %p122 = por %p120, %p121
    %p123 = scmp.ne.s32.totalorder %s112, %s113
    %p124 = scmp.eq.s32.totalorder %s15, 0
    %p125 = por %p123, %p124
    %p126 = scmp.ne.s32.totalorder %s112, %s113
    %p127 = scmp.eq.s32.totalorder %s16, 1
    %p128 = por %p126, %p127
    %p130 = scmp.ne.s32.totalorder %s113, %s129
    %p131 = scmp.eq.s32.totalorder %s16, 0
    %p132 = por %p130, %p131
    %p133 = scmp.le.s32.totalorder 1, %s10
    %p134 = scmp.lt.s32.totalorder %s10, 3
    %p135 = pnand %p133, %p134
    %p136 = pneg %p135
    // Predicated region
    $region9: #{swootnet_forward.23} parent=5 // pred_check
      _
    $region10: #{swootnet_forward.23} parent=5 // pred_check_branch
      %138 = sbr.rel (%p135) target = $region12
    $region11: #{swootnet_forward.23} parent=5 // pred_region
      %s139 = ssub.s32 %s10, 1
      // Predicated region
      $region13: #{swootnet_forward.23} parent=11 // pred_check
        %p140 = pneg %p57
      $region14: #{swootnet_forward.23} parent=11 // pred_check_branch
        %142 = sbr.rel (%p140) target = $region16
      $region15: #{swootnet_forward.23} parent=11 // pred_region
        _
      $region16: #{swootnet_forward.23} parent=11 // pred_fallthru
        _
      // Predicated region
      $region17: #{swootnet_forward.23} parent=11 // pred_check
        %p143 = pneg %p78
      $region18: #{swootnet_forward.23} parent=11 // pred_check_branch
        %145 = sbr.rel (%p143) target = $region20
      $region19: #{swootnet_forward.23} parent=11 // pred_region
        _
      $region20: #{swootnet_forward.23} parent=11 // pred_fallthru
        _
      // Predicated region
      $region21: #{swootnet_forward.23} parent=11 // pred_check
        %p146 = pneg %p99
      $region22: #{swootnet_forward.23} parent=11 // pred_check_branch
        %148 = sbr.rel (%p146) target = $region24
      $region23: #{swootnet_forward.23} parent=11 // pred_region
        _
      $region24: #{swootnet_forward.23} parent=11 // pred_fallthru
        _
    $region12: #{swootnet_forward.23} parent=5 // pred_fallthru
      _
    %p149 = scmp.lt.s32.totalorder %s10, 2
    // Predicated region
    $region25: #{swootnet_forward.23} parent=5 // pred_check
      %p150 = pneg %p149
    $region26: #{swootnet_forward.23} parent=5 // pred_check_branch
      %152 = sbr.rel (%p150) target = $region28
    $region27: #{swootnet_forward.23} parent=5 // pred_region
      // Predicated region
      $region29: #{swootnet_forward.23} parent=27 // pred_check
        %p153 = pneg %p30
      $region30: #{swootnet_forward.23} parent=27 // pred_check_branch
        %155 = sbr.rel (%p153) target = $region32
      $region31: #{swootnet_forward.23} parent=27 // pred_region
        %s156 = smul.u32 32, %s10
        %p157 = scmp.lt.s32.totalorder %s156, 63
        %s158 = scalar_select %p157, %s156, 63
        %s159 = smul.addr %s158, 2
        %s160 = smul.addr %s159, 8
        %s161 = scalar_lea.vmem %s0, %s160
        %s162 = smul.u32 32, %s10
      $region32: #{swootnet_forward.23} parent=27 // pred_fallthru
        _
    $region28: #{swootnet_forward.23} parent=5 // pred_fallthru
      _
    %p163 = scmp.le.s32.totalorder 1, %s10
    %p164 = scmp.lt.s32.totalorder %s10, 3
    %p165 = pnand %p163, %p164
    %p166 = pneg %p165
    // Predicated region
    $region33: #{swootnet_forward.23} parent=5 // pred_check
      _
    $region34: #{swootnet_forward.23} parent=5 // pred_check_branch
      %168 = sbr.rel (%p165) target = $region36
    $region35: #{swootnet_forward.23} parent=5 // pred_region
      %s169 = ssub.s32 %s10, 1
      %s170 = smul.u32 32, %s15
      %p171 = scmp.lt.s32.totalorder %s170, 63
      %s172 = scalar_select %p171, %s170, 63
      %s173 = smul.addr %s172, 2
      %s174 = smul.addr %s173, 8
      %s175 = scalar_lea.vmem %s0, %s174
      %p176 = pneg %p36
      %p177 = pneg %p33
      %p178 = pneg %p57
      %p179 = pneg %p54
      %p180 = pneg %p78
      %p181 = pneg %p75
      %p182 = pneg %p99
      %p183 = pneg %p96
      %p184 = pneg %p125
      %p185 = pneg %p122
      %s186 = smul.u32 32, %s15
      %p187 = scmp.lt.s32.totalorder %s186, 63
      %s188 = scalar_select %p187, %s186, 63
      %s189 = smul.addr %s188, 8
      %s190 = scalar_lea.vmem %s4, %s189
      %s191 = smul.u32 32, %s15
      %p192 = scmp.lt.s32.totalorder %s191, 63
      %s193 = scalar_select %p192, %s191, 63
      %s194 = smul.addr %s193, 2
      %s195 = smul.addr %s194, 8
      %s196 = scalar_lea.vmem %s0, %s195
      %s197 = smul.u32 32, %s15
      %s198 = smul.u32 32, %s15
      %p199 = scmp.lt.s32.totalorder %s198, 63
      %s200 = scalar_select %p199, %s198, 63
      %s201 = smul.addr %s200, 8
      %s202 = scalar_lea.vmem %s4, %s201
      %s203 = smul.u32 32, %s15
      %v205 = vld [vmem:[%s196] sm:$0xff]
      %v206 = vld [vmem:[%s196 + $0x8] sm:$0xff]
      %v207 = vld [vmem:[%s196 + $0x10] sm:$0xff]
      %v208 = vld [vmem:[%s196 + $0x18] sm:$0xff]
      %v209 = vld [vmem:[%s196 + $0x20] sm:$0xff]
      %v210 = vld [vmem:[%s196 + $0x28] sm:$0xff]
      %v211 = vld [vmem:[%s196 + $0x30] sm:$0xff]
      %v212 = vld [vmem:[%s196 + $0x38] sm:$0xff]
      %v213 = vld [vmem:[%s196 + $0x40] sm:$0xff]
      %v214 = vld [vmem:[%s196 + $0x48] sm:$0xff]
      %v215 = vld [vmem:[%s196 + $0x50] sm:$0xff]
      %v216 = vld [vmem:[%s196 + $0x58] sm:$0xff]
      %v217 = vld [vmem:[%s196 + $0x60] sm:$0xff]
      %v218 = vld [vmem:[%s196 + $0x68] sm:$0xff]
      %v219 = vld [vmem:[%s196 + $0x70] sm:$0xff]
      %v220 = vld [vmem:[%s196 + $0x78] sm:$0xff]
      %v221 = vld [vmem:[%s196 + $0x80] sm:$0xff]
      %v222 = vld [vmem:[%s196 + $0x88] sm:$0xff]
      %v223 = vld [vmem:[%s196 + $0x90] sm:$0xff]
      %v224 = vld [vmem:[%s196 + $0x98] sm:$0xff]
      %v225 = vld [vmem:[%s196 + $0xa0] sm:$0xff]
      %v226 = vld [vmem:[%s196 + $0xa8] sm:$0xff]
      %v227 = vld [vmem:[%s196 + $0xb0] sm:$0xff]
      %v228 = vld [vmem:[%s196 + $0xb8] sm:$0xff]
      %v229 = vld [vmem:[%s196 + $0xc0] sm:$0xff]
      %v230 = vld [vmem:[%s196 + $0xc8] sm:$0xff]
      %v231 = vld [vmem:[%s196 + $0xd0] sm:$0xff]
      %v232 = vld [vmem:[%s196 + $0xd8] sm:$0xff]
      %v233 = vld [vmem:[%s196 + $0xe0] sm:$0xff]
      %v234 = vld [vmem:[%s196 + $0xe8] sm:$0xff]
      %v235 = vld [vmem:[%s196 + $0xf0] sm:$0xff]
      %v236 = vld [vmem:[%s196 + $0xf8] sm:$0xff]
      %v237 = vld [vmem:[%s196 + $0x100] sm:$0xff]
      %v238 = vld [vmem:[%s196 + $0x108] sm:$0xff]
      %v239 = vld [vmem:[%s196 + $0x110] sm:$0xff]
      %v240 = vld [vmem:[%s196 + $0x118] sm:$0xff]
      %v241 = vld [vmem:[%s196 + $0x120] sm:$0xff]
      %v242 = vld [vmem:[%s196 + $0x128] sm:$0xff]
      %v243 = vld [vmem:[%s196 + $0x130] sm:$0xff]
      %v244 = vld [vmem:[%s196 + $0x138] sm:$0xff]
      %v245 = vld [vmem:[%s196 + $0x140] sm:$0xff]
      %v246 = vld [vmem:[%s196 + $0x148] sm:$0xff]
      %v247 = vld [vmem:[%s196 + $0x150] sm:$0xff]
      %v248 = vld [vmem:[%s196 + $0x158] sm:$0xff]
      %v249 = vld [vmem:[%s196 + $0x160] sm:$0xff]
      %v250 = vld [vmem:[%s196 + $0x168] sm:$0xff]
      %v251 = vld [vmem:[%s196 + $0x170] sm:$0xff]
      %v252 = vld [vmem:[%s196 + $0x178] sm:$0xff]
      %v253 = vld [vmem:[%s196 + $0x180] sm:$0xff]
      %v254 = vld [vmem:[%s196 + $0x188] sm:$0xff]
      %v255 = vld [vmem:[%s196 + $0x190] sm:$0xff]
      %v256 = vld [vmem:[%s196 + $0x198] sm:$0xff]
      %v257 = vld [vmem:[%s196 + $0x1a0] sm:$0xff]
      %v258 = vld [vmem:[%s196 + $0x1a8] sm:$0xff]
      %v259 = vld [vmem:[%s196 + $0x1b0] sm:$0xff]
      %v260 = vld [vmem:[%s196 + $0x1b8] sm:$0xff]
      %v261 = vld [vmem:[%s196 + $0x1c0] sm:$0xff]
      %v262 = vld [vmem:[%s196 + $0x1c8] sm:$0xff]
      %v263 = vld [vmem:[%s196 + $0x1d0] sm:$0xff]
      %v264 = vld [vmem:[%s196 + $0x1d8] sm:$0xff]
      %v265 = vld [vmem:[%s196 + $0x1e0] sm:$0xff]
      %v266 = vld [vmem:[%s196 + $0x1e8] sm:$0xff]
      %v267 = vld [vmem:[%s196 + $0x1f0] sm:$0xff]
      %v268 = vld [vmem:[%s196 + $0x1f8] sm:$0xff]
      %v269 = vpack.c.bf16 %v207, %v205
      %v270 = vpack.c.bf16 %v208, %v206
      %v271 = vpack.c.bf16 %v211, %v209
      %v272 = vpack.c.bf16 %v212, %v210
      %v273 = vpack.c.bf16 %v215, %v213
      %v274 = vpack.c.bf16 %v216, %v214
      %v275 = vpack.c.bf16 %v219, %v217
      %v276 = vpack.c.bf16 %v220, %v218
      %v277 = vpack.c.bf16 %v223, %v221
      %v278 = vpack.c.bf16 %v224, %v222
      %v279 = vpack.c.bf16 %v227, %v225
      %v280 = vpack.c.bf16 %v228, %v226
      %v281 = vpack.c.bf16 %v231, %v229
      %v282 = vpack.c.bf16 %v232, %v230
      %v283 = vpack.c.bf16 %v235, %v233
      %v284 = vpack.c.bf16 %v236, %v234
      %v285 = vpack.c.bf16 %v239, %v237
      %v286 = vpack.c.bf16 %v240, %v238
      %v287 = vpack.c.bf16 %v243, %v241
      %v288 = vpack.c.bf16 %v244, %v242
      %v289 = vpack.c.bf16 %v247, %v245
      %v290 = vpack.c.bf16 %v248, %v246
      %v291 = vpack.c.bf16 %v251, %v249
      %v292 = vpack.c.bf16 %v252, %v250
      %v293 = vpack.c.bf16 %v255, %v253
      %v294 = vpack.c.bf16 %v256, %v254
      %v295 = vpack.c.bf16 %v259, %v257
      %v296 = vpack.c.bf16 %v260, %v258
      %v297 = vpack.c.bf16 %v263, %v261
      %v298 = vpack.c.bf16 %v264, %v262
      %v299 = vpack.c.bf16 %v267, %v265
      %v300 = vpack.c.bf16 %v268, %v266
      %v301 = vld [vmem:[%s1] sm:$0xf]
      %v302 = vld [vmem:[%s1 + $0x4] sm:$0xf]
      %v303 = vld [vmem:[%s1 + $0x8] sm:$0xf]
      %v304 = vld [vmem:[%s1 + $0xc] sm:$0xf]
      %v305 = vld [vmem:[%s1 + $0x10] sm:$0xf]
      %v306 = vld [vmem:[%s1 + $0x14] sm:$0xf]
      %v307 = vld [vmem:[%s1 + $0x18] sm:$0xf]
      %v308 = vld [vmem:[%s1 + $0x1c] sm:$0xf]
      %v309 = vld [vmem:[%s1 + $0x20] sm:$0xf]
      %v310 = vld [vmem:[%s1 + $0x24] sm:$0xf]
      %v311 = vld [vmem:[%s1 + $0x28] sm:$0xf]
      %v312 = vld [vmem:[%s1 + $0x2c] sm:$0xf]
      %v313 = vld [vmem:[%s1 + $0x30] sm:$0xf]
      %v314 = vld [vmem:[%s1 + $0x34] sm:$0xf]
      %v315 = vld [vmem:[%s1 + $0x38] sm:$0xf]
      %v316 = vld [vmem:[%s1 + $0x3c] sm:$0xf]
      %v317 = vld [vmem:[%s1 + $0x40] sm:$0xf]
      %v318 = vld [vmem:[%s1 + $0x44] sm:$0xf]
      %v319 = vld [vmem:[%s1 + $0x48] sm:$0x3]
      %v339 = vunpack.c.l.b16 %v301
      %v340 = vunpack.c.l.b16 %v302
      %v341 = vunpack.c.l.b16 %v303
      %v342 = vunpack.c.l.b16 %v304
      %v343 = vunpack.c.l.b16 %v305
      %v344 = vunpack.c.l.b16 %v306
      %v345 = vunpack.c.l.b16 %v307
      %v346 = vunpack.c.l.b16 %v308
      %v347 = vunpack.c.l.b16 %v309
      %v348 = vunpack.c.l.b16 %v310
      %v349 = vunpack.c.l.b16 %v311
      %v350 = vunpack.c.l.b16 %v312
      %v351 = vunpack.c.l.b16 %v313
      %v352 = vunpack.c.l.b16 %v314
      %v353 = vunpack.c.l.b16 %v315
      %v354 = vunpack.c.l.b16 %v316
      %v355 = vunpack.c.l.b16 %v317
      %v356 = vunpack.c.l.b16 %v318
      %v357 = vunpack.c.l.b16 %v319
      %v358 = vpack.c.b16 %v340, %v339
      %v359 = vpack.c.b16 %v342, %v341
      %v360 = vpack.c.b16 %v344, %v343
      %v361 = vpack.c.b16 %v346, %v345
      %v362 = vpack.c.b16 %v348, %v347
      %v363 = vpack.c.b16 %v350, %v349
      %v364 = vpack.c.b16 %v352, %v351
      %v365 = vpack.c.b16 %v354, %v353
      %v366 = vpack.c.b16 %v356, %v355
      %v367 = vpack.c.b16 %v357, %v357
      %vm377 = vcmask 154624
      %v379 = vsel %vm377, %v270, 0
      %v382 = vsel %vm377, %v272, 0
      %v385 = vsel %vm377, %v274, 0
      %v388 = vsel %vm377, %v276, 0
      %v391 = vsel %vm377, %v278, 0
      %v394 = vsel %vm377, %v280, 0
      %v397 = vsel %vm377, %v282, 0
      %v400 = vsel %vm377, %v284, 0
      %v403 = vsel %vm377, %v286, 0
      %v406 = vsel %vm377, %v288, 0
      %v409 = vsel %vm377, %v290, 0
      %v412 = vsel %vm377, %v292, 0
      %v415 = vsel %vm377, %v294, 0
      %v418 = vsel %vm377, %v296, 0
      %v421 = vsel %vm377, %v298, 0
      %v424 = vsel %vm377, %v300, 0
      %vm426 = vcmask 1040384
      %vm427 = vcmask 1041408
      %v428 = vsel %vm426, 4294967295, 65535
      %v429 = vsel %vm427, %v428, 0
      %v431 = vand.u32 %v367, %v429
      %433 = vmatprep.subr.bf16.mxu0 0
      %434 = vmatpush1.bf16.msra.mxu0 %v358
      %435 = vmatprep.subr.bf16.mxu0 0
      %436 = vmatpush1.bf16.msra.mxu0 %v359
      %437 = vmatprep.subr.bf16.mxu0 0
      %438 = vmatpush1.bf16.msra.mxu0 %v360
      %439 = vmatprep.subr.bf16.mxu0 0
      %440 = vmatpush1.bf16.msra.mxu0 %v361
      %441 = vmatprep.subr.bf16.mxu0 0
      %442 = vmatpush1.bf16.msra.mxu0 %v362
      %443 = vmatprep.subr.bf16.mxu0 0
      %444 = vmatpush1.bf16.msra.mxu0 %v363
      %445 = vmatprep.subr.bf16.mxu0 0
      %446 = vmatpush1.bf16.msra.mxu0 %v364
      %447 = vmatprep.subr.bf16.mxu0 0
      %448 = vmatpush1.bf16.msra.mxu0 %v365
      %449 = vmatprep.subr.bf16.mxu0 0
      %450 = vmatpush1.bf16.msra.mxu0 %v366
      %451 = vmatprep.subr.bf16.mxu0 0
      %452 = vmatpush1.bf16.msra.mxu0 %v431
      %453 = vmatprep.subr.bf16.mxu0 0
      %454 = vmatpush1.bf16.msra.mxu0 0
      %455 = vmatprep.subr.bf16.mxu0 0
      %456 = vmatpush1.bf16.msra.mxu0 0
      %457 = vmatprep.subr.bf16.mxu0 0
      %458 = vmatpush1.bf16.msra.mxu0 0
      %459 = vmatprep.subr.bf16.mxu0 0
      %460 = vmatpush1.bf16.msra.mxu0 0
      %461 = vmatprep.subr.bf16.mxu0 0
      %462 = vmatpush1.bf16.msra.mxu0 0
      %463 = vmatprep.subr.bf16.mxu0 0
      %464 = vmatpush1.bf16.msra.mxu0 0
      %465 = vmatprep.mubr.bf16.mxu0 %v379
      %466 = vmatmul.mubr.bf16.gmra.mrb[0].mxu0 %v269
      %v467 = vpop.f32.mrb[0].mxu0
      %v468 = vadd.f32 0.0, %v467
      %v469 = vpop.f32.mrb[0].mxu0
      %v470 = vpop.f32.mrb[0].mxu0
      %v471 = vadd.f32 0.0, %v470
      %v472 = vpop.f32.mrb[0].mxu0
      %473 = vmatprep.mubr.bf16.mxu0 %v382
      %474 = vmatmul.mubr.bf16.gmra.mrb[0].mxu0 %v271
      %v475 = vpop.f32.mrb[0].mxu0
      %v476 = vadd.f32 0.0, %v475
      %v477 = vpop.f32.mrb[0].mxu0
      %v478 = vpop.f32.mrb[0].mxu0
      %v479 = vadd.f32 0.0, %v478
      %v480 = vpop.f32.mrb[0].mxu0
      %481 = vmatprep.mubr.bf16.mxu0 %v385
      %482 = vmatmul.mubr.bf16.gmra.mrb[0].mxu0 %v273
      %v483 = vpop.f32.mrb[0].mxu0
      %v484 = vadd.f32 0.0, %v483
      %v485 = vpop.f32.mrb[0].mxu0
      %v486 = vpop.f32.mrb[0].mxu0
      %v487 = vadd.f32 0.0, %v486
      %v488 = vpop.f32.mrb[0].mxu0
      %489 = vmatprep.mubr.bf16.mxu0 %v388
      %490 = vmatmul.mubr.bf16.gmra.mrb[0].mxu0 %v275
      %v491 = vpop.f32.mrb[0].mxu0
      %v492 = vadd.f32 0.0, %v491
      %v493 = vpop.f32.mrb[0].mxu0
      %v494 = vpop.f32.mrb[0].mxu0
      %v495 = vadd.f32 0.0, %v494
      %v496 = vpop.f32.mrb[0].mxu0
      %497 = vmatprep.mubr.bf16.mxu0 %v391
      %498 = vmatmul.mubr.bf16.gmra.mrb[0].mxu0 %v277
      %v499 = vpop.f32.mrb[0].mxu0
      %v500 = vadd.f32 0.0, %v499
      %v501 = vpop.f32.mrb[0].mxu0
      %v502 = vpop.f32.mrb[0].mxu0
      %v503 = vadd.f32 0.0, %v502
      %v504 = vpop.f32.mrb[0].mxu0
      %505 = vmatprep.mubr.bf16.mxu0 %v394
      %506 = vmatmul.mubr.bf16.gmra.mrb[0].mxu0 %v279
      %v507 = vpop.f32.mrb[0].mxu0
      %v508 = vadd.f32 0.0, %v507
      %v509 = vpop.f32.mrb[0].mxu0
      %v510 = vpop.f32.mrb[0].mxu0
      %v511 = vadd.f32 0.0, %v510
      %v512 = vpop.f32.mrb[0].mxu0
      %513 = vmatprep.mubr.bf16.mxu0 %v397
      %514 = vmatmul.mubr.bf16.gmra.mrb[0].mxu0 %v281
      %v515 = vpop.f32.mrb[0].mxu0
      %v516 = vadd.f32 0.0, %v515
      %v517 = vpop.f32.mrb[0].mxu0
      %v518 = vpop.f32.mrb[0].mxu0
      %v519 = vadd.f32 0.0, %v518
      %v520 = vpop.f32.mrb[0].mxu0
      %521 = vmatprep.mubr.bf16.mxu0 %v400
      %522 = vmatmul.mubr.bf16.gmra.mrb[0].mxu0 %v283
      %v523 = vpop.f32.mrb[0].mxu0
      %v524 = vadd.f32 0.0, %v523
      %v525 = vpop.f32.mrb[0].mxu0
      %v526 = vpop.f32.mrb[0].mxu0
      %v527 = vadd.f32 0.0, %v526
      %v528 = vpop.f32.mrb[0].mxu0
      %529 = vmatprep.mubr.bf16.mxu0 %v403
      %530 = vmatmul.mubr.bf16.gmra.mrb[0].mxu0 %v285
      %v531 = vpop.f32.mrb[0].mxu0
      %v532 = vadd.f32 0.0, %v531
      %v533 = vpop.f32.mrb[0].mxu0
      %v534 = vpop.f32.mrb[0].mxu0
      %v535 = vadd.f32 0.0, %v534
      %v536 = vpop.f32.mrb[0].mxu0
      %537 = vmatprep.mubr.bf16.mxu0 %v406
      %538 = vmatmul.mubr.bf16.gmra.mrb[0].mxu0 %v287
      %v539 = vpop.f32.mrb[0].mxu0
      %v540 = vadd.f32 0.0, %v539
      %v541 = vpop.f32.mrb[0].mxu0
      %v542 = vpop.f32.mrb[0].mxu0
      %v543 = vadd.f32 0.0, %v542
      %v544 = vpop.f32.mrb[0].mxu0
      %545 = vmatprep.mubr.bf16.mxu0 %v409
      %546 = vmatmul.mubr.bf16.gmra.mrb[0].mxu0 %v289
      %v547 = vpop.f32.mrb[0].mxu0
      %v548 = vadd.f32 0.0, %v547
      %v549 = vpop.f32.mrb[0].mxu0
      %v550 = vpop.f32.mrb[0].mxu0
      %v551 = vadd.f32 0.0, %v550
      %v552 = vpop.f32.mrb[0].mxu0
      %553 = vmatprep.mubr.bf16.mxu0 %v412
      %554 = vmatmul.mubr.bf16.gmra.mrb[0].mxu0 %v291
      %v555 = vpop.f32.mrb[0].mxu0
      %v556 = vadd.f32 0.0, %v555
      %v557 = vpop.f32.mrb[0].mxu0
      %v558 = vpop.f32.mrb[0].mxu0
      %v559 = vadd.f32 0.0, %v558
      %v560 = vpop.f32.mrb[0].mxu0
      %561 = vmatprep.mubr.bf16.mxu0 %v415
      %562 = vmatmul.mubr.bf16.gmra.mrb[0].mxu0 %v293
      %v563 = vpop.f32.mrb[0].mxu0
      %v564 = vadd.f32 0.0, %v563
      %v565 = vpop.f32.mrb[0].mxu0
      %v566 = vpop.f32.mrb[0].mxu0
      %v567 = vadd.f32 0.0, %v566
      %v568 = vpop.f32.mrb[0].mxu0
      %569 = vmatprep.mubr.bf16.mxu0 %v418
      %570 = vmatmul.mubr.bf16.gmra.mrb[0].mxu0 %v295
      %v571 = vpop.f32.mrb[0].mxu0
      %v572 = vadd.f32 0.0, %v571
      %v573 = vpop.f32.mrb[0].mxu0
      %v574 = vpop.f32.mrb[0].mxu0
      %v575 = vadd.f32 0.0, %v574
      %v576 = vpop.f32.mrb[0].mxu0
      %577 = vmatprep.mubr.bf16.mxu0 %v421
      %578 = vmatmul.mubr.bf16.gmra.mrb[0].mxu0 %v297
      %v579 = vpop.f32.mrb[0].mxu0
      %v580 = vadd.f32 0.0, %v579
      %v581 = vpop.f32.mrb[0].mxu0
      %v582 = vpop.f32.mrb[0].mxu0
      %v583 = vadd.f32 0.0, %v582
      %v584 = vpop.f32.mrb[0].mxu0
      %585 = vmatprep.mubr.bf16.mxu0 %v424
      %586 = vmatmul.mubr.bf16.gmra.mrb[0].mxu0 %v299
      %v587 = vpop.f32.mrb[0].mxu0
      %v588 = vadd.f32 0.0, %v587
      %v589 = vpop.f32.mrb[0].mxu0
      %v590 = vpop.f32.mrb[0].mxu0
      %v591 = vadd.f32 0.0, %v590
      %v592 = vpop.f32.mrb[0].mxu0
      %593 = vdwg.mxu0
      %v594 = vld [vmem:[%s2] sm:$0x1]
      %v596 = vlaneseq
      %v597 = vshrl.u32 %v596, 7
      %v598 = vsub.s32 0, %v597
      %v599 = vrot.slane %v594, %v598
      %v601 = vmul.f32 %v468, %v599
      %v602 = vmul.f32 %v471, %v599
      %v603 = vmul.f32 %v476, %v599
      %v604 = vmul.f32 %v479, %v599
      %v605 = vmul.f32 %v484, %v599
      %v606 = vmul.f32 %v487, %v599
      %v607 = vmul.f32 %v492, %v599
      %v608 = vmul.f32 %v495, %v599
      %v609 = vmul.f32 %v500, %v599
      %v610 = vmul.f32 %v503, %v599
      %v611 = vmul.f32 %v508, %v599
      %v612 = vmul.f32 %v511, %v599
      %v613 = vmul.f32 %v516, %v599
      %v614 = vmul.f32 %v519, %v599
      %v615 = vmul.f32 %v524, %v599
      %v616 = vmul.f32 %v527, %v599
      %v617 = vmul.f32 %v532, %v599
      %v618 = vmul.f32 %v535, %v599
      %v619 = vmul.f32 %v540, %v599
      %v620 = vmul.f32 %v543, %v599
      %v621 = vmul.f32 %v548, %v599
      %v622 = vmul.f32 %v551, %v599
      %v623 = vmul.f32 %v556, %v599
      %v624 = vmul.f32 %v559, %v599
      %v625 = vmul.f32 %v564, %v599
      %v626 = vmul.f32 %v567, %v599
      %v627 = vmul.f32 %v572, %v599
      %v628 = vmul.f32 %v575, %v599
      %v629 = vmul.f32 %v580, %v599
      %v630 = vmul.f32 %v583, %v599
      %v631 = vmul.f32 %v588, %v599
      %v632 = vmul.f32 %v591, %v599
      %v633 = vld [vmem:[%s3] sm:$0x1]
      %v635 = vlaneseq
      %v636 = vshrl.u32 %v635, 7
      %v637 = vsub.s32 0, %v636
      %v638 = vrot.slane %v633, %v637
      %v640 = vadd.f32 %v601, %v638
      %v641 = vadd.f32 %v602, %v638
      %v642 = vadd.f32 %v603, %v638
      %v643 = vadd.f32 %v604, %v638
      %v644 = vadd.f32 %v605, %v638
      %v645 = vadd.f32 %v606, %v638
      %v646 = vadd.f32 %v607, %v638
      %v647 = vadd.f32 %v608, %v638
      %v648 = vadd.f32 %v609, %v638
      %v649 = vadd.f32 %v610, %v638
      %v650 = vadd.f32 %v611, %v638
      %v651 = vadd.f32 %v612, %v638
      %v652 = vadd.f32 %v613, %v638
      %v653 = vadd.f32 %v614, %v638
      %v654 = vadd.f32 %v615, %v638
      %v655 = vadd.f32 %v616, %v638
      %v656 = vadd.f32 %v617, %v638
      %v657 = vadd.f32 %v618, %v638
      %v658 = vadd.f32 %v619, %v638
      %v659 = vadd.f32 %v620, %v638
      %v660 = vadd.f32 %v621, %v638
      %v661 = vadd.f32 %v622, %v638
      %v662 = vadd.f32 %v623, %v638
      %v663 = vadd.f32 %v624, %v638
      %v664 = vadd.f32 %v625, %v638
      %v665 = vadd.f32 %v626, %v638
      %v666 = vadd.f32 %v627, %v638
      %v667 = vadd.f32 %v628, %v638
      %v668 = vadd.f32 %v629, %v638
      %v669 = vadd.f32 %v630, %v638
      %v670 = vadd.f32 %v631, %v638
      %v671 = vadd.f32 %v632, %v638
      %v672 = vmax.f32 %v640, 0.0
      %v673 = vmax.f32 %v641, 0.0
      %v674 = vmax.f32 %v642, 0.0
      %v675 = vmax.f32 %v643, 0.0
      %v676 = vmax.f32 %v644, 0.0
      %v677 = vmax.f32 %v645, 0.0
      %v678 = vmax.f32 %v646, 0.0
      %v679 = vmax.f32 %v647, 0.0
      %v680 = vmax.f32 %v648, 0.0
      %v681 = vmax.f32 %v649, 0.0
      %v682 = vmax.f32 %v650, 0.0
      %v683 = vmax.f32 %v651, 0.0
      %v684 = vmax.f32 %v652, 0.0
      %v685 = vmax.f32 %v653, 0.0
      %v686 = vmax.f32 %v654, 0.0
      %v687 = vmax.f32 %v655, 0.0
      %v688 = vmax.f32 %v656, 0.0
      %v689 = vmax.f32 %v657, 0.0
      %v690 = vmax.f32 %v658, 0.0
      %v691 = vmax.f32 %v659, 0.0
      %v692 = vmax.f32 %v660, 0.0
      %v693 = vmax.f32 %v661, 0.0
      %v694 = vmax.f32 %v662, 0.0
      %v695 = vmax.f32 %v663, 0.0
      %v696 = vmax.f32 %v664, 0.0
      %v697 = vmax.f32 %v665, 0.0
      %v698 = vmax.f32 %v666, 0.0
      %v699 = vmax.f32 %v667, 0.0
      %v700 = vmax.f32 %v668, 0.0
      %v701 = vmax.f32 %v669, 0.0
      %v702 = vmax.f32 %v670, 0.0
      %v703 = vmax.f32 %v671, 0.0
      %vm704 = vcmask 523264
      %705 = vst.msk [vmem:[%s202] sm:$0xff] %vm704, %v672
      %706 = vst.msk [vmem:[%s202 + $0x8] sm:$0xff] %vm704, %v673
      %707 = vst.msk [vmem:[%s202 + $0x10] sm:$0xff] %vm704, %v674
      %708 = vst.msk [vmem:[%s202 + $0x18] sm:$0xff] %vm704, %v675
      %709 = vst.msk [vmem:[%s202 + $0x20] sm:$0xff] %vm704, %v676
      %710 = vst.msk [vmem:[%s202 + $0x28] sm:$0xff] %vm704, %v677
      %711 = vst.msk [vmem:[%s202 + $0x30] sm:$0xff] %vm704, %v678
      %712 = vst.msk [vmem:[%s202 + $0x38] sm:$0xff] %vm704, %v679
      %713 = vst.msk [vmem:[%s202 + $0x40] sm:$0xff] %vm704, %v680
      %714 = vst.msk [vmem:[%s202 + $0x48] sm:$0xff] %vm704, %v681
      %715 = vst.msk [vmem:[%s202 + $0x50] sm:$0xff] %vm704, %v682
      %716 = vst.msk [vmem:[%s202 + $0x58] sm:$0xff] %vm704, %v683
      %717 = vst.msk [vmem:[%s202 + $0x60] sm:$0xff] %vm704, %v684
      %718 = vst.msk [vmem:[%s202 + $0x68] sm:$0xff] %vm704, %v685
      %719 = vst.msk [vmem:[%s202 + $0x70] sm:$0xff] %vm704, %v686
      %720 = vst.msk [vmem:[%s202 + $0x78] sm:$0xff] %vm704, %v687
      %721 = vst.msk [vmem:[%s202 + $0x80] sm:$0xff] %vm704, %v688
      %722 = vst.msk [vmem:[%s202 + $0x88] sm:$0xff] %vm704, %v689
      %723 = vst.msk [vmem:[%s202 + $0x90] sm:$0xff] %vm704, %v690
      %724 = vst.msk [vmem:[%s202 + $0x98] sm:$0xff] %vm704, %v691
      %725 = vst.msk [vmem:[%s202 + $0xa0] sm:$0xff] %vm704, %v692
      %726 = vst.msk [vmem:[%s202 + $0xa8] sm:$0xff] %vm704, %v693
      %727 = vst.msk [vmem:[%s202 + $0xb0] sm:$0xff] %vm704, %v694
      %728 = vst.msk [vmem:[%s202 + $0xb8] sm:$0xff] %vm704, %v695
      %729 = vst.msk [vmem:[%s202 + $0xc0] sm:$0xff] %vm704, %v696
      %730 = vst.msk [vmem:[%s202 + $0xc8] sm:$0xff] %vm704, %v697
      %731 = vst.msk [vmem:[%s202 + $0xd0] sm:$0xff] %vm704, %v698
      %732 = vst.msk [vmem:[%s202 + $0xd8] sm:$0xff] %vm704, %v699
      %733 = vst.msk [vmem:[%s202 + $0xe0] sm:$0xff] %vm704, %v700
      %734 = vst.msk [vmem:[%s202 + $0xe8] sm:$0xff] %vm704, %v701
      %735 = vst.msk [vmem:[%s202 + $0xf0] sm:$0xff] %vm704, %v702
      %736 = vst.msk [vmem:[%s202 + $0xf8] sm:$0xff] %vm704, %v703
      %s737 = smul.u32 32, %s15
      %p738 = scmp.lt.s32.totalorder %s737, 63
      %s739 = scalar_select %p738, %s737, 63
      %s740 = smul.addr %s739, 8
      %s741 = scalar_lea.vmem %s4, %s740
      // Predicated region
      $region37: #{swootnet_forward.23} parent=35 // pred_check
        %p742 = pneg %p122
      $region38: #{swootnet_forward.23} parent=35 // pred_check_branch
        %744 = sbr.rel (%p742) target = $region40
      $region39: #{swootnet_forward.23} parent=35 // pred_region
        %s745 = smul.u32 32, %s15
      $region40: #{swootnet_forward.23} parent=35 // pred_fallthru
        _
    $region36: #{swootnet_forward.23} parent=5 // pred_fallthru
      _
    %p746 = scmp.le.s32.totalorder 2, %s10
    // Predicated region
    $region41: #{swootnet_forward.23} parent=5 // pred_check
      %p747 = pneg %p746
    $region42: #{swootnet_forward.23} parent=5 // pred_check_branch
      %749 = sbr.rel (%p747) target = $region44
    $region43: #{swootnet_forward.23} parent=5 // pred_region
      %s750 = ssub.s32 %s10, 2
      // Predicated region
      $region45: #{swootnet_forward.23} parent=43 // pred_check
        %p751 = pneg %p128
      $region46: #{swootnet_forward.23} parent=43 // pred_check_branch
        %753 = sbr.rel (%p751) target = $region48
      $region47: #{swootnet_forward.23} parent=43 // pred_region
        %s754 = smul.u32 32, %s16
        %p755 = scmp.lt.s32.totalorder %s754, 63
        %s756 = scalar_select %p755, %s754, 63
        %s757 = smul.addr %s756, 8
        %s758 = scalar_lea.vmem %s4, %s757
      $region48: #{swootnet_forward.23} parent=43 // pred_fallthru
        _
    $region44: #{swootnet_forward.23} parent=5 // pred_fallthru
      _
  $region6: #{swootnet_forward.23} parent=0 // loop_footer
    %s14 = sadd.s32 1, %s10
  $region7: #{swootnet_forward.23} parent=0 // loop_footer_branch
    %9 = sbr.rel target = $region3
  $region8: #{swootnet_forward.23} parent=0 // loop_exit
    _

// kernel: swootnet_forward.24
$region0: #{swootnet_forward.24}
  #allocation0 [shape = 'u32[]', space=smem, size = 0x4, offset = 0x4, fixed_abs, tag = 'smem constant byte address 0x4 - core index']
  #allocation1 [shape = 'u32[144,128]{1,0:T(1,128)}', space=vmem, size = 0x12000, scoped, tag = 'internal scratch']
  %s0 = inlined_call_operand.vmem [shape: f32[32,576], index: 0, kind: input, shape index: {}]
  %s1 = inlined_call_operand.vmem [shape: bf16[576,12], index: 1, kind: input, shape index: {}]
  %s2 = inlined_call_operand.vmem [shape: f32[1,576], index: 2, kind: input, shape index: {}]
  %s3 = inlined_call_operand.vmem [shape: f32[1,576], index: 3, kind: input, shape index: {}]
  %s4 = inlined_call_operand.vmem [shape: f32[32,12], index: 4, kind: output, shape index: {}]
  %s5 = sld [smem:[#allocation0]]
  $region26: #{swootnet_forward.24} parent=0
    _
  %s7 = ssub.s32 1, %s5
  %s8 = scalar_select 0, %s7, %s5
  // Predicated region
  $region2: #{swootnet_forward.24} parent=0 // pred_check
    _
  $region3: #{swootnet_forward.24} parent=0 // pred_check_branch
    %10 = sbr.rel (0) target = $region5
  $region4: #{swootnet_forward.24} parent=0 // pred_region
    _
  $region5: #{swootnet_forward.24} parent=0 // pred_fallthru
    _
  // Predicated region
  $region6: #{swootnet_forward.24} parent=0 // pred_check
    _
  $region7: #{swootnet_forward.24} parent=0 // pred_check_branch
    %12 = sbr.rel (0) target = $region9
  $region8: #{swootnet_forward.24} parent=0 // pred_region
    _
  $region9: #{swootnet_forward.24} parent=0 // pred_fallthru
    _
  // Predicated region
  $region10: #{swootnet_forward.24} parent=0 // pred_check
    _
  $region11: #{swootnet_forward.24} parent=0 // pred_check_branch
    %14 = sbr.rel (0) target = $region13
  $region12: #{swootnet_forward.24} parent=0 // pred_region
    _
  $region13: #{swootnet_forward.24} parent=0 // pred_fallthru
    _
  // Predicated region
  $region14: #{swootnet_forward.24} parent=0 // pred_check
    _
  $region15: #{swootnet_forward.24} parent=0 // pred_check_branch
    %16 = sbr.rel (0) target = $region17
  $region16: #{swootnet_forward.24} parent=0 // pred_region
    _
  $region17: #{swootnet_forward.24} parent=0 // pred_fallthru
    _
  %v18 = vld [vmem:[%s0] sm:$0xff]
  %v19 = vld [vmem:[%s0 + $0x8] sm:$0xff]
  %v20 = vld [vmem:[%s0 + $0x10] sm:$0xff]
  %v21 = vld [vmem:[%s0 + $0x18] sm:$0xff]
  %v22 = vld [vmem:[%s0 + $0x20] sm:$0xff]
  %v23 = vld [vmem:[%s0 + $0x28] sm:$0xff]
  %v24 = vld [vmem:[%s0 + $0x30] sm:$0xff]
  %v25 = vld [vmem:[%s0 + $0x38] sm:$0xff]
  %v26 = vld [vmem:[%s0 + $0x40] sm:$0xff]
  %v27 = vld [vmem:[%s0 + $0x48] sm:$0xff]
  %v28 = vld [vmem:[%s0 + $0x50] sm:$0xff]
  %v29 = vld [vmem:[%s0 + $0x58] sm:$0xff]
  %v30 = vld [vmem:[%s0 + $0x60] sm:$0xff]
  %v31 = vld [vmem:[%s0 + $0x68] sm:$0xff]
  %v32 = vld [vmem:[%s0 + $0x70] sm:$0xff]
  %v33 = vld [vmem:[%s0 + $0x78] sm:$0xff]
  %v34 = vld [vmem:[%s0 + $0x80] sm:$0xff]
  %v35 = vld [vmem:[%s0 + $0x88] sm:$0xff]
  %v36 = vld [vmem:[%s0 + $0x90] sm:$0xff]
  %v37 = vld [vmem:[%s0 + $0x98] sm:$0xff]
  %v38 = vld [vmem:[%s2] sm:$0x1f]
  %v40 = vlaneseq
  %v41 = vshrl.u32 %v40, 7
  %v42 = vsub.s32 0, %v41
  %v43 = vrot.slane %v38, %v42
  %v44 = vlaneseq
  %v45 = vshrl.u32 %v44, 7
  %v46 = vsub.s32 1, %v45
  %v47 = vrot.slane %v38, %v46
  %v48 = vlaneseq
  %v49 = vshrl.u32 %v48, 7
  %v50 = vsub.s32 2, %v49
  %v51 = vrot.slane %v38, %v50
  %v52 = vlaneseq
  %v53 = vshrl.u32 %v52, 7
  %v54 = vsub.s32 3, %v53
  %v55 = vrot.slane %v38, %v54
  %v56 = vlaneseq
  %v57 = vshrl.u32 %v56, 7
  %v58 = vsub.s32 4, %v57
  %v59 = vrot.slane %v38, %v58
  %v65 = vmul.f32 %v18, %v43
  %v66 = vmul.f32 %v19, %v47
  %v67 = vmul.f32 %v20, %v51
  %v68 = vmul.f32 %v21, %v55
  %v69 = vmul.f32 %v22, %v59
  %v70 = vmul.f32 %v23, %v43
  %v71 = vmul.f32 %v24, %v47
  %v72 = vmul.f32 %v25, %v51
  %v73 = vmul.f32 %v26, %v55
  %v74 = vmul.f32 %v27, %v59
  %v75 = vmul.f32 %v28, %v43
  %v76 = vmul.f32 %v29, %v47
  %v77 = vmul.f32 %v30, %v51
  %v78 = vmul.f32 %v31, %v55
  %v79 = vmul.f32 %v32, %v59
  %v80 = vmul.f32 %v33, %v43
  %v81 = vmul.f32 %v34, %v47
  %v82 = vmul.f32 %v35, %v51
  %v83 = vmul.f32 %v36, %v55
  %v84 = vmul.f32 %v37, %v59
  %v85 = vld [vmem:[%s3] sm:$0x1f]
  %v87 = vlaneseq
  %v88 = vshrl.u32 %v87, 7
  %v89 = vsub.s32 0, %v88
  %v90 = vrot.slane %v85, %v89
  %v91 = vlaneseq
  %v92 = vshrl.u32 %v91, 7
  %v93 = vsub.s32 1, %v92
  %v94 = vrot.slane %v85, %v93
  %v95 = vlaneseq
  %v96 = vshrl.u32 %v95, 7
  %v97 = vsub.s32 2, %v96
  %v98 = vrot.slane %v85, %v97
  %v99 = vlaneseq
  %v100 = vshrl.u32 %v99, 7
  %v101 = vsub.s32 3, %v100
  %v102 = vrot.slane %v85, %v101
  %v103 = vlaneseq
  %v104 = vshrl.u32 %v103, 7
  %v105 = vsub.s32 4, %v104
  %v106 = vrot.slane %v85, %v105
  %v112 = vadd.f32 %v65, %v90
  %v113 = vadd.f32 %v66, %v94
  %v114 = vadd.f32 %v67, %v98
  %v115 = vadd.f32 %v68, %v102
  %v116 = vadd.f32 %v69, %v106
  %v117 = vadd.f32 %v70, %v90
  %v118 = vadd.f32 %v71, %v94
  %v119 = vadd.f32 %v72, %v98
  %v120 = vadd.f32 %v73, %v102
  %v121 = vadd.f32 %v74, %v106
  %v122 = vadd.f32 %v75, %v90
  %v123 = vadd.f32 %v76, %v94
  %v124 = vadd.f32 %v77, %v98
  %v125 = vadd.f32 %v78, %v102
  %v126 = vadd.f32 %v79, %v106
  %v127 = vadd.f32 %v80, %v90
  %v128 = vadd.f32 %v81, %v94
  %v129 = vadd.f32 %v82, %v98
  %v130 = vadd.f32 %v83, %v102
  %v131 = vadd.f32 %v84, %v106
  %v132 = vmax.f32 %v112, 0.0
  %v133 = vmax.f32 %v113, 0.0
  %v134 = vmax.f32 %v114, 0.0
  %v135 = vmax.f32 %v115, 0.0
  %v136 = vmax.f32 %v116, 0.0
  %v137 = vmax.f32 %v117, 0.0
  %v138 = vmax.f32 %v118, 0.0
  %v139 = vmax.f32 %v119, 0.0
  %v140 = vmax.f32 %v120, 0.0
  %v141 = vmax.f32 %v121, 0.0
  %v142 = vmax.f32 %v122, 0.0
  %v143 = vmax.f32 %v123, 0.0
  %v144 = vmax.f32 %v124, 0.0
  %v145 = vmax.f32 %v125, 0.0
  %v146 = vmax.f32 %v126, 0.0
  %v147 = vmax.f32 %v127, 0.0
  %v148 = vmax.f32 %v128, 0.0
  %v149 = vmax.f32 %v129, 0.0
  %v150 = vmax.f32 %v130, 0.0
  %v151 = vmax.f32 %v131, 0.0
  %v152 = vpack.c.bf16 %v137, %v132
  %v153 = vpack.c.bf16 %v138, %v133
  %v154 = vpack.c.bf16 %v139, %v134
  %v155 = vpack.c.bf16 %v140, %v135
  %v156 = vpack.c.bf16 %v141, %v136
  %v157 = vpack.c.bf16 %v147, %v142
  %v158 = vpack.c.bf16 %v148, %v143
  %v159 = vpack.c.bf16 %v149, %v144
  %v160 = vpack.c.bf16 %v150, %v145
  %v161 = vpack.c.bf16 %v151, %v146
  %v162 = vld [vmem:[%s1] sm:$0xf]
  %v163 = vld [vmem:[%s1 + $0x4] sm:$0xf]
  %v164 = vld [vmem:[%s1 + $0x8] sm:$0xf]
  %v165 = vld [vmem:[%s1 + $0xc] sm:$0xf]
  %v166 = vld [vmem:[%s1 + $0x10] sm:$0xf]
  %v167 = vld [vmem:[%s1 + $0x14] sm:$0xf]
  %v168 = vld [vmem:[%s1 + $0x18] sm:$0xf]
  %v169 = vld [vmem:[%s1 + $0x1c] sm:$0xf]
  %v170 = vld [vmem:[%s1 + $0x20] sm:$0xf]
  %v171 = vld [vmem:[%s1 + $0x24] sm:$0xf]
  %v172 = vld [vmem:[%s1 + $0x28] sm:$0xf]
  %v173 = vld [vmem:[%s1 + $0x2c] sm:$0xf]
  %v174 = vld [vmem:[%s1 + $0x30] sm:$0xf]
  %v175 = vld [vmem:[%s1 + $0x34] sm:$0xf]
  %v176 = vld [vmem:[%s1 + $0x38] sm:$0xf]
  %v177 = vld [vmem:[%s1 + $0x3c] sm:$0xf]
  %v178 = vld [vmem:[%s1 + $0x40] sm:$0xf]
  %v179 = vld [vmem:[%s1 + $0x44] sm:$0xf]
  %v180 = vld [vmem:[%s1 + $0x48] sm:$0xf]
  %v181 = vld [vmem:[%s1 + $0x4c] sm:$0xf]
  %v182 = vld [vmem:[%s1 + $0x50] sm:$0xf]
  %v183 = vld [vmem:[%s1 + $0x54] sm:$0xf]
  %v184 = vld [vmem:[%s1 + $0x58] sm:$0xf]
  %v185 = vld [vmem:[%s1 + $0x5c] sm:$0xf]
  %v186 = vld [vmem:[%s1 + $0x60] sm:$0xf]
  %v187 = vld [vmem:[%s1 + $0x64] sm:$0xf]
  %v188 = vld [vmem:[%s1 + $0x68] sm:$0xf]
  %v189 = vld [vmem:[%s1 + $0x6c] sm:$0xf]
  %v190 = vld [vmem:[%s1 + $0x70] sm:$0xf]
  %v191 = vld [vmem:[%s1 + $0x74] sm:$0xf]
  %v192 = vld [vmem:[%s1 + $0x78] sm:$0xf]
  %v193 = vld [vmem:[%s1 + $0x7c] sm:$0xf]
  %v194 = vld [vmem:[%s1 + $0x80] sm:$0xf]
  %v195 = vld [vmem:[%s1 + $0x84] sm:$0xf]
  %v196 = vld [vmem:[%s1 + $0x88] sm:$0xf]
  %v197 = vld [vmem:[%s1 + $0x8c] sm:$0xf]
  %v198 = vld [vmem:[%s1 + $0x90] sm:$0xf]
  %v199 = vld [vmem:[%s1 + $0x94] sm:$0xf]
  %v200 = vld [vmem:[%s1 + $0x98] sm:$0xf]
  %v201 = vld [vmem:[%s1 + $0x9c] sm:$0xf]
  %v202 = vld [vmem:[%s1 + $0xa0] sm:$0xf]
  %v203 = vld [vmem:[%s1 + $0xa4] sm:$0xf]
  %v204 = vld [vmem:[%s1 + $0xa8] sm:$0xf]
  %v205 = vld [vmem:[%s1 + $0xac] sm:$0xf]
  %v206 = vld [vmem:[%s1 + $0xb0] sm:$0xf]
  %v207 = vld [vmem:[%s1 + $0xb4] sm:$0xf]
  %v208 = vld [vmem:[%s1 + $0xb8] sm:$0xf]
  %v209 = vld [vmem:[%s1 + $0xbc] sm:$0xf]
  %v210 = vld [vmem:[%s1 + $0xc0] sm:$0xf]
  %v211 = vld [vmem:[%s1 + $0xc4] sm:$0xf]
  %v212 = vld [vmem:[%s1 + $0xc8] sm:$0xf]
  %v213 = vld [vmem:[%s1 + $0xcc] sm:$0xf]
  %v214 = vld [vmem:[%s1 + $0xd0] sm:$0xf]
  %v215 = vld [vmem:[%s1 + $0xd4] sm:$0xf]
  %v216 = vld [vmem:[%s1 + $0xd8] sm:$0xf]
  %v217 = vld [vmem:[%s1 + $0xdc] sm:$0xf]
  %v218 = vld [vmem:[%s1 + $0xe0] sm:$0xf]
  %v219 = vld [vmem:[%s1 + $0xe4] sm:$0xf]
  %v220 = vld [vmem:[%s1 + $0xe8] sm:$0xf]
  %v221 = vld [vmem:[%s1 + $0xec] sm:$0xf]
  %v222 = vld [vmem:[%s1 + $0xf0] sm:$0xf]
  %v223 = vld [vmem:[%s1 + $0xf4] sm:$0xf]
  %v224 = vld [vmem:[%s1 + $0xf8] sm:$0xf]
  %v225 = vld [vmem:[%s1 + $0xfc] sm:$0xf]
  %v226 = vld [vmem:[%s1 + $0x100] sm:$0xf]
  %v227 = vld [vmem:[%s1 + $0x104] sm:$0xf]
  %v228 = vld [vmem:[%s1 + $0x108] sm:$0xf]
  %v229 = vld [vmem:[%s1 + $0x10c] sm:$0xf]
  %v230 = vld [vmem:[%s1 + $0x110] sm:$0xf]
  %v231 = vld [vmem:[%s1 + $0x114] sm:$0xf]
  %v232 = vld [vmem:[%s1 + $0x118] sm:$0xf]
  %v233 = vld [vmem:[%s1 + $0x11c] sm:$0xf]
  %v306 = vunpack.c.l.b16 %v162
  %v307 = vunpack.c.l.b16 %v163
  %v308 = vunpack.c.l.b16 %v164
  %v309 = vunpack.c.l.b16 %v165
  %v310 = vunpack.c.l.b16 %v166
  %v311 = vunpack.c.l.b16 %v167
  %v312 = vunpack.c.l.b16 %v168
  %v313 = vunpack.c.l.b16 %v169
  %v314 = vunpack.c.l.b16 %v170
  %v315 = vunpack.c.l.b16 %v171
  %v316 = vunpack.c.l.b16 %v172
  %v317 = vunpack.c.l.b16 %v173
  %v318 = vunpack.c.l.b16 %v174
  %v319 = vunpack.c.l.b16 %v175
  %v320 = vunpack.c.l.b16 %v176
  %v321 = vunpack.c.l.b16 %v177
  %v322 = vunpack.c.l.b16 %v178
  %v323 = vunpack.c.l.b16 %v179
  %v324 = vunpack.c.l.b16 %v180
  %v325 = vunpack.c.l.b16 %v181
  %v326 = vunpack.c.l.b16 %v182
  %v327 = vunpack.c.l.b16 %v183
  %v328 = vunpack.c.l.b16 %v184
  %v329 = vunpack.c.l.b16 %v185
  %v330 = vunpack.c.l.b16 %v186
  %v331 = vunpack.c.l.b16 %v187
  %v332 = vunpack.c.l.b16 %v188
  %v333 = vunpack.c.l.b16 %v189
  %v334 = vunpack.c.l.b16 %v190
  %v335 = vunpack.c.l.b16 %v191
  %v336 = vunpack.c.l.b16 %v192
  %v337 = vunpack.c.l.b16 %v193
  %v338 = vunpack.c.l.b16 %v194
  %v339 = vunpack.c.l.b16 %v195
  %v340 = vunpack.c.l.b16 %v196
  %v341 = vunpack.c.l.b16 %v197
  %v342 = vunpack.c.l.b16 %v198
  %v343 = vunpack.c.l.b16 %v199
  %v344 = vunpack.c.l.b16 %v200
  %v345 = vunpack.c.l.b16 %v201
  %v346 = vunpack.c.l.b16 %v202
  %v347 = vunpack.c.l.b16 %v203
  %v348 = vunpack.c.l.b16 %v204
  %v349 = vunpack.c.l.b16 %v205
  %v350 = vunpack.c.l.b16 %v206
  %v351 = vunpack.c.l.b16 %v207
  %v352 = vunpack.c.l.b16 %v208
  %v353 = vunpack.c.l.b16 %v209
  %v354 = vunpack.c.l.b16 %v210
  %v355 = vunpack.c.l.b16 %v211
  %v356 = vunpack.c.l.b16 %v212
  %v357 = vunpack.c.l.b16 %v213
  %v358 = vunpack.c.l.b16 %v214
  %v359 = vunpack.c.l.b16 %v215
  %v360 = vunpack.c.l.b16 %v216
  %v361 = vunpack.c.l.b16 %v217
  %v362 = vunpack.c.l.b16 %v218
  %v363 = vunpack.c.l.b16 %v219
  %v364 = vunpack.c.l.b16 %v220
  %v365 = vunpack.c.l.b16 %v221
  %v366 = vunpack.c.l.b16 %v222
  %v367 = vunpack.c.l.b16 %v223
  %v368 = vunpack.c.l.b16 %v224
  %v369 = vunpack.c.l.b16 %v225
  %v370 = vunpack.c.l.b16 %v226
  %v371 = vunpack.c.l.b16 %v227
  %v372 = vunpack.c.l.b16 %v228
  %v373 = vunpack.c.l.b16 %v229
  %v374 = vunpack.c.l.b16 %v230
  %v375 = vunpack.c.l.b16 %v231
  %v376 = vunpack.c.l.b16 %v232
  %v377 = vunpack.c.l.b16 %v233
  %v378 = vpack.c.b16 %v307, %v306
  %v379 = vpack.c.b16 %v309, %v308
  %v380 = vpack.c.b16 %v311, %v310
  %v381 = vpack.c.b16 %v313, %v312
  %v382 = vpack.c.b16 %v315, %v314
  %v383 = vpack.c.b16 %v317, %v316
  %v384 = vpack.c.b16 %v319, %v318
  %v385 = vpack.c.b16 %v321, %v320
  %v386 = vpack.c.b16 %v323, %v322
  %v387 = vpack.c.b16 %v325, %v324
  %v388 = vpack.c.b16 %v327, %v326
  %v389 = vpack.c.b16 %v329, %v328
  %v390 = vpack.c.b16 %v331, %v330
  %v391 = vpack.c.b16 %v333, %v332
  %v392 = vpack.c.b16 %v335, %v334
  %v393 = vpack.c.b16 %v337, %v336
  %v394 = vpack.c.b16 %v339, %v338
  %v395 = vpack.c.b16 %v341, %v340
  %v396 = vpack.c.b16 %v343, %v342
  %v397 = vpack.c.b16 %v345, %v344
  %v398 = vpack.c.b16 %v347, %v346
  %v399 = vpack.c.b16 %v349, %v348
  %v400 = vpack.c.b16 %v351, %v350
  %v401 = vpack.c.b16 %v353, %v352
  %v402 = vpack.c.b16 %v355, %v354
  %v403 = vpack.c.b16 %v357, %v356
  %v404 = vpack.c.b16 %v359, %v358
  %v405 = vpack.c.b16 %v361, %v360
  %v406 = vpack.c.b16 %v363, %v362
  %v407 = vpack.c.b16 %v365, %v364
  %v408 = vpack.c.b16 %v367, %v366
  %v409 = vpack.c.b16 %v369, %v368
  %v410 = vpack.c.b16 %v371, %v370
  %v411 = vpack.c.b16 %v373, %v372
  %v412 = vpack.c.b16 %v375, %v374
  %v413 = vpack.c.b16 %v377, %v376
  %vm450 = vcmask 523264
  %v452 = vsel %vm450, %v156, 0
  %v455 = vsel %vm450, %v161, 0
  %457 = vmatprep.subr.bf16.mxu0 0
  %458 = vmatpush1.bf16.msra.mxu0 %v378
  %459 = vmatprep.subr.bf16.mxu0 0
  %460 = vmatpush1.bf16.msra.mxu0 %v379
  %461 = vmatprep.subr.bf16.mxu0 0
  %462 = vmatpush1.bf16.msra.mxu0 %v380
  %463 = vmatprep.subr.bf16.mxu0 0
  %464 = vmatpush1.bf16.msra.mxu0 %v381
  %465 = vmatprep.subr.bf16.mxu0 0
  %466 = vmatpush1.bf16.msra.mxu0 %v382
  %467 = vmatprep.subr.bf16.mxu0 0
  %468 = vmatpush1.bf16.msra.mxu0 %v383
  %469 = vmatprep.subr.bf16.mxu0 0
  %470 = vmatpush1.bf16.msra.mxu0 %v384
  %471 = vmatprep.subr.bf16.mxu0 0
  %472 = vmatpush1.bf16.msra.mxu0 %v385
  %473 = vmatprep.subr.bf16.mxu0 0
  %474 = vmatpush1.bf16.msra.mxu0 %v386
  %475 = vmatprep.subr.bf16.mxu0 0
  %476 = vmatpush1.bf16.msra.mxu0 %v387
  %477 = vmatprep.subr.bf16.mxu0 0
  %478 = vmatpush1.bf16.msra.mxu0 %v388
  %479 = vmatprep.subr.bf16.mxu0 0
  %480 = vmatpush1.bf16.msra.mxu0 %v389
  %481 = vmatprep.subr.bf16.mxu0 0
  %482 = vmatpush1.bf16.msra.mxu0 %v390
  %483 = vmatprep.subr.bf16.mxu0 0
  %484 = vmatpush1.bf16.msra.mxu0 %v391
  %485 = vmatprep.subr.bf16.mxu0 0
  %486 = vmatpush1.bf16.msra.mxu0 %v392
  %487 = vmatprep.subr.bf16.mxu0 0
  %488 = vmatpush1.bf16.msra.mxu0 %v393
  %489 = vmatprep.mubr.bf16.mxu0 %v153
  %490 = vmatmul.mubr.bf16.gmra.mrb[0].mxu0 %v152
  %v491 = vpop.f32.mrb[0].mxu0
  %v492 = vadd.f32 0.0, %v491
  %v493 = vpop.f32.mrb[0].mxu0
  %v494 = vpop.f32.mrb[0].mxu0
  %v495 = vadd.f32 0.0, %v494
  %v496 = vpop.f32.mrb[0].mxu0
  %497 = vmatprep.mubr.bf16.mxu0 %v158
  %498 = vmatmul.mubr.bf16.gmra.mrb[0].mxu0 %v157
  %v499 = vpop.f32.mrb[0].mxu0
  %v500 = vadd.f32 0.0, %v499
  %v501 = vpop.f32.mrb[0].mxu0
  %v502 = vpop.f32.mrb[0].mxu0
  %v503 = vadd.f32 0.0, %v502
  %v504 = vpop.f32.mrb[0].mxu0
  %505 = vdwg.mxu0
  %506 = vmatprep.subr.bf16.mxu0 0
  %507 = vmatpush1.bf16.msra.mxu0 %v394
  %508 = vmatprep.subr.bf16.mxu0 0
  %509 = vmatpush1.bf16.msra.mxu0 %v395
  %510 = vmatprep.subr.bf16.mxu0 0
  %511 = vmatpush1.bf16.msra.mxu0 %v396
  %512 = vmatprep.subr.bf16.mxu0 0
  %513 = vmatpush1.bf16.msra.mxu0 %v397
  %514 = vmatprep.subr.bf16.mxu0 0
  %515 = vmatpush1.bf16.msra.mxu0 %v398
  %516 = vmatprep.subr.bf16.mxu0 0
  %517 = vmatpush1.bf16.msra.mxu0 %v399
  %518 = vmatprep.subr.bf16.mxu0 0
  %519 = vmatpush1.bf16.msra.mxu0 %v400
  %520 = vmatprep.subr.bf16.mxu0 0
  %521 = vmatpush1.bf16.msra.mxu0 %v401
  %522 = vmatprep.subr.bf16.mxu0 0
  %523 = vmatpush1.bf16.msra.mxu0 %v402
  %524 = vmatprep.subr.bf16.mxu0 0
  %525 = vmatpush1.bf16.msra.mxu0 %v403
  %526 = vmatprep.subr.bf16.mxu0 0
  %527 = vmatpush1.bf16.msra.mxu0 %v404
  %528 = vmatprep.subr.bf16.mxu0 0
  %529 = vmatpush1.bf16.msra.mxu0 %v405
  %530 = vmatprep.subr.bf16.mxu0 0
  %531 = vmatpush1.bf16.msra.mxu0 %v406
  %532 = vmatprep.subr.bf16.mxu0 0
  %533 = vmatpush1.bf16.msra.mxu0 %v407
  %534 = vmatprep.subr.bf16.mxu0 0
  %535 = vmatpush1.bf16.msra.mxu0 %v408
  %536 = vmatprep.subr.bf16.mxu0 0
  %537 = vmatpush1.bf16.msra.mxu0 %v409
  %538 = vmatprep.mubr.bf16.mxu0 %v155
  %539 = vmatmul.mubr.bf16.gmra.mrb[0].mxu0 %v154
  %v540 = vpop.f32.mrb[0].mxu0
  %v541 = vadd.f32 %v492, %v540
  %v542 = vpop.f32.mrb[0].mxu0
  %v543 = vpop.f32.mrb[0].mxu0
  %v544 = vadd.f32 %v495, %v543
  %v545 = vpop.f32.mrb[0].mxu0
  %546 = vmatprep.mubr.bf16.mxu0 %v160
  %547 = vmatmul.mubr.bf16.gmra.mrb[0].mxu0 %v159
  %v548 = vpop.f32.mrb[0].mxu0
  %v549 = vadd.f32 %v500, %v548
  %v550 = vpop.f32.mrb[0].mxu0
  %v551 = vpop.f32.mrb[0].mxu0
  %v552 = vadd.f32 %v503, %v551
  %v553 = vpop.f32.mrb[0].mxu0
  %554 = vdwg.mxu0
  %555 = vmatprep.subr.bf16.mxu0 0
  %556 = vmatpush1.bf16.msra.mxu0 %v410
  %557 = vmatprep.subr.bf16.mxu0 0
  %558 = vmatpush1.bf16.msra.mxu0 %v411
  %559 = vmatprep.subr.bf16.mxu0 0
  %560 = vmatpush1.bf16.msra.mxu0 %v412
  %561 = vmatprep.subr.bf16.mxu0 0
  %562 = vmatpush1.bf16.msra.mxu0 %v413
  %563 = vmatprep.subr.bf16.mxu0 0
  %564 = vmatpush1.bf16.msra.mxu0 0
  %565 = vmatprep.subr.bf16.mxu0 0
  %566 = vmatpush1.bf16.msra.mxu0 0
  %567 = vmatprep.subr.bf16.mxu0 0
  %568 = vmatpush1.bf16.msra.mxu0 0
  %569 = vmatprep.subr.bf16.mxu0 0
  %570 = vmatpush1.bf16.msra.mxu0 0
  %571 = vmatprep.subr.bf16.mxu0 0
  %572 = vmatpush1.bf16.msra.mxu0 0
  %573 = vmatprep.subr.bf16.mxu0 0
  %574 = vmatpush1.bf16.msra.mxu0 0
  %575 = vmatprep.subr.bf16.mxu0 0
  %576 = vmatpush1.bf16.msra.mxu0 0
  %577 = vmatprep.subr.bf16.mxu0 0
  %578 = vmatpush1.bf16.msra.mxu0 0
  %579 = vmatprep.subr.bf16.mxu0 0
  %580 = vmatpush1.bf16.msra.mxu0 0
  %581 = vmatprep.subr.bf16.mxu0 0
  %582 = vmatpush1.bf16.msra.mxu0 0
  %583 = vmatprep.subr.bf16.mxu0 0
  %584 = vmatpush1.bf16.msra.mxu0 0
  %585 = vmatprep.subr.bf16.mxu0 0
  %586 = vmatpush1.bf16.msra.mxu0 0
  %587 = vmatprep.mubr.bf16.mxu0 0
  %588 = vmatmul.mubr.bf16.gmra.mrb[0].mxu0 %v452
  %v589 = vpop.f32.mrb[0].mxu0
  %v590 = vadd.f32 %v541, %v589
  %v591 = vpop.f32.mrb[0].mxu0
  %v592 = vpop.f32.mrb[0].mxu0
  %v593 = vadd.f32 %v544, %v592
  %v594 = vpop.f32.mrb[0].mxu0
  %595 = vmatprep.mubr.bf16.mxu0 0
  %596 = vmatmul.mubr.bf16.gmra.mrb[0].mxu0 %v455
  %v597 = vpop.f32.mrb[0].mxu0
  %v598 = vadd.f32 %v549, %v597
  %v599 = vpop.f32.mrb[0].mxu0
  %v600 = vpop.f32.mrb[0].mxu0
  %v601 = vadd.f32 %v552, %v600
  %v602 = vpop.f32.mrb[0].mxu0
  %603 = vdwg.mxu0
  %vm604 = vcmask 97280
  %605 = vst.msk [vmem:[%s4] sm:$0xff] %vm604, %v590
  %606 = vst.msk [vmem:[%s4 + $0x8] sm:$0xff] %vm604, %v593
  %607 = vst.msk [vmem:[%s4 + $0x10] sm:$0xff] %vm604, %v598
  %608 = vst.msk [vmem:[%s4 + $0x18] sm:$0xff] %vm604, %v601
  // Predicated region
  $region18: #{swootnet_forward.24} parent=0 // pred_check
    _
  $region19: #{swootnet_forward.24} parent=0 // pred_check_branch
    %610 = sbr.rel (0) target = $region21
  $region20: #{swootnet_forward.24} parent=0 // pred_region
    _
  $region21: #{swootnet_forward.24} parent=0 // pred_fallthru
    _
  // Predicated region
  $region22: #{swootnet_forward.24} parent=0 // pred_check
    _
  $region23: #{swootnet_forward.24} parent=0 // pred_check_branch
    %612 = sbr.rel (0) target = $region25
  $region24: #{swootnet_forward.24} parent=0 // pred_region
    _
  $region25: #{swootnet_forward.24} parent=0 // pred_fallthru
    _

// kernel: swootnet_forward.25
$region0: #{swootnet_forward.25}
  #allocation0 [shape = 'u32[]', space=smem, size = 0x4, offset = 0x4, fixed_abs, tag = 'smem constant byte address 0x4 - core index']
  #allocation1 [shape = 'u32[144,128]{1,0:T(1,128)}', space=vmem, size = 0x12000, scoped, tag = 'internal scratch']
  %s0 = inlined_call_operand.vmem [shape: f32[32,304], index: 0, kind: input, shape index: {}]
  %s1 = inlined_call_operand.vmem [shape: bf16[304,48], index: 1, kind: input, shape index: {}]
  %s2 = inlined_call_operand.vmem [shape: f32[1,304], index: 2, kind: input, shape index: {}]
  %s3 = inlined_call_operand.vmem [shape: f32[1,304], index: 3, kind: input, shape index: {}]
  %s4 = inlined_call_operand.vmem [shape: f32[32,48], index: 4, kind: output, shape index: {}]
  %s5 = sld [smem:[#allocation0]]
  $region26: #{swootnet_forward.25} parent=0
    _
  %s7 = ssub.s32 1, %s5
  %s8 = scalar_select 0, %s7, %s5
  // Predicated region
  $region2: #{swootnet_forward.25} parent=0 // pred_check
    _
  $region3: #{swootnet_forward.25} parent=0 // pred_check_branch
    %10 = sbr.rel (0) target = $region5
  $region4: #{swootnet_forward.25} parent=0 // pred_region
    _
  $region5: #{swootnet_forward.25} parent=0 // pred_fallthru
    _
  // Predicated region
  $region6: #{swootnet_forward.25} parent=0 // pred_check
    _
  $region7: #{swootnet_forward.25} parent=0 // pred_check_branch
    %12 = sbr.rel (0) target = $region9
  $region8: #{swootnet_forward.25} parent=0 // pred_region
    _
  $region9: #{swootnet_forward.25} parent=0 // pred_fallthru
    _
  // Predicated region
  $region10: #{swootnet_forward.25} parent=0 // pred_check
    _
  $region11: #{swootnet_forward.25} parent=0 // pred_check_branch
    %14 = sbr.rel (0) target = $region13
  $region12: #{swootnet_forward.25} parent=0 // pred_region
    _
  $region13: #{swootnet_forward.25} parent=0 // pred_fallthru
    _
  // Predicated region
  $region14: #{swootnet_forward.25} parent=0 // pred_check
    _
  $region15: #{swootnet_forward.25} parent=0 // pred_check_branch
    %16 = sbr.rel (0) target = $region17
  $region16: #{swootnet_forward.25} parent=0 // pred_region
    _
  $region17: #{swootnet_forward.25} parent=0 // pred_fallthru
    _
  %v18 = vld [vmem:[%s0] sm:$0xff]
  %v19 = vld [vmem:[%s0 + $0x8] sm:$0xff]
  %v20 = vld [vmem:[%s0 + $0x10] sm:$0xff]
  %v21 = vld [vmem:[%s0 + $0x18] sm:$0xff]
  %v22 = vld [vmem:[%s0 + $0x20] sm:$0xff]
  %v23 = vld [vmem:[%s0 + $0x28] sm:$0xff]
  %v24 = vld [vmem:[%s0 + $0x30] sm:$0xff]
  %v25 = vld [vmem:[%s0 + $0x38] sm:$0xff]
  %v26 = vld [vmem:[%s0 + $0x40] sm:$0xff]
  %v27 = vld [vmem:[%s0 + $0x48] sm:$0xff]
  %v28 = vld [vmem:[%s0 + $0x50] sm:$0xff]
  %v29 = vld [vmem:[%s0 + $0x58] sm:$0xff]
  %v30 = vld [vmem:[%s2] sm:$0x7]
  %v32 = vlaneseq
  %v33 = vshrl.u32 %v32, 7
  %v34 = vsub.s32 0, %v33
  %v35 = vrot.slane %v30, %v34
  %v36 = vlaneseq
  %v37 = vshrl.u32 %v36, 7
  %v38 = vsub.s32 1, %v37
  %v39 = vrot.slane %v30, %v38
  %v40 = vlaneseq
  %v41 = vshrl.u32 %v40, 7
  %v42 = vsub.s32 2, %v41
  %v43 = vrot.slane %v30, %v42
  %v47 = vmul.f32 %v18, %v35
  %v48 = vmul.f32 %v19, %v39
  %v49 = vmul.f32 %v20, %v43
  %v50 = vmul.f32 %v21, %v35
  %v51 = vmul.f32 %v22, %v39
  %v52 = vmul.f32 %v23, %v43
  %v53 = vmul.f32 %v24, %v35
  %v54 = vmul.f32 %v25, %v39
  %v55 = vmul.f32 %v26, %v43
  %v56 = vmul.f32 %v27, %v35
  %v57 = vmul.f32 %v28, %v39
  %v58 = vmul.f32 %v29, %v43
  %v59 = vld [vmem:[%s3] sm:$0x7]
  %v61 = vlaneseq
  %v62 = vshrl.u32 %v61, 7
  %v63 = vsub.s32 0, %v62
  %v64 = vrot.slane %v59, %v63
  %v65 = vlaneseq
  %v66 = vshrl.u32 %v65, 7
  %v67 = vsub.s32 1, %v66
  %v68 = vrot.slane %v59, %v67
  %v69 = vlaneseq
  %v70 = vshrl.u32 %v69, 7
  %v71 = vsub.s32 2, %v70
  %v72 = vrot.slane %v59, %v71
  %v76 = vadd.f32 %v47, %v64
  %v77 = vadd.f32 %v48, %v68
  %v78 = vadd.f32 %v49, %v72
  %v79 = vadd.f32 %v50, %v64
  %v80 = vadd.f32 %v51, %v68
  %v81 = vadd.f32 %v52, %v72
  %v82 = vadd.f32 %v53, %v64
  %v83 = vadd.f32 %v54, %v68
  %v84 = vadd.f32 %v55, %v72
  %v85 = vadd.f32 %v56, %v64
  %v86 = vadd.f32 %v57, %v68
  %v87 = vadd.f32 %v58, %v72
  %v88 = vmax.f32 %v76, 0.0
  %v89 = vmax.f32 %v77, 0.0
  %v90 = vmax.f32 %v78, 0.0
  %v91 = vmax.f32 %v79, 0.0
  %v92 = vmax.f32 %v80, 0.0
  %v93 = vmax.f32 %v81, 0.0
  %v94 = vmax.f32 %v82, 0.0
  %v95 = vmax.f32 %v83, 0.0
  %v96 = vmax.f32 %v84, 0.0
  %v97 = vmax.f32 %v85, 0.0
  %v98 = vmax.f32 %v86, 0.0
  %v99 = vmax.f32 %v87, 0.0
  %v100 = vpack.c.bf16 %v91, %v88
  %v101 = vpack.c.bf16 %v92, %v89
  %v102 = vpack.c.bf16 %v93, %v90
  %v103 = vpack.c.bf16 %v97, %v94
  %v104 = vpack.c.bf16 %v98, %v95
  %v105 = vpack.c.bf16 %v99, %v96
  %v106 = vld [vmem:[%s1] sm:$0xf]
  %v107 = vld [vmem:[%s1 + $0x4] sm:$0xf]
  %v108 = vld [vmem:[%s1 + $0x8] sm:$0xf]
  %v109 = vld [vmem:[%s1 + $0xc] sm:$0xf]
  %v110 = vld [vmem:[%s1 + $0x10] sm:$0xf]
  %v111 = vld [vmem:[%s1 + $0x14] sm:$0xf]
  %v112 = vld [vmem:[%s1 + $0x18] sm:$0xf]
  %v113 = vld [vmem:[%s1 + $0x1c] sm:$0xf]
  %v114 = vld [vmem:[%s1 + $0x20] sm:$0xf]
  %v115 = vld [vmem:[%s1 + $0x24] sm:$0xf]
  %v116 = vld [vmem:[%s1 + $0x28] sm:$0xf]
  %v117 = vld [vmem:[%s1 + $0x2c] sm:$0xf]
  %v118 = vld [vmem:[%s1 + $0x30] sm:$0xf]
  %v119 = vld [vmem:[%s1 + $0x34] sm:$0xf]
  %v120 = vld [vmem:[%s1 + $0x38] sm:$0xf]
  %v121 = vld [vmem:[%s1 + $0x3c] sm:$0xf]
  %v122 = vld [vmem:[%s1 + $0x40] sm:$0xf]
  %v123 = vld [vmem:[%s1 + $0x44] sm:$0xf]
  %v124 = vld [vmem:[%s1 + $0x48] sm:$0xf]
  %v125 = vld [vmem:[%s1 + $0x4c] sm:$0xf]
  %v126 = vld [vmem:[%s1 + $0x50] sm:$0xf]
  %v127 = vld [vmem:[%s1 + $0x54] sm:$0xf]
  %v128 = vld [vmem:[%s1 + $0x58] sm:$0xf]
  %v129 = vld [vmem:[%s1 + $0x5c] sm:$0xf]
  %v130 = vld [vmem:[%s1 + $0x60] sm:$0xf]
  %v131 = vld [vmem:[%s1 + $0x64] sm:$0xf]
  %v132 = vld [vmem:[%s1 + $0x68] sm:$0xf]
  %v133 = vld [vmem:[%s1 + $0x6c] sm:$0xf]
  %v134 = vld [vmem:[%s1 + $0x70] sm:$0xf]
  %v135 = vld [vmem:[%s1 + $0x74] sm:$0xf]
  %v136 = vld [vmem:[%s1 + $0x78] sm:$0xf]
  %v137 = vld [vmem:[%s1 + $0x7c] sm:$0xf]
  %v138 = vld [vmem:[%s1 + $0x80] sm:$0xf]
  %v139 = vld [vmem:[%s1 + $0x84] sm:$0xf]
  %v140 = vld [vmem:[%s1 + $0x88] sm:$0xf]
  %v141 = vld [vmem:[%s1 + $0x8c] sm:$0xf]
  %v142 = vld [vmem:[%s1 + $0x90] sm:$0xf]
  %v143 = vld [vmem:[%s1 + $0x94] sm:$0xf]
  %v182 = vunpack.c.l.b16 %v106
  %v183 = vunpack.c.l.b16 %v107
  %v184 = vunpack.c.l.b16 %v108
  %v185 = vunpack.c.l.b16 %v109
  %v186 = vunpack.c.l.b16 %v110
  %v187 = vunpack.c.l.b16 %v111
  %v188 = vunpack.c.l.b16 %v112
  %v189 = vunpack.c.l.b16 %v113
  %v190 = vunpack.c.l.b16 %v114
  %v191 = vunpack.c.l.b16 %v115
  %v192 = vunpack.c.l.b16 %v116
  %v193 = vunpack.c.l.b16 %v117
  %v194 = vunpack.c.l.b16 %v118
  %v195 = vunpack.c.l.b16 %v119
  %v196 = vunpack.c.l.b16 %v120
  %v197 = vunpack.c.l.b16 %v121
  %v198 = vunpack.c.l.b16 %v122
  %v199 = vunpack.c.l.b16 %v123
  %v200 = vunpack.c.l.b16 %v124
  %v201 = vunpack.c.l.b16 %v125
  %v202 = vunpack.c.l.b16 %v126
  %v203 = vunpack.c.l.b16 %v127
  %v204 = vunpack.c.l.b16 %v128
  %v205 = vunpack.c.l.b16 %v129
  %v206 = vunpack.c.l.b16 %v130
  %v207 = vunpack.c.l.b16 %v131
  %v208 = vunpack.c.l.b16 %v132
  %v209 = vunpack.c.l.b16 %v133
  %v210 = vunpack.c.l.b16 %v134
  %v211 = vunpack.c.l.b16 %v135
  %v212 = vunpack.c.l.b16 %v136
  %v213 = vunpack.c.l.b16 %v137
  %v214 = vunpack.c.l.b16 %v138
  %v215 = vunpack.c.l.b16 %v139
  %v216 = vunpack.c.l.b16 %v140
  %v217 = vunpack.c.l.b16 %v141
  %v218 = vunpack.c.l.b16 %v142
  %v219 = vunpack.c.l.b16 %v143
  %v220 = vpack.c.b16 %v183, %v182
  %v221 = vpack.c.b16 %v185, %v184
  %v222 = vpack.c.b16 %v187, %v186
  %v223 = vpack.c.b16 %v189, %v188
  %v224 = vpack.c.b16 %v191, %v190
  %v225 = vpack.c.b16 %v193, %v192
  %v226 = vpack.c.b16 %v195, %v194
  %v227 = vpack.c.b16 %v197, %v196
  %v228 = vpack.c.b16 %v199, %v198
  %v229 = vpack.c.b16 %v201, %v200
  %v230 = vpack.c.b16 %v203, %v202
  %v231 = vpack.c.b16 %v205, %v204
  %v232 = vpack.c.b16 %v207, %v206
  %v233 = vpack.c.b16 %v209, %v208
  %v234 = vpack.c.b16 %v211, %v210
  %v235 = vpack.c.b16 %v213, %v212
  %v236 = vpack.c.b16 %v215, %v214
  %v237 = vpack.c.b16 %v217, %v216
  %v238 = vpack.c.b16 %v219, %v218
  %vm258 = vcmask 392192
  %v260 = vsel %vm258, %v102, 0
  %v263 = vsel %vm258, %v105, 0
  %265 = vmatprep.subr.bf16.mxu0 0
  %266 = vmatpush1.bf16.msra.mxu0 %v220
  %267 = vmatprep.subr.bf16.mxu0 0
  %268 = vmatpush1.bf16.msra.mxu0 %v221
  %269 = vmatprep.subr.bf16.mxu0 0
  %270 = vmatpush1.bf16.msra.mxu0 %v222
  %271 = vmatprep.subr.bf16.mxu0 0
  %272 = vmatpush1.bf16.msra.mxu0 %v223
  %273 = vmatprep.subr.bf16.mxu0 0
  %274 = vmatpush1.bf16.msra.mxu0 %v224
  %275 = vmatprep.subr.bf16.mxu0 0
  %276 = vmatpush1.bf16.msra.mxu0 %v225
  %277 = vmatprep.subr.bf16.mxu0 0
  %278 = vmatpush1.bf16.msra.mxu0 %v226
  %279 = vmatprep.subr.bf16.mxu0 0
  %280 = vmatpush1.bf16.msra.mxu0 %v227
  %281 = vmatprep.subr.bf16.mxu0 0
  %282 = vmatpush1.bf16.msra.mxu0 %v228
  %283 = vmatprep.subr.bf16.mxu0 0
  %284 = vmatpush1.bf16.msra.mxu0 %v229
  %285 = vmatprep.subr.bf16.mxu0 0
  %286 = vmatpush1.bf16.msra.mxu0 %v230
  %287 = vmatprep.subr.bf16.mxu0 0
  %288 = vmatpush1.bf16.msra.mxu0 %v231
  %289 = vmatprep.subr.bf16.mxu0 0
  %290 = vmatpush1.bf16.msra.mxu0 %v232
  %291 = vmatprep.subr.bf16.mxu0 0
  %292 = vmatpush1.bf16.msra.mxu0 %v233
  %293 = vmatprep.subr.bf16.mxu0 0
  %294 = vmatpush1.bf16.msra.mxu0 %v234
  %295 = vmatprep.subr.bf16.mxu0 0
  %296 = vmatpush1.bf16.msra.mxu0 %v235
  %297 = vmatprep.mubr.bf16.mxu0 %v101
  %298 = vmatmul.mubr.bf16.gmra.mrb[0].mxu0 %v100
  %v299 = vpop.f32.mrb[0].mxu0
  %v300 = vadd.f32 0.0, %v299
  %v301 = vpop.f32.mrb[0].mxu0
  %v302 = vpop.f32.mrb[0].mxu0
  %v303 = vadd.f32 0.0, %v302
  %v304 = vpop.f32.mrb[0].mxu0
  %305 = vmatprep.mubr.bf16.mxu0 %v104
  %306 = vmatmul.mubr.bf16.gmra.mrb[0].mxu0 %v103
  %v307 = vpop.f32.mrb[0].mxu0
  %v308 = vadd.f32 0.0, %v307
  %v309 = vpop.f32.mrb[0].mxu0
  %v310 = vpop.f32.mrb[0].mxu0
  %v311 = vadd.f32 0.0, %v310
  %v312 = vpop.f32.mrb[0].mxu0
  %313 = vdwg.mxu0
  %314 = vmatprep.subr.bf16.mxu0 0
  %315 = vmatpush1.bf16.msra.mxu0 %v236
  %316 = vmatprep.subr.bf16.mxu0 0
  %317 = vmatpush1.bf16.msra.mxu0 %v237
  %318 = vmatprep.subr.bf16.mxu0 0
  %319 = vmatpush1.bf16.msra.mxu0 %v238
  %320 = vmatprep.subr.bf16.mxu0 0
  %321 = vmatpush1.bf16.msra.mxu0 0
  %322 = vmatprep.subr.bf16.mxu0 0
  %323 = vmatpush1.bf16.msra.mxu0 0
  %324 = vmatprep.subr.bf16.mxu0 0
  %325 = vmatpush1.bf16.msra.mxu0 0
  %326 = vmatprep.subr.bf16.mxu0 0
  %327 = vmatpush1.bf16.msra.mxu0 0
  %328 = vmatprep.subr.bf16.mxu0 0
  %329 = vmatpush1.bf16.msra.mxu0 0
  %330 = vmatprep.subr.bf16.mxu0 0
  %331 = vmatpush1.bf16.msra.mxu0 0
  %332 = vmatprep.subr.bf16.mxu0 0
  %333 = vmatpush1.bf16.msra.mxu0 0
  %334 = vmatprep.subr.bf16.mxu0 0
  %335 = vmatpush1.bf16.msra.mxu0 0
  %336 = vmatprep.subr.bf16.mxu0 0
  %337 = vmatpush1.bf16.msra.mxu0 0
  %338 = vmatprep.subr.bf16.mxu0 0
  %339 = vmatpush1.bf16.msra.mxu0 0
  %340 = vmatprep.subr.bf16.mxu0 0
  %341 = vmatpush1.bf16.msra.mxu0 0
  %342 = vmatprep.subr.bf16.mxu0 0
  %343 = vmatpush1.bf16.msra.mxu0 0
  %344 = vmatprep.subr.bf16.mxu0 0
  %345 = vmatpush1.bf16.msra.mxu0 0
  %346 = vmatprep.mubr.bf16.mxu0 0
  %347 = vmatmul.mubr.bf16.gmra.mrb[0].mxu0 %v260
  %v348 = vpop.f32.mrb[0].mxu0
  %v349 = vadd.f32 %v300, %v348
  %v350 = vpop.f32.mrb[0].mxu0
  %v351 = vpop.f32.mrb[0].mxu0
  %v352 = vadd.f32 %v303, %v351
  %v353 = vpop.f32.mrb[0].mxu0
  %354 = vmatprep.mubr.bf16.mxu0 0
  %355 = vmatmul.mubr.bf16.gmra.mrb[0].mxu0 %v263
  %v356 = vpop.f32.mrb[0].mxu0
  %v357 = vadd.f32 %v308, %v356
  %v358 = vpop.f32.mrb[0].mxu0
  %v359 = vpop.f32.mrb[0].mxu0
  %v360 = vadd.f32 %v311, %v359
  %v361 = vpop.f32.mrb[0].mxu0
  %362 = vdwg.mxu0
  %363 = vst.msk [vmem:[%s4] sm:$0xff] %vm258, %v349
  %364 = vst.msk [vmem:[%s4 + $0x8] sm:$0xff] %vm258, %v352
  %365 = vst.msk [vmem:[%s4 + $0x10] sm:$0xff] %vm258, %v357
  %366 = vst.msk [vmem:[%s4 + $0x18] sm:$0xff] %vm258, %v360
  // Predicated region
  $region18: #{swootnet_forward.25} parent=0 // pred_check
    _
  $region19: #{swootnet_forward.25} parent=0 // pred_check_branch
    %368 = sbr.rel (0) target = $region21
  $region20: #{swootnet_forward.25} parent=0 // pred_region
    _
  $region21: #{swootnet_forward.25} parent=0 // pred_fallthru
    _
  // Predicated region
  $region22: #{swootnet_forward.25} parent=0 // pred_check
    _
  $region23: #{swootnet_forward.25} parent=0 // pred_check_branch
    %370 = sbr.rel (0) target = $region25
  $region24: #{swootnet_forward.25} parent=0 // pred_region
    _
  $region25: #{swootnet_forward.25} parent=0 // pred_fallthru
    _

// kernel: swootnet_forward.26
$region0: #{swootnet_forward.26}
  #allocation0 [shape = 'u32[]', space=smem, size = 0x4, offset = 0x4, fixed_abs, tag = 'smem constant byte address 0x4 - core index']
  #allocation1 [shape = 'u32[144,128]{1,0:T(1,128)}', space=vmem, size = 0x12000, scoped, tag = 'internal scratch']
  %s0 = inlined_call_operand.vmem [shape: f32[32,684], index: 0, kind: input, shape index: {}]
  %s1 = inlined_call_operand.vmem [shape: bf16[684,12], index: 1, kind: input, shape index: {}]
  %s2 = inlined_call_operand.vmem [shape: f32[1,684], index: 2, kind: input, shape index: {}]
  %s3 = inlined_call_operand.vmem [shape: f32[1,684], index: 3, kind: input, shape index: {}]
  %s4 = inlined_call_operand.vmem [shape: f32[32,12], index: 4, kind: output, shape index: {}]
  %s5 = sld [smem:[#allocation0]]
  $region26: #{swootnet_forward.26} parent=0
    _
  %s7 = ssub.s32 1, %s5
  %s8 = scalar_select 0, %s7, %s5
  // Predicated region
  $region2: #{swootnet_forward.26} parent=0 // pred_check
    _
  $region3: #{swootnet_forward.26} parent=0 // pred_check_branch
    %10 = sbr.rel (0) target = $region5
  $region4: #{swootnet_forward.26} parent=0 // pred_region
    _
  $region5: #{swootnet_forward.26} parent=0 // pred_fallthru
    _
  // Predicated region
  $region6: #{swootnet_forward.26} parent=0 // pred_check
    _
  $region7: #{swootnet_forward.26} parent=0 // pred_check_branch
    %12 = sbr.rel (0) target = $region9
  $region8: #{swootnet_forward.26} parent=0 // pred_region
    _
  $region9: #{swootnet_forward.26} parent=0 // pred_fallthru
    _
  // Predicated region
  $region10: #{swootnet_forward.26} parent=0 // pred_check
    _
  $region11: #{swootnet_forward.26} parent=0 // pred_check_branch
    %14 = sbr.rel (0) target = $region13
  $region12: #{swootnet_forward.26} parent=0 // pred_region
    _
  $region13: #{swootnet_forward.26} parent=0 // pred_fallthru
    _
  // Predicated region
  $region14: #{swootnet_forward.26} parent=0 // pred_check
    _
  $region15: #{swootnet_forward.26} parent=0 // pred_check_branch
    %16 = sbr.rel (0) target = $region17
  $region16: #{swootnet_forward.26} parent=0 // pred_region
    _
  $region17: #{swootnet_forward.26} parent=0 // pred_fallthru
    _
  %v18 = vld [vmem:[%s0] sm:$0xff]
  %v19 = vld [vmem:[%s0 + $0x8] sm:$0xff]
  %v20 = vld [vmem:[%s0 + $0x10] sm:$0xff]
  %v21 = vld [vmem:[%s0 + $0x18] sm:$0xff]
  %v22 = vld [vmem:[%s0 + $0x20] sm:$0xff]
  %v23 = vld [vmem:[%s0 + $0x28] sm:$0xff]
  %v24 = vld [vmem:[%s0 + $0x30] sm:$0xff]
  %v25 = vld [vmem:[%s0 + $0x38] sm:$0xff]
  %v26 = vld [vmem:[%s0 + $0x40] sm:$0xff]
  %v27 = vld [vmem:[%s0 + $0x48] sm:$0xff]
  %v28 = vld [vmem:[%s0 + $0x50] sm:$0xff]
  %v29 = vld [vmem:[%s0 + $0x58] sm:$0xff]
  %v30 = vld [vmem:[%s0 + $0x60] sm:$0xff]
  %v31 = vld [vmem:[%s0 + $0x68] sm:$0xff]
  %v32 = vld [vmem:[%s0 + $0x70] sm:$0xff]
  %v33 = vld [vmem:[%s0 + $0x78] sm:$0xff]
  %v34 = vld [vmem:[%s0 + $0x80] sm:$0xff]
  %v35 = vld [vmem:[%s0 + $0x88] sm:$0xff]
  %v36 = vld [vmem:[%s0 + $0x90] sm:$0xff]
  %v37 = vld [vmem:[%s0 + $0x98] sm:$0xff]
  %v38 = vld [vmem:[%s0 + $0xa0] sm:$0xff]
  %v39 = vld [vmem:[%s0 + $0xa8] sm:$0xff]
  %v40 = vld [vmem:[%s0 + $0xb0] sm:$0xff]
  %v41 = vld [vmem:[%s0 + $0xb8] sm:$0xff]
  %v42 = vld [vmem:[%s2] sm:$0x3f]
  %v44 = vlaneseq
  %v45 = vshrl.u32 %v44, 7
  %v46 = vsub.s32 0, %v45
  %v47 = vrot.slane %v42, %v46
  %v48 = vlaneseq
  %v49 = vshrl.u32 %v48, 7
  %v50 = vsub.s32 1, %v49
  %v51 = vrot.slane %v42, %v50
  %v52 = vlaneseq
  %v53 = vshrl.u32 %v52, 7
  %v54 = vsub.s32 2, %v53
  %v55 = vrot.slane %v42, %v54
  %v56 = vlaneseq
  %v57 = vshrl.u32 %v56, 7
  %v58 = vsub.s32 3, %v57
  %v59 = vrot.slane %v42, %v58
  %v60 = vlaneseq
  %v61 = vshrl.u32 %v60, 7
  %v62 = vsub.s32 4, %v61
  %v63 = vrot.slane %v42, %v62
  %v64 = vlaneseq
  %v65 = vshrl.u32 %v64, 7
  %v66 = vsub.s32 5, %v65
  %v67 = vrot.slane %v42, %v66
  %v74 = vmul.f32 %v18, %v47
  %v75 = vmul.f32 %v19, %v51
  %v76 = vmul.f32 %v20, %v55
  %v77 = vmul.f32 %v21, %v59
  %v78 = vmul.f32 %v22, %v63
  %v79 = vmul.f32 %v23, %v67
  %v80 = vmul.f32 %v24, %v47
  %v81 = vmul.f32 %v25, %v51
  %v82 = vmul.f32 %v26, %v55
  %v83 = vmul.f32 %v27, %v59
  %v84 = vmul.f32 %v28, %v63
  %v85 = vmul.f32 %v29, %v67
  %v86 = vmul.f32 %v30, %v47
  %v87 = vmul.f32 %v31, %v51
  %v88 = vmul.f32 %v32, %v55
  %v89 = vmul.f32 %v33, %v59
  %v90 = vmul.f32 %v34, %v63
  %v91 = vmul.f32 %v35, %v67
  %v92 = vmul.f32 %v36, %v47
  %v93 = vmul.f32 %v37, %v51
  %v94 = vmul.f32 %v38, %v55
  %v95 = vmul.f32 %v39, %v59
  %v96 = vmul.f32 %v40, %v63
  %v97 = vmul.f32 %v41, %v67
  %v98 = vld [vmem:[%s3] sm:$0x3f]
  %v100 = vlaneseq
  %v101 = vshrl.u32 %v100, 7
  %v102 = vsub.s32 0, %v101
  %v103 = vrot.slane %v98, %v102
  %v104 = vlaneseq
  %v105 = vshrl.u32 %v104, 7
  %v106 = vsub.s32 1, %v105
  %v107 = vrot.slane %v98, %v106
  %v108 = vlaneseq
  %v109 = vshrl.u32 %v108, 7
  %v110 = vsub.s32 2, %v109
  %v111 = vrot.slane %v98, %v110
  %v112 = vlaneseq
  %v113 = vshrl.u32 %v112, 7
  %v114 = vsub.s32 3, %v113
  %v115 = vrot.slane %v98, %v114
  %v116 = vlaneseq
  %v117 = vshrl.u32 %v116, 7
  %v118 = vsub.s32 4, %v117
  %v119 = vrot.slane %v98, %v118
  %v120 = vlaneseq
  %v121 = vshrl.u32 %v120, 7
  %v122 = vsub.s32 5, %v121
  %v123 = vrot.slane %v98, %v122
  %v130 = vadd.f32 %v74, %v103
  %v131 = vadd.f32 %v75, %v107
  %v132 = vadd.f32 %v76, %v111
  %v133 = vadd.f32 %v77, %v115
  %v134 = vadd.f32 %v78, %v119
  %v135 = vadd.f32 %v79, %v123
  %v136 = vadd.f32 %v80, %v103
  %v137 = vadd.f32 %v81, %v107
  %v138 = vadd.f32 %v82, %v111
  %v139 = vadd.f32 %v83, %v115
  %v140 = vadd.f32 %v84, %v119
  %v141 = vadd.f32 %v85, %v123
  %v142 = vadd.f32 %v86, %v103
  %v143 = vadd.f32 %v87, %v107
  %v144 = vadd.f32 %v88, %v111
  %v145 = vadd.f32 %v89, %v115
  %v146 = vadd.f32 %v90, %v119
  %v147 = vadd.f32 %v91, %v123
  %v148 = vadd.f32 %v92, %v103
  %v149 = vadd.f32 %v93, %v107
  %v150 = vadd.f32 %v94, %v111
  %v151 = vadd.f32 %v95, %v115
  %v152 = vadd.f32 %v96, %v119
  %v153 = vadd.f32 %v97, %v123
  %v154 = vmax.f32 %v130, 0.0
  %v155 = vmax.f32 %v131, 0.0
  %v156 = vmax.f32 %v132, 0.0
  %v157 = vmax.f32 %v133, 0.0
  %v158 = vmax.f32 %v134, 0.0
  %v159 = vmax.f32 %v135, 0.0
  %v160 = vmax.f32 %v136, 0.0
  %v161 = vmax.f32 %v137, 0.0
  %v162 = vmax.f32 %v138, 0.0
  %v163 = vmax.f32 %v139, 0.0
  %v164 = vmax.f32 %v140, 0.0
  %v165 = vmax.f32 %v141, 0.0
  %v166 = vmax.f32 %v142, 0.0
  %v167 = vmax.f32 %v143, 0.0
  %v168 = vmax.f32 %v144, 0.0
  %v169 = vmax.f32 %v145, 0.0
  %v170 = vmax.f32 %v146, 0.0
  %v171 = vmax.f32 %v147, 0.0
  %v172 = vmax.f32 %v148, 0.0
  %v173 = vmax.f32 %v149, 0.0
  %v174 = vmax.f32 %v150, 0.0
  %v175 = vmax.f32 %v151, 0.0
  %v176 = vmax.f32 %v152, 0.0
  %v177 = vmax.f32 %v153, 0.0
  %v178 = vpack.c.bf16 %v160, %v154
  %v179 = vpack.c.bf16 %v161, %v155
  %v180 = vpack.c.bf16 %v162, %v156
  %v181 = vpack.c.bf16 %v163, %v157
  %v182 = vpack.c.bf16 %v164, %v158
  %v183 = vpack.c.bf16 %v165, %v159
  %v184 = vpack.c.bf16 %v172, %v166
  %v185 = vpack.c.bf16 %v173, %v167
  %v186 = vpack.c.bf16 %v174, %v168
  %v187 = vpack.c.bf16 %v175, %v169
  %v188 = vpack.c.bf16 %v176, %v170
  %v189 = vpack.c.bf16 %v177, %v171
  %v190 = vld [vmem:[%s1] sm:$0xf]
  %v191 = vld [vmem:[%s1 + $0x4] sm:$0xf]
  %v192 = vld [vmem:[%s1 + $0x8] sm:$0xf]
  %v193 = vld [vmem:[%s1 + $0xc] sm:$0xf]
  %v194 = vld [vmem:[%s1 + $0x10] sm:$0xf]
  %v195 = vld [vmem:[%s1 + $0x14] sm:$0xf]
  %v196 = vld [vmem:[%s1 + $0x18] sm:$0xf]
  %v197 = vld [vmem:[%s1 + $0x1c] sm:$0xf]
  %v198 = vld [vmem:[%s1 + $0x20] sm:$0xf]
  %v199 = vld [vmem:[%s1 + $0x24] sm:$0xf]
  %v200 = vld [vmem:[%s1 + $0x28] sm:$0xf]
  %v201 = vld [vmem:[%s1 + $0x2c] sm:$0xf]
  %v202 = vld [vmem:[%s1 + $0x30] sm:$0xf]
  %v203 = vld [vmem:[%s1 + $0x34] sm:$0xf]
  %v204 = vld [vmem:[%s1 + $0x38] sm:$0xf]
  %v205 = vld [vmem:[%s1 + $0x3c] sm:$0xf]
  %v206 = vld [vmem:[%s1 + $0x40] sm:$0xf]
  %v207 = vld [vmem:[%s1 + $0x44] sm:$0xf]
  %v208 = vld [vmem:[%s1 + $0x48] sm:$0xf]
  %v209 = vld [vmem:[%s1 + $0x4c] sm:$0xf]
  %v210 = vld [vmem:[%s1 + $0x50] sm:$0xf]
  %v211 = vld [vmem:[%s1 + $0x54] sm:$0xf]
  %v212 = vld [vmem:[%s1 + $0x58] sm:$0xf]
  %v213 = vld [vmem:[%s1 + $0x5c] sm:$0xf]
  %v214 = vld [vmem:[%s1 + $0x60] sm:$0xf]
  %v215 = vld [vmem:[%s1 + $0x64] sm:$0xf]
  %v216 = vld [vmem:[%s1 + $0x68] sm:$0xf]
  %v217 = vld [vmem:[%s1 + $0x6c] sm:$0xf]
  %v218 = vld [vmem:[%s1 + $0x70] sm:$0xf]
  %v219 = vld [vmem:[%s1 + $0x74] sm:$0xf]
  %v220 = vld [vmem:[%s1 + $0x78] sm:$0xf]
  %v221 = vld [vmem:[%s1 + $0x7c] sm:$0xf]
  %v222 = vld [vmem:[%s1 + $0x80] sm:$0xf]
  %v223 = vld [vmem:[%s1 + $0x84] sm:$0xf]
  %v224 = vld [vmem:[%s1 + $0x88] sm:$0xf]
  %v225 = vld [vmem:[%s1 + $0x8c] sm:$0xf]
  %v226 = vld [vmem:[%s1 + $0x90] sm:$0xf]
  %v227 = vld [vmem:[%s1 + $0x94] sm:$0xf]
  %v228 = vld [vmem:[%s1 + $0x98] sm:$0xf]
  %v229 = vld [vmem:[%s1 + $0x9c] sm:$0xf]
  %v230 = vld [vmem:[%s1 + $0xa0] sm:$0xf]
  %v231 = vld [vmem:[%s1 + $0xa4] sm:$0xf]
  %v232 = vld [vmem:[%s1 + $0xa8] sm:$0xf]
  %v233 = vld [vmem:[%s1 + $0xac] sm:$0xf]
  %v234 = vld [vmem:[%s1 + $0xb0] sm:$0xf]
  %v235 = vld [vmem:[%s1 + $0xb4] sm:$0xf]
  %v236 = vld [vmem:[%s1 + $0xb8] sm:$0xf]
  %v237 = vld [vmem:[%s1 + $0xbc] sm:$0xf]
  %v238 = vld [vmem:[%s1 + $0xc0] sm:$0xf]
  %v239 = vld [vmem:[%s1 + $0xc4] sm:$0xf]
  %v240 = vld [vmem:[%s1 + $0xc8] sm:$0xf]
  %v241 = vld [vmem:[%s1 + $0xcc] sm:$0xf]
  %v242 = vld [vmem:[%s1 + $0xd0] sm:$0xf]
  %v243 = vld [vmem:[%s1 + $0xd4] sm:$0xf]
  %v244 = vld [vmem:[%s1 + $0xd8] sm:$0xf]
  %v245 = vld [vmem:[%s1 + $0xdc] sm:$0xf]
  %v246 = vld [vmem:[%s1 + $0xe0] sm:$0xf]
  %v247 = vld [vmem:[%s1 + $0xe4] sm:$0xf]
  %v248 = vld [vmem:[%s1 + $0xe8] sm:$0xf]
  %v249 = vld [vmem:[%s1 + $0xec] sm:$0xf]
  %v250 = vld [vmem:[%s1 + $0xf0] sm:$0xf]
  %v251 = vld [vmem:[%s1 + $0xf4] sm:$0xf]
  %v252 = vld [vmem:[%s1 + $0xf8] sm:$0xf]
  %v253 = vld [vmem:[%s1 + $0xfc] sm:$0xf]
  %v254 = vld [vmem:[%s1 + $0x100] sm:$0xf]
  %v255 = vld [vmem:[%s1 + $0x104] sm:$0xf]
  %v256 = vld [vmem:[%s1 + $0x108] sm:$0xf]
  %v257 = vld [vmem:[%s1 + $0x10c] sm:$0xf]
  %v258 = vld [vmem:[%s1 + $0x110] sm:$0xf]
  %v259 = vld [vmem:[%s1 + $0x114] sm:$0xf]
  %v260 = vld [vmem:[%s1 + $0x118] sm:$0xf]
  %v261 = vld [vmem:[%s1 + $0x11c] sm:$0xf]
  %v262 = vld [vmem:[%s1 + $0x120] sm:$0xf]
  %v263 = vld [vmem:[%s1 + $0x124] sm:$0xf]
  %v264 = vld [vmem:[%s1 + $0x128] sm:$0xf]
  %v265 = vld [vmem:[%s1 + $0x12c] sm:$0xf]
  %v266 = vld [vmem:[%s1 + $0x130] sm:$0xf]
  %v267 = vld [vmem:[%s1 + $0x134] sm:$0xf]
  %v268 = vld [vmem:[%s1 + $0x138] sm:$0xf]
  %v269 = vld [vmem:[%s1 + $0x13c] sm:$0xf]
  %v270 = vld [vmem:[%s1 + $0x140] sm:$0xf]
  %v271 = vld [vmem:[%s1 + $0x144] sm:$0xf]
  %v272 = vld [vmem:[%s1 + $0x148] sm:$0xf]
  %v273 = vld [vmem:[%s1 + $0x14c] sm:$0xf]
  %v274 = vld [vmem:[%s1 + $0x150] sm:$0xf]
  %v275 = vld [vmem:[%s1 + $0x154] sm:$0x3]
  %v362 = vunpack.c.l.b16 %v190
  %v363 = vunpack.c.l.b16 %v191
  %v364 = vunpack.c.l.b16 %v192
  %v365 = vunpack.c.l.b16 %v193
  %v366 = vunpack.c.l.b16 %v194
  %v367 = vunpack.c.l.b16 %v195
  %v368 = vunpack.c.l.b16 %v196
  %v369 = vunpack.c.l.b16 %v197
  %v370 = vunpack.c.l.b16 %v198
  %v371 = vunpack.c.l.b16 %v199
  %v372 = vunpack.c.l.b16 %v200
  %v373 = vunpack.c.l.b16 %v201
  %v374 = vunpack.c.l.b16 %v202
  %v375 = vunpack.c.l.b16 %v203
  %v376 = vunpack.c.l.b16 %v204
  %v377 = vunpack.c.l.b16 %v205
  %v378 = vunpack.c.l.b16 %v206
  %v379 = vunpack.c.l.b16 %v207
  %v380 = vunpack.c.l.b16 %v208
  %v381 = vunpack.c.l.b16 %v209
  %v382 = vunpack.c.l.b16 %v210
  %v383 = vunpack.c.l.b16 %v211
  %v384 = vunpack.c.l.b16 %v212
  %v385 = vunpack.c.l.b16 %v213
  %v386 = vunpack.c.l.b16 %v214
  %v387 = vunpack.c.l.b16 %v215
  %v388 = vunpack.c.l.b16 %v216
  %v389 = vunpack.c.l.b16 %v217
  %v390 = vunpack.c.l.b16 %v218
  %v391 = vunpack.c.l.b16 %v219
  %v392 = vunpack.c.l.b16 %v220
  %v393 = vunpack.c.l.b16 %v221
  %v394 = vunpack.c.l.b16 %v222
  %v395 = vunpack.c.l.b16 %v223
  %v396 = vunpack.c.l.b16 %v224
  %v397 = vunpack.c.l.b16 %v225
  %v398 = vunpack.c.l.b16 %v226
  %v399 = vunpack.c.l.b16 %v227
  %v400 = vunpack.c.l.b16 %v228
  %v401 = vunpack.c.l.b16 %v229
  %v402 = vunpack.c.l.b16 %v230
  %v403 = vunpack.c.l.b16 %v231
  %v404 = vunpack.c.l.b16 %v232
  %v405 = vunpack.c.l.b16 %v233
  %v406 = vunpack.c.l.b16 %v234
  %v407 = vunpack.c.l.b16 %v235
  %v408 = vunpack.c.l.b16 %v236
  %v409 = vunpack.c.l.b16 %v237
  %v410 = vunpack.c.l.b16 %v238
  %v411 = vunpack.c.l.b16 %v239
  %v412 = vunpack.c.l.b16 %v240
  %v413 = vunpack.c.l.b16 %v241
  %v414 = vunpack.c.l.b16 %v242
  %v415 = vunpack.c.l.b16 %v243
  %v416 = vunpack.c.l.b16 %v244
  %v417 = vunpack.c.l.b16 %v245
  %v418 = vunpack.c.l.b16 %v246
  %v419 = vunpack.c.l.b16 %v247
  %v420 = vunpack.c.l.b16 %v248
  %v421 = vunpack.c.l.b16 %v249
  %v422 = vunpack.c.l.b16 %v250
  %v423 = vunpack.c.l.b16 %v251
  %v424 = vunpack.c.l.b16 %v252
  %v425 = vunpack.c.l.b16 %v253
  %v426 = vunpack.c.l.b16 %v254
  %v427 = vunpack.c.l.b16 %v255
  %v428 = vunpack.c.l.b16 %v256
  %v429 = vunpack.c.l.b16 %v257
  %v430 = vunpack.c.l.b16 %v258
  %v431 = vunpack.c.l.b16 %v259
  %v432 = vunpack.c.l.b16 %v260
  %v433 = vunpack.c.l.b16 %v261
  %v434 = vunpack.c.l.b16 %v262
  %v435 = vunpack.c.l.b16 %v263
  %v436 = vunpack.c.l.b16 %v264
  %v437 = vunpack.c.l.b16 %v265
  %v438 = vunpack.c.l.b16 %v266
  %v439 = vunpack.c.l.b16 %v267
  %v440 = vunpack.c.l.b16 %v268
  %v441 = vunpack.c.l.b16 %v269
  %v442 = vunpack.c.l.b16 %v270
  %v443 = vunpack.c.l.b16 %v271
  %v444 = vunpack.c.l.b16 %v272
  %v445 = vunpack.c.l.b16 %v273
  %v446 = vunpack.c.l.b16 %v274
  %v447 = vunpack.c.l.b16 %v275
  %v448 = vpack.c.b16 %v363, %v362
  %v449 = vpack.c.b16 %v365, %v364
  %v450 = vpack.c.b16 %v367, %v366
  %v451 = vpack.c.b16 %v369, %v368
  %v452 = vpack.c.b16 %v371, %v370
  %v453 = vpack.c.b16 %v373, %v372
  %v454 = vpack.c.b16 %v375, %v374
  %v455 = vpack.c.b16 %v377, %v376
  %v456 = vpack.c.b16 %v379, %v378
  %v457 = vpack.c.b16 %v381, %v380
  %v458 = vpack.c.b16 %v383, %v382
  %v459 = vpack.c.b16 %v385, %v384
  %v460 = vpack.c.b16 %v387, %v386
  %v461 = vpack.c.b16 %v389, %v388
  %v462 = vpack.c.b16 %v391, %v390
  %v463 = vpack.c.b16 %v393, %v392
  %v464 = vpack.c.b16 %v395, %v394
  %v465 = vpack.c.b16 %v397, %v396
  %v466 = vpack.c.b16 %v399, %v398
  %v467 = vpack.c.b16 %v401, %v400
  %v468 = vpack.c.b16 %v403, %v402
  %v469 = vpack.c.b16 %v405, %v404
  %v470 = vpack.c.b16 %v407, %v406
  %v471 = vpack.c.b16 %v409, %v408
  %v472 = vpack.c.b16 %v411, %v410
  %v473 = vpack.c.b16 %v413, %v412
  %v474 = vpack.c.b16 %v415, %v414
  %v475 = vpack.c.b16 %v417, %v416
  %v476 = vpack.c.b16 %v419, %v418
  %v477 = vpack.c.b16 %v421, %v420
  %v478 = vpack.c.b16 %v423, %v422
  %v479 = vpack.c.b16 %v425, %v424
  %v480 = vpack.c.b16 %v427, %v426
  %v481 = vpack.c.b16 %v429, %v428
  %v482 = vpack.c.b16 %v431, %v430
  %v483 = vpack.c.b16 %v433, %v432
  %v484 = vpack.c.b16 %v435, %v434
  %v485 = vpack.c.b16 %v437, %v436
  %v486 = vpack.c.b16 %v439, %v438
  %v487 = vpack.c.b16 %v441, %v440
  %v488 = vpack.c.b16 %v443, %v442
  %v489 = vpack.c.b16 %v445, %v444
  %v490 = vpack.c.b16 %v447, %v446
  %vm533 = vcmask 359424
  %v535 = vsel %vm533, %v183, 0
  %v538 = vsel %vm533, %v189, 0
  %vm540 = vcmask 1045504
  %v542 = vsel %vm540, %v490, 0
  %544 = vmatprep.subr.bf16.mxu0 0
  %545 = vmatpush1.bf16.msra.mxu0 %v448
  %546 = vmatprep.subr.bf16.mxu0 0
  %547 = vmatpush1.bf16.msra.mxu0 %v449
  %548 = vmatprep.subr.bf16.mxu0 0
  %549 = vmatpush1.bf16.msra.mxu0 %v450
  %550 = vmatprep.subr.bf16.mxu0 0
  %551 = vmatpush1.bf16.msra.mxu0 %v451
  %552 = vmatprep.subr.bf16.mxu0 0
  %553 = vmatpush1.bf16.msra.mxu0 %v452
  %554 = vmatprep.subr.bf16.mxu0 0
  %555 = vmatpush1.bf16.msra.mxu0 %v453
  %556 = vmatprep.subr.bf16.mxu0 0
  %557 = vmatpush1.bf16.msra.mxu0 %v454
  %558 = vmatprep.subr.bf16.mxu0 0
  %559 = vmatpush1.bf16.msra.mxu0 %v455
  %560 = vmatprep.subr.bf16.mxu0 0
  %561 = vmatpush1.bf16.msra.mxu0 %v456
  %562 = vmatprep.subr.bf16.mxu0 0
  %563 = vmatpush1.bf16.msra.mxu0 %v457
  %564 = vmatprep.subr.bf16.mxu0 0
  %565 = vmatpush1.bf16.msra.mxu0 %v458
  %566 = vmatprep.subr.bf16.mxu0 0
  %567 = vmatpush1.bf16.msra.mxu0 %v459
  %568 = vmatprep.subr.bf16.mxu0 0
  %569 = vmatpush1.bf16.msra.mxu0 %v460
  %570 = vmatprep.subr.bf16.mxu0 0
  %571 = vmatpush1.bf16.msra.mxu0 %v461
  %572 = vmatprep.subr.bf16.mxu0 0
  %573 = vmatpush1.bf16.msra.mxu0 %v462
  %574 = vmatprep.subr.bf16.mxu0 0
  %575 = vmatpush1.bf16.msra.mxu0 %v463
  %576 = vmatprep.mubr.bf16.mxu0 %v179
  %577 = vmatmul.mubr.bf16.gmra.mrb[0].mxu0 %v178
  %v578 = vpop.f32.mrb[0].mxu0
  %v579 = vadd.f32 0.0, %v578
  %v580 = vpop.f32.mrb[0].mxu0
  %v581 = vpop.f32.mrb[0].mxu0
  %v582 = vadd.f32 0.0, %v581
  %v583 = vpop.f32.mrb[0].mxu0
  %584 = vmatprep.mubr.bf16.mxu0 %v185
  %585 = vmatmul.mubr.bf16.gmra.mrb[0].mxu0 %v184
  %v586 = vpop.f32.mrb[0].mxu0
  %v587 = vadd.f32 0.0, %v586
  %v588 = vpop.f32.mrb[0].mxu0
  %v589 = vpop.f32.mrb[0].mxu0
  %v590 = vadd.f32 0.0, %v589
  %v591 = vpop.f32.mrb[0].mxu0
  %592 = vdwg.mxu0
  %593 = vmatprep.subr.bf16.mxu0 0
  %594 = vmatpush1.bf16.msra.mxu0 %v464
  %595 = vmatprep.subr.bf16.mxu0 0
  %596 = vmatpush1.bf16.msra.mxu0 %v465
  %597 = vmatprep.subr.bf16.mxu0 0
  %598 = vmatpush1.bf16.msra.mxu0 %v466
  %599 = vmatprep.subr.bf16.mxu0 0
  %600 = vmatpush1.bf16.msra.mxu0 %v467
  %601 = vmatprep.subr.bf16.mxu0 0
  %602 = vmatpush1.bf16.msra.mxu0 %v468
  %603 = vmatprep.subr.bf16.mxu0 0
  %604 = vmatpush1.bf16.msra.mxu0 %v469
  %605 = vmatprep.subr.bf16.mxu0 0
  %606 = vmatpush1.bf16.msra.mxu0 %v470
  %607 = vmatprep.subr.bf16.mxu0 0
  %608 = vmatpush1.bf16.msra.mxu0 %v471
  %609 = vmatprep.subr.bf16.mxu0 0
  %610 = vmatpush1.bf16.msra.mxu0 %v472
  %611 = vmatprep.subr.bf16.mxu0 0
  %612 = vmatpush1.bf16.msra.mxu0 %v473
  %613 = vmatprep.subr.bf16.mxu0 0
  %614 = vmatpush1.bf16.msra.mxu0 %v474
  %615 = vmatprep.subr.bf16.mxu0 0
  %616 = vmatpush1.bf16.msra.mxu0 %v475
  %617 = vmatprep.subr.bf16.mxu0 0
  %618 = vmatpush1.bf16.msra.mxu0 %v476
  %619 = vmatprep.subr.bf16.mxu0 0
  %620 = vmatpush1.bf16.msra.mxu0 %v477
  %621 = vmatprep.subr.bf16.mxu0 0
  %622 = vmatpush1.bf16.msra.mxu0 %v478
  %623 = vmatprep.subr.bf16.mxu0 0
  %624 = vmatpush1.bf16.msra.mxu0 %v479
  %625 = vmatprep.mubr.bf16.mxu0 %v181
  %626 = vmatmul.mubr.bf16.gmra.mrb[0].mxu0 %v180
  %v627 = vpop.f32.mrb[0].mxu0
  %v628 = vadd.f32 %v579, %v627
  %v629 = vpop.f32.mrb[0].mxu0
  %v630 = vpop.f32.mrb[0].mxu0
  %v631 = vadd.f32 %v582, %v630
  %v632 = vpop.f32.mrb[0].mxu0
  %633 = vmatprep.mubr.bf16.mxu0 %v187
  %634 = vmatmul.mubr.bf16.gmra.mrb[0].mxu0 %v186
  %v635 = vpop.f32.mrb[0].mxu0
  %v636 = vadd.f32 %v587, %v635
  %v637 = vpop.f32.mrb[0].mxu0
  %v638 = vpop.f32.mrb[0].mxu0
  %v639 = vadd.f32 %v590, %v638
  %v640 = vpop.f32.mrb[0].mxu0
  %641 = vdwg.mxu0
  %642 = vmatprep.subr.bf16.mxu0 0
  %643 = vmatpush1.bf16.msra.mxu0 %v480
  %644 = vmatprep.subr.bf16.mxu0 0
  %645 = vmatpush1.bf16.msra.mxu0 %v481
  %646 = vmatprep.subr.bf16.mxu0 0
  %647 = vmatpush1.bf16.msra.mxu0 %v482
  %648 = vmatprep.subr.bf16.mxu0 0
  %649 = vmatpush1.bf16.msra.mxu0 %v483
  %650 = vmatprep.subr.bf16.mxu0 0
  %651 = vmatpush1.bf16.msra.mxu0 %v484
  %652 = vmatprep.subr.bf16.mxu0 0
  %653 = vmatpush1.bf16.msra.mxu0 %v485
  %654 = vmatprep.subr.bf16.mxu0 0
  %655 = vmatpush1.bf16.msra.mxu0 %v486
  %656 = vmatprep.subr.bf16.mxu0 0
  %657 = vmatpush1.bf16.msra.mxu0 %v487
  %658 = vmatprep.subr.bf16.mxu0 0
  %659 = vmatpush1.bf16.msra.mxu0 %v488
  %660 = vmatprep.subr.bf16.mxu0 0
  %661 = vmatpush1.bf16.msra.mxu0 %v489
  %662 = vmatprep.subr.bf16.mxu0 0
  %663 = vmatpush1.bf16.msra.mxu0 %v542
  %664 = vmatprep.subr.bf16.mxu0 0
  %665 = vmatpush1.bf16.msra.mxu0 0
  %666 = vmatprep.subr.bf16.mxu0 0
  %667 = vmatpush1.bf16.msra.mxu0 0
  %668 = vmatprep.subr.bf16.mxu0 0
  %669 = vmatpush1.bf16.msra.mxu0 0
  %670 = vmatprep.subr.bf16.mxu0 0
  %671 = vmatpush1.bf16.msra.mxu0 0
  %672 = vmatprep.subr.bf16.mxu0 0
  %673 = vmatpush1.bf16.msra.mxu0 0
  %674 = vmatprep.mubr.bf16.mxu0 %v535
  %675 = vmatmul.mubr.bf16.gmra.mrb[0].mxu0 %v182
  %v676 = vpop.f32.mrb[0].mxu0
  %v677 = vadd.f32 %v628, %v676
  %v678 = vpop.f32.mrb[0].mxu0
  %v679 = vpop.f32.mrb[0].mxu0
  %v680 = vadd.f32 %v631, %v679
  %v681 = vpop.f32.mrb[0].mxu0
  %682 = vmatprep.mubr.bf16.mxu0 %v538
  %683 = vmatmul.mubr.bf16.gmra.mrb[0].mxu0 %v188
  %v684 = vpop.f32.mrb[0].mxu0
  %v685 = vadd.f32 %v636, %v684
  %v686 = vpop.f32.mrb[0].mxu0
  %v687 = vpop.f32.mrb[0].mxu0
  %v688 = vadd.f32 %v639, %v687
  %v689 = vpop.f32.mrb[0].mxu0
  %690 = vdwg.mxu0
  %vm691 = vcmask 97280
  %692 = vst.msk [vmem:[%s4] sm:$0xff] %vm691, %v677
  %693 = vst.msk [vmem:[%s4 + $0x8] sm:$0xff] %vm691, %v680
  %694 = vst.msk [vmem:[%s4 + $0x10] sm:$0xff] %vm691, %v685
  %695 = vst.msk [vmem:[%s4 + $0x18] sm:$0xff] %vm691, %v688
  // Predicated region
  $region18: #{swootnet_forward.26} parent=0 // pred_check
    _
  $region19: #{swootnet_forward.26} parent=0 // pred_check_branch
    %697 = sbr.rel (0) target = $region21
  $region20: #{swootnet_forward.26} parent=0 // pred_region
    _
  $region21: #{swootnet_forward.26} parent=0 // pred_fallthru
    _
  // Predicated region
  $region22: #{swootnet_forward.26} parent=0 // pred_check
    _
  $region23: #{swootnet_forward.26} parent=0 // pred_check_branch
    %699 = sbr.rel (0) target = $region25
  $region24: #{swootnet_forward.26} parent=0 // pred_region
    _
  $region25: #{swootnet_forward.26} parent=0 // pred_fallthru
    _

// kernel: swootnet_forward.28
$region0: #{swootnet_forward.28}
  #allocation0 [shape = 'u32[]', space=smem, size = 0x4, offset = 0x4, fixed_abs, tag = 'smem constant byte address 0x4 - core index']
  #allocation1 [shape = 'u32[144,128]{1,0:T(1,128)}', space=vmem, size = 0x12000, scoped, tag = 'internal scratch']
  %s0 = inlined_call_operand.vmem [shape: f32[128,88], index: 0, kind: input, shape index: {}]
  %s1 = inlined_call_operand.vmem [shape: bf16[88,44], index: 1, kind: input, shape index: {}]
  %s2 = inlined_call_operand.vmem [shape: f32[1,88], index: 2, kind: input, shape index: {}]
  %s3 = inlined_call_operand.vmem [shape: f32[1,88], index: 3, kind: input, shape index: {}]
  %s4 = inlined_call_operand.vmem [shape: f32[128,44], index: 4, kind: output, shape index: {}]
  %s5 = sld [smem:[#allocation0]]
  $region26: #{swootnet_forward.28} parent=0
    _
  %s7 = ssub.s32 1, %s5
  %s8 = scalar_select 0, %s7, %s5
  // Predicated region
  $region2: #{swootnet_forward.28} parent=0 // pred_check
    _
  $region3: #{swootnet_forward.28} parent=0 // pred_check_branch
    %10 = sbr.rel (0) target = $region5
  $region4: #{swootnet_forward.28} parent=0 // pred_region
    _
  $region5: #{swootnet_forward.28} parent=0 // pred_fallthru
    _
  // Predicated region
  $region6: #{swootnet_forward.28} parent=0 // pred_check
    _
  $region7: #{swootnet_forward.28} parent=0 // pred_check_branch
    %12 = sbr.rel (0) target = $region9
  $region8: #{swootnet_forward.28} parent=0 // pred_region
    _
  $region9: #{swootnet_forward.28} parent=0 // pred_fallthru
    _
  // Predicated region
  $region10: #{swootnet_forward.28} parent=0 // pred_check
    _
  $region11: #{swootnet_forward.28} parent=0 // pred_check_branch
    %14 = sbr.rel (0) target = $region13
  $region12: #{swootnet_forward.28} parent=0 // pred_region
    _
  $region13: #{swootnet_forward.28} parent=0 // pred_fallthru
    _
  // Predicated region
  $region14: #{swootnet_forward.28} parent=0 // pred_check
    _
  $region15: #{swootnet_forward.28} parent=0 // pred_check_branch
    %16 = sbr.rel (0) target = $region17
  $region16: #{swootnet_forward.28} parent=0 // pred_region
    _
  $region17: #{swootnet_forward.28} parent=0 // pred_fallthru
    _
  %v18 = vld [vmem:[%s0] sm:$0xff]
  %v19 = vld [vmem:[%s0 + $0x8] sm:$0xff]
  %v20 = vld [vmem:[%s0 + $0x10] sm:$0xff]
  %v21 = vld [vmem:[%s0 + $0x18] sm:$0xff]
  %v22 = vld [vmem:[%s0 + $0x20] sm:$0xff]
  %v23 = vld [vmem:[%s0 + $0x28] sm:$0xff]
  %v24 = vld [vmem:[%s0 + $0x30] sm:$0xff]
  %v25 = vld [vmem:[%s0 + $0x38] sm:$0xff]
  %v26 = vld [vmem:[%s0 + $0x40] sm:$0xff]
  %v27 = vld [vmem:[%s0 + $0x48] sm:$0xff]
  %v28 = vld [vmem:[%s0 + $0x50] sm:$0xff]
  %v29 = vld [vmem:[%s0 + $0x58] sm:$0xff]
  %v30 = vld [vmem:[%s0 + $0x60] sm:$0xff]
  %v31 = vld [vmem:[%s0 + $0x68] sm:$0xff]
  %v32 = vld [vmem:[%s0 + $0x70] sm:$0xff]
  %v33 = vld [vmem:[%s0 + $0x78] sm:$0xff]
  %v34 = vld [vmem:[%s2] sm:$0x1]
  %v36 = vlaneseq
  %v37 = vshrl.u32 %v36, 7
  %v38 = vsub.s32 0, %v37
  %v39 = vrot.slane %v34, %v38
  %v41 = vmul.f32 %v18, %v39
  %v42 = vmul.f32 %v19, %v39
  %v43 = vmul.f32 %v20, %v39
  %v44 = vmul.f32 %v21, %v39
  %v45 = vmul.f32 %v22, %v39
  %v46 = vmul.f32 %v23, %v39
  %v47 = vmul.f32 %v24, %v39
  %v48 = vmul.f32 %v25, %v39
  %v49 = vmul.f32 %v26, %v39
  %v50 = vmul.f32 %v27, %v39
  %v51 = vmul.f32 %v28, %v39
  %v52 = vmul.f32 %v29, %v39
  %v53 = vmul.f32 %v30, %v39
  %v54 = vmul.f32 %v31, %v39
  %v55 = vmul.f32 %v32, %v39
  %v56 = vmul.f32 %v33, %v39
  %v57 = vld [vmem:[%s3] sm:$0x1]
  %v59 = vlaneseq
  %v60 = vshrl.u32 %v59, 7
  %v61 = vsub.s32 0, %v60
  %v62 = vrot.slane %v57, %v61
  %v64 = vadd.f32 %v41, %v62
  %v65 = vadd.f32 %v42, %v62
  %v66 = vadd.f32 %v43, %v62
  %v67 = vadd.f32 %v44, %v62
  %v68 = vadd.f32 %v45, %v62
  %v69 = vadd.f32 %v46, %v62
  %v70 = vadd.f32 %v47, %v62
  %v71 = vadd.f32 %v48, %v62
  %v72 = vadd.f32 %v49, %v62
  %v73 = vadd.f32 %v50, %v62
  %v74 = vadd.f32 %v51, %v62
  %v75 = vadd.f32 %v52, %v62
  %v76 = vadd.f32 %v53, %v62
  %v77 = vadd.f32 %v54, %v62
  %v78 = vadd.f32 %v55, %v62
  %v79 = vadd.f32 %v56, %v62
  %v80 = vmax.f32 %v64, 0.0
  %v81 = vmax.f32 %v65, 0.0
  %v82 = vmax.f32 %v66, 0.0
  %v83 = vmax.f32 %v67, 0.0
  %v84 = vmax.f32 %v68, 0.0
  %v85 = vmax.f32 %v69, 0.0
  %v86 = vmax.f32 %v70, 0.0
  %v87 = vmax.f32 %v71, 0.0
  %v88 = vmax.f32 %v72, 0.0
  %v89 = vmax.f32 %v73, 0.0
  %v90 = vmax.f32 %v74, 0.0
  %v91 = vmax.f32 %v75, 0.0
  %v92 = vmax.f32 %v76, 0.0
  %v93 = vmax.f32 %v77, 0.0
  %v94 = vmax.f32 %v78, 0.0
  %v95 = vmax.f32 %v79, 0.0
  %v96 = vpack.c.bf16 %v81, %v80
  %v97 = vpack.c.bf16 %v83, %v82
  %v98 = vpack.c.bf16 %v85, %v84
  %v99 = vpack.c.bf16 %v87, %v86
  %v100 = vpack.c.bf16 %v89, %v88
  %v101 = vpack.c.bf16 %v91, %v90
  %v102 = vpack.c.bf16 %v93, %v92
  %v103 = vpack.c.bf16 %v95, %v94
  %v104 = vld [vmem:[%s1] sm:$0xf]
  %v105 = vld [vmem:[%s1 + $0x4] sm:$0xf]
  %v106 = vld [vmem:[%s1 + $0x8] sm:$0xf]
  %v107 = vld [vmem:[%s1 + $0xc] sm:$0xf]
  %v108 = vld [vmem:[%s1 + $0x10] sm:$0xf]
  %v109 = vld [vmem:[%s1 + $0x14] sm:$0xf]
  %v110 = vld [vmem:[%s1 + $0x18] sm:$0xf]
  %v111 = vld [vmem:[%s1 + $0x1c] sm:$0xf]
  %v112 = vld [vmem:[%s1 + $0x20] sm:$0xf]
  %v113 = vld [vmem:[%s1 + $0x24] sm:$0xf]
  %v114 = vld [vmem:[%s1 + $0x28] sm:$0xf]
  %v126 = vunpack.c.l.b16 %v104
  %v127 = vunpack.c.l.b16 %v105
  %v128 = vunpack.c.l.b16 %v106
  %v129 = vunpack.c.l.b16 %v107
  %v130 = vunpack.c.l.b16 %v108
  %v131 = vunpack.c.l.b16 %v109
  %v132 = vunpack.c.l.b16 %v110
  %v133 = vunpack.c.l.b16 %v111
  %v134 = vunpack.c.l.b16 %v112
  %v135 = vunpack.c.l.b16 %v113
  %v136 = vunpack.c.l.b16 %v114
  %v137 = vpack.c.b16 %v127, %v126
  %v138 = vpack.c.b16 %v129, %v128
  %v139 = vpack.c.b16 %v131, %v130
  %v140 = vpack.c.b16 %v133, %v132
  %v141 = vpack.c.b16 %v135, %v134
  %v142 = vpack.c.b16 %v136, %v136
  %vm148 = vcmask 719872
  %v150 = vsel %vm148, %v96, 0
  %v153 = vsel %vm148, %v97, 0
  %v156 = vsel %vm148, %v98, 0
  %v159 = vsel %vm148, %v99, 0
  %v162 = vsel %vm148, %v100, 0
  %v165 = vsel %vm148, %v101, 0
  %v168 = vsel %vm148, %v102, 0
  %v171 = vsel %vm148, %v103, 0
  %vm173 = vcmask 1043456
  %v175 = vsel %vm173, %v142, 0
  %177 = vmatprep.subr.bf16.mxu0 0
  %178 = vmatpush1.bf16.msra.mxu0 %v137
  %179 = vmatprep.subr.bf16.mxu0 0
  %180 = vmatpush1.bf16.msra.mxu0 %v138
  %181 = vmatprep.subr.bf16.mxu0 0
  %182 = vmatpush1.bf16.msra.mxu0 %v139
  %183 = vmatprep.subr.bf16.mxu0 0
  %184 = vmatpush1.bf16.msra.mxu0 %v140
  %185 = vmatprep.subr.bf16.mxu0 0
  %186 = vmatpush1.bf16.msra.mxu0 %v141
  %187 = vmatprep.subr.bf16.mxu0 0
  %188 = vmatpush1.bf16.msra.mxu0 %v175
  %189 = vmatprep.subr.bf16.mxu0 0
  %190 = vmatpush1.bf16.msra.mxu0 0
  %191 = vmatprep.subr.bf16.mxu0 0
  %192 = vmatpush1.bf16.msra.mxu0 0
  %193 = vmatprep.subr.bf16.mxu0 0
  %194 = vmatpush1.bf16.msra.mxu0 0
  %195 = vmatprep.subr.bf16.mxu0 0
  %196 = vmatpush1.bf16.msra.mxu0 0
  %197 = vmatprep.subr.bf16.mxu0 0
  %198 = vmatpush1.bf16.msra.mxu0 0
  %199 = vmatprep.subr.bf16.mxu0 0
  %200 = vmatpush1.bf16.msra.mxu0 0
  %201 = vmatprep.subr.bf16.mxu0 0
  %202 = vmatpush1.bf16.msra.mxu0 0
  %203 = vmatprep.subr.bf16.mxu0 0
  %204 = vmatpush1.bf16.msra.mxu0 0
  %205 = vmatprep.subr.bf16.mxu0 0
  %206 = vmatpush1.bf16.msra.mxu0 0
  %207 = vmatprep.subr.bf16.mxu0 0
  %208 = vmatpush1.bf16.msra.mxu0 0
  %209 = vmatprep.mubr.bf16.mxu0 0
  %210 = vmatmul.mubr.bf16.gmra.mrb[0].mxu0 %v150
  %v211 = vpop.f32.mrb[0].mxu0
  %v212 = vadd.f32 0.0, %v211
  %v213 = vpop.f32.mrb[0].mxu0
  %v214 = vpop.f32.mrb[0].mxu0
  %v215 = vadd.f32 0.0, %v214
  %v216 = vpop.f32.mrb[0].mxu0
  %217 = vmatprep.mubr.bf16.mxu0 0
  %218 = vmatmul.mubr.bf16.gmra.mrb[0].mxu0 %v153
  %v219 = vpop.f32.mrb[0].mxu0
  %v220 = vadd.f32 0.0, %v219
  %v221 = vpop.f32.mrb[0].mxu0
  %v222 = vpop.f32.mrb[0].mxu0
  %v223 = vadd.f32 0.0, %v222
  %v224 = vpop.f32.mrb[0].mxu0
  %225 = vmatprep.mubr.bf16.mxu0 0
  %226 = vmatmul.mubr.bf16.gmra.mrb[0].mxu0 %v156
  %v227 = vpop.f32.mrb[0].mxu0
  %v228 = vadd.f32 0.0, %v227
  %v229 = vpop.f32.mrb[0].mxu0
  %v230 = vpop.f32.mrb[0].mxu0
  %v231 = vadd.f32 0.0, %v230
  %v232 = vpop.f32.mrb[0].mxu0
  %233 = vmatprep.mubr.bf16.mxu0 0
  %234 = vmatmul.mubr.bf16.gmra.mrb[0].mxu0 %v159
  %v235 = vpop.f32.mrb[0].mxu0
  %v236 = vadd.f32 0.0, %v235
  %v237 = vpop.f32.mrb[0].mxu0
  %v238 = vpop.f32.mrb[0].mxu0
  %v239 = vadd.f32 0.0, %v238
  %v240 = vpop.f32.mrb[0].mxu0
  %241 = vmatprep.mubr.bf16.mxu0 0
  %242 = vmatmul.mubr.bf16.gmra.mrb[0].mxu0 %v162
  %v243 = vpop.f32.mrb[0].mxu0
  %v244 = vadd.f32 0.0, %v243
  %v245 = vpop.f32.mrb[0].mxu0
  %v246 = vpop.f32.mrb[0].mxu0
  %v247 = vadd.f32 0.0, %v246
  %v248 = vpop.f32.mrb[0].mxu0
  %249 = vmatprep.mubr.bf16.mxu0 0
  %250 = vmatmul.mubr.bf16.gmra.mrb[0].mxu0 %v165
  %v251 = vpop.f32.mrb[0].mxu0
  %v252 = vadd.f32 0.0, %v251
  %v253 = vpop.f32.mrb[0].mxu0
  %v254 = vpop.f32.mrb[0].mxu0
  %v255 = vadd.f32 0.0, %v254
  %v256 = vpop.f32.mrb[0].mxu0
  %257 = vmatprep.mubr.bf16.mxu0 0
  %258 = vmatmul.mubr.bf16.gmra.mrb[0].mxu0 %v168
  %v259 = vpop.f32.mrb[0].mxu0
  %v260 = vadd.f32 0.0, %v259
  %v261 = vpop.f32.mrb[0].mxu0
  %v262 = vpop.f32.mrb[0].mxu0
  %v263 = vadd.f32 0.0, %v262
  %v264 = vpop.f32.mrb[0].mxu0
  %265 = vmatprep.mubr.bf16.mxu0 0
  %266 = vmatmul.mubr.bf16.gmra.mrb[0].mxu0 %v171
  %v267 = vpop.f32.mrb[0].mxu0
  %v268 = vadd.f32 0.0, %v267
  %v269 = vpop.f32.mrb[0].mxu0
  %v270 = vpop.f32.mrb[0].mxu0
  %v271 = vadd.f32 0.0, %v270
  %v272 = vpop.f32.mrb[0].mxu0
  %273 = vdwg.mxu0
  %vm274 = vcmask 359424
  %275 = vst.msk [vmem:[%s4] sm:$0xff] %vm274, %v212
  %276 = vst.msk [vmem:[%s4 + $0x8] sm:$0xff] %vm274, %v215
  %277 = vst.msk [vmem:[%s4 + $0x10] sm:$0xff] %vm274, %v220
  %278 = vst.msk [vmem:[%s4 + $0x18] sm:$0xff] %vm274, %v223
  %279 = vst.msk [vmem:[%s4 + $0x20] sm:$0xff] %vm274, %v228
  %280 = vst.msk [vmem:[%s4 + $0x28] sm:$0xff] %vm274, %v231
  %281 = vst.msk [vmem:[%s4 + $0x30] sm:$0xff] %vm274, %v236
  %282 = vst.msk [vmem:[%s4 + $0x38] sm:$0xff] %vm274, %v239
  %283 = vst.msk [vmem:[%s4 + $0x40] sm:$0xff] %vm274, %v244
  %284 = vst.msk [vmem:[%s4 + $0x48] sm:$0xff] %vm274, %v247
  %285 = vst.msk [vmem:[%s4 + $0x50] sm:$0xff] %vm274, %v252
  %286 = vst.msk [vmem:[%s4 + $0x58] sm:$0xff] %vm274, %v255
  %287 = vst.msk [vmem:[%s4 + $0x60] sm:$0xff] %vm274, %v260
  %288 = vst.msk [vmem:[%s4 + $0x68] sm:$0xff] %vm274, %v263
  %289 = vst.msk [vmem:[%s4 + $0x70] sm:$0xff] %vm274, %v268
  %290 = vst.msk [vmem:[%s4 + $0x78] sm:$0xff] %vm274, %v271
  // Predicated region
  $region18: #{swootnet_forward.28} parent=0 // pred_check
    _
  $region19: #{swootnet_forward.28} parent=0 // pred_check_branch
    %292 = sbr.rel (0) target = $region21
  $region20: #{swootnet_forward.28} parent=0 // pred_region
    _
  $region21: #{swootnet_forward.28} parent=0 // pred_fallthru
    _
  // Predicated region
  $region22: #{swootnet_forward.28} parent=0 // pred_check
    _
  $region23: #{swootnet_forward.28} parent=0 // pred_check_branch
    %294 = sbr.rel (0) target = $region25
  $region24: #{swootnet_forward.28} parent=0 // pred_region
    _
  $region25: #{swootnet_forward.28} parent=0 // pred_fallthru
    _

// kernel: swootnet_forward.27
$region0: #{swootnet_forward.27}
  #allocation0 [shape = 'u32[]', space=smem, size = 0x4, offset = 0x4, fixed_abs, tag = 'smem constant byte address 0x4 - core index']
  #allocation1 [shape = 'u32[144,128]{1,0:T(1,128)}', space=vmem, size = 0x12000, scoped, tag = 'internal scratch']
  %s0 = inlined_call_operand.vmem [shape: f32[32,352], index: 0, kind: input, shape index: {}]
  %s1 = inlined_call_operand.vmem [shape: bf16[352,48], index: 1, kind: input, shape index: {}]
  %s2 = inlined_call_operand.vmem [shape: f32[1,352], index: 2, kind: input, shape index: {}]
  %s3 = inlined_call_operand.vmem [shape: f32[1,352], index: 3, kind: input, shape index: {}]
  %s4 = inlined_call_operand.vmem [shape: f32[32,48], index: 4, kind: output, shape index: {}]
  %s5 = sld [smem:[#allocation0]]
  $region26: #{swootnet_forward.27} parent=0
    _
  %s7 = ssub.s32 1, %s5
  %s8 = scalar_select 0, %s7, %s5
  // Predicated region
  $region2: #{swootnet_forward.27} parent=0 // pred_check
    _
  $region3: #{swootnet_forward.27} parent=0 // pred_check_branch
    %10 = sbr.rel (0) target = $region5
  $region4: #{swootnet_forward.27} parent=0 // pred_region
    _
  $region5: #{swootnet_forward.27} parent=0 // pred_fallthru
    _
  // Predicated region
  $region6: #{swootnet_forward.27} parent=0 // pred_check
    _
  $region7: #{swootnet_forward.27} parent=0 // pred_check_branch
    %12 = sbr.rel (0) target = $region9
  $region8: #{swootnet_forward.27} parent=0 // pred_region
    _
  $region9: #{swootnet_forward.27} parent=0 // pred_fallthru
    _
  // Predicated region
  $region10: #{swootnet_forward.27} parent=0 // pred_check
    _
  $region11: #{swootnet_forward.27} parent=0 // pred_check_branch
    %14 = sbr.rel (0) target = $region13
  $region12: #{swootnet_forward.27} parent=0 // pred_region
    _
  $region13: #{swootnet_forward.27} parent=0 // pred_fallthru
    _
  // Predicated region
  $region14: #{swootnet_forward.27} parent=0 // pred_check
    _
  $region15: #{swootnet_forward.27} parent=0 // pred_check_branch
    %16 = sbr.rel (0) target = $region17
  $region16: #{swootnet_forward.27} parent=0 // pred_region
    _
  $region17: #{swootnet_forward.27} parent=0 // pred_fallthru
    _
  %v18 = vld [vmem:[%s0] sm:$0xff]
  %v19 = vld [vmem:[%s0 + $0x8] sm:$0xff]
  %v20 = vld [vmem:[%s0 + $0x10] sm:$0xff]
  %v21 = vld [vmem:[%s0 + $0x18] sm:$0xff]
  %v22 = vld [vmem:[%s0 + $0x20] sm:$0xff]
  %v23 = vld [vmem:[%s0 + $0x28] sm:$0xff]
  %v24 = vld [vmem:[%s0 + $0x30] sm:$0xff]
  %v25 = vld [vmem:[%s0 + $0x38] sm:$0xff]
  %v26 = vld [vmem:[%s0 + $0x40] sm:$0xff]
  %v27 = vld [vmem:[%s0 + $0x48] sm:$0xff]
  %v28 = vld [vmem:[%s0 + $0x50] sm:$0xff]
  %v29 = vld [vmem:[%s0 + $0x58] sm:$0xff]
  %v30 = vld [vmem:[%s2] sm:$0x7]
  %v32 = vlaneseq
  %v33 = vshrl.u32 %v32, 7
  %v34 = vsub.s32 0, %v33
  %v35 = vrot.slane %v30, %v34
  %v36 = vlaneseq
  %v37 = vshrl.u32 %v36, 7
  %v38 = vsub.s32 1, %v37
  %v39 = vrot.slane %v30, %v38
  %v40 = vlaneseq
  %v41 = vshrl.u32 %v40, 7
  %v42 = vsub.s32 2, %v41
  %v43 = vrot.slane %v30, %v42
  %v47 = vmul.f32 %v18, %v35
  %v48 = vmul.f32 %v19, %v39
  %v49 = vmul.f32 %v20, %v43
  %v50 = vmul.f32 %v21, %v35
  %v51 = vmul.f32 %v22, %v39
  %v52 = vmul.f32 %v23, %v43
  %v53 = vmul.f32 %v24, %v35
  %v54 = vmul.f32 %v25, %v39
  %v55 = vmul.f32 %v26, %v43
  %v56 = vmul.f32 %v27, %v35
  %v57 = vmul.f32 %v28, %v39
  %v58 = vmul.f32 %v29, %v43
  %v59 = vld [vmem:[%s3] sm:$0x7]
  %v61 = vlaneseq
  %v62 = vshrl.u32 %v61, 7
  %v63 = vsub.s32 0, %v62
  %v64 = vrot.slane %v59, %v63
  %v65 = vlaneseq
  %v66 = vshrl.u32 %v65, 7
  %v67 = vsub.s32 1, %v66
  %v68 = vrot.slane %v59, %v67
  %v69 = vlaneseq
  %v70 = vshrl.u32 %v69, 7
  %v71 = vsub.s32 2, %v70
  %v72 = vrot.slane %v59, %v71
  %v76 = vadd.f32 %v47, %v64
  %v77 = vadd.f32 %v48, %v68
  %v78 = vadd.f32 %v49, %v72
  %v79 = vadd.f32 %v50, %v64
  %v80 = vadd.f32 %v51, %v68
  %v81 = vadd.f32 %v52, %v72
  %v82 = vadd.f32 %v53, %v64
  %v83 = vadd.f32 %v54, %v68
  %v84 = vadd.f32 %v55, %v72
  %v85 = vadd.f32 %v56, %v64
  %v86 = vadd.f32 %v57, %v68
  %v87 = vadd.f32 %v58, %v72
  %v88 = vmax.f32 %v76, 0.0
  %v89 = vmax.f32 %v77, 0.0
  %v90 = vmax.f32 %v78, 0.0
  %v91 = vmax.f32 %v79, 0.0
  %v92 = vmax.f32 %v80, 0.0
  %v93 = vmax.f32 %v81, 0.0
  %v94 = vmax.f32 %v82, 0.0
  %v95 = vmax.f32 %v83, 0.0
  %v96 = vmax.f32 %v84, 0.0
  %v97 = vmax.f32 %v85, 0.0
  %v98 = vmax.f32 %v86, 0.0
  %v99 = vmax.f32 %v87, 0.0
  %v100 = vpack.c.bf16 %v91, %v88
  %v101 = vpack.c.bf16 %v92, %v89
  %v102 = vpack.c.bf16 %v93, %v90
  %v103 = vpack.c.bf16 %v97, %v94
  %v104 = vpack.c.bf16 %v98, %v95
  %v105 = vpack.c.bf16 %v99, %v96
  %v106 = vld [vmem:[%s1] sm:$0xf]
  %v107 = vld [vmem:[%s1 + $0x4] sm:$0xf]
  %v108 = vld [vmem:[%s1 + $0x8] sm:$0xf]
  %v109 = vld [vmem:[%s1 + $0xc] sm:$0xf]
  %v110 = vld [vmem:[%s1 + $0x10] sm:$0xf]
  %v111 = vld [vmem:[%s1 + $0x14] sm:$0xf]
  %v112 = vld [vmem:[%s1 + $0x18] sm:$0xf]
  %v113 = vld [vmem:[%s1 + $0x1c] sm:$0xf]
  %v114 = vld [vmem:[%s1 + $0x20] sm:$0xf]
  %v115 = vld [vmem:[%s1 + $0x24] sm:$0xf]
  %v116 = vld [vmem:[%s1 + $0x28] sm:$0xf]
  %v117 = vld [vmem:[%s1 + $0x2c] sm:$0xf]
  %v118 = vld [vmem:[%s1 + $0x30] sm:$0xf]
  %v119 = vld [vmem:[%s1 + $0x34] sm:$0xf]
  %v120 = vld [vmem:[%s1 + $0x38] sm:$0xf]
  %v121 = vld [vmem:[%s1 + $0x3c] sm:$0xf]
  %v122 = vld [vmem:[%s1 + $0x40] sm:$0xf]
  %v123 = vld [vmem:[%s1 + $0x44] sm:$0xf]
  %v124 = vld [vmem:[%s1 + $0x48] sm:$0xf]
  %v125 = vld [vmem:[%s1 + $0x4c] sm:$0xf]
  %v126 = vld [vmem:[%s1 + $0x50] sm:$0xf]
  %v127 = vld [vmem:[%s1 + $0x54] sm:$0xf]
  %v128 = vld [vmem:[%s1 + $0x58] sm:$0xf]
  %v129 = vld [vmem:[%s1 + $0x5c] sm:$0xf]
  %v130 = vld [vmem:[%s1 + $0x60] sm:$0xf]
  %v131 = vld [vmem:[%s1 + $0x64] sm:$0xf]
  %v132 = vld [vmem:[%s1 + $0x68] sm:$0xf]
  %v133 = vld [vmem:[%s1 + $0x6c] sm:$0xf]
  %v134 = vld [vmem:[%s1 + $0x70] sm:$0xf]
  %v135 = vld [vmem:[%s1 + $0x74] sm:$0xf]
  %v136 = vld [vmem:[%s1 + $0x78] sm:$0xf]
  %v137 = vld [vmem:[%s1 + $0x7c] sm:$0xf]
  %v138 = vld [vmem:[%s1 + $0x80] sm:$0xf]
  %v139 = vld [vmem:[%s1 + $0x84] sm:$0xf]
  %v140 = vld [vmem:[%s1 + $0x88] sm:$0xf]
  %v141 = vld [vmem:[%s1 + $0x8c] sm:$0xf]
  %v142 = vld [vmem:[%s1 + $0x90] sm:$0xf]
  %v143 = vld [vmem:[%s1 + $0x94] sm:$0xf]
  %v144 = vld [vmem:[%s1 + $0x98] sm:$0xf]
  %v145 = vld [vmem:[%s1 + $0x9c] sm:$0xf]
  %v146 = vld [vmem:[%s1 + $0xa0] sm:$0xf]
  %v147 = vld [vmem:[%s1 + $0xa4] sm:$0xf]
  %v148 = vld [vmem:[%s1 + $0xa8] sm:$0xf]
  %v149 = vld [vmem:[%s1 + $0xac] sm:$0xf]
  %v194 = vunpack.c.l.b16 %v106
  %v195 = vunpack.c.l.b16 %v107
  %v196 = vunpack.c.l.b16 %v108
  %v197 = vunpack.c.l.b16 %v109
  %v198 = vunpack.c.l.b16 %v110
  %v199 = vunpack.c.l.b16 %v111
  %v200 = vunpack.c.l.b16 %v112
  %v201 = vunpack.c.l.b16 %v113
  %v202 = vunpack.c.l.b16 %v114
  %v203 = vunpack.c.l.b16 %v115
  %v204 = vunpack.c.l.b16 %v116
  %v205 = vunpack.c.l.b16 %v117
  %v206 = vunpack.c.l.b16 %v118
  %v207 = vunpack.c.l.b16 %v119
  %v208 = vunpack.c.l.b16 %v120
  %v209 = vunpack.c.l.b16 %v121
  %v210 = vunpack.c.l.b16 %v122
  %v211 = vunpack.c.l.b16 %v123
  %v212 = vunpack.c.l.b16 %v124
  %v213 = vunpack.c.l.b16 %v125
  %v214 = vunpack.c.l.b16 %v126
  %v215 = vunpack.c.l.b16 %v127
  %v216 = vunpack.c.l.b16 %v128
  %v217 = vunpack.c.l.b16 %v129
  %v218 = vunpack.c.l.b16 %v130
  %v219 = vunpack.c.l.b16 %v131
  %v220 = vunpack.c.l.b16 %v132
  %v221 = vunpack.c.l.b16 %v133
  %v222 = vunpack.c.l.b16 %v134
  %v223 = vunpack.c.l.b16 %v135
  %v224 = vunpack.c.l.b16 %v136
  %v225 = vunpack.c.l.b16 %v137
  %v226 = vunpack.c.l.b16 %v138
  %v227 = vunpack.c.l.b16 %v139
  %v228 = vunpack.c.l.b16 %v140
  %v229 = vunpack.c.l.b16 %v141
  %v230 = vunpack.c.l.b16 %v142
  %v231 = vunpack.c.l.b16 %v143
  %v232 = vunpack.c.l.b16 %v144
  %v233 = vunpack.c.l.b16 %v145
  %v234 = vunpack.c.l.b16 %v146
  %v235 = vunpack.c.l.b16 %v147
  %v236 = vunpack.c.l.b16 %v148
  %v237 = vunpack.c.l.b16 %v149
  %v238 = vpack.c.b16 %v195, %v194
  %v239 = vpack.c.b16 %v197, %v196
  %v240 = vpack.c.b16 %v199, %v198
  %v241 = vpack.c.b16 %v201, %v200
  %v242 = vpack.c.b16 %v203, %v202
  %v243 = vpack.c.b16 %v205, %v204
  %v244 = vpack.c.b16 %v207, %v206
  %v245 = vpack.c.b16 %v209, %v208
  %v246 = vpack.c.b16 %v211, %v210
  %v247 = vpack.c.b16 %v213, %v212
  %v248 = vpack.c.b16 %v215, %v214
  %v249 = vpack.c.b16 %v217, %v216
  %v250 = vpack.c.b16 %v219, %v218
  %v251 = vpack.c.b16 %v221, %v220
  %v252 = vpack.c.b16 %v223, %v222
  %v253 = vpack.c.b16 %v225, %v224
  %v254 = vpack.c.b16 %v227, %v226
  %v255 = vpack.c.b16 %v229, %v228
  %v256 = vpack.c.b16 %v231, %v230
  %v257 = vpack.c.b16 %v233, %v232
  %v258 = vpack.c.b16 %v235, %v234
  %v259 = vpack.c.b16 %v237, %v236
  %vm282 = vcmask 785408
  %v284 = vsel %vm282, %v102, 0
  %v287 = vsel %vm282, %v105, 0
  %289 = vmatprep.subr.bf16.mxu0 0
  %290 = vmatpush1.bf16.msra.mxu0 %v238
  %291 = vmatprep.subr.bf16.mxu0 0
  %292 = vmatpush1.bf16.msra.mxu0 %v239
  %293 = vmatprep.subr.bf16.mxu0 0
  %294 = vmatpush1.bf16.msra.mxu0 %v240
  %295 = vmatprep.subr.bf16.mxu0 0
  %296 = vmatpush1.bf16.msra.mxu0 %v241
  %297 = vmatprep.subr.bf16.mxu0 0
  %298 = vmatpush1.bf16.msra.mxu0 %v242
  %299 = vmatprep.subr.bf16.mxu0 0
  %300 = vmatpush1.bf16.msra.mxu0 %v243
  %301 = vmatprep.subr.bf16.mxu0 0
  %302 = vmatpush1.bf16.msra.mxu0 %v244
  %303 = vmatprep.subr.bf16.mxu0 0
  %304 = vmatpush1.bf16.msra.mxu0 %v245
  %305 = vmatprep.subr.bf16.mxu0 0
  %306 = vmatpush1.bf16.msra.mxu0 %v246
  %307 = vmatprep.subr.bf16.mxu0 0
  %308 = vmatpush1.bf16.msra.mxu0 %v247
  %309 = vmatprep.subr.bf16.mxu0 0
  %310 = vmatpush1.bf16.msra.mxu0 %v248
  %311 = vmatprep.subr.bf16.mxu0 0
  %312 = vmatpush1.bf16.msra.mxu0 %v249
  %313 = vmatprep.subr.bf16.mxu0 0
  %314 = vmatpush1.bf16.msra.mxu0 %v250
  %315 = vmatprep.subr.bf16.mxu0 0
  %316 = vmatpush1.bf16.msra.mxu0 %v251
  %317 = vmatprep.subr.bf16.mxu0 0
  %318 = vmatpush1.bf16.msra.mxu0 %v252
  %319 = vmatprep.subr.bf16.mxu0 0
  %320 = vmatpush1.bf16.msra.mxu0 %v253
  %321 = vmatprep.mubr.bf16.mxu0 %v101
  %322 = vmatmul.mubr.bf16.gmra.mrb[0].mxu0 %v100
  %v323 = vpop.f32.mrb[0].mxu0
  %v324 = vadd.f32 0.0, %v323
  %v325 = vpop.f32.mrb[0].mxu0
  %v326 = vpop.f32.mrb[0].mxu0
  %v327 = vadd.f32 0.0, %v326
  %v328 = vpop.f32.mrb[0].mxu0
  %329 = vmatprep.mubr.bf16.mxu0 %v104
  %330 = vmatmul.mubr.bf16.gmra.mrb[0].mxu0 %v103
  %v331 = vpop.f32.mrb[0].mxu0
  %v332 = vadd.f32 0.0, %v331
  %v333 = vpop.f32.mrb[0].mxu0
  %v334 = vpop.f32.mrb[0].mxu0
  %v335 = vadd.f32 0.0, %v334
  %v336 = vpop.f32.mrb[0].mxu0
  %337 = vdwg.mxu0
  %338 = vmatprep.subr.bf16.mxu0 0
  %339 = vmatpush1.bf16.msra.mxu0 %v254
  %340 = vmatprep.subr.bf16.mxu0 0
  %341 = vmatpush1.bf16.msra.mxu0 %v255
  %342 = vmatprep.subr.bf16.mxu0 0
  %343 = vmatpush1.bf16.msra.mxu0 %v256
  %344 = vmatprep.subr.bf16.mxu0 0
  %345 = vmatpush1.bf16.msra.mxu0 %v257
  %346 = vmatprep.subr.bf16.mxu0 0
  %347 = vmatpush1.bf16.msra.mxu0 %v258
  %348 = vmatprep.subr.bf16.mxu0 0
  %349 = vmatpush1.bf16.msra.mxu0 %v259
  %350 = vmatprep.subr.bf16.mxu0 0
  %351 = vmatpush1.bf16.msra.mxu0 0
  %352 = vmatprep.subr.bf16.mxu0 0
  %353 = vmatpush1.bf16.msra.mxu0 0
  %354 = vmatprep.subr.bf16.mxu0 0
  %355 = vmatpush1.bf16.msra.mxu0 0
  %356 = vmatprep.subr.bf16.mxu0 0
  %357 = vmatpush1.bf16.msra.mxu0 0
  %358 = vmatprep.subr.bf16.mxu0 0
  %359 = vmatpush1.bf16.msra.mxu0 0
  %360 = vmatprep.subr.bf16.mxu0 0
  %361 = vmatpush1.bf16.msra.mxu0 0
  %362 = vmatprep.subr.bf16.mxu0 0
  %363 = vmatpush1.bf16.msra.mxu0 0
  %364 = vmatprep.subr.bf16.mxu0 0
  %365 = vmatpush1.bf16.msra.mxu0 0
  %366 = vmatprep.subr.bf16.mxu0 0
  %367 = vmatpush1.bf16.msra.mxu0 0
  %368 = vmatprep.subr.bf16.mxu0 0
  %369 = vmatpush1.bf16.msra.mxu0 0
  %370 = vmatprep.mubr.bf16.mxu0 0
  %371 = vmatmul.mubr.bf16.gmra.mrb[0].mxu0 %v284
  %v372 = vpop.f32.mrb[0].mxu0
  %v373 = vadd.f32 %v324, %v372
  %v374 = vpop.f32.mrb[0].mxu0
  %v375 = vpop.f32.mrb[0].mxu0
  %v376 = vadd.f32 %v327, %v375
  %v377 = vpop.f32.mrb[0].mxu0
  %378 = vmatprep.mubr.bf16.mxu0 0
  %379 = vmatmul.mubr.bf16.gmra.mrb[0].mxu0 %v287
  %v380 = vpop.f32.mrb[0].mxu0
  %v381 = vadd.f32 %v332, %v380
  %v382 = vpop.f32.mrb[0].mxu0
  %v383 = vpop.f32.mrb[0].mxu0
  %v384 = vadd.f32 %v335, %v383
  %v385 = vpop.f32.mrb[0].mxu0
  %386 = vdwg.mxu0
  %vm387 = vcmask 392192
  %388 = vst.msk [vmem:[%s4] sm:$0xff] %vm387, %v373
  %389 = vst.msk [vmem:[%s4 + $0x8] sm:$0xff] %vm387, %v376
  %390 = vst.msk [vmem:[%s4 + $0x10] sm:$0xff] %vm387, %v381
  %391 = vst.msk [vmem:[%s4 + $0x18] sm:$0xff] %vm387, %v384
  // Predicated region
  $region18: #{swootnet_forward.27} parent=0 // pred_check
    _
  $region19: #{swootnet_forward.27} parent=0 // pred_check_branch
    %393 = sbr.rel (0) target = $region21
  $region20: #{swootnet_forward.27} parent=0 // pred_region
    _
  $region21: #{swootnet_forward.27} parent=0 // pred_fallthru
    _
  // Predicated region
  $region22: #{swootnet_forward.27} parent=0 // pred_check
    _
  $region23: #{swootnet_forward.27} parent=0 // pred_check_branch
    %395 = sbr.rel (0) target = $region25
  $region24: #{swootnet_forward.27} parent=0 // pred_region
    _
  $region25: #{swootnet_forward.27} parent=0 // pred_fallthru
    _

// kernel: swootnet_forward.29
$region0: #{swootnet_forward.29}
  #allocation0 [shape = 'u32[]', space=smem, size = 0x4, offset = 0x4, fixed_abs, tag = 'smem constant byte address 0x4 - core index']
  #allocation1 [shape = 'u32[144,128]{1,0:T(1,128)}', space=vmem, size = 0x12000, scoped, tag = 'internal scratch']
  %s0 = inlined_call_operand.vmem [shape: f32[32,88], index: 0, kind: input, shape index: {}]
  %s1 = inlined_call_operand.vmem [shape: bf16[88,44], index: 1, kind: input, shape index: {}]
  %s2 = inlined_call_operand.vmem [shape: f32[1,88], index: 2, kind: input, shape index: {}]
  %s3 = inlined_call_operand.vmem [shape: f32[1,88], index: 3, kind: input, shape index: {}]
  %s4 = inlined_call_operand.vmem [shape: f32[32,44], index: 4, kind: output, shape index: {}]
  %s5 = sld [smem:[#allocation0]]
  $region26: #{swootnet_forward.29} parent=0
    _
  %s7 = ssub.s32 1, %s5
  %s8 = scalar_select 0, %s7, %s5
  // Predicated region
  $region2: #{swootnet_forward.29} parent=0 // pred_check
    _
  $region3: #{swootnet_forward.29} parent=0 // pred_check_branch
    %10 = sbr.rel (0) target = $region5
  $region4: #{swootnet_forward.29} parent=0 // pred_region
    _
  $region5: #{swootnet_forward.29} parent=0 // pred_fallthru
    _
  // Predicated region
  $region6: #{swootnet_forward.29} parent=0 // pred_check
    _
  $region7: #{swootnet_forward.29} parent=0 // pred_check_branch
    %12 = sbr.rel (0) target = $region9
  $region8: #{swootnet_forward.29} parent=0 // pred_region
    _
  $region9: #{swootnet_forward.29} parent=0 // pred_fallthru
    _
  // Predicated region
  $region10: #{swootnet_forward.29} parent=0 // pred_check
    _
  $region11: #{swootnet_forward.29} parent=0 // pred_check_branch
    %14 = sbr.rel (0) target = $region13
  $region12: #{swootnet_forward.29} parent=0 // pred_region
    _
  $region13: #{swootnet_forward.29} parent=0 // pred_fallthru
    _
  // Predicated region
  $region14: #{swootnet_forward.29} parent=0 // pred_check
    _
  $region15: #{swootnet_forward.29} parent=0 // pred_check_branch
    %16 = sbr.rel (0) target = $region17
  $region16: #{swootnet_forward.29} parent=0 // pred_region
    _
  $region17: #{swootnet_forward.29} parent=0 // pred_fallthru
    _
  %v18 = vld [vmem:[%s0] sm:$0xff]
  %v19 = vld [vmem:[%s0 + $0x8] sm:$0xff]
  %v20 = vld [vmem:[%s0 + $0x10] sm:$0xff]
  %v21 = vld [vmem:[%s0 + $0x18] sm:$0xff]
  %v22 = vld [vmem:[%s2] sm:$0x1]
  %v24 = vlaneseq
  %v25 = vshrl.u32 %v24, 7
  %v26 = vsub.s32 0, %v25
  %v27 = vrot.slane %v22, %v26
  %v29 = vmul.f32 %v18, %v27
  %v30 = vmul.f32 %v19, %v27
  %v31 = vmul.f32 %v20, %v27
  %v32 = vmul.f32 %v21, %v27
  %v33 = vld [vmem:[%s3] sm:$0x1]
  %v35 = vlaneseq
  %v36 = vshrl.u32 %v35, 7
  %v37 = vsub.s32 0, %v36
  %v38 = vrot.slane %v33, %v37
  %v40 = vadd.f32 %v29, %v38
  %v41 = vadd.f32 %v30, %v38
  %v42 = vadd.f32 %v31, %v38
  %v43 = vadd.f32 %v32, %v38
  %v44 = vmax.f32 %v40, 0.0
  %v45 = vmax.f32 %v41, 0.0
  %v46 = vmax.f32 %v42, 0.0
  %v47 = vmax.f32 %v43, 0.0
  %v48 = vpack.c.bf16 %v45, %v44
  %v49 = vpack.c.bf16 %v47, %v46
  %v50 = vld [vmem:[%s1] sm:$0xf]
  %v51 = vld [vmem:[%s1 + $0x4] sm:$0xf]
  %v52 = vld [vmem:[%s1 + $0x8] sm:$0xf]
  %v53 = vld [vmem:[%s1 + $0xc] sm:$0xf]
  %v54 = vld [vmem:[%s1 + $0x10] sm:$0xf]
  %v55 = vld [vmem:[%s1 + $0x14] sm:$0xf]
  %v56 = vld [vmem:[%s1 + $0x18] sm:$0xf]
  %v57 = vld [vmem:[%s1 + $0x1c] sm:$0xf]
  %v58 = vld [vmem:[%s1 + $0x20] sm:$0xf]
  %v59 = vld [vmem:[%s1 + $0x24] sm:$0xf]
  %v60 = vld [vmem:[%s1 + $0x28] sm:$0xf]
  %v72 = vunpack.c.l.b16 %v50
  %v73 = vunpack.c.l.b16 %v51
  %v74 = vunpack.c.l.b16 %v52
  %v75 = vunpack.c.l.b16 %v53
  %v76 = vunpack.c.l.b16 %v54
  %v77 = vunpack.c.l.b16 %v55
  %v78 = vunpack.c.l.b16 %v56
  %v79 = vunpack.c.l.b16 %v57
  %v80 = vunpack.c.l.b16 %v58
  %v81 = vunpack.c.l.b16 %v59
  %v82 = vunpack.c.l.b16 %v60
  %v83 = vpack.c.b16 %v73, %v72
  %v84 = vpack.c.b16 %v75, %v74
  %v85 = vpack.c.b16 %v77, %v76
  %v86 = vpack.c.b16 %v79, %v78
  %v87 = vpack.c.b16 %v81, %v80
  %v88 = vpack.c.b16 %v82, %v82
  %vm94 = vcmask 719872
  %v96 = vsel %vm94, %v48, 0
  %v99 = vsel %vm94, %v49, 0
  %vm101 = vcmask 1043456
  %v103 = vsel %vm101, %v88, 0
  %105 = vmatprep.subr.bf16.mxu0 0
  %106 = vmatpush1.bf16.msra.mxu0 %v83
  %107 = vmatprep.subr.bf16.mxu0 0
  %108 = vmatpush1.bf16.msra.mxu0 %v84
  %109 = vmatprep.subr.bf16.mxu0 0
  %110 = vmatpush1.bf16.msra.mxu0 %v85
  %111 = vmatprep.subr.bf16.mxu0 0
  %112 = vmatpush1.bf16.msra.mxu0 %v86
  %113 = vmatprep.subr.bf16.mxu0 0
  %114 = vmatpush1.bf16.msra.mxu0 %v87
  %115 = vmatprep.subr.bf16.mxu0 0
  %116 = vmatpush1.bf16.msra.mxu0 %v103
  %117 = vmatprep.subr.bf16.mxu0 0
  %118 = vmatpush1.bf16.msra.mxu0 0
  %119 = vmatprep.subr.bf16.mxu0 0
  %120 = vmatpush1.bf16.msra.mxu0 0
  %121 = vmatprep.subr.bf16.mxu0 0
  %122 = vmatpush1.bf16.msra.mxu0 0
  %123 = vmatprep.subr.bf16.mxu0 0
  %124 = vmatpush1.bf16.msra.mxu0 0
  %125 = vmatprep.subr.bf16.mxu0 0
  %126 = vmatpush1.bf16.msra.mxu0 0
  %127 = vmatprep.subr.bf16.mxu0 0
  %128 = vmatpush1.bf16.msra.mxu0 0
  %129 = vmatprep.subr.bf16.mxu0 0
  %130 = vmatpush1.bf16.msra.mxu0 0
  %131 = vmatprep.subr.bf16.mxu0 0
  %132 = vmatpush1.bf16.msra.mxu0 0
  %133 = vmatprep.subr.bf16.mxu0 0
  %134 = vmatpush1.bf16.msra.mxu0 0
  %135 = vmatprep.subr.bf16.mxu0 0
  %136 = vmatpush1.bf16.msra.mxu0 0
  %137 = vmatprep.mubr.bf16.mxu0 0
  %138 = vmatmul.mubr.bf16.gmra.mrb[0].mxu0 %v96
  %v139 = vpop.f32.mrb[0].mxu0
  %v140 = vadd.f32 0.0, %v139
  %v141 = vpop.f32.mrb[0].mxu0
  %v142 = vpop.f32.mrb[0].mxu0
  %v143 = vadd.f32 0.0, %v142
  %v144 = vpop.f32.mrb[0].mxu0
  %145 = vmatprep.mubr.bf16.mxu0 0
  %146 = vmatmul.mubr.bf16.gmra.mrb[0].mxu0 %v99
  %v147 = vpop.f32.mrb[0].mxu0
  %v148 = vadd.f32 0.0, %v147
  %v149 = vpop.f32.mrb[0].mxu0
  %v150 = vpop.f32.mrb[0].mxu0
  %v151 = vadd.f32 0.0, %v150
  %v152 = vpop.f32.mrb[0].mxu0
  %153 = vdwg.mxu0
  %vm154 = vcmask 359424
  %155 = vst.msk [vmem:[%s4] sm:$0xff] %vm154, %v140
  %156 = vst.msk [vmem:[%s4 + $0x8] sm:$0xff] %vm154, %v143
  %157 = vst.msk [vmem:[%s4 + $0x10] sm:$0xff] %vm154, %v148
  %158 = vst.msk [vmem:[%s4 + $0x18] sm:$0xff] %vm154, %v151
  // Predicated region
  $region18: #{swootnet_forward.29} parent=0 // pred_check
    _
  $region19: #{swootnet_forward.29} parent=0 // pred_check_branch
    %160 = sbr.rel (0) target = $region21
  $region20: #{swootnet_forward.29} parent=0 // pred_region
    _
  $region21: #{swootnet_forward.29} parent=0 // pred_fallthru
    _
  // Predicated region
  $region22: #{swootnet_forward.29} parent=0 // pred_check
    _
  $region23: #{swootnet_forward.29} parent=0 // pred_check_branch
    %162 = sbr.rel (0) target = $region25
  $region24: #{swootnet_forward.29} parent=0 // pred_region
    _
  $region25: #{swootnet_forward.29} parent=0 // pred_fallthru
    _

// kernel: swootnet_forward.30
$region0: #{swootnet_forward.30}
  #allocation0 [shape = 'u32[]', space=smem, size = 0x4, offset = 0x4, fixed_abs, tag = 'smem constant byte address 0x4 - core index']
  #allocation1 [shape = 'u32[144,128]{1,0:T(1,128)}', space=vmem, size = 0x12000, scoped, tag = 'internal scratch']
  %s0 = inlined_call_operand.vmem [shape: f32[8,396], index: 0, kind: input, shape index: {}]
  %s1 = inlined_call_operand.vmem [shape: bf16[396,12], index: 1, kind: input, shape index: {}]
  %s2 = inlined_call_operand.vmem [shape: f32[1,396], index: 2, kind: input, shape index: {}]
  %s3 = inlined_call_operand.vmem [shape: f32[1,396], index: 3, kind: input, shape index: {}]
  %s4 = inlined_call_operand.vmem [shape: f32[8,12], index: 4, kind: output, shape index: {}]
  %s5 = sld [smem:[#allocation0]]
  $region26: #{swootnet_forward.30} parent=0
    _
  %s7 = ssub.s32 1, %s5
  %s8 = scalar_select 0, %s7, %s5
  // Predicated region
  $region2: #{swootnet_forward.30} parent=0 // pred_check
    _
  $region3: #{swootnet_forward.30} parent=0 // pred_check_branch
    %10 = sbr.rel (0) target = $region5
  $region4: #{swootnet_forward.30} parent=0 // pred_region
    _
  $region5: #{swootnet_forward.30} parent=0 // pred_fallthru
    _
  // Predicated region
  $region6: #{swootnet_forward.30} parent=0 // pred_check
    _
  $region7: #{swootnet_forward.30} parent=0 // pred_check_branch
    %12 = sbr.rel (0) target = $region9
  $region8: #{swootnet_forward.30} parent=0 // pred_region
    _
  $region9: #{swootnet_forward.30} parent=0 // pred_fallthru
    _
  // Predicated region
  $region10: #{swootnet_forward.30} parent=0 // pred_check
    _
  $region11: #{swootnet_forward.30} parent=0 // pred_check_branch
    %14 = sbr.rel (0) target = $region13
  $region12: #{swootnet_forward.30} parent=0 // pred_region
    _
  $region13: #{swootnet_forward.30} parent=0 // pred_fallthru
    _
  // Predicated region
  $region14: #{swootnet_forward.30} parent=0 // pred_check
    _
  $region15: #{swootnet_forward.30} parent=0 // pred_check_branch
    %16 = sbr.rel (0) target = $region17
  $region16: #{swootnet_forward.30} parent=0 // pred_region
    _
  $region17: #{swootnet_forward.30} parent=0 // pred_fallthru
    _
  %v18 = vld [vmem:[%s0] sm:$0xff]
  %v19 = vld [vmem:[%s0 + $0x8] sm:$0xff]
  %v20 = vld [vmem:[%s0 + $0x10] sm:$0xff]
  %v21 = vld [vmem:[%s0 + $0x18] sm:$0xff]
  %v22 = vld [vmem:[%s2] sm:$0xf]
  %v24 = vlaneseq
  %v25 = vshrl.u32 %v24, 7
  %v26 = vsub.s32 0, %v25
  %v27 = vrot.slane %v22, %v26
  %v28 = vlaneseq
  %v29 = vshrl.u32 %v28, 7
  %v30 = vsub.s32 1, %v29
  %v31 = vrot.slane %v22, %v30
  %v32 = vlaneseq
  %v33 = vshrl.u32 %v32, 7
  %v34 = vsub.s32 2, %v33
  %v35 = vrot.slane %v22, %v34
  %v36 = vlaneseq
  %v37 = vshrl.u32 %v36, 7
  %v38 = vsub.s32 3, %v37
  %v39 = vrot.slane %v22, %v38
  %v44 = vmul.f32 %v18, %v27
  %v45 = vmul.f32 %v19, %v31
  %v46 = vmul.f32 %v20, %v35
  %v47 = vmul.f32 %v21, %v39
  %v48 = vld [vmem:[%s3] sm:$0xf]
  %v50 = vlaneseq
  %v51 = vshrl.u32 %v50, 7
  %v52 = vsub.s32 0, %v51
  %v53 = vrot.slane %v48, %v52
  %v54 = vlaneseq
  %v55 = vshrl.u32 %v54, 7
  %v56 = vsub.s32 1, %v55
  %v57 = vrot.slane %v48, %v56
  %v58 = vlaneseq
  %v59 = vshrl.u32 %v58, 7
  %v60 = vsub.s32 2, %v59
  %v61 = vrot.slane %v48, %v60
  %v62 = vlaneseq
  %v63 = vshrl.u32 %v62, 7
  %v64 = vsub.s32 3, %v63
  %v65 = vrot.slane %v48, %v64
  %v70 = vadd.f32 %v44, %v53
  %v71 = vadd.f32 %v45, %v57
  %v72 = vadd.f32 %v46, %v61
  %v73 = vadd.f32 %v47, %v65
  %v74 = vmax.f32 %v70, 0.0
  %v75 = vmax.f32 %v71, 0.0
  %v76 = vmax.f32 %v72, 0.0
  %v77 = vmax.f32 %v73, 0.0
  %v78 = vpack.c.bf16 %v74, %v74
  %v79 = vpack.c.bf16 %v75, %v75
  %v80 = vpack.c.bf16 %v76, %v76
  %v81 = vpack.c.bf16 %v77, %v77
  %v82 = vld [vmem:[%s1] sm:$0xf]
  %v83 = vld [vmem:[%s1 + $0x4] sm:$0xf]
  %v84 = vld [vmem:[%s1 + $0x8] sm:$0xf]
  %v85 = vld [vmem:[%s1 + $0xc] sm:$0xf]
  %v86 = vld [vmem:[%s1 + $0x10] sm:$0xf]
  %v87 = vld [vmem:[%s1 + $0x14] sm:$0xf]
  %v88 = vld [vmem:[%s1 + $0x18] sm:$0xf]
  %v89 = vld [vmem:[%s1 + $0x1c] sm:$0xf]
  %v90 = vld [vmem:[%s1 + $0x20] sm:$0xf]
  %v91 = vld [vmem:[%s1 + $0x24] sm:$0xf]
  %v92 = vld [vmem:[%s1 + $0x28] sm:$0xf]
  %v93 = vld [vmem:[%s1 + $0x2c] sm:$0xf]
  %v94 = vld [vmem:[%s1 + $0x30] sm:$0xf]
  %v95 = vld [vmem:[%s1 + $0x34] sm:$0xf]
  %v96 = vld [vmem:[%s1 + $0x38] sm:$0xf]
  %v97 = vld [vmem:[%s1 + $0x3c] sm:$0xf]
  %v98 = vld [vmem:[%s1 + $0x40] sm:$0xf]
  %v99 = vld [vmem:[%s1 + $0x44] sm:$0xf]
  %v100 = vld [vmem:[%s1 + $0x48] sm:$0xf]
  %v101 = vld [vmem:[%s1 + $0x4c] sm:$0xf]
  %v102 = vld [vmem:[%s1 + $0x50] sm:$0xf]
  %v103 = vld [vmem:[%s1 + $0x54] sm:$0xf]
  %v104 = vld [vmem:[%s1 + $0x58] sm:$0xf]
  %v105 = vld [vmem:[%s1 + $0x5c] sm:$0xf]
  %v106 = vld [vmem:[%s1 + $0x60] sm:$0xf]
  %v107 = vld [vmem:[%s1 + $0x64] sm:$0xf]
  %v108 = vld [vmem:[%s1 + $0x68] sm:$0xf]
  %v109 = vld [vmem:[%s1 + $0x6c] sm:$0xf]
  %v110 = vld [vmem:[%s1 + $0x70] sm:$0xf]
  %v111 = vld [vmem:[%s1 + $0x74] sm:$0xf]
  %v112 = vld [vmem:[%s1 + $0x78] sm:$0xf]
  %v113 = vld [vmem:[%s1 + $0x7c] sm:$0xf]
  %v114 = vld [vmem:[%s1 + $0x80] sm:$0xf]
  %v115 = vld [vmem:[%s1 + $0x84] sm:$0xf]
  %v116 = vld [vmem:[%s1 + $0x88] sm:$0xf]
  %v117 = vld [vmem:[%s1 + $0x8c] sm:$0xf]
  %v118 = vld [vmem:[%s1 + $0x90] sm:$0xf]
  %v119 = vld [vmem:[%s1 + $0x94] sm:$0xf]
  %v120 = vld [vmem:[%s1 + $0x98] sm:$0xf]
  %v121 = vld [vmem:[%s1 + $0x9c] sm:$0xf]
  %v122 = vld [vmem:[%s1 + $0xa0] sm:$0xf]
  %v123 = vld [vmem:[%s1 + $0xa4] sm:$0xf]
  %v124 = vld [vmem:[%s1 + $0xa8] sm:$0xf]
  %v125 = vld [vmem:[%s1 + $0xac] sm:$0xf]
  %v126 = vld [vmem:[%s1 + $0xb0] sm:$0xf]
  %v127 = vld [vmem:[%s1 + $0xb4] sm:$0xf]
  %v128 = vld [vmem:[%s1 + $0xb8] sm:$0xf]
  %v129 = vld [vmem:[%s1 + $0xbc] sm:$0xf]
  %v130 = vld [vmem:[%s1 + $0xc0] sm:$0xf]
  %v131 = vld [vmem:[%s1 + $0xc4] sm:$0x3]
  %v182 = vunpack.c.l.b16 %v82
  %v183 = vunpack.c.l.b16 %v83
  %v184 = vunpack.c.l.b16 %v84
  %v185 = vunpack.c.l.b16 %v85
  %v186 = vunpack.c.l.b16 %v86
  %v187 = vunpack.c.l.b16 %v87
  %v188 = vunpack.c.l.b16 %v88
  %v189 = vunpack.c.l.b16 %v89
  %v190 = vunpack.c.l.b16 %v90
  %v191 = vunpack.c.l.b16 %v91
  %v192 = vunpack.c.l.b16 %v92
  %v193 = vunpack.c.l.b16 %v93
  %v194 = vunpack.c.l.b16 %v94
  %v195 = vunpack.c.l.b16 %v95
  %v196 = vunpack.c.l.b16 %v96
  %v197 = vunpack.c.l.b16 %v97
  %v198 = vunpack.c.l.b16 %v98
  %v199 = vunpack.c.l.b16 %v99
  %v200 = vunpack.c.l.b16 %v100
  %v201 = vunpack.c.l.b16 %v101
  %v202 = vunpack.c.l.b16 %v102
  %v203 = vunpack.c.l.b16 %v103
  %v204 = vunpack.c.l.b16 %v104
  %v205 = vunpack.c.l.b16 %v105
  %v206 = vunpack.c.l.b16 %v106
  %v207 = vunpack.c.l.b16 %v107
  %v208 = vunpack.c.l.b16 %v108
  %v209 = vunpack.c.l.b16 %v109
  %v210 = vunpack.c.l.b16 %v110
  %v211 = vunpack.c.l.b16 %v111
  %v212 = vunpack.c.l.b16 %v112
  %v213 = vunpack.c.l.b16 %v113
  %v214 = vunpack.c.l.b16 %v114
  %v215 = vunpack.c.l.b16 %v115
  %v216 = vunpack.c.l.b16 %v116
  %v217 = vunpack.c.l.b16 %v117
  %v218 = vunpack.c.l.b16 %v118
  %v219 = vunpack.c.l.b16 %v119
  %v220 = vunpack.c.l.b16 %v120
  %v221 = vunpack.c.l.b16 %v121
  %v222 = vunpack.c.l.b16 %v122
  %v223 = vunpack.c.l.b16 %v123
  %v224 = vunpack.c.l.b16 %v124
  %v225 = vunpack.c.l.b16 %v125
  %v226 = vunpack.c.l.b16 %v126
  %v227 = vunpack.c.l.b16 %v127
  %v228 = vunpack.c.l.b16 %v128
  %v229 = vunpack.c.l.b16 %v129
  %v230 = vunpack.c.l.b16 %v130
  %v231 = vunpack.c.l.b16 %v131
  %v232 = vpack.c.b16 %v183, %v182
  %v233 = vpack.c.b16 %v185, %v184
  %v234 = vpack.c.b16 %v187, %v186
  %v235 = vpack.c.b16 %v189, %v188
  %v236 = vpack.c.b16 %v191, %v190
  %v237 = vpack.c.b16 %v193, %v192
  %v238 = vpack.c.b16 %v195, %v194
  %v239 = vpack.c.b16 %v197, %v196
  %v240 = vpack.c.b16 %v199, %v198
  %v241 = vpack.c.b16 %v201, %v200
  %v242 = vpack.c.b16 %v203, %v202
  %v243 = vpack.c.b16 %v205, %v204
  %v244 = vpack.c.b16 %v207, %v206
  %v245 = vpack.c.b16 %v209, %v208
  %v246 = vpack.c.b16 %v211, %v210
  %v247 = vpack.c.b16 %v213, %v212
  %v248 = vpack.c.b16 %v215, %v214
  %v249 = vpack.c.b16 %v217, %v216
  %v250 = vpack.c.b16 %v219, %v218
  %v251 = vpack.c.b16 %v221, %v220
  %v252 = vpack.c.b16 %v223, %v222
  %v253 = vpack.c.b16 %v225, %v224
  %v254 = vpack.c.b16 %v227, %v226
  %v255 = vpack.c.b16 %v229, %v228
  %v256 = vpack.c.b16 %v231, %v230
  %vm281 = vcmask 97280
  %v283 = vsel %vm281, %v81, 0
  %vm285 = vcmask 1045504
  %v287 = vsel %vm285, %v256, 0
  %289 = vmatprep.subr.bf16.mxu0 0
  %290 = vmatpush1.bf16.msra.mxu0 %v232
  %291 = vmatprep.subr.bf16.mxu0 0
  %292 = vmatpush1.bf16.msra.mxu0 %v233
  %293 = vmatprep.subr.bf16.mxu0 0
  %294 = vmatpush1.bf16.msra.mxu0 %v234
  %295 = vmatprep.subr.bf16.mxu0 0
  %296 = vmatpush1.bf16.msra.mxu0 %v235
  %297 = vmatprep.subr.bf16.mxu0 0
  %298 = vmatpush1.bf16.msra.mxu0 %v236
  %299 = vmatprep.subr.bf16.mxu0 0
  %300 = vmatpush1.bf16.msra.mxu0 %v237
  %301 = vmatprep.subr.bf16.mxu0 0
  %302 = vmatpush1.bf16.msra.mxu0 %v238
  %303 = vmatprep.subr.bf16.mxu0 0
  %304 = vmatpush1.bf16.msra.mxu0 %v239
  %305 = vmatprep.subr.bf16.mxu0 0
  %306 = vmatpush1.bf16.msra.mxu0 %v240
  %307 = vmatprep.subr.bf16.mxu0 0
  %308 = vmatpush1.bf16.msra.mxu0 %v241
  %309 = vmatprep.subr.bf16.mxu0 0
  %310 = vmatpush1.bf16.msra.mxu0 %v242
  %311 = vmatprep.subr.bf16.mxu0 0
  %312 = vmatpush1.bf16.msra.mxu0 %v243
  %313 = vmatprep.subr.bf16.mxu0 0
  %314 = vmatpush1.bf16.msra.mxu0 %v244
  %315 = vmatprep.subr.bf16.mxu0 0
  %316 = vmatpush1.bf16.msra.mxu0 %v245
  %317 = vmatprep.subr.bf16.mxu0 0
  %318 = vmatpush1.bf16.msra.mxu0 %v246
  %319 = vmatprep.subr.bf16.mxu0 0
  %320 = vmatpush1.bf16.msra.mxu0 %v247
  %321 = vmatprep.mubr.bf16.mxu0 %v79
  %322 = vmatmul.mubr.bf16.gmra.mrb[0].mxu0 %v78
  %v323 = vpop.f32.mrb[0].mxu0
  %v324 = vadd.f32 0.0, %v323
  %v325 = vpop.f32.mrb[0].mxu0
  %v326 = vpop.f32.mrb[0].mxu0
  %v327 = vpop.f32.mrb[0].mxu0
  %328 = vdwg.mxu0
  %329 = vmatprep.subr.bf16.mxu0 0
  %330 = vmatpush1.bf16.msra.mxu0 %v248
  %331 = vmatprep.subr.bf16.mxu0 0
  %332 = vmatpush1.bf16.msra.mxu0 %v249
  %333 = vmatprep.subr.bf16.mxu0 0
  %334 = vmatpush1.bf16.msra.mxu0 %v250
  %335 = vmatprep.subr.bf16.mxu0 0
  %336 = vmatpush1.bf16.msra.mxu0 %v251
  %337 = vmatprep.subr.bf16.mxu0 0
  %338 = vmatpush1.bf16.msra.mxu0 %v252
  %339 = vmatprep.subr.bf16.mxu0 0
  %340 = vmatpush1.bf16.msra.mxu0 %v253
  %341 = vmatprep.subr.bf16.mxu0 0
  %342 = vmatpush1.bf16.msra.mxu0 %v254
  %343 = vmatprep.subr.bf16.mxu0 0
  %344 = vmatpush1.bf16.msra.mxu0 %v255
  %345 = vmatprep.subr.bf16.mxu0 0
  %346 = vmatpush1.bf16.msra.mxu0 %v287
  %347 = vmatprep.subr.bf16.mxu0 0
  %348 = vmatpush1.bf16.msra.mxu0 0
  %349 = vmatprep.subr.bf16.mxu0 0
  %350 = vmatpush1.bf16.msra.mxu0 0
  %351 = vmatprep.subr.bf16.mxu0 0
  %352 = vmatpush1.bf16.msra.mxu0 0
  %353 = vmatprep.subr.bf16.mxu0 0
  %354 = vmatpush1.bf16.msra.mxu0 0
  %355 = vmatprep.subr.bf16.mxu0 0
  %356 = vmatpush1.bf16.msra.mxu0 0
  %357 = vmatprep.subr.bf16.mxu0 0
  %358 = vmatpush1.bf16.msra.mxu0 0
  %359 = vmatprep.subr.bf16.mxu0 0
  %360 = vmatpush1.bf16.msra.mxu0 0
  %361 = vmatprep.mubr.bf16.mxu0 %v283
  %362 = vmatmul.mubr.bf16.gmra.mrb[0].mxu0 %v80
  %v363 = vpop.f32.mrb[0].mxu0
  %v364 = vadd.f32 %v324, %v363
  %v365 = vpop.f32.mrb[0].mxu0
  %v366 = vpop.f32.mrb[0].mxu0
  %v367 = vpop.f32.mrb[0].mxu0
  %368 = vdwg.mxu0
  %369 = vst.msk [vmem:[%s4] sm:$0xff] %vm281, %v364
  // Predicated region
  $region18: #{swootnet_forward.30} parent=0 // pred_check
    _
  $region19: #{swootnet_forward.30} parent=0 // pred_check_branch
    %371 = sbr.rel (0) target = $region21
  $region20: #{swootnet_forward.30} parent=0 // pred_region
    _
  $region21: #{swootnet_forward.30} parent=0 // pred_fallthru
    _
  // Predicated region
  $region22: #{swootnet_forward.30} parent=0 // pred_check
    _
  $region23: #{swootnet_forward.30} parent=0 // pred_check_branch
    %373 = sbr.rel (0) target = $region25
  $region24: #{swootnet_forward.30} parent=0 // pred_region
    _
  $region25: #{swootnet_forward.30} parent=0 // pred_fallthru
    _

// kernel: swootnet_forward.31
$region0: #{swootnet_forward.31}
  #allocation0 [shape = 'u32[]', space=smem, size = 0x4, offset = 0x4, fixed_abs, tag = 'smem constant byte address 0x4 - core index']
  #allocation1 [shape = 'u32[144,128]{1,0:T(1,128)}', space=vmem, size = 0x12000, scoped, tag = 'internal scratch']
  %s0 = inlined_call_operand.vmem [shape: f32[8,224], index: 0, kind: input, shape index: {}]
  %s1 = inlined_call_operand.vmem [shape: bf16[224,48], index: 1, kind: input, shape index: {}]
  %s2 = inlined_call_operand.vmem [shape: f32[1,224], index: 2, kind: input, shape index: {}]
  %s3 = inlined_call_operand.vmem [shape: f32[1,224], index: 3, kind: input, shape index: {}]
  %s4 = inlined_call_operand.vmem [shape: f32[8,48], index: 4, kind: output, shape index: {}]
  %s5 = sld [smem:[#allocation0]]
  $region26: #{swootnet_forward.31} parent=0
    _
  %s7 = ssub.s32 1, %s5
  %s8 = scalar_select 0, %s7, %s5
  // Predicated region
  $region2: #{swootnet_forward.31} parent=0 // pred_check
    _
  $region3: #{swootnet_forward.31} parent=0 // pred_check_branch
    %10 = sbr.rel (0) target = $region5
  $region4: #{swootnet_forward.31} parent=0 // pred_region
    _
  $region5: #{swootnet_forward.31} parent=0 // pred_fallthru
    _
  // Predicated region
  $region6: #{swootnet_forward.31} parent=0 // pred_check
    _
  $region7: #{swootnet_forward.31} parent=0 // pred_check_branch
    %12 = sbr.rel (0) target = $region9
  $region8: #{swootnet_forward.31} parent=0 // pred_region
    _
  $region9: #{swootnet_forward.31} parent=0 // pred_fallthru
    _
  // Predicated region
  $region10: #{swootnet_forward.31} parent=0 // pred_check
    _
  $region11: #{swootnet_forward.31} parent=0 // pred_check_branch
    %14 = sbr.rel (0) target = $region13
  $region12: #{swootnet_forward.31} parent=0 // pred_region
    _
  $region13: #{swootnet_forward.31} parent=0 // pred_fallthru
    _
  // Predicated region
  $region14: #{swootnet_forward.31} parent=0 // pred_check
    _
  $region15: #{swootnet_forward.31} parent=0 // pred_check_branch
    %16 = sbr.rel (0) target = $region17
  $region16: #{swootnet_forward.31} parent=0 // pred_region
    _
  $region17: #{swootnet_forward.31} parent=0 // pred_fallthru
    _
  %v18 = vld [vmem:[%s0] sm:$0xff]
  %v19 = vld [vmem:[%s0 + $0x8] sm:$0xff]
  %v20 = vld [vmem:[%s2] sm:$0x3]
  %v22 = vlaneseq
  %v23 = vshrl.u32 %v22, 7
  %v24 = vsub.s32 0, %v23
  %v25 = vrot.slane %v20, %v24
  %v26 = vlaneseq
  %v27 = vshrl.u32 %v26, 7
  %v28 = vsub.s32 1, %v27
  %v29 = vrot.slane %v20, %v28
  %v32 = vmul.f32 %v18, %v25
  %v33 = vmul.f32 %v19, %v29
  %v34 = vld [vmem:[%s3] sm:$0x3]
  %v36 = vlaneseq
  %v37 = vshrl.u32 %v36, 7
  %v38 = vsub.s32 0, %v37
  %v39 = vrot.slane %v34, %v38
  %v40 = vlaneseq
  %v41 = vshrl.u32 %v40, 7
  %v42 = vsub.s32 1, %v41
  %v43 = vrot.slane %v34, %v42
  %v46 = vadd.f32 %v32, %v39
  %v47 = vadd.f32 %v33, %v43
  %v48 = vmax.f32 %v46, 0.0
  %v49 = vmax.f32 %v47, 0.0
  %v50 = vpack.c.bf16 %v48, %v48
  %v51 = vpack.c.bf16 %v49, %v49
  %v52 = vld [vmem:[%s1] sm:$0xf]
  %v53 = vld [vmem:[%s1 + $0x4] sm:$0xf]
  %v54 = vld [vmem:[%s1 + $0x8] sm:$0xf]
  %v55 = vld [vmem:[%s1 + $0xc] sm:$0xf]
  %v56 = vld [vmem:[%s1 + $0x10] sm:$0xf]
  %v57 = vld [vmem:[%s1 + $0x14] sm:$0xf]
  %v58 = vld [vmem:[%s1 + $0x18] sm:$0xf]
  %v59 = vld [vmem:[%s1 + $0x1c] sm:$0xf]
  %v60 = vld [vmem:[%s1 + $0x20] sm:$0xf]
  %v61 = vld [vmem:[%s1 + $0x24] sm:$0xf]
  %v62 = vld [vmem:[%s1 + $0x28] sm:$0xf]
  %v63 = vld [vmem:[%s1 + $0x2c] sm:$0xf]
  %v64 = vld [vmem:[%s1 + $0x30] sm:$0xf]
  %v65 = vld [vmem:[%s1 + $0x34] sm:$0xf]
  %v66 = vld [vmem:[%s1 + $0x38] sm:$0xf]
  %v67 = vld [vmem:[%s1 + $0x3c] sm:$0xf]
  %v68 = vld [vmem:[%s1 + $0x40] sm:$0xf]
  %v69 = vld [vmem:[%s1 + $0x44] sm:$0xf]
  %v70 = vld [vmem:[%s1 + $0x48] sm:$0xf]
  %v71 = vld [vmem:[%s1 + $0x4c] sm:$0xf]
  %v72 = vld [vmem:[%s1 + $0x50] sm:$0xf]
  %v73 = vld [vmem:[%s1 + $0x54] sm:$0xf]
  %v74 = vld [vmem:[%s1 + $0x58] sm:$0xf]
  %v75 = vld [vmem:[%s1 + $0x5c] sm:$0xf]
  %v76 = vld [vmem:[%s1 + $0x60] sm:$0xf]
  %v77 = vld [vmem:[%s1 + $0x64] sm:$0xf]
  %v78 = vld [vmem:[%s1 + $0x68] sm:$0xf]
  %v79 = vld [vmem:[%s1 + $0x6c] sm:$0xf]
  %v108 = vunpack.c.l.b16 %v52
  %v109 = vunpack.c.l.b16 %v53
  %v110 = vunpack.c.l.b16 %v54
  %v111 = vunpack.c.l.b16 %v55
  %v112 = vunpack.c.l.b16 %v56
  %v113 = vunpack.c.l.b16 %v57
  %v114 = vunpack.c.l.b16 %v58
  %v115 = vunpack.c.l.b16 %v59
  %v116 = vunpack.c.l.b16 %v60
  %v117 = vunpack.c.l.b16 %v61
  %v118 = vunpack.c.l.b16 %v62
  %v119 = vunpack.c.l.b16 %v63
  %v120 = vunpack.c.l.b16 %v64
  %v121 = vunpack.c.l.b16 %v65
  %v122 = vunpack.c.l.b16 %v66
  %v123 = vunpack.c.l.b16 %v67
  %v124 = vunpack.c.l.b16 %v68
  %v125 = vunpack.c.l.b16 %v69
  %v126 = vunpack.c.l.b16 %v70
  %v127 = vunpack.c.l.b16 %v71
  %v128 = vunpack.c.l.b16 %v72
  %v129 = vunpack.c.l.b16 %v73
  %v130 = vunpack.c.l.b16 %v74
  %v131 = vunpack.c.l.b16 %v75
  %v132 = vunpack.c.l.b16 %v76
  %v133 = vunpack.c.l.b16 %v77
  %v134 = vunpack.c.l.b16 %v78
  %v135 = vunpack.c.l.b16 %v79
  %v136 = vpack.c.b16 %v109, %v108
  %v137 = vpack.c.b16 %v111, %v110
  %v138 = vpack.c.b16 %v113, %v112
  %v139 = vpack.c.b16 %v115, %v114
  %v140 = vpack.c.b16 %v117, %v116
  %v141 = vpack.c.b16 %v119, %v118
  %v142 = vpack.c.b16 %v121, %v120
  %v143 = vpack.c.b16 %v123, %v122
  %v144 = vpack.c.b16 %v125, %v124
  %v145 = vpack.c.b16 %v127, %v126
  %v146 = vpack.c.b16 %v129, %v128
  %v147 = vpack.c.b16 %v131, %v130
  %v148 = vpack.c.b16 %v133, %v132
  %v149 = vpack.c.b16 %v135, %v134
  %vm164 = vcmask 785408
  %v166 = vsel %vm164, %v51, 0
  %168 = vmatprep.subr.bf16.mxu0 0
  %169 = vmatpush1.bf16.msra.mxu0 %v136
  %170 = vmatprep.subr.bf16.mxu0 0
  %171 = vmatpush1.bf16.msra.mxu0 %v137
  %172 = vmatprep.subr.bf16.mxu0 0
  %173 = vmatpush1.bf16.msra.mxu0 %v138
  %174 = vmatprep.subr.bf16.mxu0 0
  %175 = vmatpush1.bf16.msra.mxu0 %v139
  %176 = vmatprep.subr.bf16.mxu0 0
  %177 = vmatpush1.bf16.msra.mxu0 %v140
  %178 = vmatprep.subr.bf16.mxu0 0
  %179 = vmatpush1.bf16.msra.mxu0 %v141
  %180 = vmatprep.subr.bf16.mxu0 0
  %181 = vmatpush1.bf16.msra.mxu0 %v142
  %182 = vmatprep.subr.bf16.mxu0 0
  %183 = vmatpush1.bf16.msra.mxu0 %v143
  %184 = vmatprep.subr.bf16.mxu0 0
  %185 = vmatpush1.bf16.msra.mxu0 %v144
  %186 = vmatprep.subr.bf16.mxu0 0
  %187 = vmatpush1.bf16.msra.mxu0 %v145
  %188 = vmatprep.subr.bf16.mxu0 0
  %189 = vmatpush1.bf16.msra.mxu0 %v146
  %190 = vmatprep.subr.bf16.mxu0 0
  %191 = vmatpush1.bf16.msra.mxu0 %v147
  %192 = vmatprep.subr.bf16.mxu0 0
  %193 = vmatpush1.bf16.msra.mxu0 %v148
  %194 = vmatprep.subr.bf16.mxu0 0
  %195 = vmatpush1.bf16.msra.mxu0 %v149
  %196 = vmatprep.subr.bf16.mxu0 0
  %197 = vmatpush1.bf16.msra.mxu0 0
  %198 = vmatprep.subr.bf16.mxu0 0
  %199 = vmatpush1.bf16.msra.mxu0 0
  %200 = vmatprep.mubr.bf16.mxu0 %v166
  %201 = vmatmul.mubr.bf16.gmra.mrb[0].mxu0 %v50
  %v202 = vpop.f32.mrb[0].mxu0
  %v203 = vadd.f32 0.0, %v202
  %v204 = vpop.f32.mrb[0].mxu0
  %v205 = vpop.f32.mrb[0].mxu0
  %v206 = vpop.f32.mrb[0].mxu0
  %207 = vdwg.mxu0
  %vm208 = vcmask 392192
  %209 = vst.msk [vmem:[%s4] sm:$0xff] %vm208, %v203
  // Predicated region
  $region18: #{swootnet_forward.31} parent=0 // pred_check
    _
  $region19: #{swootnet_forward.31} parent=0 // pred_check_branch
    %211 = sbr.rel (0) target = $region21
  $region20: #{swootnet_forward.31} parent=0 // pred_region
    _
  $region21: #{swootnet_forward.31} parent=0 // pred_fallthru
    _
  // Predicated region
  $region22: #{swootnet_forward.31} parent=0 // pred_check
    _
  $region23: #{swootnet_forward.31} parent=0 // pred_check_branch
    %213 = sbr.rel (0) target = $region25
  $region24: #{swootnet_forward.31} parent=0 // pred_region
    _
  $region25: #{swootnet_forward.31} parent=0 // pred_fallthru
    _

// kernel: swootnet_forward.33
$region0: #{swootnet_forward.33}
  #allocation0 [shape = 'u32[]', space=smem, size = 0x4, offset = 0x4, fixed_abs, tag = 'smem constant byte address 0x4 - core index']
  #allocation1 [shape = 'u32[144,128]{1,0:T(1,128)}', space=vmem, size = 0x12000, scoped, tag = 'internal scratch']
  %s0 = inlined_call_operand.vmem [shape: f32[8,272], index: 0, kind: input, shape index: {}]
  %s1 = inlined_call_operand.vmem [shape: bf16[272,48], index: 1, kind: input, shape index: {}]
  %s2 = inlined_call_operand.vmem [shape: f32[1,272], index: 2, kind: input, shape index: {}]
  %s3 = inlined_call_operand.vmem [shape: f32[1,272], index: 3, kind: input, shape index: {}]
  %s4 = inlined_call_operand.vmem [shape: f32[8,48], index: 4, kind: output, shape index: {}]
  %s5 = sld [smem:[#allocation0]]
  $region26: #{swootnet_forward.33} parent=0
    _
  %s7 = ssub.s32 1, %s5
  %s8 = scalar_select 0, %s7, %s5
  // Predicated region
  $region2: #{swootnet_forward.33} parent=0 // pred_check
    _
  $region3: #{swootnet_forward.33} parent=0 // pred_check_branch
    %10 = sbr.rel (0) target = $region5
  $region4: #{swootnet_forward.33} parent=0 // pred_region
    _
  $region5: #{swootnet_forward.33} parent=0 // pred_fallthru
    _
  // Predicated region
  $region6: #{swootnet_forward.33} parent=0 // pred_check
    _
  $region7: #{swootnet_forward.33} parent=0 // pred_check_branch
    %12 = sbr.rel (0) target = $region9
  $region8: #{swootnet_forward.33} parent=0 // pred_region
    _
  $region9: #{swootnet_forward.33} parent=0 // pred_fallthru
    _
  // Predicated region
  $region10: #{swootnet_forward.33} parent=0 // pred_check
    _
  $region11: #{swootnet_forward.33} parent=0 // pred_check_branch
    %14 = sbr.rel (0) target = $region13
  $region12: #{swootnet_forward.33} parent=0 // pred_region
    _
  $region13: #{swootnet_forward.33} parent=0 // pred_fallthru
    _
  // Predicated region
  $region14: #{swootnet_forward.33} parent=0 // pred_check
    _
  $region15: #{swootnet_forward.33} parent=0 // pred_check_branch
    %16 = sbr.rel (0) target = $region17
  $region16: #{swootnet_forward.33} parent=0 // pred_region
    _
  $region17: #{swootnet_forward.33} parent=0 // pred_fallthru
    _
  %v18 = vld [vmem:[%s0] sm:$0xff]
  %v19 = vld [vmem:[%s0 + $0x8] sm:$0xff]
  %v20 = vld [vmem:[%s0 + $0x10] sm:$0xff]
  %v21 = vld [vmem:[%s2] sm:$0x7]
  %v23 = vlaneseq
  %v24 = vshrl.u32 %v23, 7
  %v25 = vsub.s32 0, %v24
  %v26 = vrot.slane %v21, %v25
  %v27 = vlaneseq
  %v28 = vshrl.u32 %v27, 7
  %v29 = vsub.s32 1, %v28
  %v30 = vrot.slane %v21, %v29
  %v31 = vlaneseq
  %v32 = vshrl.u32 %v31, 7
  %v33 = vsub.s32 2, %v32
  %v34 = vrot.slane %v21, %v33
  %v38 = vmul.f32 %v18, %v26
  %v39 = vmul.f32 %v19, %v30
  %v40 = vmul.f32 %v20, %v34
  %v41 = vld [vmem:[%s3] sm:$0x7]
  %v43 = vlaneseq
  %v44 = vshrl.u32 %v43, 7
  %v45 = vsub.s32 0, %v44
  %v46 = vrot.slane %v41, %v45
  %v47 = vlaneseq
  %v48 = vshrl.u32 %v47, 7
  %v49 = vsub.s32 1, %v48
  %v50 = vrot.slane %v41, %v49
  %v51 = vlaneseq
  %v52 = vshrl.u32 %v51, 7
  %v53 = vsub.s32 2, %v52
  %v54 = vrot.slane %v41, %v53
  %v58 = vadd.f32 %v38, %v46
  %v59 = vadd.f32 %v39, %v50
  %v60 = vadd.f32 %v40, %v54
  %v61 = vmax.f32 %v58, 0.0
  %v62 = vmax.f32 %v59, 0.0
  %v63 = vmax.f32 %v60, 0.0
  %v64 = vpack.c.bf16 %v61, %v61
  %v65 = vpack.c.bf16 %v62, %v62
  %v66 = vpack.c.bf16 %v63, %v63
  %v67 = vld [vmem:[%s1] sm:$0xf]
  %v68 = vld [vmem:[%s1 + $0x4] sm:$0xf]
  %v69 = vld [vmem:[%s1 + $0x8] sm:$0xf]
  %v70 = vld [vmem:[%s1 + $0xc] sm:$0xf]
  %v71 = vld [vmem:[%s1 + $0x10] sm:$0xf]
  %v72 = vld [vmem:[%s1 + $0x14] sm:$0xf]
  %v73 = vld [vmem:[%s1 + $0x18] sm:$0xf]
  %v74 = vld [vmem:[%s1 + $0x1c] sm:$0xf]
  %v75 = vld [vmem:[%s1 + $0x20] sm:$0xf]
  %v76 = vld [vmem:[%s1 + $0x24] sm:$0xf]
  %v77 = vld [vmem:[%s1 + $0x28] sm:$0xf]
  %v78 = vld [vmem:[%s1 + $0x2c] sm:$0xf]
  %v79 = vld [vmem:[%s1 + $0x30] sm:$0xf]
  %v80 = vld [vmem:[%s1 + $0x34] sm:$0xf]
  %v81 = vld [vmem:[%s1 + $0x38] sm:$0xf]
  %v82 = vld [vmem:[%s1 + $0x3c] sm:$0xf]
  %v83 = vld [vmem:[%s1 + $0x40] sm:$0xf]
  %v84 = vld [vmem:[%s1 + $0x44] sm:$0xf]
  %v85 = vld [vmem:[%s1 + $0x48] sm:$0xf]
  %v86 = vld [vmem:[%s1 + $0x4c] sm:$0xf]
  %v87 = vld [vmem:[%s1 + $0x50] sm:$0xf]
  %v88 = vld [vmem:[%s1 + $0x54] sm:$0xf]
  %v89 = vld [vmem:[%s1 + $0x58] sm:$0xf]
  %v90 = vld [vmem:[%s1 + $0x5c] sm:$0xf]
  %v91 = vld [vmem:[%s1 + $0x60] sm:$0xf]
  %v92 = vld [vmem:[%s1 + $0x64] sm:$0xf]
  %v93 = vld [vmem:[%s1 + $0x68] sm:$0xf]
  %v94 = vld [vmem:[%s1 + $0x6c] sm:$0xf]
  %v95 = vld [vmem:[%s1 + $0x70] sm:$0xf]
  %v96 = vld [vmem:[%s1 + $0x74] sm:$0xf]
  %v97 = vld [vmem:[%s1 + $0x78] sm:$0xf]
  %v98 = vld [vmem:[%s1 + $0x7c] sm:$0xf]
  %v99 = vld [vmem:[%s1 + $0x80] sm:$0xf]
  %v100 = vld [vmem:[%s1 + $0x84] sm:$0xf]
  %v135 = vunpack.c.l.b16 %v67
  %v136 = vunpack.c.l.b16 %v68
  %v137 = vunpack.c.l.b16 %v69
  %v138 = vunpack.c.l.b16 %v70
  %v139 = vunpack.c.l.b16 %v71
  %v140 = vunpack.c.l.b16 %v72
  %v141 = vunpack.c.l.b16 %v73
  %v142 = vunpack.c.l.b16 %v74
  %v143 = vunpack.c.l.b16 %v75
  %v144 = vunpack.c.l.b16 %v76
  %v145 = vunpack.c.l.b16 %v77
  %v146 = vunpack.c.l.b16 %v78
  %v147 = vunpack.c.l.b16 %v79
  %v148 = vunpack.c.l.b16 %v80
  %v149 = vunpack.c.l.b16 %v81
  %v150 = vunpack.c.l.b16 %v82
  %v151 = vunpack.c.l.b16 %v83
  %v152 = vunpack.c.l.b16 %v84
  %v153 = vunpack.c.l.b16 %v85
  %v154 = vunpack.c.l.b16 %v86
  %v155 = vunpack.c.l.b16 %v87
  %v156 = vunpack.c.l.b16 %v88
  %v157 = vunpack.c.l.b16 %v89
  %v158 = vunpack.c.l.b16 %v90
  %v159 = vunpack.c.l.b16 %v91
  %v160 = vunpack.c.l.b16 %v92
  %v161 = vunpack.c.l.b16 %v93
  %v162 = vunpack.c.l.b16 %v94
  %v163 = vunpack.c.l.b16 %v95
  %v164 = vunpack.c.l.b16 %v96
  %v165 = vunpack.c.l.b16 %v97
  %v166 = vunpack.c.l.b16 %v98
  %v167 = vunpack.c.l.b16 %v99
  %v168 = vunpack.c.l.b16 %v100
  %v169 = vpack.c.b16 %v136, %v135
  %v170 = vpack.c.b16 %v138, %v137
  %v171 = vpack.c.b16 %v140, %v139
  %v172 = vpack.c.b16 %v142, %v141
  %v173 = vpack.c.b16 %v144, %v143
  %v174 = vpack.c.b16 %v146, %v145
  %v175 = vpack.c.b16 %v148, %v147
  %v176 = vpack.c.b16 %v150, %v149
  %v177 = vpack.c.b16 %v152, %v151
  %v178 = vpack.c.b16 %v154, %v153
  %v179 = vpack.c.b16 %v156, %v155
  %v180 = vpack.c.b16 %v158, %v157
  %v181 = vpack.c.b16 %v160, %v159
  %v182 = vpack.c.b16 %v162, %v161
  %v183 = vpack.c.b16 %v164, %v163
  %v184 = vpack.c.b16 %v166, %v165
  %v185 = vpack.c.b16 %v168, %v167
  %vm203 = vcmask 130048
  %v205 = vsel %vm203, %v66, 0
  %207 = vmatprep.subr.bf16.mxu0 0
  %208 = vmatpush1.bf16.msra.mxu0 %v169
  %209 = vmatprep.subr.bf16.mxu0 0
  %210 = vmatpush1.bf16.msra.mxu0 %v170
  %211 = vmatprep.subr.bf16.mxu0 0
  %212 = vmatpush1.bf16.msra.mxu0 %v171
  %213 = vmatprep.subr.bf16.mxu0 0
  %214 = vmatpush1.bf16.msra.mxu0 %v172
  %215 = vmatprep.subr.bf16.mxu0 0
  %216 = vmatpush1.bf16.msra.mxu0 %v173
  %217 = vmatprep.subr.bf16.mxu0 0
  %218 = vmatpush1.bf16.msra.mxu0 %v174
  %219 = vmatprep.subr.bf16.mxu0 0
  %220 = vmatpush1.bf16.msra.mxu0 %v175
  %221 = vmatprep.subr.bf16.mxu0 0
  %222 = vmatpush1.bf16.msra.mxu0 %v176
  %223 = vmatprep.subr.bf16.mxu0 0
  %224 = vmatpush1.bf16.msra.mxu0 %v177
  %225 = vmatprep.subr.bf16.mxu0 0
  %226 = vmatpush1.bf16.msra.mxu0 %v178
  %227 = vmatprep.subr.bf16.mxu0 0
  %228 = vmatpush1.bf16.msra.mxu0 %v179
  %229 = vmatprep.subr.bf16.mxu0 0
  %230 = vmatpush1.bf16.msra.mxu0 %v180
  %231 = vmatprep.subr.bf16.mxu0 0
  %232 = vmatpush1.bf16.msra.mxu0 %v181
  %233 = vmatprep.subr.bf16.mxu0 0
  %234 = vmatpush1.bf16.msra.mxu0 %v182
  %235 = vmatprep.subr.bf16.mxu0 0
  %236 = vmatpush1.bf16.msra.mxu0 %v183
  %237 = vmatprep.subr.bf16.mxu0 0
  %238 = vmatpush1.bf16.msra.mxu0 %v184
  %239 = vmatprep.mubr.bf16.mxu0 %v65
  %240 = vmatmul.mubr.bf16.gmra.mrb[0].mxu0 %v64
  %v241 = vpop.f32.mrb[0].mxu0
  %v242 = vadd.f32 0.0, %v241
  %v243 = vpop.f32.mrb[0].mxu0
  %v244 = vpop.f32.mrb[0].mxu0
  %v245 = vpop.f32.mrb[0].mxu0
  %246 = vdwg.mxu0
  %247 = vmatprep.subr.bf16.mxu0 0
  %248 = vmatpush1.bf16.msra.mxu0 %v185
  %249 = vmatprep.subr.bf16.mxu0 0
  %250 = vmatpush1.bf16.msra.mxu0 0
  %251 = vmatprep.subr.bf16.mxu0 0
  %252 = vmatpush1.bf16.msra.mxu0 0
  %253 = vmatprep.subr.bf16.mxu0 0
  %254 = vmatpush1.bf16.msra.mxu0 0
  %255 = vmatprep.subr.bf16.mxu0 0
  %256 = vmatpush1.bf16.msra.mxu0 0
  %257 = vmatprep.subr.bf16.mxu0 0
  %258 = vmatpush1.bf16.msra.mxu0 0
  %259 = vmatprep.subr.bf16.mxu0 0
  %260 = vmatpush1.bf16.msra.mxu0 0
  %261 = vmatprep.subr.bf16.mxu0 0
  %262 = vmatpush1.bf16.msra.mxu0 0
  %263 = vmatprep.subr.bf16.mxu0 0
  %264 = vmatpush1.bf16.msra.mxu0 0
  %265 = vmatprep.subr.bf16.mxu0 0
  %266 = vmatpush1.bf16.msra.mxu0 0
  %267 = vmatprep.subr.bf16.mxu0 0
  %268 = vmatpush1.bf16.msra.mxu0 0
  %269 = vmatprep.subr.bf16.mxu0 0
  %270 = vmatpush1.bf16.msra.mxu0 0
  %271 = vmatprep.subr.bf16.mxu0 0
  %272 = vmatpush1.bf16.msra.mxu0 0
  %273 = vmatprep.subr.bf16.mxu0 0
  %274 = vmatpush1.bf16.msra.mxu0 0
  %275 = vmatprep.subr.bf16.mxu0 0
  %276 = vmatpush1.bf16.msra.mxu0 0
  %277 = vmatprep.subr.bf16.mxu0 0
  %278 = vmatpush1.bf16.msra.mxu0 0
  %279 = vmatprep.mubr.bf16.mxu0 0
  %280 = vmatmul.mubr.bf16.gmra.mrb[0].mxu0 %v205
  %v281 = vpop.f32.mrb[0].mxu0
  %v282 = vadd.f32 %v242, %v281
  %v283 = vpop.f32.mrb[0].mxu0
  %v284 = vpop.f32.mrb[0].mxu0
  %v285 = vpop.f32.mrb[0].mxu0
  %286 = vdwg.mxu0
  %vm287 = vcmask 392192
  %288 = vst.msk [vmem:[%s4] sm:$0xff] %vm287, %v282
  // Predicated region
  $region18: #{swootnet_forward.33} parent=0 // pred_check
    _
  $region19: #{swootnet_forward.33} parent=0 // pred_check_branch
    %290 = sbr.rel (0) target = $region21
  $region20: #{swootnet_forward.33} parent=0 // pred_region
    _
  $region21: #{swootnet_forward.33} parent=0 // pred_fallthru
    _
  // Predicated region
  $region22: #{swootnet_forward.33} parent=0 // pred_check
    _
  $region23: #{swootnet_forward.33} parent=0 // pred_check_branch
    %292 = sbr.rel (0) target = $region25
  $region24: #{swootnet_forward.33} parent=0 // pred_region
    _
  $region25: #{swootnet_forward.33} parent=0 // pred_fallthru
    _

// kernel: swootnet_forward.32
$region0: #{swootnet_forward.32}
  #allocation0 [shape = 'u32[]', space=smem, size = 0x4, offset = 0x4, fixed_abs, tag = 'smem constant byte address 0x4 - core index']
  #allocation1 [shape = 'u32[144,128]{1,0:T(1,128)}', space=vmem, size = 0x12000, scoped, tag = 'internal scratch']
  %s0 = inlined_call_operand.vmem [shape: f32[8,504], index: 0, kind: input, shape index: {}]
  %s1 = inlined_call_operand.vmem [shape: bf16[504,12], index: 1, kind: input, shape index: {}]
  %s2 = inlined_call_operand.vmem [shape: f32[1,504], index: 2, kind: input, shape index: {}]
  %s3 = inlined_call_operand.vmem [shape: f32[1,504], index: 3, kind: input, shape index: {}]
  %s4 = inlined_call_operand.vmem [shape: f32[8,12], index: 4, kind: output, shape index: {}]
  %s5 = sld [smem:[#allocation0]]
  $region26: #{swootnet_forward.32} parent=0
    _
  %s7 = ssub.s32 1, %s5
  %s8 = scalar_select 0, %s7, %s5
  // Predicated region
  $region2: #{swootnet_forward.32} parent=0 // pred_check
    _
  $region3: #{swootnet_forward.32} parent=0 // pred_check_branch
    %10 = sbr.rel (0) target = $region5
  $region4: #{swootnet_forward.32} parent=0 // pred_region
    _
  $region5: #{swootnet_forward.32} parent=0 // pred_fallthru
    _
  // Predicated region
  $region6: #{swootnet_forward.32} parent=0 // pred_check
    _
  $region7: #{swootnet_forward.32} parent=0 // pred_check_branch
    %12 = sbr.rel (0) target = $region9
  $region8: #{swootnet_forward.32} parent=0 // pred_region
    _
  $region9: #{swootnet_forward.32} parent=0 // pred_fallthru
    _
  // Predicated region
  $region10: #{swootnet_forward.32} parent=0 // pred_check
    _
  $region11: #{swootnet_forward.32} parent=0 // pred_check_branch
    %14 = sbr.rel (0) target = $region13
  $region12: #{swootnet_forward.32} parent=0 // pred_region
    _
  $region13: #{swootnet_forward.32} parent=0 // pred_fallthru
    _
  // Predicated region
  $region14: #{swootnet_forward.32} parent=0 // pred_check
    _
  $region15: #{swootnet_forward.32} parent=0 // pred_check_branch
    %16 = sbr.rel (0) target = $region17
  $region16: #{swootnet_forward.32} parent=0 // pred_region
    _
  $region17: #{swootnet_forward.32} parent=0 // pred_fallthru
    _
  %v18 = vld [vmem:[%s0] sm:$0xff]
  %v19 = vld [vmem:[%s0 + $0x8] sm:$0xff]
  %v20 = vld [vmem:[%s0 + $0x10] sm:$0xff]
  %v21 = vld [vmem:[%s0 + $0x18] sm:$0xff]
  %v22 = vld [vmem:[%s2] sm:$0xf]
  %v24 = vlaneseq
  %v25 = vshrl.u32 %v24, 7
  %v26 = vsub.s32 0, %v25
  %v27 = vrot.slane %v22, %v26
  %v28 = vlaneseq
  %v29 = vshrl.u32 %v28, 7
  %v30 = vsub.s32 1, %v29
  %v31 = vrot.slane %v22, %v30
  %v32 = vlaneseq
  %v33 = vshrl.u32 %v32, 7
  %v34 = vsub.s32 2, %v33
  %v35 = vrot.slane %v22, %v34
  %v36 = vlaneseq
  %v37 = vshrl.u32 %v36, 7
  %v38 = vsub.s32 3, %v37
  %v39 = vrot.slane %v22, %v38
  %v44 = vmul.f32 %v18, %v27
  %v45 = vmul.f32 %v19, %v31
  %v46 = vmul.f32 %v20, %v35
  %v47 = vmul.f32 %v21, %v39
  %v48 = vld [vmem:[%s3] sm:$0xf]
  %v50 = vlaneseq
  %v51 = vshrl.u32 %v50, 7
  %v52 = vsub.s32 0, %v51
  %v53 = vrot.slane %v48, %v52
  %v54 = vlaneseq
  %v55 = vshrl.u32 %v54, 7
  %v56 = vsub.s32 1, %v55
  %v57 = vrot.slane %v48, %v56
  %v58 = vlaneseq
  %v59 = vshrl.u32 %v58, 7
  %v60 = vsub.s32 2, %v59
  %v61 = vrot.slane %v48, %v60
  %v62 = vlaneseq
  %v63 = vshrl.u32 %v62, 7
  %v64 = vsub.s32 3, %v63
  %v65 = vrot.slane %v48, %v64
  %v70 = vadd.f32 %v44, %v53
  %v71 = vadd.f32 %v45, %v57
  %v72 = vadd.f32 %v46, %v61
  %v73 = vadd.f32 %v47, %v65
  %v74 = vmax.f32 %v70, 0.0
  %v75 = vmax.f32 %v71, 0.0
  %v76 = vmax.f32 %v72, 0.0
  %v77 = vmax.f32 %v73, 0.0
  %v78 = vpack.c.bf16 %v74, %v74
  %v79 = vpack.c.bf16 %v75, %v75
  %v80 = vpack.c.bf16 %v76, %v76
  %v81 = vpack.c.bf16 %v77, %v77
  %v82 = vld [vmem:[%s1] sm:$0xf]
  %v83 = vld [vmem:[%s1 + $0x4] sm:$0xf]
  %v84 = vld [vmem:[%s1 + $0x8] sm:$0xf]
  %v85 = vld [vmem:[%s1 + $0xc] sm:$0xf]
  %v86 = vld [vmem:[%s1 + $0x10] sm:$0xf]
  %v87 = vld [vmem:[%s1 + $0x14] sm:$0xf]
  %v88 = vld [vmem:[%s1 + $0x18] sm:$0xf]
  %v89 = vld [vmem:[%s1 + $0x1c] sm:$0xf]
  %v90 = vld [vmem:[%s1 + $0x20] sm:$0xf]
  %v91 = vld [vmem:[%s1 + $0x24] sm:$0xf]
  %v92 = vld [vmem:[%s1 + $0x28] sm:$0xf]
  %v93 = vld [vmem:[%s1 + $0x2c] sm:$0xf]
  %v94 = vld [vmem:[%s1 + $0x30] sm:$0xf]
  %v95 = vld [vmem:[%s1 + $0x34] sm:$0xf]
  %v96 = vld [vmem:[%s1 + $0x38] sm:$0xf]
  %v97 = vld [vmem:[%s1 + $0x3c] sm:$0xf]
  %v98 = vld [vmem:[%s1 + $0x40] sm:$0xf]
  %v99 = vld [vmem:[%s1 + $0x44] sm:$0xf]
  %v100 = vld [vmem:[%s1 + $0x48] sm:$0xf]
  %v101 = vld [vmem:[%s1 + $0x4c] sm:$0xf]
  %v102 = vld [vmem:[%s1 + $0x50] sm:$0xf]
  %v103 = vld [vmem:[%s1 + $0x54] sm:$0xf]
  %v104 = vld [vmem:[%s1 + $0x58] sm:$0xf]
  %v105 = vld [vmem:[%s1 + $0x5c] sm:$0xf]
  %v106 = vld [vmem:[%s1 + $0x60] sm:$0xf]
  %v107 = vld [vmem:[%s1 + $0x64] sm:$0xf]
  %v108 = vld [vmem:[%s1 + $0x68] sm:$0xf]
  %v109 = vld [vmem:[%s1 + $0x6c] sm:$0xf]
  %v110 = vld [vmem:[%s1 + $0x70] sm:$0xf]
  %v111 = vld [vmem:[%s1 + $0x74] sm:$0xf]
  %v112 = vld [vmem:[%s1 + $0x78] sm:$0xf]
  %v113 = vld [vmem:[%s1 + $0x7c] sm:$0xf]
  %v114 = vld [vmem:[%s1 + $0x80] sm:$0xf]
  %v115 = vld [vmem:[%s1 + $0x84] sm:$0xf]
  %v116 = vld [vmem:[%s1 + $0x88] sm:$0xf]
  %v117 = vld [vmem:[%s1 + $0x8c] sm:$0xf]
  %v118 = vld [vmem:[%s1 + $0x90] sm:$0xf]
  %v119 = vld [vmem:[%s1 + $0x94] sm:$0xf]
  %v120 = vld [vmem:[%s1 + $0x98] sm:$0xf]
  %v121 = vld [vmem:[%s1 + $0x9c] sm:$0xf]
  %v122 = vld [vmem:[%s1 + $0xa0] sm:$0xf]
  %v123 = vld [vmem:[%s1 + $0xa4] sm:$0xf]
  %v124 = vld [vmem:[%s1 + $0xa8] sm:$0xf]
  %v125 = vld [vmem:[%s1 + $0xac] sm:$0xf]
  %v126 = vld [vmem:[%s1 + $0xb0] sm:$0xf]
  %v127 = vld [vmem:[%s1 + $0xb4] sm:$0xf]
  %v128 = vld [vmem:[%s1 + $0xb8] sm:$0xf]
  %v129 = vld [vmem:[%s1 + $0xbc] sm:$0xf]
  %v130 = vld [vmem:[%s1 + $0xc0] sm:$0xf]
  %v131 = vld [vmem:[%s1 + $0xc4] sm:$0xf]
  %v132 = vld [vmem:[%s1 + $0xc8] sm:$0xf]
  %v133 = vld [vmem:[%s1 + $0xcc] sm:$0xf]
  %v134 = vld [vmem:[%s1 + $0xd0] sm:$0xf]
  %v135 = vld [vmem:[%s1 + $0xd4] sm:$0xf]
  %v136 = vld [vmem:[%s1 + $0xd8] sm:$0xf]
  %v137 = vld [vmem:[%s1 + $0xdc] sm:$0xf]
  %v138 = vld [vmem:[%s1 + $0xe0] sm:$0xf]
  %v139 = vld [vmem:[%s1 + $0xe4] sm:$0xf]
  %v140 = vld [vmem:[%s1 + $0xe8] sm:$0xf]
  %v141 = vld [vmem:[%s1 + $0xec] sm:$0xf]
  %v142 = vld [vmem:[%s1 + $0xf0] sm:$0xf]
  %v143 = vld [vmem:[%s1 + $0xf4] sm:$0xf]
  %v144 = vld [vmem:[%s1 + $0xf8] sm:$0xf]
  %v208 = vunpack.c.l.b16 %v82
  %v209 = vunpack.c.l.b16 %v83
  %v210 = vunpack.c.l.b16 %v84
  %v211 = vunpack.c.l.b16 %v85
  %v212 = vunpack.c.l.b16 %v86
  %v213 = vunpack.c.l.b16 %v87
  %v214 = vunpack.c.l.b16 %v88
  %v215 = vunpack.c.l.b16 %v89
  %v216 = vunpack.c.l.b16 %v90
  %v217 = vunpack.c.l.b16 %v91
  %v218 = vunpack.c.l.b16 %v92
  %v219 = vunpack.c.l.b16 %v93
  %v220 = vunpack.c.l.b16 %v94
  %v221 = vunpack.c.l.b16 %v95
  %v222 = vunpack.c.l.b16 %v96
  %v223 = vunpack.c.l.b16 %v97
  %v224 = vunpack.c.l.b16 %v98
  %v225 = vunpack.c.l.b16 %v99
  %v226 = vunpack.c.l.b16 %v100
  %v227 = vunpack.c.l.b16 %v101
  %v228 = vunpack.c.l.b16 %v102
  %v229 = vunpack.c.l.b16 %v103
  %v230 = vunpack.c.l.b16 %v104
  %v231 = vunpack.c.l.b16 %v105
  %v232 = vunpack.c.l.b16 %v106
  %v233 = vunpack.c.l.b16 %v107
  %v234 = vunpack.c.l.b16 %v108
  %v235 = vunpack.c.l.b16 %v109
  %v236 = vunpack.c.l.b16 %v110
  %v237 = vunpack.c.l.b16 %v111
  %v238 = vunpack.c.l.b16 %v112
  %v239 = vunpack.c.l.b16 %v113
  %v240 = vunpack.c.l.b16 %v114
  %v241 = vunpack.c.l.b16 %v115
  %v242 = vunpack.c.l.b16 %v116
  %v243 = vunpack.c.l.b16 %v117
  %v244 = vunpack.c.l.b16 %v118
  %v245 = vunpack.c.l.b16 %v119
  %v246 = vunpack.c.l.b16 %v120
  %v247 = vunpack.c.l.b16 %v121
  %v248 = vunpack.c.l.b16 %v122
  %v249 = vunpack.c.l.b16 %v123
  %v250 = vunpack.c.l.b16 %v124
  %v251 = vunpack.c.l.b16 %v125
  %v252 = vunpack.c.l.b16 %v126
  %v253 = vunpack.c.l.b16 %v127
  %v254 = vunpack.c.l.b16 %v128
  %v255 = vunpack.c.l.b16 %v129
  %v256 = vunpack.c.l.b16 %v130
  %v257 = vunpack.c.l.b16 %v131
  %v258 = vunpack.c.l.b16 %v132
  %v259 = vunpack.c.l.b16 %v133
  %v260 = vunpack.c.l.b16 %v134
  %v261 = vunpack.c.l.b16 %v135
  %v262 = vunpack.c.l.b16 %v136
  %v263 = vunpack.c.l.b16 %v137
  %v264 = vunpack.c.l.b16 %v138
  %v265 = vunpack.c.l.b16 %v139
  %v266 = vunpack.c.l.b16 %v140
  %v267 = vunpack.c.l.b16 %v141
  %v268 = vunpack.c.l.b16 %v142
  %v269 = vunpack.c.l.b16 %v143
  %v270 = vunpack.c.l.b16 %v144
  %v271 = vpack.c.b16 %v209, %v208
  %v272 = vpack.c.b16 %v211, %v210
  %v273 = vpack.c.b16 %v213, %v212
  %v274 = vpack.c.b16 %v215, %v214
  %v275 = vpack.c.b16 %v217, %v216
  %v276 = vpack.c.b16 %v219, %v218
  %v277 = vpack.c.b16 %v221, %v220
  %v278 = vpack.c.b16 %v223, %v222
  %v279 = vpack.c.b16 %v225, %v224
  %v280 = vpack.c.b16 %v227, %v226
  %v281 = vpack.c.b16 %v229, %v228
  %v282 = vpack.c.b16 %v231, %v230
  %v283 = vpack.c.b16 %v233, %v232
  %v284 = vpack.c.b16 %v235, %v234
  %v285 = vpack.c.b16 %v237, %v236
  %v286 = vpack.c.b16 %v239, %v238
  %v287 = vpack.c.b16 %v241, %v240
  %v288 = vpack.c.b16 %v243, %v242
  %v289 = vpack.c.b16 %v245, %v244
  %v290 = vpack.c.b16 %v247, %v246
  %v291 = vpack.c.b16 %v249, %v248
  %v292 = vpack.c.b16 %v251, %v250
  %v293 = vpack.c.b16 %v253, %v252
  %v294 = vpack.c.b16 %v255, %v254
  %v295 = vpack.c.b16 %v257, %v256
  %v296 = vpack.c.b16 %v259, %v258
  %v297 = vpack.c.b16 %v261, %v260
  %v298 = vpack.c.b16 %v263, %v262
  %v299 = vpack.c.b16 %v265, %v264
  %v300 = vpack.c.b16 %v267, %v266
  %v301 = vpack.c.b16 %v269, %v268
  %v302 = vpack.c.b16 %v270, %v270
  %vm334 = vcmask 982016
  %v336 = vsel %vm334, %v81, 0
  %vm338 = vcmask 1043456
  %v340 = vsel %vm338, %v302, 0
  %342 = vmatprep.subr.bf16.mxu0 0
  %343 = vmatpush1.bf16.msra.mxu0 %v271
  %344 = vmatprep.subr.bf16.mxu0 0
  %345 = vmatpush1.bf16.msra.mxu0 %v272
  %346 = vmatprep.subr.bf16.mxu0 0
  %347 = vmatpush1.bf16.msra.mxu0 %v273
  %348 = vmatprep.subr.bf16.mxu0 0
  %349 = vmatpush1.bf16.msra.mxu0 %v274
  %350 = vmatprep.subr.bf16.mxu0 0
  %351 = vmatpush1.bf16.msra.mxu0 %v275
  %352 = vmatprep.subr.bf16.mxu0 0
  %353 = vmatpush1.bf16.msra.mxu0 %v276
  %354 = vmatprep.subr.bf16.mxu0 0
  %355 = vmatpush1.bf16.msra.mxu0 %v277
  %356 = vmatprep.subr.bf16.mxu0 0
  %357 = vmatpush1.bf16.msra.mxu0 %v278
  %358 = vmatprep.subr.bf16.mxu0 0
  %359 = vmatpush1.bf16.msra.mxu0 %v279
  %360 = vmatprep.subr.bf16.mxu0 0
  %361 = vmatpush1.bf16.msra.mxu0 %v280
  %362 = vmatprep.subr.bf16.mxu0 0
  %363 = vmatpush1.bf16.msra.mxu0 %v281
  %364 = vmatprep.subr.bf16.mxu0 0
  %365 = vmatpush1.bf16.msra.mxu0 %v282
  %366 = vmatprep.subr.bf16.mxu0 0
  %367 = vmatpush1.bf16.msra.mxu0 %v283
  %368 = vmatprep.subr.bf16.mxu0 0
  %369 = vmatpush1.bf16.msra.mxu0 %v284
  %370 = vmatprep.subr.bf16.mxu0 0
  %371 = vmatpush1.bf16.msra.mxu0 %v285
  %372 = vmatprep.subr.bf16.mxu0 0
  %373 = vmatpush1.bf16.msra.mxu0 %v286
  %374 = vmatprep.mubr.bf16.mxu0 %v79
  %375 = vmatmul.mubr.bf16.gmra.mrb[0].mxu0 %v78
  %v376 = vpop.f32.mrb[0].mxu0
  %v377 = vadd.f32 0.0, %v376
  %v378 = vpop.f32.mrb[0].mxu0
  %v379 = vpop.f32.mrb[0].mxu0
  %v380 = vpop.f32.mrb[0].mxu0
  %381 = vdwg.mxu0
  %382 = vmatprep.subr.bf16.mxu0 0
  %383 = vmatpush1.bf16.msra.mxu0 %v287
  %384 = vmatprep.subr.bf16.mxu0 0
  %385 = vmatpush1.bf16.msra.mxu0 %v288
  %386 = vmatprep.subr.bf16.mxu0 0
  %387 = vmatpush1.bf16.msra.mxu0 %v289
  %388 = vmatprep.subr.bf16.mxu0 0
  %389 = vmatpush1.bf16.msra.mxu0 %v290
  %390 = vmatprep.subr.bf16.mxu0 0
  %391 = vmatpush1.bf16.msra.mxu0 %v291
  %392 = vmatprep.subr.bf16.mxu0 0
  %393 = vmatpush1.bf16.msra.mxu0 %v292
  %394 = vmatprep.subr.bf16.mxu0 0
  %395 = vmatpush1.bf16.msra.mxu0 %v293
  %396 = vmatprep.subr.bf16.mxu0 0
  %397 = vmatpush1.bf16.msra.mxu0 %v294
  %398 = vmatprep.subr.bf16.mxu0 0
  %399 = vmatpush1.bf16.msra.mxu0 %v295
  %400 = vmatprep.subr.bf16.mxu0 0
  %401 = vmatpush1.bf16.msra.mxu0 %v296
  %402 = vmatprep.subr.bf16.mxu0 0
  %403 = vmatpush1.bf16.msra.mxu0 %v297
  %404 = vmatprep.subr.bf16.mxu0 0
  %405 = vmatpush1.bf16.msra.mxu0 %v298
  %406 = vmatprep.subr.bf16.mxu0 0
  %407 = vmatpush1.bf16.msra.mxu0 %v299
  %408 = vmatprep.subr.bf16.mxu0 0
  %409 = vmatpush1.bf16.msra.mxu0 %v300
  %410 = vmatprep.subr.bf16.mxu0 0
  %411 = vmatpush1.bf16.msra.mxu0 %v301
  %412 = vmatprep.subr.bf16.mxu0 0
  %413 = vmatpush1.bf16.msra.mxu0 %v340
  %414 = vmatprep.mubr.bf16.mxu0 %v336
  %415 = vmatmul.mubr.bf16.gmra.mrb[0].mxu0 %v80
  %v416 = vpop.f32.mrb[0].mxu0
  %v417 = vadd.f32 %v377, %v416
  %v418 = vpop.f32.mrb[0].mxu0
  %v419 = vpop.f32.mrb[0].mxu0
  %v420 = vpop.f32.mrb[0].mxu0
  %421 = vdwg.mxu0
  %vm422 = vcmask 97280
  %423 = vst.msk [vmem:[%s4] sm:$0xff] %vm422, %v417
  // Predicated region
  $region18: #{swootnet_forward.32} parent=0 // pred_check
    _
  $region19: #{swootnet_forward.32} parent=0 // pred_check_branch
    %425 = sbr.rel (0) target = $region21
  $region20: #{swootnet_forward.32} parent=0 // pred_region
    _
  $region21: #{swootnet_forward.32} parent=0 // pred_fallthru
    _
  // Predicated region
  $region22: #{swootnet_forward.32} parent=0 // pred_check
    _
  $region23: #{swootnet_forward.32} parent=0 // pred_check_branch
    %427 = sbr.rel (0) target = $region25
  $region24: #{swootnet_forward.32} parent=0 // pred_region
    _
  $region25: #{swootnet_forward.32} parent=0 // pred_fallthru
    _

// kernel: swootnet_forward.35
$region0: #{swootnet_forward.35}
  #allocation0 [shape = 'u32[]', space=smem, size = 0x4, offset = 0x4, fixed_abs, tag = 'smem constant byte address 0x4 - core index']
  #allocation1 [shape = 'u32[144,128]{1,0:T(1,128)}', space=vmem, size = 0x12000, scoped, tag = 'internal scratch']
  %s0 = inlined_call_operand.vmem [shape: f32[8,320], index: 0, kind: input, shape index: {}]
  %s1 = inlined_call_operand.vmem [shape: bf16[320,48], index: 1, kind: input, shape index: {}]
  %s2 = inlined_call_operand.vmem [shape: f32[1,320], index: 2, kind: input, shape index: {}]
  %s3 = inlined_call_operand.vmem [shape: f32[1,320], index: 3, kind: input, shape index: {}]
  %s4 = inlined_call_operand.vmem [shape: f32[8,48], index: 4, kind: output, shape index: {}]
  %s5 = sld [smem:[#allocation0]]
  $region26: #{swootnet_forward.35} parent=0
    _
  %s7 = ssub.s32 1, %s5
  %s8 = scalar_select 0, %s7, %s5
  // Predicated region
  $region2: #{swootnet_forward.35} parent=0 // pred_check
    _
  $region3: #{swootnet_forward.35} parent=0 // pred_check_branch
    %10 = sbr.rel (0) target = $region5
  $region4: #{swootnet_forward.35} parent=0 // pred_region
    _
  $region5: #{swootnet_forward.35} parent=0 // pred_fallthru
    _
  // Predicated region
  $region6: #{swootnet_forward.35} parent=0 // pred_check
    _
  $region7: #{swootnet_forward.35} parent=0 // pred_check_branch
    %12 = sbr.rel (0) target = $region9
  $region8: #{swootnet_forward.35} parent=0 // pred_region
    _
  $region9: #{swootnet_forward.35} parent=0 // pred_fallthru
    _
  // Predicated region
  $region10: #{swootnet_forward.35} parent=0 // pred_check
    _
  $region11: #{swootnet_forward.35} parent=0 // pred_check_branch
    %14 = sbr.rel (0) target = $region13
  $region12: #{swootnet_forward.35} parent=0 // pred_region
    _
  $region13: #{swootnet_forward.35} parent=0 // pred_fallthru
    _
  // Predicated region
  $region14: #{swootnet_forward.35} parent=0 // pred_check
    _
  $region15: #{swootnet_forward.35} parent=0 // pred_check_branch
    %16 = sbr.rel (0) target = $region17
  $region16: #{swootnet_forward.35} parent=0 // pred_region
    _
  $region17: #{swootnet_forward.35} parent=0 // pred_fallthru
    _
  %v18 = vld [vmem:[%s0] sm:$0xff]
  %v19 = vld [vmem:[%s0 + $0x8] sm:$0xff]
  %v20 = vld [vmem:[%s0 + $0x10] sm:$0xff]
  %v21 = vld [vmem:[%s2] sm:$0x7]
  %v23 = vlaneseq
  %v24 = vshrl.u32 %v23, 7
  %v25 = vsub.s32 0, %v24
  %v26 = vrot.slane %v21, %v25
  %v27 = vlaneseq
  %v28 = vshrl.u32 %v27, 7
  %v29 = vsub.s32 1, %v28
  %v30 = vrot.slane %v21, %v29
  %v31 = vlaneseq
  %v32 = vshrl.u32 %v31, 7
  %v33 = vsub.s32 2, %v32
  %v34 = vrot.slane %v21, %v33
  %v38 = vmul.f32 %v18, %v26
  %v39 = vmul.f32 %v19, %v30
  %v40 = vmul.f32 %v20, %v34
  %v41 = vld [vmem:[%s3] sm:$0x7]
  %v43 = vlaneseq
  %v44 = vshrl.u32 %v43, 7
  %v45 = vsub.s32 0, %v44
  %v46 = vrot.slane %v41, %v45
  %v47 = vlaneseq
  %v48 = vshrl.u32 %v47, 7
  %v49 = vsub.s32 1, %v48
  %v50 = vrot.slane %v41, %v49
  %v51 = vlaneseq
  %v52 = vshrl.u32 %v51, 7
  %v53 = vsub.s32 2, %v52
  %v54 = vrot.slane %v41, %v53
  %v58 = vadd.f32 %v38, %v46
  %v59 = vadd.f32 %v39, %v50
  %v60 = vadd.f32 %v40, %v54
  %v61 = vmax.f32 %v58, 0.0
  %v62 = vmax.f32 %v59, 0.0
  %v63 = vmax.f32 %v60, 0.0
  %v64 = vpack.c.bf16 %v61, %v61
  %v65 = vpack.c.bf16 %v62, %v62
  %v66 = vpack.c.bf16 %v63, %v63
  %v67 = vld [vmem:[%s1] sm:$0xf]
  %v68 = vld [vmem:[%s1 + $0x4] sm:$0xf]
  %v69 = vld [vmem:[%s1 + $0x8] sm:$0xf]
  %v70 = vld [vmem:[%s1 + $0xc] sm:$0xf]
  %v71 = vld [vmem:[%s1 + $0x10] sm:$0xf]
  %v72 = vld [vmem:[%s1 + $0x14] sm:$0xf]
  %v73 = vld [vmem:[%s1 + $0x18] sm:$0xf]
  %v74 = vld [vmem:[%s1 + $0x1c] sm:$0xf]
  %v75 = vld [vmem:[%s1 + $0x20] sm:$0xf]
  %v76 = vld [vmem:[%s1 + $0x24] sm:$0xf]
  %v77 = vld [vmem:[%s1 + $0x28] sm:$0xf]
  %v78 = vld [vmem:[%s1 + $0x2c] sm:$0xf]
  %v79 = vld [vmem:[%s1 + $0x30] sm:$0xf]
  %v80 = vld [vmem:[%s1 + $0x34] sm:$0xf]
  %v81 = vld [vmem:[%s1 + $0x38] sm:$0xf]
  %v82 = vld [vmem:[%s1 + $0x3c] sm:$0xf]
  %v83 = vld [vmem:[%s1 + $0x40] sm:$0xf]
  %v84 = vld [vmem:[%s1 + $0x44] sm:$0xf]
  %v85 = vld [vmem:[%s1 + $0x48] sm:$0xf]
  %v86 = vld [vmem:[%s1 + $0x4c] sm:$0xf]
  %v87 = vld [vmem:[%s1 + $0x50] sm:$0xf]
  %v88 = vld [vmem:[%s1 + $0x54] sm:$0xf]
  %v89 = vld [vmem:[%s1 + $0x58] sm:$0xf]
  %v90 = vld [vmem:[%s1 + $0x5c] sm:$0xf]
  %v91 = vld [vmem:[%s1 + $0x60] sm:$0xf]
  %v92 = vld [vmem:[%s1 + $0x64] sm:$0xf]
  %v93 = vld [vmem:[%s1 + $0x68] sm:$0xf]
  %v94 = vld [vmem:[%s1 + $0x6c] sm:$0xf]
  %v95 = vld [vmem:[%s1 + $0x70] sm:$0xf]
  %v96 = vld [vmem:[%s1 + $0x74] sm:$0xf]
  %v97 = vld [vmem:[%s1 + $0x78] sm:$0xf]
  %v98 = vld [vmem:[%s1 + $0x7c] sm:$0xf]
  %v99 = vld [vmem:[%s1 + $0x80] sm:$0xf]
  %v100 = vld [vmem:[%s1 + $0x84] sm:$0xf]
  %v101 = vld [vmem:[%s1 + $0x88] sm:$0xf]
  %v102 = vld [vmem:[%s1 + $0x8c] sm:$0xf]
  %v103 = vld [vmem:[%s1 + $0x90] sm:$0xf]
  %v104 = vld [vmem:[%s1 + $0x94] sm:$0xf]
  %v105 = vld [vmem:[%s1 + $0x98] sm:$0xf]
  %v106 = vld [vmem:[%s1 + $0x9c] sm:$0xf]
  %v147 = vunpack.c.l.b16 %v67
  %v148 = vunpack.c.l.b16 %v68
  %v149 = vunpack.c.l.b16 %v69
  %v150 = vunpack.c.l.b16 %v70
  %v151 = vunpack.c.l.b16 %v71
  %v152 = vunpack.c.l.b16 %v72
  %v153 = vunpack.c.l.b16 %v73
  %v154 = vunpack.c.l.b16 %v74
  %v155 = vunpack.c.l.b16 %v75
  %v156 = vunpack.c.l.b16 %v76
  %v157 = vunpack.c.l.b16 %v77
  %v158 = vunpack.c.l.b16 %v78
  %v159 = vunpack.c.l.b16 %v79
  %v160 = vunpack.c.l.b16 %v80
  %v161 = vunpack.c.l.b16 %v81
  %v162 = vunpack.c.l.b16 %v82
  %v163 = vunpack.c.l.b16 %v83
  %v164 = vunpack.c.l.b16 %v84
  %v165 = vunpack.c.l.b16 %v85
  %v166 = vunpack.c.l.b16 %v86
  %v167 = vunpack.c.l.b16 %v87
  %v168 = vunpack.c.l.b16 %v88
  %v169 = vunpack.c.l.b16 %v89
  %v170 = vunpack.c.l.b16 %v90
  %v171 = vunpack.c.l.b16 %v91
  %v172 = vunpack.c.l.b16 %v92
  %v173 = vunpack.c.l.b16 %v93
  %v174 = vunpack.c.l.b16 %v94
  %v175 = vunpack.c.l.b16 %v95
  %v176 = vunpack.c.l.b16 %v96
  %v177 = vunpack.c.l.b16 %v97
  %v178 = vunpack.c.l.b16 %v98
  %v179 = vunpack.c.l.b16 %v99
  %v180 = vunpack.c.l.b16 %v100
  %v181 = vunpack.c.l.b16 %v101
  %v182 = vunpack.c.l.b16 %v102
  %v183 = vunpack.c.l.b16 %v103
  %v184 = vunpack.c.l.b16 %v104
  %v185 = vunpack.c.l.b16 %v105
  %v186 = vunpack.c.l.b16 %v106
  %v187 = vpack.c.b16 %v148, %v147
  %v188 = vpack.c.b16 %v150, %v149
  %v189 = vpack.c.b16 %v152, %v151
  %v190 = vpack.c.b16 %v154, %v153
  %v191 = vpack.c.b16 %v156, %v155
  %v192 = vpack.c.b16 %v158, %v157
  %v193 = vpack.c.b16 %v160, %v159
  %v194 = vpack.c.b16 %v162, %v161
  %v195 = vpack.c.b16 %v164, %v163
  %v196 = vpack.c.b16 %v166, %v165
  %v197 = vpack.c.b16 %v168, %v167
  %v198 = vpack.c.b16 %v170, %v169
  %v199 = vpack.c.b16 %v172, %v171
  %v200 = vpack.c.b16 %v174, %v173
  %v201 = vpack.c.b16 %v176, %v175
  %v202 = vpack.c.b16 %v178, %v177
  %v203 = vpack.c.b16 %v180, %v179
  %v204 = vpack.c.b16 %v182, %v181
  %v205 = vpack.c.b16 %v184, %v183
  %v206 = vpack.c.b16 %v186, %v185
  %vm227 = vcmask 523264
  %v229 = vsel %vm227, %v66, 0
  %231 = vmatprep.subr.bf16.mxu0 0
  %232 = vmatpush1.bf16.msra.mxu0 %v187
  %233 = vmatprep.subr.bf16.mxu0 0
  %234 = vmatpush1.bf16.msra.mxu0 %v188
  %235 = vmatprep.subr.bf16.mxu0 0
  %236 = vmatpush1.bf16.msra.mxu0 %v189
  %237 = vmatprep.subr.bf16.mxu0 0
  %238 = vmatpush1.bf16.msra.mxu0 %v190
  %239 = vmatprep.subr.bf16.mxu0 0
  %240 = vmatpush1.bf16.msra.mxu0 %v191
  %241 = vmatprep.subr.bf16.mxu0 0
  %242 = vmatpush1.bf16.msra.mxu0 %v192
  %243 = vmatprep.subr.bf16.mxu0 0
  %244 = vmatpush1.bf16.msra.mxu0 %v193
  %245 = vmatprep.subr.bf16.mxu0 0
  %246 = vmatpush1.bf16.msra.mxu0 %v194
  %247 = vmatprep.subr.bf16.mxu0 0
  %248 = vmatpush1.bf16.msra.mxu0 %v195
  %249 = vmatprep.subr.bf16.mxu0 0
  %250 = vmatpush1.bf16.msra.mxu0 %v196
  %251 = vmatprep.subr.bf16.mxu0 0
  %252 = vmatpush1.bf16.msra.mxu0 %v197
  %253 = vmatprep.subr.bf16.mxu0 0
  %254 = vmatpush1.bf16.msra.mxu0 %v198
  %255 = vmatprep.subr.bf16.mxu0 0
  %256 = vmatpush1.bf16.msra.mxu0 %v199
  %257 = vmatprep.subr.bf16.mxu0 0
  %258 = vmatpush1.bf16.msra.mxu0 %v200
  %259 = vmatprep.subr.bf16.mxu0 0
  %260 = vmatpush1.bf16.msra.mxu0 %v201
  %261 = vmatprep.subr.bf16.mxu0 0
  %262 = vmatpush1.bf16.msra.mxu0 %v202
  %263 = vmatprep.mubr.bf16.mxu0 %v65
  %264 = vmatmul.mubr.bf16.gmra.mrb[0].mxu0 %v64
  %v265 = vpop.f32.mrb[0].mxu0
  %v266 = vadd.f32 0.0, %v265
  %v267 = vpop.f32.mrb[0].mxu0
  %v268 = vpop.f32.mrb[0].mxu0
  %v269 = vpop.f32.mrb[0].mxu0
  %270 = vdwg.mxu0
  %271 = vmatprep.subr.bf16.mxu0 0
  %272 = vmatpush1.bf16.msra.mxu0 %v203
  %273 = vmatprep.subr.bf16.mxu0 0
  %274 = vmatpush1.bf16.msra.mxu0 %v204
  %275 = vmatprep.subr.bf16.mxu0 0
  %276 = vmatpush1.bf16.msra.mxu0 %v205
  %277 = vmatprep.subr.bf16.mxu0 0
  %278 = vmatpush1.bf16.msra.mxu0 %v206
  %279 = vmatprep.subr.bf16.mxu0 0
  %280 = vmatpush1.bf16.msra.mxu0 0
  %281 = vmatprep.subr.bf16.mxu0 0
  %282 = vmatpush1.bf16.msra.mxu0 0
  %283 = vmatprep.subr.bf16.mxu0 0
  %284 = vmatpush1.bf16.msra.mxu0 0
  %285 = vmatprep.subr.bf16.mxu0 0
  %286 = vmatpush1.bf16.msra.mxu0 0
  %287 = vmatprep.subr.bf16.mxu0 0
  %288 = vmatpush1.bf16.msra.mxu0 0
  %289 = vmatprep.subr.bf16.mxu0 0
  %290 = vmatpush1.bf16.msra.mxu0 0
  %291 = vmatprep.subr.bf16.mxu0 0
  %292 = vmatpush1.bf16.msra.mxu0 0
  %293 = vmatprep.subr.bf16.mxu0 0
  %294 = vmatpush1.bf16.msra.mxu0 0
  %295 = vmatprep.subr.bf16.mxu0 0
  %296 = vmatpush1.bf16.msra.mxu0 0
  %297 = vmatprep.subr.bf16.mxu0 0
  %298 = vmatpush1.bf16.msra.mxu0 0
  %299 = vmatprep.subr.bf16.mxu0 0
  %300 = vmatpush1.bf16.msra.mxu0 0
  %301 = vmatprep.subr.bf16.mxu0 0
  %302 = vmatpush1.bf16.msra.mxu0 0
  %303 = vmatprep.mubr.bf16.mxu0 0
  %304 = vmatmul.mubr.bf16.gmra.mrb[0].mxu0 %v229
  %v305 = vpop.f32.mrb[0].mxu0
  %v306 = vadd.f32 %v266, %v305
  %v307 = vpop.f32.mrb[0].mxu0
  %v308 = vpop.f32.mrb[0].mxu0
  %v309 = vpop.f32.mrb[0].mxu0
  %310 = vdwg.mxu0
  %vm311 = vcmask 392192
  %312 = vst.msk [vmem:[%s4] sm:$0xff] %vm311, %v306
  // Predicated region
  $region18: #{swootnet_forward.35} parent=0 // pred_check
    _
  $region19: #{swootnet_forward.35} parent=0 // pred_check_branch
    %314 = sbr.rel (0) target = $region21
  $region20: #{swootnet_forward.35} parent=0 // pred_region
    _
  $region21: #{swootnet_forward.35} parent=0 // pred_fallthru
    _
  // Predicated region
  $region22: #{swootnet_forward.35} parent=0 // pred_check
    _
  $region23: #{swootnet_forward.35} parent=0 // pred_check_branch
    %316 = sbr.rel (0) target = $region25
  $region24: #{swootnet_forward.35} parent=0 // pred_region
    _
  $region25: #{swootnet_forward.35} parent=0 // pred_fallthru
    _

// kernel: swootnet_forward.34
$region0: #{swootnet_forward.34}
  #allocation0 [shape = 'u32[]', space=smem, size = 0x4, offset = 0x4, fixed_abs, tag = 'smem constant byte address 0x4 - core index']
  #allocation1 [shape = 'u32[144,128]{1,0:T(1,128)}', space=vmem, size = 0x12000, scoped, tag = 'internal scratch']
  %s0 = inlined_call_operand.vmem [shape: f32[8,612], index: 0, kind: input, shape index: {}]
  %s1 = inlined_call_operand.vmem [shape: bf16[612,12], index: 1, kind: input, shape index: {}]
  %s2 = inlined_call_operand.vmem [shape: f32[1,612], index: 2, kind: input, shape index: {}]
  %s3 = inlined_call_operand.vmem [shape: f32[1,612], index: 3, kind: input, shape index: {}]
  %s4 = inlined_call_operand.vmem [shape: f32[8,12], index: 4, kind: output, shape index: {}]
  %s5 = sld [smem:[#allocation0]]
  $region26: #{swootnet_forward.34} parent=0
    _
  %s7 = ssub.s32 1, %s5
  %s8 = scalar_select 0, %s7, %s5
  // Predicated region
  $region2: #{swootnet_forward.34} parent=0 // pred_check
    _
  $region3: #{swootnet_forward.34} parent=0 // pred_check_branch
    %10 = sbr.rel (0) target = $region5
  $region4: #{swootnet_forward.34} parent=0 // pred_region
    _
  $region5: #{swootnet_forward.34} parent=0 // pred_fallthru
    _
  // Predicated region
  $region6: #{swootnet_forward.34} parent=0 // pred_check
    _
  $region7: #{swootnet_forward.34} parent=0 // pred_check_branch
    %12 = sbr.rel (0) target = $region9
  $region8: #{swootnet_forward.34} parent=0 // pred_region
    _
  $region9: #{swootnet_forward.34} parent=0 // pred_fallthru
    _
  // Predicated region
  $region10: #{swootnet_forward.34} parent=0 // pred_check
    _
  $region11: #{swootnet_forward.34} parent=0 // pred_check_branch
    %14 = sbr.rel (0) target = $region13
  $region12: #{swootnet_forward.34} parent=0 // pred_region
    _
  $region13: #{swootnet_forward.34} parent=0 // pred_fallthru
    _
  // Predicated region
  $region14: #{swootnet_forward.34} parent=0 // pred_check
    _
  $region15: #{swootnet_forward.34} parent=0 // pred_check_branch
    %16 = sbr.rel (0) target = $region17
  $region16: #{swootnet_forward.34} parent=0 // pred_region
    _
  $region17: #{swootnet_forward.34} parent=0 // pred_fallthru
    _
  %v18 = vld [vmem:[%s0] sm:$0xff]
  %v19 = vld [vmem:[%s0 + $0x8] sm:$0xff]
  %v20 = vld [vmem:[%s0 + $0x10] sm:$0xff]
  %v21 = vld [vmem:[%s0 + $0x18] sm:$0xff]
  %v22 = vld [vmem:[%s0 + $0x20] sm:$0xff]
  %v23 = vld [vmem:[%s2] sm:$0x1f]
  %v25 = vlaneseq
  %v26 = vshrl.u32 %v25, 7
  %v27 = vsub.s32 0, %v26
  %v28 = vrot.slane %v23, %v27
  %v29 = vlaneseq
  %v30 = vshrl.u32 %v29, 7
  %v31 = vsub.s32 1, %v30
  %v32 = vrot.slane %v23, %v31
  %v33 = vlaneseq
  %v34 = vshrl.u32 %v33, 7
  %v35 = vsub.s32 2, %v34
  %v36 = vrot.slane %v23, %v35
  %v37 = vlaneseq
  %v38 = vshrl.u32 %v37, 7
  %v39 = vsub.s32 3, %v38
  %v40 = vrot.slane %v23, %v39
  %v41 = vlaneseq
  %v42 = vshrl.u32 %v41, 7
  %v43 = vsub.s32 4, %v42
  %v44 = vrot.slane %v23, %v43
  %v50 = vmul.f32 %v18, %v28
  %v51 = vmul.f32 %v19, %v32
  %v52 = vmul.f32 %v20, %v36
  %v53 = vmul.f32 %v21, %v40
  %v54 = vmul.f32 %v22, %v44
  %v55 = vld [vmem:[%s3] sm:$0x1f]
  %v57 = vlaneseq
  %v58 = vshrl.u32 %v57, 7
  %v59 = vsub.s32 0, %v58
  %v60 = vrot.slane %v55, %v59
  %v61 = vlaneseq
  %v62 = vshrl.u32 %v61, 7
  %v63 = vsub.s32 1, %v62
  %v64 = vrot.slane %v55, %v63
  %v65 = vlaneseq
  %v66 = vshrl.u32 %v65, 7
  %v67 = vsub.s32 2, %v66
  %v68 = vrot.slane %v55, %v67
  %v69 = vlaneseq
  %v70 = vshrl.u32 %v69, 7
  %v71 = vsub.s32 3, %v70
  %v72 = vrot.slane %v55, %v71
  %v73 = vlaneseq
  %v74 = vshrl.u32 %v73, 7
  %v75 = vsub.s32 4, %v74
  %v76 = vrot.slane %v55, %v75
  %v82 = vadd.f32 %v50, %v60
  %v83 = vadd.f32 %v51, %v64
  %v84 = vadd.f32 %v52, %v68
  %v85 = vadd.f32 %v53, %v72
  %v86 = vadd.f32 %v54, %v76
  %v87 = vmax.f32 %v82, 0.0
  %v88 = vmax.f32 %v83, 0.0
  %v89 = vmax.f32 %v84, 0.0
  %v90 = vmax.f32 %v85, 0.0
  %v91 = vmax.f32 %v86, 0.0
  %v92 = vpack.c.bf16 %v87, %v87
  %v93 = vpack.c.bf16 %v88, %v88
  %v94 = vpack.c.bf16 %v89, %v89
  %v95 = vpack.c.bf16 %v90, %v90
  %v96 = vpack.c.bf16 %v91, %v91
  %v97 = vld [vmem:[%s1] sm:$0xf]
  %v98 = vld [vmem:[%s1 + $0x4] sm:$0xf]
  %v99 = vld [vmem:[%s1 + $0x8] sm:$0xf]
  %v100 = vld [vmem:[%s1 + $0xc] sm:$0xf]
  %v101 = vld [vmem:[%s1 + $0x10] sm:$0xf]
  %v102 = vld [vmem:[%s1 + $0x14] sm:$0xf]
  %v103 = vld [vmem:[%s1 + $0x18] sm:$0xf]
  %v104 = vld [vmem:[%s1 + $0x1c] sm:$0xf]
  %v105 = vld [vmem:[%s1 + $0x20] sm:$0xf]
  %v106 = vld [vmem:[%s1 + $0x24] sm:$0xf]
  %v107 = vld [vmem:[%s1 + $0x28] sm:$0xf]
  %v108 = vld [vmem:[%s1 + $0x2c] sm:$0xf]
  %v109 = vld [vmem:[%s1 + $0x30] sm:$0xf]
  %v110 = vld [vmem:[%s1 + $0x34] sm:$0xf]
  %v111 = vld [vmem:[%s1 + $0x38] sm:$0xf]
  %v112 = vld [vmem:[%s1 + $0x3c] sm:$0xf]
  %v113 = vld [vmem:[%s1 + $0x40] sm:$0xf]
  %v114 = vld [vmem:[%s1 + $0x44] sm:$0xf]
  %v115 = vld [vmem:[%s1 + $0x48] sm:$0xf]
  %v116 = vld [vmem:[%s1 + $0x4c] sm:$0xf]
  %v117 = vld [vmem:[%s1 + $0x50] sm:$0xf]
  %v118 = vld [vmem:[%s1 + $0x54] sm:$0xf]
  %v119 = vld [vmem:[%s1 + $0x58] sm:$0xf]
  %v120 = vld [vmem:[%s1 + $0x5c] sm:$0xf]
  %v121 = vld [vmem:[%s1 + $0x60] sm:$0xf]
  %v122 = vld [vmem:[%s1 + $0x64] sm:$0xf]
  %v123 = vld [vmem:[%s1 + $0x68] sm:$0xf]
  %v124 = vld [vmem:[%s1 + $0x6c] sm:$0xf]
  %v125 = vld [vmem:[%s1 + $0x70] sm:$0xf]
  %v126 = vld [vmem:[%s1 + $0x74] sm:$0xf]
  %v127 = vld [vmem:[%s1 + $0x78] sm:$0xf]
  %v128 = vld [vmem:[%s1 + $0x7c] sm:$0xf]
  %v129 = vld [vmem:[%s1 + $0x80] sm:$0xf]
  %v130 = vld [vmem:[%s1 + $0x84] sm:$0xf]
  %v131 = vld [vmem:[%s1 + $0x88] sm:$0xf]
  %v132 = vld [vmem:[%s1 + $0x8c] sm:$0xf]
  %v133 = vld [vmem:[%s1 + $0x90] sm:$0xf]
  %v134 = vld [vmem:[%s1 + $0x94] sm:$0xf]
  %v135 = vld [vmem:[%s1 + $0x98] sm:$0xf]
  %v136 = vld [vmem:[%s1 + $0x9c] sm:$0xf]
  %v137 = vld [vmem:[%s1 + $0xa0] sm:$0xf]
  %v138 = vld [vmem:[%s1 + $0xa4] sm:$0xf]
  %v139 = vld [vmem:[%s1 + $0xa8] sm:$0xf]
  %v140 = vld [vmem:[%s1 + $0xac] sm:$0xf]
  %v141 = vld [vmem:[%s1 + $0xb0] sm:$0xf]
  %v142 = vld [vmem:[%s1 + $0xb4] sm:$0xf]
  %v143 = vld [vmem:[%s1 + $0xb8] sm:$0xf]
  %v144 = vld [vmem:[%s1 + $0xbc] sm:$0xf]
  %v145 = vld [vmem:[%s1 + $0xc0] sm:$0xf]
  %v146 = vld [vmem:[%s1 + $0xc4] sm:$0xf]
  %v147 = vld [vmem:[%s1 + $0xc8] sm:$0xf]
  %v148 = vld [vmem:[%s1 + $0xcc] sm:$0xf]
  %v149 = vld [vmem:[%s1 + $0xd0] sm:$0xf]
  %v150 = vld [vmem:[%s1 + $0xd4] sm:$0xf]
  %v151 = vld [vmem:[%s1 + $0xd8] sm:$0xf]
  %v152 = vld [vmem:[%s1 + $0xdc] sm:$0xf]
  %v153 = vld [vmem:[%s1 + $0xe0] sm:$0xf]
  %v154 = vld [vmem:[%s1 + $0xe4] sm:$0xf]
  %v155 = vld [vmem:[%s1 + $0xe8] sm:$0xf]
  %v156 = vld [vmem:[%s1 + $0xec] sm:$0xf]
  %v157 = vld [vmem:[%s1 + $0xf0] sm:$0xf]
  %v158 = vld [vmem:[%s1 + $0xf4] sm:$0xf]
  %v159 = vld [vmem:[%s1 + $0xf8] sm:$0xf]
  %v160 = vld [vmem:[%s1 + $0xfc] sm:$0xf]
  %v161 = vld [vmem:[%s1 + $0x100] sm:$0xf]
  %v162 = vld [vmem:[%s1 + $0x104] sm:$0xf]
  %v163 = vld [vmem:[%s1 + $0x108] sm:$0xf]
  %v164 = vld [vmem:[%s1 + $0x10c] sm:$0xf]
  %v165 = vld [vmem:[%s1 + $0x110] sm:$0xf]
  %v166 = vld [vmem:[%s1 + $0x114] sm:$0xf]
  %v167 = vld [vmem:[%s1 + $0x118] sm:$0xf]
  %v168 = vld [vmem:[%s1 + $0x11c] sm:$0xf]
  %v169 = vld [vmem:[%s1 + $0x120] sm:$0xf]
  %v170 = vld [vmem:[%s1 + $0x124] sm:$0xf]
  %v171 = vld [vmem:[%s1 + $0x128] sm:$0xf]
  %v172 = vld [vmem:[%s1 + $0x12c] sm:$0xf]
  %v173 = vld [vmem:[%s1 + $0x130] sm:$0x3]
  %v251 = vunpack.c.l.b16 %v97
  %v252 = vunpack.c.l.b16 %v98
  %v253 = vunpack.c.l.b16 %v99
  %v254 = vunpack.c.l.b16 %v100
  %v255 = vunpack.c.l.b16 %v101
  %v256 = vunpack.c.l.b16 %v102
  %v257 = vunpack.c.l.b16 %v103
  %v258 = vunpack.c.l.b16 %v104
  %v259 = vunpack.c.l.b16 %v105
  %v260 = vunpack.c.l.b16 %v106
  %v261 = vunpack.c.l.b16 %v107
  %v262 = vunpack.c.l.b16 %v108
  %v263 = vunpack.c.l.b16 %v109
  %v264 = vunpack.c.l.b16 %v110
  %v265 = vunpack.c.l.b16 %v111
  %v266 = vunpack.c.l.b16 %v112
  %v267 = vunpack.c.l.b16 %v113
  %v268 = vunpack.c.l.b16 %v114
  %v269 = vunpack.c.l.b16 %v115
  %v270 = vunpack.c.l.b16 %v116
  %v271 = vunpack.c.l.b16 %v117
  %v272 = vunpack.c.l.b16 %v118
  %v273 = vunpack.c.l.b16 %v119
  %v274 = vunpack.c.l.b16 %v120
  %v275 = vunpack.c.l.b16 %v121
  %v276 = vunpack.c.l.b16 %v122
  %v277 = vunpack.c.l.b16 %v123
  %v278 = vunpack.c.l.b16 %v124
  %v279 = vunpack.c.l.b16 %v125
  %v280 = vunpack.c.l.b16 %v126
  %v281 = vunpack.c.l.b16 %v127
  %v282 = vunpack.c.l.b16 %v128
  %v283 = vunpack.c.l.b16 %v129
  %v284 = vunpack.c.l.b16 %v130
  %v285 = vunpack.c.l.b16 %v131
  %v286 = vunpack.c.l.b16 %v132
  %v287 = vunpack.c.l.b16 %v133
  %v288 = vunpack.c.l.b16 %v134
  %v289 = vunpack.c.l.b16 %v135
  %v290 = vunpack.c.l.b16 %v136
  %v291 = vunpack.c.l.b16 %v137
  %v292 = vunpack.c.l.b16 %v138
  %v293 = vunpack.c.l.b16 %v139
  %v294 = vunpack.c.l.b16 %v140
  %v295 = vunpack.c.l.b16 %v141
  %v296 = vunpack.c.l.b16 %v142
  %v297 = vunpack.c.l.b16 %v143
  %v298 = vunpack.c.l.b16 %v144
  %v299 = vunpack.c.l.b16 %v145
  %v300 = vunpack.c.l.b16 %v146
  %v301 = vunpack.c.l.b16 %v147
  %v302 = vunpack.c.l.b16 %v148
  %v303 = vunpack.c.l.b16 %v149
  %v304 = vunpack.c.l.b16 %v150
  %v305 = vunpack.c.l.b16 %v151
  %v306 = vunpack.c.l.b16 %v152
  %v307 = vunpack.c.l.b16 %v153
  %v308 = vunpack.c.l.b16 %v154
  %v309 = vunpack.c.l.b16 %v155
  %v310 = vunpack.c.l.b16 %v156
  %v311 = vunpack.c.l.b16 %v157
  %v312 = vunpack.c.l.b16 %v158
  %v313 = vunpack.c.l.b16 %v159
  %v314 = vunpack.c.l.b16 %v160
  %v315 = vunpack.c.l.b16 %v161
  %v316 = vunpack.c.l.b16 %v162
  %v317 = vunpack.c.l.b16 %v163
  %v318 = vunpack.c.l.b16 %v164
  %v319 = vunpack.c.l.b16 %v165
  %v320 = vunpack.c.l.b16 %v166
  %v321 = vunpack.c.l.b16 %v167
  %v322 = vunpack.c.l.b16 %v168
  %v323 = vunpack.c.l.b16 %v169
  %v324 = vunpack.c.l.b16 %v170
  %v325 = vunpack.c.l.b16 %v171
  %v326 = vunpack.c.l.b16 %v172
  %v327 = vunpack.c.l.b16 %v173
  %v328 = vpack.c.b16 %v252, %v251
  %v329 = vpack.c.b16 %v254, %v253
  %v330 = vpack.c.b16 %v256, %v255
  %v331 = vpack.c.b16 %v258, %v257
  %v332 = vpack.c.b16 %v260, %v259
  %v333 = vpack.c.b16 %v262, %v261
  %v334 = vpack.c.b16 %v264, %v263
  %v335 = vpack.c.b16 %v266, %v265
  %v336 = vpack.c.b16 %v268, %v267
  %v337 = vpack.c.b16 %v270, %v269
  %v338 = vpack.c.b16 %v272, %v271
  %v339 = vpack.c.b16 %v274, %v273
  %v340 = vpack.c.b16 %v276, %v275
  %v341 = vpack.c.b16 %v278, %v277
  %v342 = vpack.c.b16 %v280, %v279
  %v343 = vpack.c.b16 %v282, %v281
  %v344 = vpack.c.b16 %v284, %v283
  %v345 = vpack.c.b16 %v286, %v285
  %v346 = vpack.c.b16 %v288, %v287
  %v347 = vpack.c.b16 %v290, %v289
  %v348 = vpack.c.b16 %v292, %v291
  %v349 = vpack.c.b16 %v294, %v293
  %v350 = vpack.c.b16 %v296, %v295
  %v351 = vpack.c.b16 %v298, %v297
  %v352 = vpack.c.b16 %v300, %v299
  %v353 = vpack.c.b16 %v302, %v301
  %v354 = vpack.c.b16 %v304, %v303
  %v355 = vpack.c.b16 %v306, %v305
  %v356 = vpack.c.b16 %v308, %v307
  %v357 = vpack.c.b16 %v310, %v309
  %v358 = vpack.c.b16 %v312, %v311
  %v359 = vpack.c.b16 %v314, %v313
  %v360 = vpack.c.b16 %v316, %v315
  %v361 = vpack.c.b16 %v318, %v317
  %v362 = vpack.c.b16 %v320, %v319
  %v363 = vpack.c.b16 %v322, %v321
  %v364 = vpack.c.b16 %v324, %v323
  %v365 = vpack.c.b16 %v326, %v325
  %v366 = vpack.c.b16 %v327, %v327
  %vm405 = vcmask 818176
  %v407 = vsel %vm405, %v96, 0
  %vm409 = vcmask 1041408
  %v411 = vsel %vm409, %v366, 0
  %413 = vmatprep.subr.bf16.mxu0 0
  %414 = vmatpush1.bf16.msra.mxu0 %v328
  %415 = vmatprep.subr.bf16.mxu0 0
  %416 = vmatpush1.bf16.msra.mxu0 %v329
  %417 = vmatprep.subr.bf16.mxu0 0
  %418 = vmatpush1.bf16.msra.mxu0 %v330
  %419 = vmatprep.subr.bf16.mxu0 0
  %420 = vmatpush1.bf16.msra.mxu0 %v331
  %421 = vmatprep.subr.bf16.mxu0 0
  %422 = vmatpush1.bf16.msra.mxu0 %v332
  %423 = vmatprep.subr.bf16.mxu0 0
  %424 = vmatpush1.bf16.msra.mxu0 %v333
  %425 = vmatprep.subr.bf16.mxu0 0
  %426 = vmatpush1.bf16.msra.mxu0 %v334
  %427 = vmatprep.subr.bf16.mxu0 0
  %428 = vmatpush1.bf16.msra.mxu0 %v335
  %429 = vmatprep.subr.bf16.mxu0 0
  %430 = vmatpush1.bf16.msra.mxu0 %v336
  %431 = vmatprep.subr.bf16.mxu0 0
  %432 = vmatpush1.bf16.msra.mxu0 %v337
  %433 = vmatprep.subr.bf16.mxu0 0
  %434 = vmatpush1.bf16.msra.mxu0 %v338
  %435 = vmatprep.subr.bf16.mxu0 0
  %436 = vmatpush1.bf16.msra.mxu0 %v339
  %437 = vmatprep.subr.bf16.mxu0 0
  %438 = vmatpush1.bf16.msra.mxu0 %v340
  %439 = vmatprep.subr.bf16.mxu0 0
  %440 = vmatpush1.bf16.msra.mxu0 %v341
  %441 = vmatprep.subr.bf16.mxu0 0
  %442 = vmatpush1.bf16.msra.mxu0 %v342
  %443 = vmatprep.subr.bf16.mxu0 0
  %444 = vmatpush1.bf16.msra.mxu0 %v343
  %445 = vmatprep.mubr.bf16.mxu0 %v93
  %446 = vmatmul.mubr.bf16.gmra.mrb[0].mxu0 %v92
  %v447 = vpop.f32.mrb[0].mxu0
  %v448 = vadd.f32 0.0, %v447
  %v449 = vpop.f32.mrb[0].mxu0
  %v450 = vpop.f32.mrb[0].mxu0
  %v451 = vpop.f32.mrb[0].mxu0
  %452 = vdwg.mxu0
  %453 = vmatprep.subr.bf16.mxu0 0
  %454 = vmatpush1.bf16.msra.mxu0 %v344
  %455 = vmatprep.subr.bf16.mxu0 0
  %456 = vmatpush1.bf16.msra.mxu0 %v345
  %457 = vmatprep.subr.bf16.mxu0 0
  %458 = vmatpush1.bf16.msra.mxu0 %v346
  %459 = vmatprep.subr.bf16.mxu0 0
  %460 = vmatpush1.bf16.msra.mxu0 %v347
  %461 = vmatprep.subr.bf16.mxu0 0
  %462 = vmatpush1.bf16.msra.mxu0 %v348
  %463 = vmatprep.subr.bf16.mxu0 0
  %464 = vmatpush1.bf16.msra.mxu0 %v349
  %465 = vmatprep.subr.bf16.mxu0 0
  %466 = vmatpush1.bf16.msra.mxu0 %v350
  %467 = vmatprep.subr.bf16.mxu0 0
  %468 = vmatpush1.bf16.msra.mxu0 %v351
  %469 = vmatprep.subr.bf16.mxu0 0
  %470 = vmatpush1.bf16.msra.mxu0 %v352
  %471 = vmatprep.subr.bf16.mxu0 0
  %472 = vmatpush1.bf16.msra.mxu0 %v353
  %473 = vmatprep.subr.bf16.mxu0 0
  %474 = vmatpush1.bf16.msra.mxu0 %v354
  %475 = vmatprep.subr.bf16.mxu0 0
  %476 = vmatpush1.bf16.msra.mxu0 %v355
  %477 = vmatprep.subr.bf16.mxu0 0
  %478 = vmatpush1.bf16.msra.mxu0 %v356
  %479 = vmatprep.subr.bf16.mxu0 0
  %480 = vmatpush1.bf16.msra.mxu0 %v357
  %481 = vmatprep.subr.bf16.mxu0 0
  %482 = vmatpush1.bf16.msra.mxu0 %v358
  %483 = vmatprep.subr.bf16.mxu0 0
  %484 = vmatpush1.bf16.msra.mxu0 %v359
  %485 = vmatprep.mubr.bf16.mxu0 %v95
  %486 = vmatmul.mubr.bf16.gmra.mrb[0].mxu0 %v94
  %v487 = vpop.f32.mrb[0].mxu0
  %v488 = vadd.f32 %v448, %v487
  %v489 = vpop.f32.mrb[0].mxu0
  %v490 = vpop.f32.mrb[0].mxu0
  %v491 = vpop.f32.mrb[0].mxu0
  %492 = vdwg.mxu0
  %493 = vmatprep.subr.bf16.mxu0 0
  %494 = vmatpush1.bf16.msra.mxu0 %v360
  %495 = vmatprep.subr.bf16.mxu0 0
  %496 = vmatpush1.bf16.msra.mxu0 %v361
  %497 = vmatprep.subr.bf16.mxu0 0
  %498 = vmatpush1.bf16.msra.mxu0 %v362
  %499 = vmatprep.subr.bf16.mxu0 0
  %500 = vmatpush1.bf16.msra.mxu0 %v363
  %501 = vmatprep.subr.bf16.mxu0 0
  %502 = vmatpush1.bf16.msra.mxu0 %v364
  %503 = vmatprep.subr.bf16.mxu0 0
  %504 = vmatpush1.bf16.msra.mxu0 %v365
  %505 = vmatprep.subr.bf16.mxu0 0
  %506 = vmatpush1.bf16.msra.mxu0 %v411
  %507 = vmatprep.subr.bf16.mxu0 0
  %508 = vmatpush1.bf16.msra.mxu0 0
  %509 = vmatprep.subr.bf16.mxu0 0
  %510 = vmatpush1.bf16.msra.mxu0 0
  %511 = vmatprep.subr.bf16.mxu0 0
  %512 = vmatpush1.bf16.msra.mxu0 0
  %513 = vmatprep.subr.bf16.mxu0 0
  %514 = vmatpush1.bf16.msra.mxu0 0
  %515 = vmatprep.subr.bf16.mxu0 0
  %516 = vmatpush1.bf16.msra.mxu0 0
  %517 = vmatprep.subr.bf16.mxu0 0
  %518 = vmatpush1.bf16.msra.mxu0 0
  %519 = vmatprep.subr.bf16.mxu0 0
  %520 = vmatpush1.bf16.msra.mxu0 0
  %521 = vmatprep.subr.bf16.mxu0 0
  %522 = vmatpush1.bf16.msra.mxu0 0
  %523 = vmatprep.subr.bf16.mxu0 0
  %524 = vmatpush1.bf16.msra.mxu0 0
  %525 = vmatprep.mubr.bf16.mxu0 0
  %526 = vmatmul.mubr.bf16.gmra.mrb[0].mxu0 %v407
  %v527 = vpop.f32.mrb[0].mxu0
  %v528 = vadd.f32 %v488, %v527
  %v529 = vpop.f32.mrb[0].mxu0
  %v530 = vpop.f32.mrb[0].mxu0
  %v531 = vpop.f32.mrb[0].mxu0
  %532 = vdwg.mxu0
  %vm533 = vcmask 97280
  %534 = vst.msk [vmem:[%s4] sm:$0xff] %vm533, %v528
  // Predicated region
  $region18: #{swootnet_forward.34} parent=0 // pred_check
    _
  $region19: #{swootnet_forward.34} parent=0 // pred_check_branch
    %536 = sbr.rel (0) target = $region21
  $region20: #{swootnet_forward.34} parent=0 // pred_region
    _
  $region21: #{swootnet_forward.34} parent=0 // pred_fallthru
    _
  // Predicated region
  $region22: #{swootnet_forward.34} parent=0 // pred_check
    _
  $region23: #{swootnet_forward.34} parent=0 // pred_check_branch
    %538 = sbr.rel (0) target = $region25
  $region24: #{swootnet_forward.34} parent=0 // pred_region
    _
  $region25: #{swootnet_forward.34} parent=0 // pred_fallthru
    _

// kernel: swootnet_forward.36
$region0: #{swootnet_forward.36}
  #allocation0 [shape = 'u32[]', space=smem, size = 0x4, offset = 0x4, fixed_abs, tag = 'smem constant byte address 0x4 - core index']
  #allocation1 [shape = 'u32[144,128]{1,0:T(1,128)}', space=vmem, size = 0x12000, scoped, tag = 'internal scratch']
  %s0 = inlined_call_operand.vmem [shape: f32[32,80], index: 0, kind: input, shape index: {}]
  %s1 = inlined_call_operand.vmem [shape: bf16[80,40], index: 1, kind: input, shape index: {}]
  %s2 = inlined_call_operand.vmem [shape: f32[1,80], index: 2, kind: input, shape index: {}]
  %s3 = inlined_call_operand.vmem [shape: f32[1,80], index: 3, kind: input, shape index: {}]
  %s4 = inlined_call_operand.vmem [shape: f32[32,40], index: 4, kind: output, shape index: {}]
  %s5 = sld [smem:[#allocation0]]
  $region26: #{swootnet_forward.36} parent=0
    _
  %s7 = ssub.s32 1, %s5
  %s8 = scalar_select 0, %s7, %s5
  // Predicated region
  $region2: #{swootnet_forward.36} parent=0 // pred_check
    _
  $region3: #{swootnet_forward.36} parent=0 // pred_check_branch
    %10 = sbr.rel (0) target = $region5
  $region4: #{swootnet_forward.36} parent=0 // pred_region
    _
  $region5: #{swootnet_forward.36} parent=0 // pred_fallthru
    _
  // Predicated region
  $region6: #{swootnet_forward.36} parent=0 // pred_check
    _
  $region7: #{swootnet_forward.36} parent=0 // pred_check_branch
    %12 = sbr.rel (0) target = $region9
  $region8: #{swootnet_forward.36} parent=0 // pred_region
    _
  $region9: #{swootnet_forward.36} parent=0 // pred_fallthru
    _
  // Predicated region
  $region10: #{swootnet_forward.36} parent=0 // pred_check
    _
  $region11: #{swootnet_forward.36} parent=0 // pred_check_branch
    %14 = sbr.rel (0) target = $region13
  $region12: #{swootnet_forward.36} parent=0 // pred_region
    _
  $region13: #{swootnet_forward.36} parent=0 // pred_fallthru
    _
  // Predicated region
  $region14: #{swootnet_forward.36} parent=0 // pred_check
    _
  $region15: #{swootnet_forward.36} parent=0 // pred_check_branch
    %16 = sbr.rel (0) target = $region17
  $region16: #{swootnet_forward.36} parent=0 // pred_region
    _
  $region17: #{swootnet_forward.36} parent=0 // pred_fallthru
    _
  %v18 = vld [vmem:[%s0] sm:$0xff]
  %v19 = vld [vmem:[%s0 + $0x8] sm:$0xff]
  %v20 = vld [vmem:[%s0 + $0x10] sm:$0xff]
  %v21 = vld [vmem:[%s0 + $0x18] sm:$0xff]
  %v22 = vld [vmem:[%s2] sm:$0x1]
  %v24 = vlaneseq
  %v25 = vshrl.u32 %v24, 7
  %v26 = vsub.s32 0, %v25
  %v27 = vrot.slane %v22, %v26
  %v29 = vmul.f32 %v18, %v27
  %v30 = vmul.f32 %v19, %v27
  %v31 = vmul.f32 %v20, %v27
  %v32 = vmul.f32 %v21, %v27
  %v33 = vld [vmem:[%s3] sm:$0x1]
  %v35 = vlaneseq
  %v36 = vshrl.u32 %v35, 7
  %v37 = vsub.s32 0, %v36
  %v38 = vrot.slane %v33, %v37
  %v40 = vadd.f32 %v29, %v38
  %v41 = vadd.f32 %v30, %v38
  %v42 = vadd.f32 %v31, %v38
  %v43 = vadd.f32 %v32, %v38
  %v44 = vmax.f32 %v40, 0.0
  %v45 = vmax.f32 %v41, 0.0
  %v46 = vmax.f32 %v42, 0.0
  %v47 = vmax.f32 %v43, 0.0
  %v48 = vpack.c.bf16 %v45, %v44
  %v49 = vpack.c.bf16 %v47, %v46
  %v50 = vld [vmem:[%s1] sm:$0xf]
  %v51 = vld [vmem:[%s1 + $0x4] sm:$0xf]
  %v52 = vld [vmem:[%s1 + $0x8] sm:$0xf]
  %v53 = vld [vmem:[%s1 + $0xc] sm:$0xf]
  %v54 = vld [vmem:[%s1 + $0x10] sm:$0xf]
  %v55 = vld [vmem:[%s1 + $0x14] sm:$0xf]
  %v56 = vld [vmem:[%s1 + $0x18] sm:$0xf]
  %v57 = vld [vmem:[%s1 + $0x1c] sm:$0xf]
  %v58 = vld [vmem:[%s1 + $0x20] sm:$0xf]
  %v59 = vld [vmem:[%s1 + $0x24] sm:$0xf]
  %v70 = vunpack.c.l.b16 %v50
  %v71 = vunpack.c.l.b16 %v51
  %v72 = vunpack.c.l.b16 %v52
  %v73 = vunpack.c.l.b16 %v53
  %v74 = vunpack.c.l.b16 %v54
  %v75 = vunpack.c.l.b16 %v55
  %v76 = vunpack.c.l.b16 %v56
  %v77 = vunpack.c.l.b16 %v57
  %v78 = vunpack.c.l.b16 %v58
  %v79 = vunpack.c.l.b16 %v59
  %v80 = vpack.c.b16 %v71, %v70
  %v81 = vpack.c.b16 %v73, %v72
  %v82 = vpack.c.b16 %v75, %v74
  %v83 = vpack.c.b16 %v77, %v76
  %v84 = vpack.c.b16 %v79, %v78
  %vm90 = vcmask 654336
  %v92 = vsel %vm90, %v48, 0
  %v95 = vsel %vm90, %v49, 0
  %97 = vmatprep.subr.bf16.mxu0 0
  %98 = vmatpush1.bf16.msra.mxu0 %v80
  %99 = vmatprep.subr.bf16.mxu0 0
  %100 = vmatpush1.bf16.msra.mxu0 %v81
  %101 = vmatprep.subr.bf16.mxu0 0
  %102 = vmatpush1.bf16.msra.mxu0 %v82
  %103 = vmatprep.subr.bf16.mxu0 0
  %104 = vmatpush1.bf16.msra.mxu0 %v83
  %105 = vmatprep.subr.bf16.mxu0 0
  %106 = vmatpush1.bf16.msra.mxu0 %v84
  %107 = vmatprep.subr.bf16.mxu0 0
  %108 = vmatpush1.bf16.msra.mxu0 0
  %109 = vmatprep.subr.bf16.mxu0 0
  %110 = vmatpush1.bf16.msra.mxu0 0
  %111 = vmatprep.subr.bf16.mxu0 0
  %112 = vmatpush1.bf16.msra.mxu0 0
  %113 = vmatprep.subr.bf16.mxu0 0
  %114 = vmatpush1.bf16.msra.mxu0 0
  %115 = vmatprep.subr.bf16.mxu0 0
  %116 = vmatpush1.bf16.msra.mxu0 0
  %117 = vmatprep.subr.bf16.mxu0 0
  %118 = vmatpush1.bf16.msra.mxu0 0
  %119 = vmatprep.subr.bf16.mxu0 0
  %120 = vmatpush1.bf16.msra.mxu0 0
  %121 = vmatprep.subr.bf16.mxu0 0
  %122 = vmatpush1.bf16.msra.mxu0 0
  %123 = vmatprep.subr.bf16.mxu0 0
  %124 = vmatpush1.bf16.msra.mxu0 0
  %125 = vmatprep.subr.bf16.mxu0 0
  %126 = vmatpush1.bf16.msra.mxu0 0
  %127 = vmatprep.subr.bf16.mxu0 0
  %128 = vmatpush1.bf16.msra.mxu0 0
  %129 = vmatprep.mubr.bf16.mxu0 0
  %130 = vmatmul.mubr.bf16.gmra.mrb[0].mxu0 %v92
  %v131 = vpop.f32.mrb[0].mxu0
  %v132 = vadd.f32 0.0, %v131
  %v133 = vpop.f32.mrb[0].mxu0
  %v134 = vpop.f32.mrb[0].mxu0
  %v135 = vadd.f32 0.0, %v134
  %v136 = vpop.f32.mrb[0].mxu0
  %137 = vmatprep.mubr.bf16.mxu0 0
  %138 = vmatmul.mubr.bf16.gmra.mrb[0].mxu0 %v95
  %v139 = vpop.f32.mrb[0].mxu0
  %v140 = vadd.f32 0.0, %v139
  %v141 = vpop.f32.mrb[0].mxu0
  %v142 = vpop.f32.mrb[0].mxu0
  %v143 = vadd.f32 0.0, %v142
  %v144 = vpop.f32.mrb[0].mxu0
  %145 = vdwg.mxu0
  %vm146 = vcmask 326656
  %147 = vst.msk [vmem:[%s4] sm:$0xff] %vm146, %v132
  %148 = vst.msk [vmem:[%s4 + $0x8] sm:$0xff] %vm146, %v135
  %149 = vst.msk [vmem:[%s4 + $0x10] sm:$0xff] %vm146, %v140
  %150 = vst.msk [vmem:[%s4 + $0x18] sm:$0xff] %vm146, %v143
  // Predicated region
  $region18: #{swootnet_forward.36} parent=0 // pred_check
    _
  $region19: #{swootnet_forward.36} parent=0 // pred_check_branch
    %152 = sbr.rel (0) target = $region21
  $region20: #{swootnet_forward.36} parent=0 // pred_region
    _
  $region21: #{swootnet_forward.36} parent=0 // pred_fallthru
    _
  // Predicated region
  $region22: #{swootnet_forward.36} parent=0 // pred_check
    _
  $region23: #{swootnet_forward.36} parent=0 // pred_check_branch
    %154 = sbr.rel (0) target = $region25
  $region24: #{swootnet_forward.36} parent=0 // pred_region
    _
  $region25: #{swootnet_forward.36} parent=0 // pred_fallthru
    _

// kernel: swootnet_forward.37
$region0: #{swootnet_forward.37}
  #allocation0 [shape = 'u32[]', space=smem, size = 0x4, offset = 0x4, fixed_abs, tag = 'smem constant byte address 0x4 - core index']
  #allocation1 [shape = 'u32[144,128]{1,0:T(1,128)}', space=vmem, size = 0x12000, scoped, tag = 'internal scratch']
  %s0 = inlined_call_operand.vmem [shape: f32[8,80], index: 0, kind: input, shape index: {}]
  %s1 = inlined_call_operand.vmem [shape: bf16[80,40], index: 1, kind: input, shape index: {}]
  %s2 = inlined_call_operand.hbm [shape: f32[1,80], index: 2, kind: input, shape index: {}]
  %s3 = inlined_call_operand.hbm [shape: f32[1,80], index: 3, kind: input, shape index: {}]
  %s4 = inlined_call_operand.vmem [shape: f32[8,40], index: 4, kind: output, shape index: {}]
  %s5 = sld [smem:[#allocation0]]
  $region34: #{swootnet_forward.37} parent=0
    _
  %s7 = ssub.s32 1, %s5
  %s8 = scalar_select 0, %s7, %s5
  $region1: #{swootnet_forward.37} parent=0
    #allocation2 [shape = 'u8[512]{0}', space=vmem, size = 0x400, scoped, tag = 'input window, operand 2, single buffered']
    #allocation3 [shape = 's32[1]{0}', space=sflag, size = 0x4, scoped, tag = 'scoped memory for swootnet_forward.37']
    #allocation4 [shape = 'u8[512]{0}', space=vmem, size = 0x400, scoped, tag = 'input window, operand 3, single buffered']
    #allocation5 [shape = 's32[1]{0}', space=sflag, size = 0x4, scoped, tag = 'scoped memory for swootnet_forward.37']
    %9 = vsyncpa [#allocation3], 0
    %10 = vsyncpa [#allocation5], 0
    // Predicated region
    $region2: #{swootnet_forward.37} parent=1 // pred_check
      _
    $region3: #{swootnet_forward.37} parent=1 // pred_check_branch
      %12 = sbr.rel (0) target = $region5
    $region4: #{swootnet_forward.37} parent=1 // pred_region
      _
    $region5: #{swootnet_forward.37} parent=1 // pred_fallthru
      _
    // Predicated region
    $region6: #{swootnet_forward.37} parent=1 // pred_check
      _
    $region7: #{swootnet_forward.37} parent=1 // pred_check_branch
      %14 = sbr.rel (0) target = $region9
    $region8: #{swootnet_forward.37} parent=1 // pred_region
      _
    $region9: #{swootnet_forward.37} parent=1 // pred_fallthru
      _
    // Predicated region
    $region10: #{swootnet_forward.37} parent=1 // pred_check
      _
    $region11: #{swootnet_forward.37} parent=1 // pred_check_branch
      %16 = sbr.rel (0) target = $region13
    $region12: #{swootnet_forward.37} parent=1 // pred_region
      %s18 = ssub.s32 16, 16
      %19 = vsyncadd [#allocation3], %s18
      %s21 = sshll.u32 [#allocation2], 4
      %s22 = int_to_ptr.vmem [resolvable:$true] %s21
      %24 = dma.hbm_to_vmem [thread:$0]  %s2, 16, %s22, [#allocation3]
    $region13: #{swootnet_forward.37} parent=1 // pred_fallthru
      _
    // Predicated region
    $region14: #{swootnet_forward.37} parent=1 // pred_check
      _
    $region15: #{swootnet_forward.37} parent=1 // pred_check_branch
      %26 = sbr.rel (0) target = $region17
    $region16: #{swootnet_forward.37} parent=1 // pred_region
      %s28 = ssub.s32 16, 16
      %29 = vsyncadd [#allocation5], %s28
      %s31 = sshll.u32 [#allocation4], 4
      %s32 = int_to_ptr.vmem [resolvable:$true] %s31
      %34 = dma.hbm_to_vmem [thread:$0]  %s3, 16, %s32, [#allocation5]
    $region17: #{swootnet_forward.37} parent=1 // pred_fallthru
      _
    // Predicated region
    $region18: #{swootnet_forward.37} parent=1 // pred_check
      _
    $region19: #{swootnet_forward.37} parent=1 // pred_check_branch
      %36 = sbr.rel (0) target = $region21
    $region20: #{swootnet_forward.37} parent=1 // pred_region
      %37 = dma.done [#allocation3], 16
    $region21: #{swootnet_forward.37} parent=1 // pred_fallthru
      _
    // Predicated region
    $region22: #{swootnet_forward.37} parent=1 // pred_check
      _
    $region23: #{swootnet_forward.37} parent=1 // pred_check_branch
      %39 = sbr.rel (0) target = $region25
    $region24: #{swootnet_forward.37} parent=1 // pred_region
      %40 = dma.done [#allocation5], 16
    $region25: #{swootnet_forward.37} parent=1 // pred_fallthru
      _
    %v42 = vld [vmem:[%s0] sm:$0xff]
    %v43 = vld [vmem:[#allocation2] sm:$0x1]
    %v45 = vlaneseq
    %v46 = vshrl.u32 %v45, 7
    %v47 = vsub.s32 0, %v46
    %v48 = vrot.slane %v43, %v47
    %v50 = vmul.f32 %v42, %v48
    %v51 = vld [vmem:[#allocation4] sm:$0x1]
    %v53 = vlaneseq
    %v54 = vshrl.u32 %v53, 7
    %v55 = vsub.s32 0, %v54
    %v56 = vrot.slane %v51, %v55
    %v58 = vadd.f32 %v50, %v56
    %v59 = vmax.f32 %v58, 0.0
    %v60 = vpack.c.bf16 %v59, %v59
    %v61 = vld [vmem:[%s1] sm:$0xf]
    %v62 = vld [vmem:[%s1 + $0x4] sm:$0xf]
    %v63 = vld [vmem:[%s1 + $0x8] sm:$0xf]
    %v64 = vld [vmem:[%s1 + $0xc] sm:$0xf]
    %v65 = vld [vmem:[%s1 + $0x10] sm:$0xf]
    %v66 = vld [vmem:[%s1 + $0x14] sm:$0xf]
    %v67 = vld [vmem:[%s1 + $0x18] sm:$0xf]
    %v68 = vld [vmem:[%s1 + $0x1c] sm:$0xf]
    %v69 = vld [vmem:[%s1 + $0x20] sm:$0xf]
    %v70 = vld [vmem:[%s1 + $0x24] sm:$0xf]
    %v81 = vunpack.c.l.b16 %v61
    %v82 = vunpack.c.l.b16 %v62
    %v83 = vunpack.c.l.b16 %v63
    %v84 = vunpack.c.l.b16 %v64
    %v85 = vunpack.c.l.b16 %v65
    %v86 = vunpack.c.l.b16 %v66
    %v87 = vunpack.c.l.b16 %v67
    %v88 = vunpack.c.l.b16 %v68
    %v89 = vunpack.c.l.b16 %v69
    %v90 = vunpack.c.l.b16 %v70
    %v91 = vpack.c.b16 %v82, %v81
    %v92 = vpack.c.b16 %v84, %v83
    %v93 = vpack.c.b16 %v86, %v85
    %v94 = vpack.c.b16 %v88, %v87
    %v95 = vpack.c.b16 %v90, %v89
    %vm101 = vcmask 654336
    %v103 = vsel %vm101, %v60, 0
    %105 = vmatprep.subr.bf16.mxu0 0
    %106 = vmatpush1.bf16.msra.mxu0 %v91
    %107 = vmatprep.subr.bf16.mxu0 0
    %108 = vmatpush1.bf16.msra.mxu0 %v92
    %109 = vmatprep.subr.bf16.mxu0 0
    %110 = vmatpush1.bf16.msra.mxu0 %v93
    %111 = vmatprep.subr.bf16.mxu0 0
    %112 = vmatpush1.bf16.msra.mxu0 %v94
    %113 = vmatprep.subr.bf16.mxu0 0
    %114 = vmatpush1.bf16.msra.mxu0 %v95
    %115 = vmatprep.subr.bf16.mxu0 0
    %116 = vmatpush1.bf16.msra.mxu0 0
    %117 = vmatprep.subr.bf16.mxu0 0
    %118 = vmatpush1.bf16.msra.mxu0 0
    %119 = vmatprep.subr.bf16.mxu0 0
    %120 = vmatpush1.bf16.msra.mxu0 0
    %121 = vmatprep.subr.bf16.mxu0 0
    %122 = vmatpush1.bf16.msra.mxu0 0
    %123 = vmatprep.subr.bf16.mxu0 0
    %124 = vmatpush1.bf16.msra.mxu0 0
    %125 = vmatprep.subr.bf16.mxu0 0
    %126 = vmatpush1.bf16.msra.mxu0 0
    %127 = vmatprep.subr.bf16.mxu0 0
    %128 = vmatpush1.bf16.msra.mxu0 0
    %129 = vmatprep.subr.bf16.mxu0 0
    %130 = vmatpush1.bf16.msra.mxu0 0
    %131 = vmatprep.subr.bf16.mxu0 0
    %132 = vmatpush1.bf16.msra.mxu0 0
    %133 = vmatprep.subr.bf16.mxu0 0
    %134 = vmatpush1.bf16.msra.mxu0 0
    %135 = vmatprep.subr.bf16.mxu0 0
    %136 = vmatpush1.bf16.msra.mxu0 0
    %137 = vmatprep.mubr.bf16.mxu0 0
    %138 = vmatmul.mubr.bf16.gmra.mrb[0].mxu0 %v103
    %v139 = vpop.f32.mrb[0].mxu0
    %v140 = vadd.f32 0.0, %v139
    %v141 = vpop.f32.mrb[0].mxu0
    %v142 = vpop.f32.mrb[0].mxu0
    %v143 = vpop.f32.mrb[0].mxu0
    %144 = vdwg.mxu0
    %vm145 = vcmask 326656
    %146 = vst.msk [vmem:[%s4] sm:$0xff] %vm145, %v140
    // Predicated region
    $region26: #{swootnet_forward.37} parent=1 // pred_check
      _
    $region27: #{swootnet_forward.37} parent=1 // pred_check_branch
      %148 = sbr.rel (0) target = $region29
    $region28: #{swootnet_forward.37} parent=1 // pred_region
      _
    $region29: #{swootnet_forward.37} parent=1 // pred_fallthru
      _
    // Predicated region
    $region30: #{swootnet_forward.37} parent=1 // pred_check
      _
    $region31: #{swootnet_forward.37} parent=1 // pred_check_branch
      %150 = sbr.rel (0) target = $region33
    $region32: #{swootnet_forward.37} parent=1 // pred_region
      _
    $region33: #{swootnet_forward.37} parent=1 // pred_fallthru
      _
    %151 = vsyncpa [#allocation3], 1
    %152 = vsyncpa [#allocation5], 1

// kernel: swootnet_forward.38
$region0: #{swootnet_forward.38}
  #allocation0 [shape = 'u32[]', space=smem, size = 0x4, offset = 0x4, fixed_abs, tag = 'smem constant byte address 0x4 - core index']
  #allocation1 [shape = 'u32[144,128]{1,0:T(1,128)}', space=vmem, size = 0x12000, scoped, tag = 'internal scratch']
  %s0 = inlined_call_operand.vmem [shape: f32[8,360], index: 0, kind: input, shape index: {}]
  %s1 = inlined_call_operand.vmem [shape: bf16[360,12], index: 1, kind: input, shape index: {}]
  %s2 = inlined_call_operand.vmem [shape: f32[1,360], index: 2, kind: input, shape index: {}]
  %s3 = inlined_call_operand.vmem [shape: f32[1,360], index: 3, kind: input, shape index: {}]
  %s4 = inlined_call_operand.vmem [shape: f32[8,12], index: 4, kind: output, shape index: {}]
  %s5 = sld [smem:[#allocation0]]
  $region26: #{swootnet_forward.38} parent=0
    _
  %s7 = ssub.s32 1, %s5
  %s8 = scalar_select 0, %s7, %s5
  // Predicated region
  $region2: #{swootnet_forward.38} parent=0 // pred_check
    _
  $region3: #{swootnet_forward.38} parent=0 // pred_check_branch
    %10 = sbr.rel (0) target = $region5
  $region4: #{swootnet_forward.38} parent=0 // pred_region
    _
  $region5: #{swootnet_forward.38} parent=0 // pred_fallthru
    _
  // Predicated region
  $region6: #{swootnet_forward.38} parent=0 // pred_check
    _
  $region7: #{swootnet_forward.38} parent=0 // pred_check_branch
    %12 = sbr.rel (0) target = $region9
  $region8: #{swootnet_forward.38} parent=0 // pred_region
    _
  $region9: #{swootnet_forward.38} parent=0 // pred_fallthru
    _
  // Predicated region
  $region10: #{swootnet_forward.38} parent=0 // pred_check
    _
  $region11: #{swootnet_forward.38} parent=0 // pred_check_branch
    %14 = sbr.rel (0) target = $region13
  $region12: #{swootnet_forward.38} parent=0 // pred_region
    _
  $region13: #{swootnet_forward.38} parent=0 // pred_fallthru
    _
  // Predicated region
  $region14: #{swootnet_forward.38} parent=0 // pred_check
    _
  $region15: #{swootnet_forward.38} parent=0 // pred_check_branch
    %16 = sbr.rel (0) target = $region17
  $region16: #{swootnet_forward.38} parent=0 // pred_region
    _
  $region17: #{swootnet_forward.38} parent=0 // pred_fallthru
    _
  %v18 = vld [vmem:[%s0] sm:$0xff]
  %v19 = vld [vmem:[%s0 + $0x8] sm:$0xff]
  %v20 = vld [vmem:[%s0 + $0x10] sm:$0xff]
  %v21 = vld [vmem:[%s2] sm:$0x7]
  %v23 = vlaneseq
  %v24 = vshrl.u32 %v23, 7
  %v25 = vsub.s32 0, %v24
  %v26 = vrot.slane %v21, %v25
  %v27 = vlaneseq
  %v28 = vshrl.u32 %v27, 7
  %v29 = vsub.s32 1, %v28
  %v30 = vrot.slane %v21, %v29
  %v31 = vlaneseq
  %v32 = vshrl.u32 %v31, 7
  %v33 = vsub.s32 2, %v32
  %v34 = vrot.slane %v21, %v33
  %v38 = vmul.f32 %v18, %v26
  %v39 = vmul.f32 %v19, %v30
  %v40 = vmul.f32 %v20, %v34
  %v41 = vld [vmem:[%s3] sm:$0x7]
  %v43 = vlaneseq
  %v44 = vshrl.u32 %v43, 7
  %v45 = vsub.s32 0, %v44
  %v46 = vrot.slane %v41, %v45
  %v47 = vlaneseq
  %v48 = vshrl.u32 %v47, 7
  %v49 = vsub.s32 1, %v48
  %v50 = vrot.slane %v41, %v49
  %v51 = vlaneseq
  %v52 = vshrl.u32 %v51, 7
  %v53 = vsub.s32 2, %v52
  %v54 = vrot.slane %v41, %v53
  %v58 = vadd.f32 %v38, %v46
  %v59 = vadd.f32 %v39, %v50
  %v60 = vadd.f32 %v40, %v54
  %v61 = vmax.f32 %v58, 0.0
  %v62 = vmax.f32 %v59, 0.0
  %v63 = vmax.f32 %v60, 0.0
  %v64 = vpack.c.bf16 %v61, %v61
  %v65 = vpack.c.bf16 %v62, %v62
  %v66 = vpack.c.bf16 %v63, %v63
  %v67 = vld [vmem:[%s1] sm:$0xf]
  %v68 = vld [vmem:[%s1 + $0x4] sm:$0xf]
  %v69 = vld [vmem:[%s1 + $0x8] sm:$0xf]
  %v70 = vld [vmem:[%s1 + $0xc] sm:$0xf]
  %v71 = vld [vmem:[%s1 + $0x10] sm:$0xf]
  %v72 = vld [vmem:[%s1 + $0x14] sm:$0xf]
  %v73 = vld [vmem:[%s1 + $0x18] sm:$0xf]
  %v74 = vld [vmem:[%s1 + $0x1c] sm:$0xf]
  %v75 = vld [vmem:[%s1 + $0x20] sm:$0xf]
  %v76 = vld [vmem:[%s1 + $0x24] sm:$0xf]
  %v77 = vld [vmem:[%s1 + $0x28] sm:$0xf]
  %v78 = vld [vmem:[%s1 + $0x2c] sm:$0xf]
  %v79 = vld [vmem:[%s1 + $0x30] sm:$0xf]
  %v80 = vld [vmem:[%s1 + $0x34] sm:$0xf]
  %v81 = vld [vmem:[%s1 + $0x38] sm:$0xf]
  %v82 = vld [vmem:[%s1 + $0x3c] sm:$0xf]
  %v83 = vld [vmem:[%s1 + $0x40] sm:$0xf]
  %v84 = vld [vmem:[%s1 + $0x44] sm:$0xf]
  %v85 = vld [vmem:[%s1 + $0x48] sm:$0xf]
  %v86 = vld [vmem:[%s1 + $0x4c] sm:$0xf]
  %v87 = vld [vmem:[%s1 + $0x50] sm:$0xf]
  %v88 = vld [vmem:[%s1 + $0x54] sm:$0xf]
  %v89 = vld [vmem:[%s1 + $0x58] sm:$0xf]
  %v90 = vld [vmem:[%s1 + $0x5c] sm:$0xf]
  %v91 = vld [vmem:[%s1 + $0x60] sm:$0xf]
  %v92 = vld [vmem:[%s1 + $0x64] sm:$0xf]
  %v93 = vld [vmem:[%s1 + $0x68] sm:$0xf]
  %v94 = vld [vmem:[%s1 + $0x6c] sm:$0xf]
  %v95 = vld [vmem:[%s1 + $0x70] sm:$0xf]
  %v96 = vld [vmem:[%s1 + $0x74] sm:$0xf]
  %v97 = vld [vmem:[%s1 + $0x78] sm:$0xf]
  %v98 = vld [vmem:[%s1 + $0x7c] sm:$0xf]
  %v99 = vld [vmem:[%s1 + $0x80] sm:$0xf]
  %v100 = vld [vmem:[%s1 + $0x84] sm:$0xf]
  %v101 = vld [vmem:[%s1 + $0x88] sm:$0xf]
  %v102 = vld [vmem:[%s1 + $0x8c] sm:$0xf]
  %v103 = vld [vmem:[%s1 + $0x90] sm:$0xf]
  %v104 = vld [vmem:[%s1 + $0x94] sm:$0xf]
  %v105 = vld [vmem:[%s1 + $0x98] sm:$0xf]
  %v106 = vld [vmem:[%s1 + $0x9c] sm:$0xf]
  %v107 = vld [vmem:[%s1 + $0xa0] sm:$0xf]
  %v108 = vld [vmem:[%s1 + $0xa4] sm:$0xf]
  %v109 = vld [vmem:[%s1 + $0xa8] sm:$0xf]
  %v110 = vld [vmem:[%s1 + $0xac] sm:$0xf]
  %v111 = vld [vmem:[%s1 + $0xb0] sm:$0xf]
  %v157 = vunpack.c.l.b16 %v67
  %v158 = vunpack.c.l.b16 %v68
  %v159 = vunpack.c.l.b16 %v69
  %v160 = vunpack.c.l.b16 %v70
  %v161 = vunpack.c.l.b16 %v71
  %v162 = vunpack.c.l.b16 %v72
  %v163 = vunpack.c.l.b16 %v73
  %v164 = vunpack.c.l.b16 %v74
  %v165 = vunpack.c.l.b16 %v75
  %v166 = vunpack.c.l.b16 %v76
  %v167 = vunpack.c.l.b16 %v77
  %v168 = vunpack.c.l.b16 %v78
  %v169 = vunpack.c.l.b16 %v79
  %v170 = vunpack.c.l.b16 %v80
  %v171 = vunpack.c.l.b16 %v81
  %v172 = vunpack.c.l.b16 %v82
  %v173 = vunpack.c.l.b16 %v83
  %v174 = vunpack.c.l.b16 %v84
  %v175 = vunpack.c.l.b16 %v85
  %v176 = vunpack.c.l.b16 %v86
  %v177 = vunpack.c.l.b16 %v87
  %v178 = vunpack.c.l.b16 %v88
  %v179 = vunpack.c.l.b16 %v89
  %v180 = vunpack.c.l.b16 %v90
  %v181 = vunpack.c.l.b16 %v91
  %v182 = vunpack.c.l.b16 %v92
  %v183 = vunpack.c.l.b16 %v93
  %v184 = vunpack.c.l.b16 %v94
  %v185 = vunpack.c.l.b16 %v95
  %v186 = vunpack.c.l.b16 %v96
  %v187 = vunpack.c.l.b16 %v97
  %v188 = vunpack.c.l.b16 %v98
  %v189 = vunpack.c.l.b16 %v99
  %v190 = vunpack.c.l.b16 %v100
  %v191 = vunpack.c.l.b16 %v101
  %v192 = vunpack.c.l.b16 %v102
  %v193 = vunpack.c.l.b16 %v103
  %v194 = vunpack.c.l.b16 %v104
  %v195 = vunpack.c.l.b16 %v105
  %v196 = vunpack.c.l.b16 %v106
  %v197 = vunpack.c.l.b16 %v107
  %v198 = vunpack.c.l.b16 %v108
  %v199 = vunpack.c.l.b16 %v109
  %v200 = vunpack.c.l.b16 %v110
  %v201 = vunpack.c.l.b16 %v111
  %v202 = vpack.c.b16 %v158, %v157
  %v203 = vpack.c.b16 %v160, %v159
  %v204 = vpack.c.b16 %v162, %v161
  %v205 = vpack.c.b16 %v164, %v163
  %v206 = vpack.c.b16 %v166, %v165
  %v207 = vpack.c.b16 %v168, %v167
  %v208 = vpack.c.b16 %v170, %v169
  %v209 = vpack.c.b16 %v172, %v171
  %v210 = vpack.c.b16 %v174, %v173
  %v211 = vpack.c.b16 %v176, %v175
  %v212 = vpack.c.b16 %v178, %v177
  %v213 = vpack.c.b16 %v180, %v179
  %v214 = vpack.c.b16 %v182, %v181
  %v215 = vpack.c.b16 %v184, %v183
  %v216 = vpack.c.b16 %v186, %v185
  %v217 = vpack.c.b16 %v188, %v187
  %v218 = vpack.c.b16 %v190, %v189
  %v219 = vpack.c.b16 %v192, %v191
  %v220 = vpack.c.b16 %v194, %v193
  %v221 = vpack.c.b16 %v196, %v195
  %v222 = vpack.c.b16 %v198, %v197
  %v223 = vpack.c.b16 %v200, %v199
  %v224 = vpack.c.b16 %v201, %v201
  %vm247 = vcmask 850944
  %v249 = vsel %vm247, %v66, 0
  %vm251 = vcmask 1043456
  %v253 = vsel %vm251, %v224, 0
  %255 = vmatprep.subr.bf16.mxu0 0
  %256 = vmatpush1.bf16.msra.mxu0 %v202
  %257 = vmatprep.subr.bf16.mxu0 0
  %258 = vmatpush1.bf16.msra.mxu0 %v203
  %259 = vmatprep.subr.bf16.mxu0 0
  %260 = vmatpush1.bf16.msra.mxu0 %v204
  %261 = vmatprep.subr.bf16.mxu0 0
  %262 = vmatpush1.bf16.msra.mxu0 %v205
  %263 = vmatprep.subr.bf16.mxu0 0
  %264 = vmatpush1.bf16.msra.mxu0 %v206
  %265 = vmatprep.subr.bf16.mxu0 0
  %266 = vmatpush1.bf16.msra.mxu0 %v207
  %267 = vmatprep.subr.bf16.mxu0 0
  %268 = vmatpush1.bf16.msra.mxu0 %v208
  %269 = vmatprep.subr.bf16.mxu0 0
  %270 = vmatpush1.bf16.msra.mxu0 %v209
  %271 = vmatprep.subr.bf16.mxu0 0
  %272 = vmatpush1.bf16.msra.mxu0 %v210
  %273 = vmatprep.subr.bf16.mxu0 0
  %274 = vmatpush1.bf16.msra.mxu0 %v211
  %275 = vmatprep.subr.bf16.mxu0 0
  %276 = vmatpush1.bf16.msra.mxu0 %v212
  %277 = vmatprep.subr.bf16.mxu0 0
  %278 = vmatpush1.bf16.msra.mxu0 %v213
  %279 = vmatprep.subr.bf16.mxu0 0
  %280 = vmatpush1.bf16.msra.mxu0 %v214
  %281 = vmatprep.subr.bf16.mxu0 0
  %282 = vmatpush1.bf16.msra.mxu0 %v215
  %283 = vmatprep.subr.bf16.mxu0 0
  %284 = vmatpush1.bf16.msra.mxu0 %v216
  %285 = vmatprep.subr.bf16.mxu0 0
  %286 = vmatpush1.bf16.msra.mxu0 %v217
  %287 = vmatprep.mubr.bf16.mxu0 %v65
  %288 = vmatmul.mubr.bf16.gmra.mrb[0].mxu0 %v64
  %v289 = vpop.f32.mrb[0].mxu0
  %v290 = vadd.f32 0.0, %v289
  %v291 = vpop.f32.mrb[0].mxu0
  %v292 = vpop.f32.mrb[0].mxu0
  %v293 = vpop.f32.mrb[0].mxu0
  %294 = vdwg.mxu0
  %295 = vmatprep.subr.bf16.mxu0 0
  %296 = vmatpush1.bf16.msra.mxu0 %v218
  %297 = vmatprep.subr.bf16.mxu0 0
  %298 = vmatpush1.bf16.msra.mxu0 %v219
  %299 = vmatprep.subr.bf16.mxu0 0
  %300 = vmatpush1.bf16.msra.mxu0 %v220
  %301 = vmatprep.subr.bf16.mxu0 0
  %302 = vmatpush1.bf16.msra.mxu0 %v221
  %303 = vmatprep.subr.bf16.mxu0 0
  %304 = vmatpush1.bf16.msra.mxu0 %v222
  %305 = vmatprep.subr.bf16.mxu0 0
  %306 = vmatpush1.bf16.msra.mxu0 %v223
  %307 = vmatprep.subr.bf16.mxu0 0
  %308 = vmatpush1.bf16.msra.mxu0 %v253
  %309 = vmatprep.subr.bf16.mxu0 0
  %310 = vmatpush1.bf16.msra.mxu0 0
  %311 = vmatprep.subr.bf16.mxu0 0
  %312 = vmatpush1.bf16.msra.mxu0 0
  %313 = vmatprep.subr.bf16.mxu0 0
  %314 = vmatpush1.bf16.msra.mxu0 0
  %315 = vmatprep.subr.bf16.mxu0 0
  %316 = vmatpush1.bf16.msra.mxu0 0
  %317 = vmatprep.subr.bf16.mxu0 0
  %318 = vmatpush1.bf16.msra.mxu0 0
  %319 = vmatprep.subr.bf16.mxu0 0
  %320 = vmatpush1.bf16.msra.mxu0 0
  %321 = vmatprep.subr.bf16.mxu0 0
  %322 = vmatpush1.bf16.msra.mxu0 0
  %323 = vmatprep.subr.bf16.mxu0 0
  %324 = vmatpush1.bf16.msra.mxu0 0
  %325 = vmatprep.subr.bf16.mxu0 0
  %326 = vmatpush1.bf16.msra.mxu0 0
  %327 = vmatprep.mubr.bf16.mxu0 0
  %328 = vmatmul.mubr.bf16.gmra.mrb[0].mxu0 %v249
  %v329 = vpop.f32.mrb[0].mxu0
  %v330 = vadd.f32 %v290, %v329
  %v331 = vpop.f32.mrb[0].mxu0
  %v332 = vpop.f32.mrb[0].mxu0
  %v333 = vpop.f32.mrb[0].mxu0
  %334 = vdwg.mxu0
  %vm335 = vcmask 97280
  %336 = vst.msk [vmem:[%s4] sm:$0xff] %vm335, %v330
  // Predicated region
  $region18: #{swootnet_forward.38} parent=0 // pred_check
    _
  $region19: #{swootnet_forward.38} parent=0 // pred_check_branch
    %338 = sbr.rel (0) target = $region21
  $region20: #{swootnet_forward.38} parent=0 // pred_region
    _
  $region21: #{swootnet_forward.38} parent=0 // pred_fallthru
    _
  // Predicated region
  $region22: #{swootnet_forward.38} parent=0 // pred_check
    _
  $region23: #{swootnet_forward.38} parent=0 // pred_check_branch
    %340 = sbr.rel (0) target = $region25
  $region24: #{swootnet_forward.38} parent=0 // pred_region
    _
  $region25: #{swootnet_forward.38} parent=0 // pred_fallthru
    _

// kernel: swootnet_forward.39
$region0: #{swootnet_forward.39}
  #allocation0 [shape = 'u32[]', space=smem, size = 0x4, offset = 0x4, fixed_abs, tag = 'smem constant byte address 0x4 - core index']
  #allocation1 [shape = 'u32[144,128]{1,0:T(1,128)}', space=vmem, size = 0x12000, scoped, tag = 'internal scratch']
  %s0 = inlined_call_operand.vmem [shape: f32[8,208], index: 0, kind: input, shape index: {}]
  %s1 = inlined_call_operand.vmem [shape: bf16[208,48], index: 1, kind: input, shape index: {}]
  %s2 = inlined_call_operand.vmem [shape: f32[1,208], index: 2, kind: input, shape index: {}]
  %s3 = inlined_call_operand.vmem [shape: f32[1,208], index: 3, kind: input, shape index: {}]
  %s4 = inlined_call_operand.vmem [shape: f32[8,48], index: 4, kind: output, shape index: {}]
  %s5 = sld [smem:[#allocation0]]
  $region26: #{swootnet_forward.39} parent=0
    _
  %s7 = ssub.s32 1, %s5
  %s8 = scalar_select 0, %s7, %s5
  // Predicated region
  $region2: #{swootnet_forward.39} parent=0 // pred_check
    _
  $region3: #{swootnet_forward.39} parent=0 // pred_check_branch
    %10 = sbr.rel (0) target = $region5
  $region4: #{swootnet_forward.39} parent=0 // pred_region
    _
  $region5: #{swootnet_forward.39} parent=0 // pred_fallthru
    _
  // Predicated region
  $region6: #{swootnet_forward.39} parent=0 // pred_check
    _
  $region7: #{swootnet_forward.39} parent=0 // pred_check_branch
    %12 = sbr.rel (0) target = $region9
  $region8: #{swootnet_forward.39} parent=0 // pred_region
    _
  $region9: #{swootnet_forward.39} parent=0 // pred_fallthru
    _
  // Predicated region
  $region10: #{swootnet_forward.39} parent=0 // pred_check
    _
  $region11: #{swootnet_forward.39} parent=0 // pred_check_branch
    %14 = sbr.rel (0) target = $region13
  $region12: #{swootnet_forward.39} parent=0 // pred_region
    _
  $region13: #{swootnet_forward.39} parent=0 // pred_fallthru
    _
  // Predicated region
  $region14: #{swootnet_forward.39} parent=0 // pred_check
    _
  $region15: #{swootnet_forward.39} parent=0 // pred_check_branch
    %16 = sbr.rel (0) target = $region17
  $region16: #{swootnet_forward.39} parent=0 // pred_region
    _
  $region17: #{swootnet_forward.39} parent=0 // pred_fallthru
    _
  %v18 = vld [vmem:[%s0] sm:$0xff]
  %v19 = vld [vmem:[%s0 + $0x8] sm:$0xff]
  %v20 = vld [vmem:[%s2] sm:$0x3]
  %v22 = vlaneseq
  %v23 = vshrl.u32 %v22, 7
  %v24 = vsub.s32 0, %v23
  %v25 = vrot.slane %v20, %v24
  %v26 = vlaneseq
  %v27 = vshrl.u32 %v26, 7
  %v28 = vsub.s32 1, %v27
  %v29 = vrot.slane %v20, %v28
  %v32 = vmul.f32 %v18, %v25
  %v33 = vmul.f32 %v19, %v29
  %v34 = vld [vmem:[%s3] sm:$0x3]
  %v36 = vlaneseq
  %v37 = vshrl.u32 %v36, 7
  %v38 = vsub.s32 0, %v37
  %v39 = vrot.slane %v34, %v38
  %v40 = vlaneseq
  %v41 = vshrl.u32 %v40, 7
  %v42 = vsub.s32 1, %v41
  %v43 = vrot.slane %v34, %v42
  %v46 = vadd.f32 %v32, %v39
  %v47 = vadd.f32 %v33, %v43
  %v48 = vmax.f32 %v46, 0.0
  %v49 = vmax.f32 %v47, 0.0
  %v50 = vpack.c.bf16 %v48, %v48
  %v51 = vpack.c.bf16 %v49, %v49
  %v52 = vld [vmem:[%s1] sm:$0xf]
  %v53 = vld [vmem:[%s1 + $0x4] sm:$0xf]
  %v54 = vld [vmem:[%s1 + $0x8] sm:$0xf]
  %v55 = vld [vmem:[%s1 + $0xc] sm:$0xf]
  %v56 = vld [vmem:[%s1 + $0x10] sm:$0xf]
  %v57 = vld [vmem:[%s1 + $0x14] sm:$0xf]
  %v58 = vld [vmem:[%s1 + $0x18] sm:$0xf]
  %v59 = vld [vmem:[%s1 + $0x1c] sm:$0xf]
  %v60 = vld [vmem:[%s1 + $0x20] sm:$0xf]
  %v61 = vld [vmem:[%s1 + $0x24] sm:$0xf]
  %v62 = vld [vmem:[%s1 + $0x28] sm:$0xf]
  %v63 = vld [vmem:[%s1 + $0x2c] sm:$0xf]
  %v64 = vld [vmem:[%s1 + $0x30] sm:$0xf]
  %v65 = vld [vmem:[%s1 + $0x34] sm:$0xf]
  %v66 = vld [vmem:[%s1 + $0x38] sm:$0xf]
  %v67 = vld [vmem:[%s1 + $0x3c] sm:$0xf]
  %v68 = vld [vmem:[%s1 + $0x40] sm:$0xf]
  %v69 = vld [vmem:[%s1 + $0x44] sm:$0xf]
  %v70 = vld [vmem:[%s1 + $0x48] sm:$0xf]
  %v71 = vld [vmem:[%s1 + $0x4c] sm:$0xf]
  %v72 = vld [vmem:[%s1 + $0x50] sm:$0xf]
  %v73 = vld [vmem:[%s1 + $0x54] sm:$0xf]
  %v74 = vld [vmem:[%s1 + $0x58] sm:$0xf]
  %v75 = vld [vmem:[%s1 + $0x5c] sm:$0xf]
  %v76 = vld [vmem:[%s1 + $0x60] sm:$0xf]
  %v77 = vld [vmem:[%s1 + $0x64] sm:$0xf]
  %v104 = vunpack.c.l.b16 %v52
  %v105 = vunpack.c.l.b16 %v53
  %v106 = vunpack.c.l.b16 %v54
  %v107 = vunpack.c.l.b16 %v55
  %v108 = vunpack.c.l.b16 %v56
  %v109 = vunpack.c.l.b16 %v57
  %v110 = vunpack.c.l.b16 %v58
  %v111 = vunpack.c.l.b16 %v59
  %v112 = vunpack.c.l.b16 %v60
  %v113 = vunpack.c.l.b16 %v61
  %v114 = vunpack.c.l.b16 %v62
  %v115 = vunpack.c.l.b16 %v63
  %v116 = vunpack.c.l.b16 %v64
  %v117 = vunpack.c.l.b16 %v65
  %v118 = vunpack.c.l.b16 %v66
  %v119 = vunpack.c.l.b16 %v67
  %v120 = vunpack.c.l.b16 %v68
  %v121 = vunpack.c.l.b16 %v69
  %v122 = vunpack.c.l.b16 %v70
  %v123 = vunpack.c.l.b16 %v71
  %v124 = vunpack.c.l.b16 %v72
  %v125 = vunpack.c.l.b16 %v73
  %v126 = vunpack.c.l.b16 %v74
  %v127 = vunpack.c.l.b16 %v75
  %v128 = vunpack.c.l.b16 %v76
  %v129 = vunpack.c.l.b16 %v77
  %v130 = vpack.c.b16 %v105, %v104
  %v131 = vpack.c.b16 %v107, %v106
  %v132 = vpack.c.b16 %v109, %v108
  %v133 = vpack.c.b16 %v111, %v110
  %v134 = vpack.c.b16 %v113, %v112
  %v135 = vpack.c.b16 %v115, %v114
  %v136 = vpack.c.b16 %v117, %v116
  %v137 = vpack.c.b16 %v119, %v118
  %v138 = vpack.c.b16 %v121, %v120
  %v139 = vpack.c.b16 %v123, %v122
  %v140 = vpack.c.b16 %v125, %v124
  %v141 = vpack.c.b16 %v127, %v126
  %v142 = vpack.c.b16 %v129, %v128
  %vm156 = vcmask 654336
  %v158 = vsel %vm156, %v51, 0
  %160 = vmatprep.subr.bf16.mxu0 0
  %161 = vmatpush1.bf16.msra.mxu0 %v130
  %162 = vmatprep.subr.bf16.mxu0 0
  %163 = vmatpush1.bf16.msra.mxu0 %v131
  %164 = vmatprep.subr.bf16.mxu0 0
  %165 = vmatpush1.bf16.msra.mxu0 %v132
  %166 = vmatprep.subr.bf16.mxu0 0
  %167 = vmatpush1.bf16.msra.mxu0 %v133
  %168 = vmatprep.subr.bf16.mxu0 0
  %169 = vmatpush1.bf16.msra.mxu0 %v134
  %170 = vmatprep.subr.bf16.mxu0 0
  %171 = vmatpush1.bf16.msra.mxu0 %v135
  %172 = vmatprep.subr.bf16.mxu0 0
  %173 = vmatpush1.bf16.msra.mxu0 %v136
  %174 = vmatprep.subr.bf16.mxu0 0
  %175 = vmatpush1.bf16.msra.mxu0 %v137
  %176 = vmatprep.subr.bf16.mxu0 0
  %177 = vmatpush1.bf16.msra.mxu0 %v138
  %178 = vmatprep.subr.bf16.mxu0 0
  %179 = vmatpush1.bf16.msra.mxu0 %v139
  %180 = vmatprep.subr.bf16.mxu0 0
  %181 = vmatpush1.bf16.msra.mxu0 %v140
  %182 = vmatprep.subr.bf16.mxu0 0
  %183 = vmatpush1.bf16.msra.mxu0 %v141
  %184 = vmatprep.subr.bf16.mxu0 0
  %185 = vmatpush1.bf16.msra.mxu0 %v142
  %186 = vmatprep.subr.bf16.mxu0 0
  %187 = vmatpush1.bf16.msra.mxu0 0
  %188 = vmatprep.subr.bf16.mxu0 0
  %189 = vmatpush1.bf16.msra.mxu0 0
  %190 = vmatprep.subr.bf16.mxu0 0
  %191 = vmatpush1.bf16.msra.mxu0 0
  %192 = vmatprep.mubr.bf16.mxu0 %v158
  %193 = vmatmul.mubr.bf16.gmra.mrb[0].mxu0 %v50
  %v194 = vpop.f32.mrb[0].mxu0
  %v195 = vadd.f32 0.0, %v194
  %v196 = vpop.f32.mrb[0].mxu0
  %v197 = vpop.f32.mrb[0].mxu0
  %v198 = vpop.f32.mrb[0].mxu0
  %199 = vdwg.mxu0
  %vm200 = vcmask 392192
  %201 = vst.msk [vmem:[%s4] sm:$0xff] %vm200, %v195
  // Predicated region
  $region18: #{swootnet_forward.39} parent=0 // pred_check
    _
  $region19: #{swootnet_forward.39} parent=0 // pred_check_branch
    %203 = sbr.rel (0) target = $region21
  $region20: #{swootnet_forward.39} parent=0 // pred_region
    _
  $region21: #{swootnet_forward.39} parent=0 // pred_fallthru
    _
  // Predicated region
  $region22: #{swootnet_forward.39} parent=0 // pred_check
    _
  $region23: #{swootnet_forward.39} parent=0 // pred_check_branch
    %205 = sbr.rel (0) target = $region25
  $region24: #{swootnet_forward.39} parent=0 // pred_region
    _
  $region25: #{swootnet_forward.39} parent=0 // pred_fallthru
    _

// kernel: swootnet_forward.41
$region0: #{swootnet_forward.41}
  #allocation0 [shape = 'u32[]', space=smem, size = 0x4, offset = 0x4, fixed_abs, tag = 'smem constant byte address 0x4 - core index']
  #allocation1 [shape = 'u32[144,128]{1,0:T(1,128)}', space=vmem, size = 0x12000, scoped, tag = 'internal scratch']
  %s0 = inlined_call_operand.vmem [shape: f32[8,256], index: 0, kind: input, shape index: {}]
  %s1 = inlined_call_operand.vmem [shape: bf16[256,48], index: 1, kind: input, shape index: {}]
  %s2 = inlined_call_operand.vmem [shape: f32[1,256], index: 2, kind: input, shape index: {}]
  %s3 = inlined_call_operand.vmem [shape: f32[1,256], index: 3, kind: input, shape index: {}]
  %s4 = inlined_call_operand.vmem [shape: f32[8,48], index: 4, kind: output, shape index: {}]
  %s5 = sld [smem:[#allocation0]]
  $region26: #{swootnet_forward.41} parent=0
    _
  %s7 = ssub.s32 1, %s5
  %s8 = scalar_select 0, %s7, %s5
  // Predicated region
  $region2: #{swootnet_forward.41} parent=0 // pred_check
    _
  $region3: #{swootnet_forward.41} parent=0 // pred_check_branch
    %10 = sbr.rel (0) target = $region5
  $region4: #{swootnet_forward.41} parent=0 // pred_region
    _
  $region5: #{swootnet_forward.41} parent=0 // pred_fallthru
    _
  // Predicated region
  $region6: #{swootnet_forward.41} parent=0 // pred_check
    _
  $region7: #{swootnet_forward.41} parent=0 // pred_check_branch
    %12 = sbr.rel (0) target = $region9
  $region8: #{swootnet_forward.41} parent=0 // pred_region
    _
  $region9: #{swootnet_forward.41} parent=0 // pred_fallthru
    _
  // Predicated region
  $region10: #{swootnet_forward.41} parent=0 // pred_check
    _
  $region11: #{swootnet_forward.41} parent=0 // pred_check_branch
    %14 = sbr.rel (0) target = $region13
  $region12: #{swootnet_forward.41} parent=0 // pred_region
    _
  $region13: #{swootnet_forward.41} parent=0 // pred_fallthru
    _
  // Predicated region
  $region14: #{swootnet_forward.41} parent=0 // pred_check
    _
  $region15: #{swootnet_forward.41} parent=0 // pred_check_branch
    %16 = sbr.rel (0) target = $region17
  $region16: #{swootnet_forward.41} parent=0 // pred_region
    _
  $region17: #{swootnet_forward.41} parent=0 // pred_fallthru
    _
  %v18 = vld [vmem:[%s0] sm:$0xff]
  %v19 = vld [vmem:[%s0 + $0x8] sm:$0xff]
  %v20 = vld [vmem:[%s2] sm:$0x3]
  %v22 = vlaneseq
  %v23 = vshrl.u32 %v22, 7
  %v24 = vsub.s32 0, %v23
  %v25 = vrot.slane %v20, %v24
  %v26 = vlaneseq
  %v27 = vshrl.u32 %v26, 7
  %v28 = vsub.s32 1, %v27
  %v29 = vrot.slane %v20, %v28
  %v32 = vmul.f32 %v18, %v25
  %v33 = vmul.f32 %v19, %v29
  %v34 = vld [vmem:[%s3] sm:$0x3]
  %v36 = vlaneseq
  %v37 = vshrl.u32 %v36, 7
  %v38 = vsub.s32 0, %v37
  %v39 = vrot.slane %v34, %v38
  %v40 = vlaneseq
  %v41 = vshrl.u32 %v40, 7
  %v42 = vsub.s32 1, %v41
  %v43 = vrot.slane %v34, %v42
  %v46 = vadd.f32 %v32, %v39
  %v47 = vadd.f32 %v33, %v43
  %v48 = vmax.f32 %v46, 0.0
  %v49 = vmax.f32 %v47, 0.0
  %v50 = vpack.c.bf16 %v48, %v48
  %v51 = vpack.c.bf16 %v49, %v49
  %v52 = vld [vmem:[%s1] sm:$0xf]
  %v53 = vld [vmem:[%s1 + $0x4] sm:$0xf]
  %v54 = vld [vmem:[%s1 + $0x8] sm:$0xf]
  %v55 = vld [vmem:[%s1 + $0xc] sm:$0xf]
  %v56 = vld [vmem:[%s1 + $0x10] sm:$0xf]
  %v57 = vld [vmem:[%s1 + $0x14] sm:$0xf]
  %v58 = vld [vmem:[%s1 + $0x18] sm:$0xf]
  %v59 = vld [vmem:[%s1 + $0x1c] sm:$0xf]
  %v60 = vld [vmem:[%s1 + $0x20] sm:$0xf]
  %v61 = vld [vmem:[%s1 + $0x24] sm:$0xf]
  %v62 = vld [vmem:[%s1 + $0x28] sm:$0xf]
  %v63 = vld [vmem:[%s1 + $0x2c] sm:$0xf]
  %v64 = vld [vmem:[%s1 + $0x30] sm:$0xf]
  %v65 = vld [vmem:[%s1 + $0x34] sm:$0xf]
  %v66 = vld [vmem:[%s1 + $0x38] sm:$0xf]
  %v67 = vld [vmem:[%s1 + $0x3c] sm:$0xf]
  %v68 = vld [vmem:[%s1 + $0x40] sm:$0xf]
  %v69 = vld [vmem:[%s1 + $0x44] sm:$0xf]
  %v70 = vld [vmem:[%s1 + $0x48] sm:$0xf]
  %v71 = vld [vmem:[%s1 + $0x4c] sm:$0xf]
  %v72 = vld [vmem:[%s1 + $0x50] sm:$0xf]
  %v73 = vld [vmem:[%s1 + $0x54] sm:$0xf]
  %v74 = vld [vmem:[%s1 + $0x58] sm:$0xf]
  %v75 = vld [vmem:[%s1 + $0x5c] sm:$0xf]
  %v76 = vld [vmem:[%s1 + $0x60] sm:$0xf]
  %v77 = vld [vmem:[%s1 + $0x64] sm:$0xf]
  %v78 = vld [vmem:[%s1 + $0x68] sm:$0xf]
  %v79 = vld [vmem:[%s1 + $0x6c] sm:$0xf]
  %v80 = vld [vmem:[%s1 + $0x70] sm:$0xf]
  %v81 = vld [vmem:[%s1 + $0x74] sm:$0xf]
  %v82 = vld [vmem:[%s1 + $0x78] sm:$0xf]
  %v83 = vld [vmem:[%s1 + $0x7c] sm:$0xf]
  %v116 = vunpack.c.l.b16 %v52
  %v117 = vunpack.c.l.b16 %v53
  %v118 = vunpack.c.l.b16 %v54
  %v119 = vunpack.c.l.b16 %v55
  %v120 = vunpack.c.l.b16 %v56
  %v121 = vunpack.c.l.b16 %v57
  %v122 = vunpack.c.l.b16 %v58
  %v123 = vunpack.c.l.b16 %v59
  %v124 = vunpack.c.l.b16 %v60
  %v125 = vunpack.c.l.b16 %v61
  %v126 = vunpack.c.l.b16 %v62
  %v127 = vunpack.c.l.b16 %v63
  %v128 = vunpack.c.l.b16 %v64
  %v129 = vunpack.c.l.b16 %v65
  %v130 = vunpack.c.l.b16 %v66
  %v131 = vunpack.c.l.b16 %v67
  %v132 = vunpack.c.l.b16 %v68
  %v133 = vunpack.c.l.b16 %v69
  %v134 = vunpack.c.l.b16 %v70
  %v135 = vunpack.c.l.b16 %v71
  %v136 = vunpack.c.l.b16 %v72
  %v137 = vunpack.c.l.b16 %v73
  %v138 = vunpack.c.l.b16 %v74
  %v139 = vunpack.c.l.b16 %v75
  %v140 = vunpack.c.l.b16 %v76
  %v141 = vunpack.c.l.b16 %v77
  %v142 = vunpack.c.l.b16 %v78
  %v143 = vunpack.c.l.b16 %v79
  %v144 = vunpack.c.l.b16 %v80
  %v145 = vunpack.c.l.b16 %v81
  %v146 = vunpack.c.l.b16 %v82
  %v147 = vunpack.c.l.b16 %v83
  %v148 = vpack.c.b16 %v117, %v116
  %v149 = vpack.c.b16 %v119, %v118
  %v150 = vpack.c.b16 %v121, %v120
  %v151 = vpack.c.b16 %v123, %v122
  %v152 = vpack.c.b16 %v125, %v124
  %v153 = vpack.c.b16 %v127, %v126
  %v154 = vpack.c.b16 %v129, %v128
  %v155 = vpack.c.b16 %v131, %v130
  %v156 = vpack.c.b16 %v133, %v132
  %v157 = vpack.c.b16 %v135, %v134
  %v158 = vpack.c.b16 %v137, %v136
  %v159 = vpack.c.b16 %v139, %v138
  %v160 = vpack.c.b16 %v141, %v140
  %v161 = vpack.c.b16 %v143, %v142
  %v162 = vpack.c.b16 %v145, %v144
  %v163 = vpack.c.b16 %v147, %v146
  %180 = vmatprep.subr.bf16.mxu0 0
  %181 = vmatpush1.bf16.msra.mxu0 %v148
  %182 = vmatprep.subr.bf16.mxu0 0
  %183 = vmatpush1.bf16.msra.mxu0 %v149
  %184 = vmatprep.subr.bf16.mxu0 0
  %185 = vmatpush1.bf16.msra.mxu0 %v150
  %186 = vmatprep.subr.bf16.mxu0 0
  %187 = vmatpush1.bf16.msra.mxu0 %v151
  %188 = vmatprep.subr.bf16.mxu0 0
  %189 = vmatpush1.bf16.msra.mxu0 %v152
  %190 = vmatprep.subr.bf16.mxu0 0
  %191 = vmatpush1.bf16.msra.mxu0 %v153
  %192 = vmatprep.subr.bf16.mxu0 0
  %193 = vmatpush1.bf16.msra.mxu0 %v154
  %194 = vmatprep.subr.bf16.mxu0 0
  %195 = vmatpush1.bf16.msra.mxu0 %v155
  %196 = vmatprep.subr.bf16.mxu0 0
  %197 = vmatpush1.bf16.msra.mxu0 %v156
  %198 = vmatprep.subr.bf16.mxu0 0
  %199 = vmatpush1.bf16.msra.mxu0 %v157
  %200 = vmatprep.subr.bf16.mxu0 0
  %201 = vmatpush1.bf16.msra.mxu0 %v158
  %202 = vmatprep.subr.bf16.mxu0 0
  %203 = vmatpush1.bf16.msra.mxu0 %v159
  %204 = vmatprep.subr.bf16.mxu0 0
  %205 = vmatpush1.bf16.msra.mxu0 %v160
  %206 = vmatprep.subr.bf16.mxu0 0
  %207 = vmatpush1.bf16.msra.mxu0 %v161
  %208 = vmatprep.subr.bf16.mxu0 0
  %209 = vmatpush1.bf16.msra.mxu0 %v162
  %210 = vmatprep.subr.bf16.mxu0 0
  %211 = vmatpush1.bf16.msra.mxu0 %v163
  %212 = vmatprep.mubr.bf16.mxu0 %v51
  %213 = vmatmul.mubr.bf16.gmra.mrb[0].mxu0 %v50
  %v214 = vpop.f32.mrb[0].mxu0
  %v215 = vadd.f32 0.0, %v214
  %v216 = vpop.f32.mrb[0].mxu0
  %v217 = vpop.f32.mrb[0].mxu0
  %v218 = vpop.f32.mrb[0].mxu0
  %219 = vdwg.mxu0
  %vm220 = vcmask 392192
  %221 = vst.msk [vmem:[%s4] sm:$0xff] %vm220, %v215
  // Predicated region
  $region18: #{swootnet_forward.41} parent=0 // pred_check
    _
  $region19: #{swootnet_forward.41} parent=0 // pred_check_branch
    %223 = sbr.rel (0) target = $region21
  $region20: #{swootnet_forward.41} parent=0 // pred_region
    _
  $region21: #{swootnet_forward.41} parent=0 // pred_fallthru
    _
  // Predicated region
  $region22: #{swootnet_forward.41} parent=0 // pred_check
    _
  $region23: #{swootnet_forward.41} parent=0 // pred_check_branch
    %225 = sbr.rel (0) target = $region25
  $region24: #{swootnet_forward.41} parent=0 // pred_region
    _
  $region25: #{swootnet_forward.41} parent=0 // pred_fallthru
    _

// kernel: swootnet_forward.40
$region0: #{swootnet_forward.40}
  #allocation0 [shape = 'u32[]', space=smem, size = 0x4, offset = 0x4, fixed_abs, tag = 'smem constant byte address 0x4 - core index']
  #allocation1 [shape = 'u32[144,128]{1,0:T(1,128)}', space=vmem, size = 0x12000, scoped, tag = 'internal scratch']
  %s0 = inlined_call_operand.vmem [shape: f32[8,468], index: 0, kind: input, shape index: {}]
  %s1 = inlined_call_operand.vmem [shape: bf16[468,12], index: 1, kind: input, shape index: {}]
  %s2 = inlined_call_operand.vmem [shape: f32[1,468], index: 2, kind: input, shape index: {}]
  %s3 = inlined_call_operand.vmem [shape: f32[1,468], index: 3, kind: input, shape index: {}]
  %s4 = inlined_call_operand.vmem [shape: f32[8,12], index: 4, kind: output, shape index: {}]
  %s5 = sld [smem:[#allocation0]]
  $region26: #{swootnet_forward.40} parent=0
    _
  %s7 = ssub.s32 1, %s5
  %s8 = scalar_select 0, %s7, %s5
  // Predicated region
  $region2: #{swootnet_forward.40} parent=0 // pred_check
    _
  $region3: #{swootnet_forward.40} parent=0 // pred_check_branch
    %10 = sbr.rel (0) target = $region5
  $region4: #{swootnet_forward.40} parent=0 // pred_region
    _
  $region5: #{swootnet_forward.40} parent=0 // pred_fallthru
    _
  // Predicated region
  $region6: #{swootnet_forward.40} parent=0 // pred_check
    _
  $region7: #{swootnet_forward.40} parent=0 // pred_check_branch
    %12 = sbr.rel (0) target = $region9
  $region8: #{swootnet_forward.40} parent=0 // pred_region
    _
  $region9: #{swootnet_forward.40} parent=0 // pred_fallthru
    _
  // Predicated region
  $region10: #{swootnet_forward.40} parent=0 // pred_check
    _
  $region11: #{swootnet_forward.40} parent=0 // pred_check_branch
    %14 = sbr.rel (0) target = $region13
  $region12: #{swootnet_forward.40} parent=0 // pred_region
    _
  $region13: #{swootnet_forward.40} parent=0 // pred_fallthru
    _
  // Predicated region
  $region14: #{swootnet_forward.40} parent=0 // pred_check
    _
  $region15: #{swootnet_forward.40} parent=0 // pred_check_branch
    %16 = sbr.rel (0) target = $region17
  $region16: #{swootnet_forward.40} parent=0 // pred_region
    _
  $region17: #{swootnet_forward.40} parent=0 // pred_fallthru
    _
  %v18 = vld [vmem:[%s0] sm:$0xff]
  %v19 = vld [vmem:[%s0 + $0x8] sm:$0xff]
  %v20 = vld [vmem:[%s0 + $0x10] sm:$0xff]
  %v21 = vld [vmem:[%s0 + $0x18] sm:$0xff]
  %v22 = vld [vmem:[%s2] sm:$0xf]
  %v24 = vlaneseq
  %v25 = vshrl.u32 %v24, 7
  %v26 = vsub.s32 0, %v25
  %v27 = vrot.slane %v22, %v26
  %v28 = vlaneseq
  %v29 = vshrl.u32 %v28, 7
  %v30 = vsub.s32 1, %v29
  %v31 = vrot.slane %v22, %v30
  %v32 = vlaneseq
  %v33 = vshrl.u32 %v32, 7
  %v34 = vsub.s32 2, %v33
  %v35 = vrot.slane %v22, %v34
  %v36 = vlaneseq
  %v37 = vshrl.u32 %v36, 7
  %v38 = vsub.s32 3, %v37
  %v39 = vrot.slane %v22, %v38
  %v44 = vmul.f32 %v18, %v27
  %v45 = vmul.f32 %v19, %v31
  %v46 = vmul.f32 %v20, %v35
  %v47 = vmul.f32 %v21, %v39
  %v48 = vld [vmem:[%s3] sm:$0xf]
  %v50 = vlaneseq
  %v51 = vshrl.u32 %v50, 7
  %v52 = vsub.s32 0, %v51
  %v53 = vrot.slane %v48, %v52
  %v54 = vlaneseq
  %v55 = vshrl.u32 %v54, 7
  %v56 = vsub.s32 1, %v55
  %v57 = vrot.slane %v48, %v56
  %v58 = vlaneseq
  %v59 = vshrl.u32 %v58, 7
  %v60 = vsub.s32 2, %v59
  %v61 = vrot.slane %v48, %v60
  %v62 = vlaneseq
  %v63 = vshrl.u32 %v62, 7
  %v64 = vsub.s32 3, %v63
  %v65 = vrot.slane %v48, %v64
  %v70 = vadd.f32 %v44, %v53
  %v71 = vadd.f32 %v45, %v57
  %v72 = vadd.f32 %v46, %v61
  %v73 = vadd.f32 %v47, %v65
  %v74 = vmax.f32 %v70, 0.0
  %v75 = vmax.f32 %v71, 0.0
  %v76 = vmax.f32 %v72, 0.0
  %v77 = vmax.f32 %v73, 0.0
  %v78 = vpack.c.bf16 %v74, %v74
  %v79 = vpack.c.bf16 %v75, %v75
  %v80 = vpack.c.bf16 %v76, %v76
  %v81 = vpack.c.bf16 %v77, %v77
  %v82 = vld [vmem:[%s1] sm:$0xf]
  %v83 = vld [vmem:[%s1 + $0x4] sm:$0xf]
  %v84 = vld [vmem:[%s1 + $0x8] sm:$0xf]
  %v85 = vld [vmem:[%s1 + $0xc] sm:$0xf]
  %v86 = vld [vmem:[%s1 + $0x10] sm:$0xf]
  %v87 = vld [vmem:[%s1 + $0x14] sm:$0xf]
  %v88 = vld [vmem:[%s1 + $0x18] sm:$0xf]
  %v89 = vld [vmem:[%s1 + $0x1c] sm:$0xf]
  %v90 = vld [vmem:[%s1 + $0x20] sm:$0xf]
  %v91 = vld [vmem:[%s1 + $0x24] sm:$0xf]
  %v92 = vld [vmem:[%s1 + $0x28] sm:$0xf]
  %v93 = vld [vmem:[%s1 + $0x2c] sm:$0xf]
  %v94 = vld [vmem:[%s1 + $0x30] sm:$0xf]
  %v95 = vld [vmem:[%s1 + $0x34] sm:$0xf]
  %v96 = vld [vmem:[%s1 + $0x38] sm:$0xf]
  %v97 = vld [vmem:[%s1 + $0x3c] sm:$0xf]
  %v98 = vld [vmem:[%s1 + $0x40] sm:$0xf]
  %v99 = vld [vmem:[%s1 + $0x44] sm:$0xf]
  %v100 = vld [vmem:[%s1 + $0x48] sm:$0xf]
  %v101 = vld [vmem:[%s1 + $0x4c] sm:$0xf]
  %v102 = vld [vmem:[%s1 + $0x50] sm:$0xf]
  %v103 = vld [vmem:[%s1 + $0x54] sm:$0xf]
  %v104 = vld [vmem:[%s1 + $0x58] sm:$0xf]
  %v105 = vld [vmem:[%s1 + $0x5c] sm:$0xf]
  %v106 = vld [vmem:[%s1 + $0x60] sm:$0xf]
  %v107 = vld [vmem:[%s1 + $0x64] sm:$0xf]
  %v108 = vld [vmem:[%s1 + $0x68] sm:$0xf]
  %v109 = vld [vmem:[%s1 + $0x6c] sm:$0xf]
  %v110 = vld [vmem:[%s1 + $0x70] sm:$0xf]
  %v111 = vld [vmem:[%s1 + $0x74] sm:$0xf]
  %v112 = vld [vmem:[%s1 + $0x78] sm:$0xf]
  %v113 = vld [vmem:[%s1 + $0x7c] sm:$0xf]
  %v114 = vld [vmem:[%s1 + $0x80] sm:$0xf]
  %v115 = vld [vmem:[%s1 + $0x84] sm:$0xf]
  %v116 = vld [vmem:[%s1 + $0x88] sm:$0xf]
  %v117 = vld [vmem:[%s1 + $0x8c] sm:$0xf]
  %v118 = vld [vmem:[%s1 + $0x90] sm:$0xf]
  %v119 = vld [vmem:[%s1 + $0x94] sm:$0xf]
  %v120 = vld [vmem:[%s1 + $0x98] sm:$0xf]
  %v121 = vld [vmem:[%s1 + $0x9c] sm:$0xf]
  %v122 = vld [vmem:[%s1 + $0xa0] sm:$0xf]
  %v123 = vld [vmem:[%s1 + $0xa4] sm:$0xf]
  %v124 = vld [vmem:[%s1 + $0xa8] sm:$0xf]
  %v125 = vld [vmem:[%s1 + $0xac] sm:$0xf]
  %v126 = vld [vmem:[%s1 + $0xb0] sm:$0xf]
  %v127 = vld [vmem:[%s1 + $0xb4] sm:$0xf]
  %v128 = vld [vmem:[%s1 + $0xb8] sm:$0xf]
  %v129 = vld [vmem:[%s1 + $0xbc] sm:$0xf]
  %v130 = vld [vmem:[%s1 + $0xc0] sm:$0xf]
  %v131 = vld [vmem:[%s1 + $0xc4] sm:$0xf]
  %v132 = vld [vmem:[%s1 + $0xc8] sm:$0xf]
  %v133 = vld [vmem:[%s1 + $0xcc] sm:$0xf]
  %v134 = vld [vmem:[%s1 + $0xd0] sm:$0xf]
  %v135 = vld [vmem:[%s1 + $0xd4] sm:$0xf]
  %v136 = vld [vmem:[%s1 + $0xd8] sm:$0xf]
  %v137 = vld [vmem:[%s1 + $0xdc] sm:$0xf]
  %v138 = vld [vmem:[%s1 + $0xe0] sm:$0xf]
  %v139 = vld [vmem:[%s1 + $0xe4] sm:$0xf]
  %v140 = vld [vmem:[%s1 + $0xe8] sm:$0x3]
  %v200 = vunpack.c.l.b16 %v82
  %v201 = vunpack.c.l.b16 %v83
  %v202 = vunpack.c.l.b16 %v84
  %v203 = vunpack.c.l.b16 %v85
  %v204 = vunpack.c.l.b16 %v86
  %v205 = vunpack.c.l.b16 %v87
  %v206 = vunpack.c.l.b16 %v88
  %v207 = vunpack.c.l.b16 %v89
  %v208 = vunpack.c.l.b16 %v90
  %v209 = vunpack.c.l.b16 %v91
  %v210 = vunpack.c.l.b16 %v92
  %v211 = vunpack.c.l.b16 %v93
  %v212 = vunpack.c.l.b16 %v94
  %v213 = vunpack.c.l.b16 %v95
  %v214 = vunpack.c.l.b16 %v96
  %v215 = vunpack.c.l.b16 %v97
  %v216 = vunpack.c.l.b16 %v98
  %v217 = vunpack.c.l.b16 %v99
  %v218 = vunpack.c.l.b16 %v100
  %v219 = vunpack.c.l.b16 %v101
  %v220 = vunpack.c.l.b16 %v102
  %v221 = vunpack.c.l.b16 %v103
  %v222 = vunpack.c.l.b16 %v104
  %v223 = vunpack.c.l.b16 %v105
  %v224 = vunpack.c.l.b16 %v106
  %v225 = vunpack.c.l.b16 %v107
  %v226 = vunpack.c.l.b16 %v108
  %v227 = vunpack.c.l.b16 %v109
  %v228 = vunpack.c.l.b16 %v110
  %v229 = vunpack.c.l.b16 %v111
  %v230 = vunpack.c.l.b16 %v112
  %v231 = vunpack.c.l.b16 %v113
  %v232 = vunpack.c.l.b16 %v114
  %v233 = vunpack.c.l.b16 %v115
  %v234 = vunpack.c.l.b16 %v116
  %v235 = vunpack.c.l.b16 %v117
  %v236 = vunpack.c.l.b16 %v118
  %v237 = vunpack.c.l.b16 %v119
  %v238 = vunpack.c.l.b16 %v120
  %v239 = vunpack.c.l.b16 %v121
  %v240 = vunpack.c.l.b16 %v122
  %v241 = vunpack.c.l.b16 %v123
  %v242 = vunpack.c.l.b16 %v124
  %v243 = vunpack.c.l.b16 %v125
  %v244 = vunpack.c.l.b16 %v126
  %v245 = vunpack.c.l.b16 %v127
  %v246 = vunpack.c.l.b16 %v128
  %v247 = vunpack.c.l.b16 %v129
  %v248 = vunpack.c.l.b16 %v130
  %v249 = vunpack.c.l.b16 %v131
  %v250 = vunpack.c.l.b16 %v132
  %v251 = vunpack.c.l.b16 %v133
  %v252 = vunpack.c.l.b16 %v134
  %v253 = vunpack.c.l.b16 %v135
  %v254 = vunpack.c.l.b16 %v136
  %v255 = vunpack.c.l.b16 %v137
  %v256 = vunpack.c.l.b16 %v138
  %v257 = vunpack.c.l.b16 %v139
  %v258 = vunpack.c.l.b16 %v140
  %v259 = vpack.c.b16 %v201, %v200
  %v260 = vpack.c.b16 %v203, %v202
  %v261 = vpack.c.b16 %v205, %v204
  %v262 = vpack.c.b16 %v207, %v206
  %v263 = vpack.c.b16 %v209, %v208
  %v264 = vpack.c.b16 %v211, %v210
  %v265 = vpack.c.b16 %v213, %v212
  %v266 = vpack.c.b16 %v215, %v214
  %v267 = vpack.c.b16 %v217, %v216
  %v268 = vpack.c.b16 %v219, %v218
  %v269 = vpack.c.b16 %v221, %v220
  %v270 = vpack.c.b16 %v223, %v222
  %v271 = vpack.c.b16 %v225, %v224
  %v272 = vpack.c.b16 %v227, %v226
  %v273 = vpack.c.b16 %v229, %v228
  %v274 = vpack.c.b16 %v231, %v230
  %v275 = vpack.c.b16 %v233, %v232
  %v276 = vpack.c.b16 %v235, %v234
  %v277 = vpack.c.b16 %v237, %v236
  %v278 = vpack.c.b16 %v239, %v238
  %v279 = vpack.c.b16 %v241, %v240
  %v280 = vpack.c.b16 %v243, %v242
  %v281 = vpack.c.b16 %v245, %v244
  %v282 = vpack.c.b16 %v247, %v246
  %v283 = vpack.c.b16 %v249, %v248
  %v284 = vpack.c.b16 %v251, %v250
  %v285 = vpack.c.b16 %v253, %v252
  %v286 = vpack.c.b16 %v255, %v254
  %v287 = vpack.c.b16 %v257, %v256
  %v288 = vpack.c.b16 %v258, %v258
  %vm318 = vcmask 687104
  %v320 = vsel %vm318, %v81, 0
  %vm322 = vcmask 1041408
  %v324 = vsel %vm322, %v288, 0
  %326 = vmatprep.subr.bf16.mxu0 0
  %327 = vmatpush1.bf16.msra.mxu0 %v259
  %328 = vmatprep.subr.bf16.mxu0 0
  %329 = vmatpush1.bf16.msra.mxu0 %v260
  %330 = vmatprep.subr.bf16.mxu0 0
  %331 = vmatpush1.bf16.msra.mxu0 %v261
  %332 = vmatprep.subr.bf16.mxu0 0
  %333 = vmatpush1.bf16.msra.mxu0 %v262
  %334 = vmatprep.subr.bf16.mxu0 0
  %335 = vmatpush1.bf16.msra.mxu0 %v263
  %336 = vmatprep.subr.bf16.mxu0 0
  %337 = vmatpush1.bf16.msra.mxu0 %v264
  %338 = vmatprep.subr.bf16.mxu0 0
  %339 = vmatpush1.bf16.msra.mxu0 %v265
  %340 = vmatprep.subr.bf16.mxu0 0
  %341 = vmatpush1.bf16.msra.mxu0 %v266
  %342 = vmatprep.subr.bf16.mxu0 0
  %343 = vmatpush1.bf16.msra.mxu0 %v267
  %344 = vmatprep.subr.bf16.mxu0 0
  %345 = vmatpush1.bf16.msra.mxu0 %v268
  %346 = vmatprep.subr.bf16.mxu0 0
  %347 = vmatpush1.bf16.msra.mxu0 %v269
  %348 = vmatprep.subr.bf16.mxu0 0
  %349 = vmatpush1.bf16.msra.mxu0 %v270
  %350 = vmatprep.subr.bf16.mxu0 0
  %351 = vmatpush1.bf16.msra.mxu0 %v271
  %352 = vmatprep.subr.bf16.mxu0 0
  %353 = vmatpush1.bf16.msra.mxu0 %v272
  %354 = vmatprep.subr.bf16.mxu0 0
  %355 = vmatpush1.bf16.msra.mxu0 %v273
  %356 = vmatprep.subr.bf16.mxu0 0
  %357 = vmatpush1.bf16.msra.mxu0 %v274
  %358 = vmatprep.mubr.bf16.mxu0 %v79
  %359 = vmatmul.mubr.bf16.gmra.mrb[0].mxu0 %v78
  %v360 = vpop.f32.mrb[0].mxu0
  %v361 = vadd.f32 0.0, %v360
  %v362 = vpop.f32.mrb[0].mxu0
  %v363 = vpop.f32.mrb[0].mxu0
  %v364 = vpop.f32.mrb[0].mxu0
  %365 = vdwg.mxu0
  %366 = vmatprep.subr.bf16.mxu0 0
  %367 = vmatpush1.bf16.msra.mxu0 %v275
  %368 = vmatprep.subr.bf16.mxu0 0
  %369 = vmatpush1.bf16.msra.mxu0 %v276
  %370 = vmatprep.subr.bf16.mxu0 0
  %371 = vmatpush1.bf16.msra.mxu0 %v277
  %372 = vmatprep.subr.bf16.mxu0 0
  %373 = vmatpush1.bf16.msra.mxu0 %v278
  %374 = vmatprep.subr.bf16.mxu0 0
  %375 = vmatpush1.bf16.msra.mxu0 %v279
  %376 = vmatprep.subr.bf16.mxu0 0
  %377 = vmatpush1.bf16.msra.mxu0 %v280
  %378 = vmatprep.subr.bf16.mxu0 0
  %379 = vmatpush1.bf16.msra.mxu0 %v281
  %380 = vmatprep.subr.bf16.mxu0 0
  %381 = vmatpush1.bf16.msra.mxu0 %v282
  %382 = vmatprep.subr.bf16.mxu0 0
  %383 = vmatpush1.bf16.msra.mxu0 %v283
  %384 = vmatprep.subr.bf16.mxu0 0
  %385 = vmatpush1.bf16.msra.mxu0 %v284
  %386 = vmatprep.subr.bf16.mxu0 0
  %387 = vmatpush1.bf16.msra.mxu0 %v285
  %388 = vmatprep.subr.bf16.mxu0 0
  %389 = vmatpush1.bf16.msra.mxu0 %v286
  %390 = vmatprep.subr.bf16.mxu0 0
  %391 = vmatpush1.bf16.msra.mxu0 %v287
  %392 = vmatprep.subr.bf16.mxu0 0
  %393 = vmatpush1.bf16.msra.mxu0 %v324
  %394 = vmatprep.subr.bf16.mxu0 0
  %395 = vmatpush1.bf16.msra.mxu0 0
  %396 = vmatprep.subr.bf16.mxu0 0
  %397 = vmatpush1.bf16.msra.mxu0 0
  %398 = vmatprep.mubr.bf16.mxu0 %v320
  %399 = vmatmul.mubr.bf16.gmra.mrb[0].mxu0 %v80
  %v400 = vpop.f32.mrb[0].mxu0
  %v401 = vadd.f32 %v361, %v400
  %v402 = vpop.f32.mrb[0].mxu0
  %v403 = vpop.f32.mrb[0].mxu0
  %v404 = vpop.f32.mrb[0].mxu0
  %405 = vdwg.mxu0
  %vm406 = vcmask 97280
  %407 = vst.msk [vmem:[%s4] sm:$0xff] %vm406, %v401
  // Predicated region
  $region18: #{swootnet_forward.40} parent=0 // pred_check
    _
  $region19: #{swootnet_forward.40} parent=0 // pred_check_branch
    %409 = sbr.rel (0) target = $region21
  $region20: #{swootnet_forward.40} parent=0 // pred_region
    _
  $region21: #{swootnet_forward.40} parent=0 // pred_fallthru
    _
  // Predicated region
  $region22: #{swootnet_forward.40} parent=0 // pred_check
    _
  $region23: #{swootnet_forward.40} parent=0 // pred_check_branch
    %411 = sbr.rel (0) target = $region25
  $region24: #{swootnet_forward.40} parent=0 // pred_region
    _
  $region25: #{swootnet_forward.40} parent=0 // pred_fallthru
    _

// kernel: swootnet_forward.43
$region0: #{swootnet_forward.43}
  #allocation0 [shape = 'u32[]', space=smem, size = 0x4, offset = 0x4, fixed_abs, tag = 'smem constant byte address 0x4 - core index']
  #allocation1 [shape = 'u32[144,128]{1,0:T(1,128)}', space=vmem, size = 0x12000, scoped, tag = 'internal scratch']
  %s0 = inlined_call_operand.vmem [shape: f32[8,304], index: 0, kind: input, shape index: {}]
  %s1 = inlined_call_operand.vmem [shape: bf16[304,48], index: 1, kind: input, shape index: {}]
  %s2 = inlined_call_operand.vmem [shape: f32[1,304], index: 2, kind: input, shape index: {}]
  %s3 = inlined_call_operand.vmem [shape: f32[1,304], index: 3, kind: input, shape index: {}]
  %s4 = inlined_call_operand.vmem [shape: f32[8,48], index: 4, kind: output, shape index: {}]
  %s5 = sld [smem:[#allocation0]]
  $region26: #{swootnet_forward.43} parent=0
    _
  %s7 = ssub.s32 1, %s5
  %s8 = scalar_select 0, %s7, %s5
  // Predicated region
  $region2: #{swootnet_forward.43} parent=0 // pred_check
    _
  $region3: #{swootnet_forward.43} parent=0 // pred_check_branch
    %10 = sbr.rel (0) target = $region5
  $region4: #{swootnet_forward.43} parent=0 // pred_region
    _
  $region5: #{swootnet_forward.43} parent=0 // pred_fallthru
    _
  // Predicated region
  $region6: #{swootnet_forward.43} parent=0 // pred_check
    _
  $region7: #{swootnet_forward.43} parent=0 // pred_check_branch
    %12 = sbr.rel (0) target = $region9
  $region8: #{swootnet_forward.43} parent=0 // pred_region
    _
  $region9: #{swootnet_forward.43} parent=0 // pred_fallthru
    _
  // Predicated region
  $region10: #{swootnet_forward.43} parent=0 // pred_check
    _
  $region11: #{swootnet_forward.43} parent=0 // pred_check_branch
    %14 = sbr.rel (0) target = $region13
  $region12: #{swootnet_forward.43} parent=0 // pred_region
    _
  $region13: #{swootnet_forward.43} parent=0 // pred_fallthru
    _
  // Predicated region
  $region14: #{swootnet_forward.43} parent=0 // pred_check
    _
  $region15: #{swootnet_forward.43} parent=0 // pred_check_branch
    %16 = sbr.rel (0) target = $region17
  $region16: #{swootnet_forward.43} parent=0 // pred_region
    _
  $region17: #{swootnet_forward.43} parent=0 // pred_fallthru
    _
  %v18 = vld [vmem:[%s0] sm:$0xff]
  %v19 = vld [vmem:[%s0 + $0x8] sm:$0xff]
  %v20 = vld [vmem:[%s0 + $0x10] sm:$0xff]
  %v21 = vld [vmem:[%s2] sm:$0x7]
  %v23 = vlaneseq
  %v24 = vshrl.u32 %v23, 7
  %v25 = vsub.s32 0, %v24
  %v26 = vrot.slane %v21, %v25
  %v27 = vlaneseq
  %v28 = vshrl.u32 %v27, 7
  %v29 = vsub.s32 1, %v28
  %v30 = vrot.slane %v21, %v29
  %v31 = vlaneseq
  %v32 = vshrl.u32 %v31, 7
  %v33 = vsub.s32 2, %v32
  %v34 = vrot.slane %v21, %v33
  %v38 = vmul.f32 %v18, %v26
  %v39 = vmul.f32 %v19, %v30
  %v40 = vmul.f32 %v20, %v34
  %v41 = vld [vmem:[%s3] sm:$0x7]
  %v43 = vlaneseq
  %v44 = vshrl.u32 %v43, 7
  %v45 = vsub.s32 0, %v44
  %v46 = vrot.slane %v41, %v45
  %v47 = vlaneseq
  %v48 = vshrl.u32 %v47, 7
  %v49 = vsub.s32 1, %v48
  %v50 = vrot.slane %v41, %v49
  %v51 = vlaneseq
  %v52 = vshrl.u32 %v51, 7
  %v53 = vsub.s32 2, %v52
  %v54 = vrot.slane %v41, %v53
  %v58 = vadd.f32 %v38, %v46
  %v59 = vadd.f32 %v39, %v50
  %v60 = vadd.f32 %v40, %v54
  %v61 = vmax.f32 %v58, 0.0
  %v62 = vmax.f32 %v59, 0.0
  %v63 = vmax.f32 %v60, 0.0
  %v64 = vpack.c.bf16 %v61, %v61
  %v65 = vpack.c.bf16 %v62, %v62
  %v66 = vpack.c.bf16 %v63, %v63
  %v67 = vld [vmem:[%s1] sm:$0xf]
  %v68 = vld [vmem:[%s1 + $0x4] sm:$0xf]
  %v69 = vld [vmem:[%s1 + $0x8] sm:$0xf]
  %v70 = vld [vmem:[%s1 + $0xc] sm:$0xf]
  %v71 = vld [vmem:[%s1 + $0x10] sm:$0xf]
  %v72 = vld [vmem:[%s1 + $0x14] sm:$0xf]
  %v73 = vld [vmem:[%s1 + $0x18] sm:$0xf]
  %v74 = vld [vmem:[%s1 + $0x1c] sm:$0xf]
  %v75 = vld [vmem:[%s1 + $0x20] sm:$0xf]
  %v76 = vld [vmem:[%s1 + $0x24] sm:$0xf]
  %v77 = vld [vmem:[%s1 + $0x28] sm:$0xf]
  %v78 = vld [vmem:[%s1 + $0x2c] sm:$0xf]
  %v79 = vld [vmem:[%s1 + $0x30] sm:$0xf]
  %v80 = vld [vmem:[%s1 + $0x34] sm:$0xf]
  %v81 = vld [vmem:[%s1 + $0x38] sm:$0xf]
  %v82 = vld [vmem:[%s1 + $0x3c] sm:$0xf]
  %v83 = vld [vmem:[%s1 + $0x40] sm:$0xf]
  %v84 = vld [vmem:[%s1 + $0x44] sm:$0xf]
  %v85 = vld [vmem:[%s1 + $0x48] sm:$0xf]
  %v86 = vld [vmem:[%s1 + $0x4c] sm:$0xf]
  %v87 = vld [vmem:[%s1 + $0x50] sm:$0xf]
  %v88 = vld [vmem:[%s1 + $0x54] sm:$0xf]
  %v89 = vld [vmem:[%s1 + $0x58] sm:$0xf]
  %v90 = vld [vmem:[%s1 + $0x5c] sm:$0xf]
  %v91 = vld [vmem:[%s1 + $0x60] sm:$0xf]
  %v92 = vld [vmem:[%s1 + $0x64] sm:$0xf]
  %v93 = vld [vmem:[%s1 + $0x68] sm:$0xf]
  %v94 = vld [vmem:[%s1 + $0x6c] sm:$0xf]
  %v95 = vld [vmem:[%s1 + $0x70] sm:$0xf]
  %v96 = vld [vmem:[%s1 + $0x74] sm:$0xf]
  %v97 = vld [vmem:[%s1 + $0x78] sm:$0xf]
  %v98 = vld [vmem:[%s1 + $0x7c] sm:$0xf]
  %v99 = vld [vmem:[%s1 + $0x80] sm:$0xf]
  %v100 = vld [vmem:[%s1 + $0x84] sm:$0xf]
  %v101 = vld [vmem:[%s1 + $0x88] sm:$0xf]
  %v102 = vld [vmem:[%s1 + $0x8c] sm:$0xf]
  %v103 = vld [vmem:[%s1 + $0x90] sm:$0xf]
  %v104 = vld [vmem:[%s1 + $0x94] sm:$0xf]
  %v143 = vunpack.c.l.b16 %v67
  %v144 = vunpack.c.l.b16 %v68
  %v145 = vunpack.c.l.b16 %v69
  %v146 = vunpack.c.l.b16 %v70
  %v147 = vunpack.c.l.b16 %v71
  %v148 = vunpack.c.l.b16 %v72
  %v149 = vunpack.c.l.b16 %v73
  %v150 = vunpack.c.l.b16 %v74
  %v151 = vunpack.c.l.b16 %v75
  %v152 = vunpack.c.l.b16 %v76
  %v153 = vunpack.c.l.b16 %v77
  %v154 = vunpack.c.l.b16 %v78
  %v155 = vunpack.c.l.b16 %v79
  %v156 = vunpack.c.l.b16 %v80
  %v157 = vunpack.c.l.b16 %v81
  %v158 = vunpack.c.l.b16 %v82
  %v159 = vunpack.c.l.b16 %v83
  %v160 = vunpack.c.l.b16 %v84
  %v161 = vunpack.c.l.b16 %v85
  %v162 = vunpack.c.l.b16 %v86
  %v163 = vunpack.c.l.b16 %v87
  %v164 = vunpack.c.l.b16 %v88
  %v165 = vunpack.c.l.b16 %v89
  %v166 = vunpack.c.l.b16 %v90
  %v167 = vunpack.c.l.b16 %v91
  %v168 = vunpack.c.l.b16 %v92
  %v169 = vunpack.c.l.b16 %v93
  %v170 = vunpack.c.l.b16 %v94
  %v171 = vunpack.c.l.b16 %v95
  %v172 = vunpack.c.l.b16 %v96
  %v173 = vunpack.c.l.b16 %v97
  %v174 = vunpack.c.l.b16 %v98
  %v175 = vunpack.c.l.b16 %v99
  %v176 = vunpack.c.l.b16 %v100
  %v177 = vunpack.c.l.b16 %v101
  %v178 = vunpack.c.l.b16 %v102
  %v179 = vunpack.c.l.b16 %v103
  %v180 = vunpack.c.l.b16 %v104
  %v181 = vpack.c.b16 %v144, %v143
  %v182 = vpack.c.b16 %v146, %v145
  %v183 = vpack.c.b16 %v148, %v147
  %v184 = vpack.c.b16 %v150, %v149
  %v185 = vpack.c.b16 %v152, %v151
  %v186 = vpack.c.b16 %v154, %v153
  %v187 = vpack.c.b16 %v156, %v155
  %v188 = vpack.c.b16 %v158, %v157
  %v189 = vpack.c.b16 %v160, %v159
  %v190 = vpack.c.b16 %v162, %v161
  %v191 = vpack.c.b16 %v164, %v163
  %v192 = vpack.c.b16 %v166, %v165
  %v193 = vpack.c.b16 %v168, %v167
  %v194 = vpack.c.b16 %v170, %v169
  %v195 = vpack.c.b16 %v172, %v171
  %v196 = vpack.c.b16 %v174, %v173
  %v197 = vpack.c.b16 %v176, %v175
  %v198 = vpack.c.b16 %v178, %v177
  %v199 = vpack.c.b16 %v180, %v179
  %vm219 = vcmask 392192
  %v221 = vsel %vm219, %v66, 0
  %223 = vmatprep.subr.bf16.mxu0 0
  %224 = vmatpush1.bf16.msra.mxu0 %v181
  %225 = vmatprep.subr.bf16.mxu0 0
  %226 = vmatpush1.bf16.msra.mxu0 %v182
  %227 = vmatprep.subr.bf16.mxu0 0
  %228 = vmatpush1.bf16.msra.mxu0 %v183
  %229 = vmatprep.subr.bf16.mxu0 0
  %230 = vmatpush1.bf16.msra.mxu0 %v184
  %231 = vmatprep.subr.bf16.mxu0 0
  %232 = vmatpush1.bf16.msra.mxu0 %v185
  %233 = vmatprep.subr.bf16.mxu0 0
  %234 = vmatpush1.bf16.msra.mxu0 %v186
  %235 = vmatprep.subr.bf16.mxu0 0
  %236 = vmatpush1.bf16.msra.mxu0 %v187
  %237 = vmatprep.subr.bf16.mxu0 0
  %238 = vmatpush1.bf16.msra.mxu0 %v188
  %239 = vmatprep.subr.bf16.mxu0 0
  %240 = vmatpush1.bf16.msra.mxu0 %v189
  %241 = vmatprep.subr.bf16.mxu0 0
  %242 = vmatpush1.bf16.msra.mxu0 %v190
  %243 = vmatprep.subr.bf16.mxu0 0
  %244 = vmatpush1.bf16.msra.mxu0 %v191
  %245 = vmatprep.subr.bf16.mxu0 0
  %246 = vmatpush1.bf16.msra.mxu0 %v192
  %247 = vmatprep.subr.bf16.mxu0 0
  %248 = vmatpush1.bf16.msra.mxu0 %v193
  %249 = vmatprep.subr.bf16.mxu0 0
  %250 = vmatpush1.bf16.msra.mxu0 %v194
  %251 = vmatprep.subr.bf16.mxu0 0
  %252 = vmatpush1.bf16.msra.mxu0 %v195
  %253 = vmatprep.subr.bf16.mxu0 0
  %254 = vmatpush1.bf16.msra.mxu0 %v196
  %255 = vmatprep.mubr.bf16.mxu0 %v65
  %256 = vmatmul.mubr.bf16.gmra.mrb[0].mxu0 %v64
  %v257 = vpop.f32.mrb[0].mxu0
  %v258 = vadd.f32 0.0, %v257
  %v259 = vpop.f32.mrb[0].mxu0
  %v260 = vpop.f32.mrb[0].mxu0
  %v261 = vpop.f32.mrb[0].mxu0
  %262 = vdwg.mxu0
  %263 = vmatprep.subr.bf16.mxu0 0
  %264 = vmatpush1.bf16.msra.mxu0 %v197
  %265 = vmatprep.subr.bf16.mxu0 0
  %266 = vmatpush1.bf16.msra.mxu0 %v198
  %267 = vmatprep.subr.bf16.mxu0 0
  %268 = vmatpush1.bf16.msra.mxu0 %v199
  %269 = vmatprep.subr.bf16.mxu0 0
  %270 = vmatpush1.bf16.msra.mxu0 0
  %271 = vmatprep.subr.bf16.mxu0 0
  %272 = vmatpush1.bf16.msra.mxu0 0
  %273 = vmatprep.subr.bf16.mxu0 0
  %274 = vmatpush1.bf16.msra.mxu0 0
  %275 = vmatprep.subr.bf16.mxu0 0
  %276 = vmatpush1.bf16.msra.mxu0 0
  %277 = vmatprep.subr.bf16.mxu0 0
  %278 = vmatpush1.bf16.msra.mxu0 0
  %279 = vmatprep.subr.bf16.mxu0 0
  %280 = vmatpush1.bf16.msra.mxu0 0
  %281 = vmatprep.subr.bf16.mxu0 0
  %282 = vmatpush1.bf16.msra.mxu0 0
  %283 = vmatprep.subr.bf16.mxu0 0
  %284 = vmatpush1.bf16.msra.mxu0 0
  %285 = vmatprep.subr.bf16.mxu0 0
  %286 = vmatpush1.bf16.msra.mxu0 0
  %287 = vmatprep.subr.bf16.mxu0 0
  %288 = vmatpush1.bf16.msra.mxu0 0
  %289 = vmatprep.subr.bf16.mxu0 0
  %290 = vmatpush1.bf16.msra.mxu0 0
  %291 = vmatprep.subr.bf16.mxu0 0
  %292 = vmatpush1.bf16.msra.mxu0 0
  %293 = vmatprep.subr.bf16.mxu0 0
  %294 = vmatpush1.bf16.msra.mxu0 0
  %295 = vmatprep.mubr.bf16.mxu0 0
  %296 = vmatmul.mubr.bf16.gmra.mrb[0].mxu0 %v221
  %v297 = vpop.f32.mrb[0].mxu0
  %v298 = vadd.f32 %v258, %v297
  %v299 = vpop.f32.mrb[0].mxu0
  %v300 = vpop.f32.mrb[0].mxu0
  %v301 = vpop.f32.mrb[0].mxu0
  %302 = vdwg.mxu0
  %303 = vst.msk [vmem:[%s4] sm:$0xff] %vm219, %v298
  // Predicated region
  $region18: #{swootnet_forward.43} parent=0 // pred_check
    _
  $region19: #{swootnet_forward.43} parent=0 // pred_check_branch
    %305 = sbr.rel (0) target = $region21
  $region20: #{swootnet_forward.43} parent=0 // pred_region
    _
  $region21: #{swootnet_forward.43} parent=0 // pred_fallthru
    _
  // Predicated region
  $region22: #{swootnet_forward.43} parent=0 // pred_check
    _
  $region23: #{swootnet_forward.43} parent=0 // pred_check_branch
    %307 = sbr.rel (0) target = $region25
  $region24: #{swootnet_forward.43} parent=0 // pred_region
    _
  $region25: #{swootnet_forward.43} parent=0 // pred_fallthru
    _

// kernel: swootnet_forward.42
$region0: #{swootnet_forward.42}
  #allocation0 [shape = 'u32[]', space=smem, size = 0x4, offset = 0x4, fixed_abs, tag = 'smem constant byte address 0x4 - core index']
  #allocation1 [shape = 'u32[144,128]{1,0:T(1,128)}', space=vmem, size = 0x12000, scoped, tag = 'internal scratch']
  %s0 = inlined_call_operand.vmem [shape: f32[8,576], index: 0, kind: input, shape index: {}]
  %s1 = inlined_call_operand.vmem [shape: bf16[576,12], index: 1, kind: input, shape index: {}]
  %s2 = inlined_call_operand.vmem [shape: f32[1,576], index: 2, kind: input, shape index: {}]
  %s3 = inlined_call_operand.vmem [shape: f32[1,576], index: 3, kind: input, shape index: {}]
  %s4 = inlined_call_operand.vmem [shape: f32[8,12], index: 4, kind: output, shape index: {}]
  %s5 = sld [smem:[#allocation0]]
  $region26: #{swootnet_forward.42} parent=0
    _
  %s7 = ssub.s32 1, %s5
  %s8 = scalar_select 0, %s7, %s5
  // Predicated region
  $region2: #{swootnet_forward.42} parent=0 // pred_check
    _
  $region3: #{swootnet_forward.42} parent=0 // pred_check_branch
    %10 = sbr.rel (0) target = $region5
  $region4: #{swootnet_forward.42} parent=0 // pred_region
    _
  $region5: #{swootnet_forward.42} parent=0 // pred_fallthru
    _
  // Predicated region
  $region6: #{swootnet_forward.42} parent=0 // pred_check
    _
  $region7: #{swootnet_forward.42} parent=0 // pred_check_branch
    %12 = sbr.rel (0) target = $region9
  $region8: #{swootnet_forward.42} parent=0 // pred_region
    _
  $region9: #{swootnet_forward.42} parent=0 // pred_fallthru
    _
  // Predicated region
  $region10: #{swootnet_forward.42} parent=0 // pred_check
    _
  $region11: #{swootnet_forward.42} parent=0 // pred_check_branch
    %14 = sbr.rel (0) target = $region13
  $region12: #{swootnet_forward.42} parent=0 // pred_region
    _
  $region13: #{swootnet_forward.42} parent=0 // pred_fallthru
    _
  // Predicated region
  $region14: #{swootnet_forward.42} parent=0 // pred_check
    _
  $region15: #{swootnet_forward.42} parent=0 // pred_check_branch
    %16 = sbr.rel (0) target = $region17
  $region16: #{swootnet_forward.42} parent=0 // pred_region
    _
  $region17: #{swootnet_forward.42} parent=0 // pred_fallthru
    _
  %v18 = vld [vmem:[%s0] sm:$0xff]
  %v19 = vld [vmem:[%s0 + $0x8] sm:$0xff]
  %v20 = vld [vmem:[%s0 + $0x10] sm:$0xff]
  %v21 = vld [vmem:[%s0 + $0x18] sm:$0xff]
  %v22 = vld [vmem:[%s0 + $0x20] sm:$0xff]
  %v23 = vld [vmem:[%s2] sm:$0x1f]
  %v25 = vlaneseq
  %v26 = vshrl.u32 %v25, 7
  %v27 = vsub.s32 0, %v26
  %v28 = vrot.slane %v23, %v27
  %v29 = vlaneseq
  %v30 = vshrl.u32 %v29, 7
  %v31 = vsub.s32 1, %v30
  %v32 = vrot.slane %v23, %v31
  %v33 = vlaneseq
  %v34 = vshrl.u32 %v33, 7
  %v35 = vsub.s32 2, %v34
  %v36 = vrot.slane %v23, %v35
  %v37 = vlaneseq
  %v38 = vshrl.u32 %v37, 7
  %v39 = vsub.s32 3, %v38
  %v40 = vrot.slane %v23, %v39
  %v41 = vlaneseq
  %v42 = vshrl.u32 %v41, 7
  %v43 = vsub.s32 4, %v42
  %v44 = vrot.slane %v23, %v43
  %v50 = vmul.f32 %v18, %v28
  %v51 = vmul.f32 %v19, %v32
  %v52 = vmul.f32 %v20, %v36
  %v53 = vmul.f32 %v21, %v40
  %v54 = vmul.f32 %v22, %v44
  %v55 = vld [vmem:[%s3] sm:$0x1f]
  %v57 = vlaneseq
  %v58 = vshrl.u32 %v57, 7
  %v59 = vsub.s32 0, %v58
  %v60 = vrot.slane %v55, %v59
  %v61 = vlaneseq
  %v62 = vshrl.u32 %v61, 7
  %v63 = vsub.s32 1, %v62
  %v64 = vrot.slane %v55, %v63
  %v65 = vlaneseq
  %v66 = vshrl.u32 %v65, 7
  %v67 = vsub.s32 2, %v66
  %v68 = vrot.slane %v55, %v67
  %v69 = vlaneseq
  %v70 = vshrl.u32 %v69, 7
  %v71 = vsub.s32 3, %v70
  %v72 = vrot.slane %v55, %v71
  %v73 = vlaneseq
  %v74 = vshrl.u32 %v73, 7
  %v75 = vsub.s32 4, %v74
  %v76 = vrot.slane %v55, %v75
  %v82 = vadd.f32 %v50, %v60
  %v83 = vadd.f32 %v51, %v64
  %v84 = vadd.f32 %v52, %v68
  %v85 = vadd.f32 %v53, %v72
  %v86 = vadd.f32 %v54, %v76
  %v87 = vmax.f32 %v82, 0.0
  %v88 = vmax.f32 %v83, 0.0
  %v89 = vmax.f32 %v84, 0.0
  %v90 = vmax.f32 %v85, 0.0
  %v91 = vmax.f32 %v86, 0.0
  %v92 = vpack.c.bf16 %v87, %v87
  %v93 = vpack.c.bf16 %v88, %v88
  %v94 = vpack.c.bf16 %v89, %v89
  %v95 = vpack.c.bf16 %v90, %v90
  %v96 = vpack.c.bf16 %v91, %v91
  %v97 = vld [vmem:[%s1] sm:$0xf]
  %v98 = vld [vmem:[%s1 + $0x4] sm:$0xf]
  %v99 = vld [vmem:[%s1 + $0x8] sm:$0xf]
  %v100 = vld [vmem:[%s1 + $0xc] sm:$0xf]
  %v101 = vld [vmem:[%s1 + $0x10] sm:$0xf]
  %v102 = vld [vmem:[%s1 + $0x14] sm:$0xf]
  %v103 = vld [vmem:[%s1 + $0x18] sm:$0xf]
  %v104 = vld [vmem:[%s1 + $0x1c] sm:$0xf]
  %v105 = vld [vmem:[%s1 + $0x20] sm:$0xf]
  %v106 = vld [vmem:[%s1 + $0x24] sm:$0xf]
  %v107 = vld [vmem:[%s1 + $0x28] sm:$0xf]
  %v108 = vld [vmem:[%s1 + $0x2c] sm:$0xf]
  %v109 = vld [vmem:[%s1 + $0x30] sm:$0xf]
  %v110 = vld [vmem:[%s1 + $0x34] sm:$0xf]
  %v111 = vld [vmem:[%s1 + $0x38] sm:$0xf]
  %v112 = vld [vmem:[%s1 + $0x3c] sm:$0xf]
  %v113 = vld [vmem:[%s1 + $0x40] sm:$0xf]
  %v114 = vld [vmem:[%s1 + $0x44] sm:$0xf]
  %v115 = vld [vmem:[%s1 + $0x48] sm:$0xf]
  %v116 = vld [vmem:[%s1 + $0x4c] sm:$0xf]
  %v117 = vld [vmem:[%s1 + $0x50] sm:$0xf]
  %v118 = vld [vmem:[%s1 + $0x54] sm:$0xf]
  %v119 = vld [vmem:[%s1 + $0x58] sm:$0xf]
  %v120 = vld [vmem:[%s1 + $0x5c] sm:$0xf]
  %v121 = vld [vmem:[%s1 + $0x60] sm:$0xf]
  %v122 = vld [vmem:[%s1 + $0x64] sm:$0xf]
  %v123 = vld [vmem:[%s1 + $0x68] sm:$0xf]
  %v124 = vld [vmem:[%s1 + $0x6c] sm:$0xf]
  %v125 = vld [vmem:[%s1 + $0x70] sm:$0xf]
  %v126 = vld [vmem:[%s1 + $0x74] sm:$0xf]
  %v127 = vld [vmem:[%s1 + $0x78] sm:$0xf]
  %v128 = vld [vmem:[%s1 + $0x7c] sm:$0xf]
  %v129 = vld [vmem:[%s1 + $0x80] sm:$0xf]
  %v130 = vld [vmem:[%s1 + $0x84] sm:$0xf]
  %v131 = vld [vmem:[%s1 + $0x88] sm:$0xf]
  %v132 = vld [vmem:[%s1 + $0x8c] sm:$0xf]
  %v133 = vld [vmem:[%s1 + $0x90] sm:$0xf]
  %v134 = vld [vmem:[%s1 + $0x94] sm:$0xf]
  %v135 = vld [vmem:[%s1 + $0x98] sm:$0xf]
  %v136 = vld [vmem:[%s1 + $0x9c] sm:$0xf]
  %v137 = vld [vmem:[%s1 + $0xa0] sm:$0xf]
  %v138 = vld [vmem:[%s1 + $0xa4] sm:$0xf]
  %v139 = vld [vmem:[%s1 + $0xa8] sm:$0xf]
  %v140 = vld [vmem:[%s1 + $0xac] sm:$0xf]
  %v141 = vld [vmem:[%s1 + $0xb0] sm:$0xf]
  %v142 = vld [vmem:[%s1 + $0xb4] sm:$0xf]
  %v143 = vld [vmem:[%s1 + $0xb8] sm:$0xf]
  %v144 = vld [vmem:[%s1 + $0xbc] sm:$0xf]
  %v145 = vld [vmem:[%s1 + $0xc0] sm:$0xf]
  %v146 = vld [vmem:[%s1 + $0xc4] sm:$0xf]
  %v147 = vld [vmem:[%s1 + $0xc8] sm:$0xf]
  %v148 = vld [vmem:[%s1 + $0xcc] sm:$0xf]
  %v149 = vld [vmem:[%s1 + $0xd0] sm:$0xf]
  %v150 = vld [vmem:[%s1 + $0xd4] sm:$0xf]
  %v151 = vld [vmem:[%s1 + $0xd8] sm:$0xf]
  %v152 = vld [vmem:[%s1 + $0xdc] sm:$0xf]
  %v153 = vld [vmem:[%s1 + $0xe0] sm:$0xf]
  %v154 = vld [vmem:[%s1 + $0xe4] sm:$0xf]
  %v155 = vld [vmem:[%s1 + $0xe8] sm:$0xf]
  %v156 = vld [vmem:[%s1 + $0xec] sm:$0xf]
  %v157 = vld [vmem:[%s1 + $0xf0] sm:$0xf]
  %v158 = vld [vmem:[%s1 + $0xf4] sm:$0xf]
  %v159 = vld [vmem:[%s1 + $0xf8] sm:$0xf]
  %v160 = vld [vmem:[%s1 + $0xfc] sm:$0xf]
  %v161 = vld [vmem:[%s1 + $0x100] sm:$0xf]
  %v162 = vld [vmem:[%s1 + $0x104] sm:$0xf]
  %v163 = vld [vmem:[%s1 + $0x108] sm:$0xf]
  %v164 = vld [vmem:[%s1 + $0x10c] sm:$0xf]
  %v165 = vld [vmem:[%s1 + $0x110] sm:$0xf]
  %v166 = vld [vmem:[%s1 + $0x114] sm:$0xf]
  %v167 = vld [vmem:[%s1 + $0x118] sm:$0xf]
  %v168 = vld [vmem:[%s1 + $0x11c] sm:$0xf]
  %v241 = vunpack.c.l.b16 %v97
  %v242 = vunpack.c.l.b16 %v98
  %v243 = vunpack.c.l.b16 %v99
  %v244 = vunpack.c.l.b16 %v100
  %v245 = vunpack.c.l.b16 %v101
  %v246 = vunpack.c.l.b16 %v102
  %v247 = vunpack.c.l.b16 %v103
  %v248 = vunpack.c.l.b16 %v104
  %v249 = vunpack.c.l.b16 %v105
  %v250 = vunpack.c.l.b16 %v106
  %v251 = vunpack.c.l.b16 %v107
  %v252 = vunpack.c.l.b16 %v108
  %v253 = vunpack.c.l.b16 %v109
  %v254 = vunpack.c.l.b16 %v110
  %v255 = vunpack.c.l.b16 %v111
  %v256 = vunpack.c.l.b16 %v112
  %v257 = vunpack.c.l.b16 %v113
  %v258 = vunpack.c.l.b16 %v114
  %v259 = vunpack.c.l.b16 %v115
  %v260 = vunpack.c.l.b16 %v116
  %v261 = vunpack.c.l.b16 %v117
  %v262 = vunpack.c.l.b16 %v118
  %v263 = vunpack.c.l.b16 %v119
  %v264 = vunpack.c.l.b16 %v120
  %v265 = vunpack.c.l.b16 %v121
  %v266 = vunpack.c.l.b16 %v122
  %v267 = vunpack.c.l.b16 %v123
  %v268 = vunpack.c.l.b16 %v124
  %v269 = vunpack.c.l.b16 %v125
  %v270 = vunpack.c.l.b16 %v126
  %v271 = vunpack.c.l.b16 %v127
  %v272 = vunpack.c.l.b16 %v128
  %v273 = vunpack.c.l.b16 %v129
  %v274 = vunpack.c.l.b16 %v130
  %v275 = vunpack.c.l.b16 %v131
  %v276 = vunpack.c.l.b16 %v132
  %v277 = vunpack.c.l.b16 %v133
  %v278 = vunpack.c.l.b16 %v134
  %v279 = vunpack.c.l.b16 %v135
  %v280 = vunpack.c.l.b16 %v136
  %v281 = vunpack.c.l.b16 %v137
  %v282 = vunpack.c.l.b16 %v138
  %v283 = vunpack.c.l.b16 %v139
  %v284 = vunpack.c.l.b16 %v140
  %v285 = vunpack.c.l.b16 %v141
  %v286 = vunpack.c.l.b16 %v142
  %v287 = vunpack.c.l.b16 %v143
  %v288 = vunpack.c.l.b16 %v144
  %v289 = vunpack.c.l.b16 %v145
  %v290 = vunpack.c.l.b16 %v146
  %v291 = vunpack.c.l.b16 %v147
  %v292 = vunpack.c.l.b16 %v148
  %v293 = vunpack.c.l.b16 %v149
  %v294 = vunpack.c.l.b16 %v150
  %v295 = vunpack.c.l.b16 %v151
  %v296 = vunpack.c.l.b16 %v152
  %v297 = vunpack.c.l.b16 %v153
  %v298 = vunpack.c.l.b16 %v154
  %v299 = vunpack.c.l.b16 %v155
  %v300 = vunpack.c.l.b16 %v156
  %v301 = vunpack.c.l.b16 %v157
  %v302 = vunpack.c.l.b16 %v158
  %v303 = vunpack.c.l.b16 %v159
  %v304 = vunpack.c.l.b16 %v160
  %v305 = vunpack.c.l.b16 %v161
  %v306 = vunpack.c.l.b16 %v162
  %v307 = vunpack.c.l.b16 %v163
  %v308 = vunpack.c.l.b16 %v164
  %v309 = vunpack.c.l.b16 %v165
  %v310 = vunpack.c.l.b16 %v166
  %v311 = vunpack.c.l.b16 %v167
  %v312 = vunpack.c.l.b16 %v168
  %v313 = vpack.c.b16 %v242, %v241
  %v314 = vpack.c.b16 %v244, %v243
  %v315 = vpack.c.b16 %v246, %v245
  %v316 = vpack.c.b16 %v248, %v247
  %v317 = vpack.c.b16 %v250, %v249
  %v318 = vpack.c.b16 %v252, %v251
  %v319 = vpack.c.b16 %v254, %v253
  %v320 = vpack.c.b16 %v256, %v255
  %v321 = vpack.c.b16 %v258, %v257
  %v322 = vpack.c.b16 %v260, %v259
  %v323 = vpack.c.b16 %v262, %v261
  %v324 = vpack.c.b16 %v264, %v263
  %v325 = vpack.c.b16 %v266, %v265
  %v326 = vpack.c.b16 %v268, %v267
  %v327 = vpack.c.b16 %v270, %v269
  %v328 = vpack.c.b16 %v272, %v271
  %v329 = vpack.c.b16 %v274, %v273
  %v330 = vpack.c.b16 %v276, %v275
  %v331 = vpack.c.b16 %v278, %v277
  %v332 = vpack.c.b16 %v280, %v279
  %v333 = vpack.c.b16 %v282, %v281
  %v334 = vpack.c.b16 %v284, %v283
  %v335 = vpack.c.b16 %v286, %v285
  %v336 = vpack.c.b16 %v288, %v287
  %v337 = vpack.c.b16 %v290, %v289
  %v338 = vpack.c.b16 %v292, %v291
  %v339 = vpack.c.b16 %v294, %v293
  %v340 = vpack.c.b16 %v296, %v295
  %v341 = vpack.c.b16 %v298, %v297
  %v342 = vpack.c.b16 %v300, %v299
  %v343 = vpack.c.b16 %v302, %v301
  %v344 = vpack.c.b16 %v304, %v303
  %v345 = vpack.c.b16 %v306, %v305
  %v346 = vpack.c.b16 %v308, %v307
  %v347 = vpack.c.b16 %v310, %v309
  %v348 = vpack.c.b16 %v312, %v311
  %vm385 = vcmask 523264
  %v387 = vsel %vm385, %v96, 0
  %389 = vmatprep.subr.bf16.mxu0 0
  %390 = vmatpush1.bf16.msra.mxu0 %v313
  %391 = vmatprep.subr.bf16.mxu0 0
  %392 = vmatpush1.bf16.msra.mxu0 %v314
  %393 = vmatprep.subr.bf16.mxu0 0
  %394 = vmatpush1.bf16.msra.mxu0 %v315
  %395 = vmatprep.subr.bf16.mxu0 0
  %396 = vmatpush1.bf16.msra.mxu0 %v316
  %397 = vmatprep.subr.bf16.mxu0 0
  %398 = vmatpush1.bf16.msra.mxu0 %v317
  %399 = vmatprep.subr.bf16.mxu0 0
  %400 = vmatpush1.bf16.msra.mxu0 %v318
  %401 = vmatprep.subr.bf16.mxu0 0
  %402 = vmatpush1.bf16.msra.mxu0 %v319
  %403 = vmatprep.subr.bf16.mxu0 0
  %404 = vmatpush1.bf16.msra.mxu0 %v320
  %405 = vmatprep.subr.bf16.mxu0 0
  %406 = vmatpush1.bf16.msra.mxu0 %v321
  %407 = vmatprep.subr.bf16.mxu0 0
  %408 = vmatpush1.bf16.msra.mxu0 %v322
  %409 = vmatprep.subr.bf16.mxu0 0
  %410 = vmatpush1.bf16.msra.mxu0 %v323
  %411 = vmatprep.subr.bf16.mxu0 0
  %412 = vmatpush1.bf16.msra.mxu0 %v324
  %413 = vmatprep.subr.bf16.mxu0 0
  %414 = vmatpush1.bf16.msra.mxu0 %v325
  %415 = vmatprep.subr.bf16.mxu0 0
  %416 = vmatpush1.bf16.msra.mxu0 %v326
  %417 = vmatprep.subr.bf16.mxu0 0
  %418 = vmatpush1.bf16.msra.mxu0 %v327
  %419 = vmatprep.subr.bf16.mxu0 0
  %420 = vmatpush1.bf16.msra.mxu0 %v328
  %421 = vmatprep.mubr.bf16.mxu0 %v93
  %422 = vmatmul.mubr.bf16.gmra.mrb[0].mxu0 %v92
  %v423 = vpop.f32.mrb[0].mxu0
  %v424 = vadd.f32 0.0, %v423
  %v425 = vpop.f32.mrb[0].mxu0
  %v426 = vpop.f32.mrb[0].mxu0
  %v427 = vpop.f32.mrb[0].mxu0
  %428 = vdwg.mxu0
  %429 = vmatprep.subr.bf16.mxu0 0
  %430 = vmatpush1.bf16.msra.mxu0 %v329
  %431 = vmatprep.subr.bf16.mxu0 0
  %432 = vmatpush1.bf16.msra.mxu0 %v330
  %433 = vmatprep.subr.bf16.mxu0 0
  %434 = vmatpush1.bf16.msra.mxu0 %v331
  %435 = vmatprep.subr.bf16.mxu0 0
  %436 = vmatpush1.bf16.msra.mxu0 %v332
  %437 = vmatprep.subr.bf16.mxu0 0
  %438 = vmatpush1.bf16.msra.mxu0 %v333
  %439 = vmatprep.subr.bf16.mxu0 0
  %440 = vmatpush1.bf16.msra.mxu0 %v334
  %441 = vmatprep.subr.bf16.mxu0 0
  %442 = vmatpush1.bf16.msra.mxu0 %v335
  %443 = vmatprep.subr.bf16.mxu0 0
  %444 = vmatpush1.bf16.msra.mxu0 %v336
  %445 = vmatprep.subr.bf16.mxu0 0
  %446 = vmatpush1.bf16.msra.mxu0 %v337
  %447 = vmatprep.subr.bf16.mxu0 0
  %448 = vmatpush1.bf16.msra.mxu0 %v338
  %449 = vmatprep.subr.bf16.mxu0 0
  %450 = vmatpush1.bf16.msra.mxu0 %v339
  %451 = vmatprep.subr.bf16.mxu0 0
  %452 = vmatpush1.bf16.msra.mxu0 %v340
  %453 = vmatprep.subr.bf16.mxu0 0
  %454 = vmatpush1.bf16.msra.mxu0 %v341
  %455 = vmatprep.subr.bf16.mxu0 0
  %456 = vmatpush1.bf16.msra.mxu0 %v342
  %457 = vmatprep.subr.bf16.mxu0 0
  %458 = vmatpush1.bf16.msra.mxu0 %v343
  %459 = vmatprep.subr.bf16.mxu0 0
  %460 = vmatpush1.bf16.msra.mxu0 %v344
  %461 = vmatprep.mubr.bf16.mxu0 %v95
  %462 = vmatmul.mubr.bf16.gmra.mrb[0].mxu0 %v94
  %v463 = vpop.f32.mrb[0].mxu0
  %v464 = vadd.f32 %v424, %v463
  %v465 = vpop.f32.mrb[0].mxu0
  %v466 = vpop.f32.mrb[0].mxu0
  %v467 = vpop.f32.mrb[0].mxu0
  %468 = vdwg.mxu0
  %469 = vmatprep.subr.bf16.mxu0 0
  %470 = vmatpush1.bf16.msra.mxu0 %v345
  %471 = vmatprep.subr.bf16.mxu0 0
  %472 = vmatpush1.bf16.msra.mxu0 %v346
  %473 = vmatprep.subr.bf16.mxu0 0
  %474 = vmatpush1.bf16.msra.mxu0 %v347
  %475 = vmatprep.subr.bf16.mxu0 0
  %476 = vmatpush1.bf16.msra.mxu0 %v348
  %477 = vmatprep.subr.bf16.mxu0 0
  %478 = vmatpush1.bf16.msra.mxu0 0
  %479 = vmatprep.subr.bf16.mxu0 0
  %480 = vmatpush1.bf16.msra.mxu0 0
  %481 = vmatprep.subr.bf16.mxu0 0
  %482 = vmatpush1.bf16.msra.mxu0 0
  %483 = vmatprep.subr.bf16.mxu0 0
  %484 = vmatpush1.bf16.msra.mxu0 0
  %485 = vmatprep.subr.bf16.mxu0 0
  %486 = vmatpush1.bf16.msra.mxu0 0
  %487 = vmatprep.subr.bf16.mxu0 0
  %488 = vmatpush1.bf16.msra.mxu0 0
  %489 = vmatprep.subr.bf16.mxu0 0
  %490 = vmatpush1.bf16.msra.mxu0 0
  %491 = vmatprep.subr.bf16.mxu0 0
  %492 = vmatpush1.bf16.msra.mxu0 0
  %493 = vmatprep.subr.bf16.mxu0 0
  %494 = vmatpush1.bf16.msra.mxu0 0
  %495 = vmatprep.subr.bf16.mxu0 0
  %496 = vmatpush1.bf16.msra.mxu0 0
  %497 = vmatprep.subr.bf16.mxu0 0
  %498 = vmatpush1.bf16.msra.mxu0 0
  %499 = vmatprep.subr.bf16.mxu0 0
  %500 = vmatpush1.bf16.msra.mxu0 0
  %501 = vmatprep.mubr.bf16.mxu0 0
  %502 = vmatmul.mubr.bf16.gmra.mrb[0].mxu0 %v387
  %v503 = vpop.f32.mrb[0].mxu0
  %v504 = vadd.f32 %v464, %v503
  %v505 = vpop.f32.mrb[0].mxu0
  %v506 = vpop.f32.mrb[0].mxu0
  %v507 = vpop.f32.mrb[0].mxu0
  %508 = vdwg.mxu0
  %vm509 = vcmask 97280
  %510 = vst.msk [vmem:[%s4] sm:$0xff] %vm509, %v504
  // Predicated region
  $region18: #{swootnet_forward.42} parent=0 // pred_check
    _
  $region19: #{swootnet_forward.42} parent=0 // pred_check_branch
    %512 = sbr.rel (0) target = $region21
  $region20: #{swootnet_forward.42} parent=0 // pred_region
    _
  $region21: #{swootnet_forward.42} parent=0 // pred_fallthru
    _
  // Predicated region
  $region22: #{swootnet_forward.42} parent=0 // pred_check
    _
  $region23: #{swootnet_forward.42} parent=0 // pred_check_branch
    %514 = sbr.rel (0) target = $region25
  $region24: #{swootnet_forward.42} parent=0 // pred_region
    _
  $region25: #{swootnet_forward.42} parent=0 // pred_fallthru
    _

// kernel: swootnet_forward.45
$region0: #{swootnet_forward.45}
  #allocation0 [shape = 'u32[]', space=smem, size = 0x4, offset = 0x4, fixed_abs, tag = 'smem constant byte address 0x4 - core index']
  #allocation1 [shape = 'u32[144,128]{1,0:T(1,128)}', space=vmem, size = 0x12000, scoped, tag = 'internal scratch']
  %s0 = inlined_call_operand.vmem [shape: f32[2,76], index: 0, kind: input, shape index: {}]
  %s1 = inlined_call_operand.vmem [shape: f32[2,2], index: 1, kind: input, shape index: {}]
  %s2 = inlined_call_operand.vmem [shape: f32[1,76], index: 2, kind: input, shape index: {}]
  %s3 = inlined_call_operand.vmem [shape: f32[1,76], index: 3, kind: input, shape index: {}]
  %s4 = inlined_call_operand.vmem [shape: f32[76,10], index: 4, kind: input, shape index: {}]
  %s5 = inlined_call_operand.vmem [shape: f32[1,10], index: 5, kind: input, shape index: {}]
  %s6 = inlined_call_operand.hbm [shape: f32[2,10], index: 6, kind: output, shape index: {}]
  %s7 = sld [smem:[#allocation0]]
  $region34: #{swootnet_forward.45} parent=0
    _
  %s9 = ssub.s32 1, %s7
  %s10 = scalar_select 0, %s9, %s7
  $region1: #{swootnet_forward.45} parent=0
    #allocation2 [shape = 'u8[1024]{0}', space=vmem, size = 0x400, scoped, tag = 'output window, operand 0, single buffered']
    #allocation3 [shape = 's32[1]{0}', space=sflag, size = 0x4, scoped, tag = 'scoped memory for swootnet_forward.45']
    %11 = vsyncpa [#allocation3], 0
    // Predicated region
    $region2: #{swootnet_forward.45} parent=1 // pred_check
      _
    $region3: #{swootnet_forward.45} parent=1 // pred_check_branch
      %13 = sbr.rel (0) target = $region5
    $region4: #{swootnet_forward.45} parent=1 // pred_region
      _
    $region5: #{swootnet_forward.45} parent=1 // pred_fallthru
      _
    // Predicated region
    $region6: #{swootnet_forward.45} parent=1 // pred_check
      _
    $region7: #{swootnet_forward.45} parent=1 // pred_check_branch
      %15 = sbr.rel (0) target = $region9
    $region8: #{swootnet_forward.45} parent=1 // pred_region
      _
    $region9: #{swootnet_forward.45} parent=1 // pred_fallthru
      _
    // Predicated region
    $region10: #{swootnet_forward.45} parent=1 // pred_check
      _
    $region11: #{swootnet_forward.45} parent=1 // pred_check_branch
      %17 = sbr.rel (0) target = $region13
    $region12: #{swootnet_forward.45} parent=1 // pred_region
      _
    $region13: #{swootnet_forward.45} parent=1 // pred_fallthru
      _
    // Predicated region
    $region14: #{swootnet_forward.45} parent=1 // pred_check
      _
    $region15: #{swootnet_forward.45} parent=1 // pred_check_branch
      %19 = sbr.rel (0) target = $region17
    $region16: #{swootnet_forward.45} parent=1 // pred_region
      _
    $region17: #{swootnet_forward.45} parent=1 // pred_fallthru
      _
    // Predicated region
    $region18: #{swootnet_forward.45} parent=1 // pred_check
      _
    $region19: #{swootnet_forward.45} parent=1 // pred_check_branch
      %21 = sbr.rel (0) target = $region21
    $region20: #{swootnet_forward.45} parent=1 // pred_region
      _
    $region21: #{swootnet_forward.45} parent=1 // pred_fallthru
      _
    // Predicated region
    $region22: #{swootnet_forward.45} parent=1 // pred_check
      _
    $region23: #{swootnet_forward.45} parent=1 // pred_check_branch
      %23 = sbr.rel (0) target = $region25
    $region24: #{swootnet_forward.45} parent=1 // pred_region
      _
    $region25: #{swootnet_forward.45} parent=1 // pred_fallthru
      _
    %v24 = vld [vmem:[%s0] sm:$0x3]
    %v25 = vld [vmem:[%s2] sm:$0x1]
    %v27 = vlaneseq
    %v28 = vshrl.u32 %v27, 7
    %v29 = vsub.s32 0, %v28
    %v30 = vrot.slane %v25, %v29
    %v32 = vmul.f32 %v24, %v30
    %v33 = vld [vmem:[%s3] sm:$0x1]
    %v35 = vlaneseq
    %v36 = vshrl.u32 %v35, 7
    %v37 = vsub.s32 0, %v36
    %v38 = vrot.slane %v33, %v37
    %v40 = vadd.f32 %v32, %v38
    %v41 = vmax.f32 %v40, 0.0
    %v42 = vld [vmem:[%s1] sm:$0x3]
    %vm43 = vcmask 15360
    %v45 = vsel %vm43, %v42, 0
    %vm47 = vcmask 1041408
    %v49 = vsel %vm47, %v41, 0
    %51 = vmatprep.subr.mxu0 0.0
    %52 = vmatpush1.msra.mxu0 %v49
    %53 = vmatprep.subr.mxu0 0.0
    %54 = vmatpush1.msra.mxu0 0.0
    %55 = vmatprep.subr.mxu0 0.0
    %56 = vmatpush1.msra.mxu0 0.0
    %57 = vmatprep.subr.mxu0 0.0
    %58 = vmatpush1.msra.mxu0 0.0
    %59 = vmatprep.subr.mxu0 0.0
    %60 = vmatpush1.msra.mxu0 0.0
    %61 = vmatprep.subr.mxu0 0.0
    %62 = vmatpush1.msra.mxu0 0.0
    %63 = vmatprep.subr.mxu0 0.0
    %64 = vmatpush1.msra.mxu0 0.0
    %65 = vmatprep.subr.mxu0 0.0
    %66 = vmatpush1.msra.mxu0 0.0
    %67 = vmatprep.subr.mxu0 0.0
    %68 = vmatpush1.msra.mxu0 0.0
    %69 = vmatprep.subr.mxu0 0.0
    %70 = vmatpush1.msra.mxu0 0.0
    %71 = vmatprep.subr.mxu0 0.0
    %72 = vmatpush1.msra.mxu0 0.0
    %73 = vmatprep.subr.mxu0 0.0
    %74 = vmatpush1.msra.mxu0 0.0
    %75 = vmatprep.subr.mxu0 0.0
    %76 = vmatpush1.msra.mxu0 0.0
    %77 = vmatprep.subr.mxu0 0.0
    %78 = vmatpush1.msra.mxu0 0.0
    %79 = vmatprep.subr.mxu0 0.0
    %80 = vmatpush1.msra.mxu0 0.0
    %81 = vmatprep.subr.mxu0 0.0
    %82 = vmatpush1.msra.mxu0 0.0
    %83 = vmatprep.subr.mxu0 0.0
    %84 = vmatpush1.msra.mxu0 0.0
    %85 = vmatprep.subr.mxu0 0.0
    %86 = vmatpush1.msra.mxu0 0.0
    %87 = vmatprep.subr.mxu0 0.0
    %88 = vmatpush1.msra.mxu0 0.0
    %89 = vmatprep.subr.mxu0 0.0
    %90 = vmatpush1.msra.mxu0 0.0
    %91 = vmatprep.subr.mxu0 0.0
    %92 = vmatpush1.msra.mxu0 0.0
    %93 = vmatprep.subr.mxu0 0.0
    %94 = vmatpush1.msra.mxu0 0.0
    %95 = vmatprep.subr.mxu0 0.0
    %96 = vmatpush1.msra.mxu0 0.0
    %97 = vmatprep.subr.mxu0 0.0
    %98 = vmatpush1.msra.mxu0 0.0
    %99 = vmatprep.subr.mxu0 0.0
    %100 = vmatpush1.msra.mxu0 0.0
    %101 = vmatprep.subr.mxu0 0.0
    %102 = vmatpush1.msra.mxu0 0.0
    %103 = vmatprep.subr.mxu0 0.0
    %104 = vmatpush1.msra.mxu0 0.0
    %105 = vmatprep.subr.mxu0 0.0
    %106 = vmatpush1.msra.mxu0 0.0
    %107 = vmatprep.subr.mxu0 0.0
    %108 = vmatpush1.msra.mxu0 0.0
    %109 = vmatprep.subr.mxu0 0.0
    %110 = vmatpush1.msra.mxu0 0.0
    %111 = vmatprep.subr.mxu0 0.0
    %112 = vmatpush1.msra.mxu0 0.0
    %113 = vmatprep.subr.mxu0 0.0
    %114 = vmatpush1.msra.mxu0 0.0
    %115 = vmatprep.mubr.f32.mxu0 0.0
    %116 = vmatmul.mubr.f32.gmra.mrb[0].mxu0 %v45
    %v117 = vpop.f32.mrb[0].mxu0
    %v118 = vadd.f32 0.0, %v117
    %v119 = vpop.f32.mrb[0].mxu0
    %120 = vdwg.mxu0
    %v121 = vld [vmem:[%s4] sm:$0xff]
    %v122 = vld [vmem:[%s4 + $0x8] sm:$0xff]
    %v123 = vld [vmem:[%s4 + $0x10] sm:$0xff]
    %v124 = vld [vmem:[%s4 + $0x18] sm:$0xff]
    %v125 = vld [vmem:[%s4 + $0x20] sm:$0xff]
    %v126 = vld [vmem:[%s4 + $0x28] sm:$0xff]
    %v127 = vld [vmem:[%s4 + $0x30] sm:$0xff]
    %v128 = vld [vmem:[%s4 + $0x38] sm:$0xff]
    %v129 = vld [vmem:[%s4 + $0x40] sm:$0xff]
    %v130 = vld [vmem:[%s4 + $0x48] sm:$0xf]
    %v131 = vld [vmem:[%s5] sm:$0x1]
    %v133 = vlaneseq
    %v134 = vshrl.u32 %v133, 7
    %v135 = vsub.s32 0, %v134
    %v136 = vrot.slane %v131, %v135
    %vm138 = vcmask 621568
    %v140 = vsel %vm138, %v118, 0
    %vm142 = vcmask 1043456
    %v144 = vsel %vm142, %v130, 0
    %146 = vmatprep.subr.mxu0 0.0
    %147 = vmatpush1.msra.mxu0 %v121
    %148 = vmatprep.subr.mxu0 0.0
    %149 = vmatpush1.msra.mxu0 %v122
    %150 = vmatprep.subr.mxu0 0.0
    %151 = vmatpush1.msra.mxu0 %v123
    %152 = vmatprep.subr.mxu0 0.0
    %153 = vmatpush1.msra.mxu0 %v124
    %154 = vmatprep.subr.mxu0 0.0
    %155 = vmatpush1.msra.mxu0 %v125
    %156 = vmatprep.subr.mxu0 0.0
    %157 = vmatpush1.msra.mxu0 %v126
    %158 = vmatprep.subr.mxu0 0.0
    %159 = vmatpush1.msra.mxu0 %v127
    %160 = vmatprep.subr.mxu0 0.0
    %161 = vmatpush1.msra.mxu0 %v128
    %162 = vmatprep.subr.mxu0 0.0
    %163 = vmatpush1.msra.mxu0 %v129
    %164 = vmatprep.subr.mxu0 0.0
    %165 = vmatpush1.msra.mxu0 %v144
    %166 = vmatprep.subr.mxu0 0.0
    %167 = vmatpush1.msra.mxu0 0.0
    %168 = vmatprep.subr.mxu0 0.0
    %169 = vmatpush1.msra.mxu0 0.0
    %170 = vmatprep.subr.mxu0 0.0
    %171 = vmatpush1.msra.mxu0 0.0
    %172 = vmatprep.subr.mxu0 0.0
    %173 = vmatpush1.msra.mxu0 0.0
    %174 = vmatprep.subr.mxu0 0.0
    %175 = vmatpush1.msra.mxu0 0.0
    %176 = vmatprep.subr.mxu0 0.0
    %177 = vmatpush1.msra.mxu0 0.0
    %178 = vmatprep.subr.mxu0 0.0
    %179 = vmatpush1.msra.mxu0 0.0
    %180 = vmatprep.subr.mxu0 0.0
    %181 = vmatpush1.msra.mxu0 0.0
    %182 = vmatprep.subr.mxu0 0.0
    %183 = vmatpush1.msra.mxu0 0.0
    %184 = vmatprep.subr.mxu0 0.0
    %185 = vmatpush1.msra.mxu0 0.0
    %186 = vmatprep.subr.mxu0 0.0
    %187 = vmatpush1.msra.mxu0 0.0
    %188 = vmatprep.subr.mxu0 0.0
    %189 = vmatpush1.msra.mxu0 0.0
    %190 = vmatprep.subr.mxu0 0.0
    %191 = vmatpush1.msra.mxu0 0.0
    %192 = vmatprep.subr.mxu0 0.0
    %193 = vmatpush1.msra.mxu0 0.0
    %194 = vmatprep.subr.mxu0 0.0
    %195 = vmatpush1.msra.mxu0 0.0
    %196 = vmatprep.subr.mxu0 0.0
    %197 = vmatpush1.msra.mxu0 0.0
    %198 = vmatprep.subr.mxu0 0.0
    %199 = vmatpush1.msra.mxu0 0.0
    %200 = vmatprep.subr.mxu0 0.0
    %201 = vmatpush1.msra.mxu0 0.0
    %202 = vmatprep.subr.mxu0 0.0
    %203 = vmatpush1.msra.mxu0 0.0
    %204 = vmatprep.subr.mxu0 0.0
    %205 = vmatpush1.msra.mxu0 0.0
    %206 = vmatprep.subr.mxu0 0.0
    %207 = vmatpush1.msra.mxu0 0.0
    %208 = vmatprep.subr.mxu0 0.0
    %209 = vmatpush1.msra.mxu0 0.0
    %210 = vmatprep.mubr.f32.mxu0 0.0
    %211 = vmatmul.mubr.f32.gmra.mrb[0].mxu0 %v140
    %v212 = vpop.f32.mrb[0].mxu0
    %v213 = vadd.f32 %v136, %v212
    %v214 = vpop.f32.mrb[0].mxu0
    %215 = vdwg.mxu0
    %vm216 = vcmask 74752
    %217 = vst.msk [vmem:[#allocation2] sm:$0x3] %vm216, %v213
    // Predicated region
    $region26: #{swootnet_forward.45} parent=1 // pred_check
      _
    $region27: #{swootnet_forward.45} parent=1 // pred_check_branch
      %219 = sbr.rel (0) target = $region29
    $region28: #{swootnet_forward.45} parent=1 // pred_region
      %s221 = ssub.s32 32, 32
      %222 = vsyncadd [#allocation3], %s221
      %s224 = sshll.u32 [#allocation2], 4
      %s225 = int_to_ptr.vmem [resolvable:$true] %s224
      %227 = dma.vmem_to_hbm [thread:$0]  %s225, 32, %s6, [#allocation3]
    $region29: #{swootnet_forward.45} parent=1 // pred_fallthru
      _
    // Predicated region
    $region30: #{swootnet_forward.45} parent=1 // pred_check
      _
    $region31: #{swootnet_forward.45} parent=1 // pred_check_branch
      %229 = sbr.rel (0) target = $region33
    $region32: #{swootnet_forward.45} parent=1 // pred_region
      %230 = dma.done [#allocation3], 32
    $region33: #{swootnet_forward.45} parent=1 // pred_fallthru
      _
    %231 = vsyncpa [#allocation3], 1

// kernel: swootnet_forward.44
$region0: #{swootnet_forward.44}
  #allocation0 [shape = 'u32[]', space=smem, size = 0x4, offset = 0x4, fixed_abs, tag = 'smem constant byte address 0x4 - core index']
  #allocation1 [shape = 'u32[144,128]{1,0:T(1,128)}', space=vmem, size = 0x12000, scoped, tag = 'internal scratch']
  %s0 = inlined_call_operand.vmem [shape: f32[8,76], index: 0, kind: input, shape index: {}]
  %s1 = inlined_call_operand.vmem [shape: f32[2,8], index: 1, kind: input, shape index: {}]
  %s2 = inlined_call_operand.vmem [shape: f32[1,76], index: 2, kind: input, shape index: {}]
  %s3 = inlined_call_operand.vmem [shape: f32[1,76], index: 3, kind: input, shape index: {}]
  %s4 = inlined_call_operand.vmem [shape: f32[76,10], index: 4, kind: input, shape index: {}]
  %s5 = inlined_call_operand.vmem [shape: f32[1,10], index: 5, kind: input, shape index: {}]
  %s6 = inlined_call_operand.hbm [shape: f32[2,10], index: 6, kind: output, shape index: {}]
  %s7 = sld [smem:[#allocation0]]
  $region34: #{swootnet_forward.44} parent=0
    _
  %s9 = ssub.s32 1, %s7
  %s10 = scalar_select 0, %s9, %s7
  $region1: #{swootnet_forward.44} parent=0
    #allocation2 [shape = 'u8[1024]{0}', space=vmem, size = 0x400, scoped, tag = 'output window, operand 0, single buffered']
    #allocation3 [shape = 's32[1]{0}', space=sflag, size = 0x4, scoped, tag = 'scoped memory for swootnet_forward.44']
    %11 = vsyncpa [#allocation3], 0
    // Predicated region
    $region2: #{swootnet_forward.44} parent=1 // pred_check
      _
    $region3: #{swootnet_forward.44} parent=1 // pred_check_branch
      %13 = sbr.rel (0) target = $region5
    $region4: #{swootnet_forward.44} parent=1 // pred_region
      _
    $region5: #{swootnet_forward.44} parent=1 // pred_fallthru
      _
    // Predicated region
    $region6: #{swootnet_forward.44} parent=1 // pred_check
      _
    $region7: #{swootnet_forward.44} parent=1 // pred_check_branch
      %15 = sbr.rel (0) target = $region9
    $region8: #{swootnet_forward.44} parent=1 // pred_region
      _
    $region9: #{swootnet_forward.44} parent=1 // pred_fallthru
      _
    // Predicated region
    $region10: #{swootnet_forward.44} parent=1 // pred_check
      _
    $region11: #{swootnet_forward.44} parent=1 // pred_check_branch
      %17 = sbr.rel (0) target = $region13
    $region12: #{swootnet_forward.44} parent=1 // pred_region
      _
    $region13: #{swootnet_forward.44} parent=1 // pred_fallthru
      _
    // Predicated region
    $region14: #{swootnet_forward.44} parent=1 // pred_check
      _
    $region15: #{swootnet_forward.44} parent=1 // pred_check_branch
      %19 = sbr.rel (0) target = $region17
    $region16: #{swootnet_forward.44} parent=1 // pred_region
      _
    $region17: #{swootnet_forward.44} parent=1 // pred_fallthru
      _
    // Predicated region
    $region18: #{swootnet_forward.44} parent=1 // pred_check
      _
    $region19: #{swootnet_forward.44} parent=1 // pred_check_branch
      %21 = sbr.rel (0) target = $region21
    $region20: #{swootnet_forward.44} parent=1 // pred_region
      _
    $region21: #{swootnet_forward.44} parent=1 // pred_fallthru
      _
    // Predicated region
    $region22: #{swootnet_forward.44} parent=1 // pred_check
      _
    $region23: #{swootnet_forward.44} parent=1 // pred_check_branch
      %23 = sbr.rel (0) target = $region25
    $region24: #{swootnet_forward.44} parent=1 // pred_region
      _
    $region25: #{swootnet_forward.44} parent=1 // pred_fallthru
      _
    %v24 = vld [vmem:[%s0] sm:$0xff]
    %v25 = vld [vmem:[%s2] sm:$0x1]
    %v27 = vlaneseq
    %v28 = vshrl.u32 %v27, 7
    %v29 = vsub.s32 0, %v28
    %v30 = vrot.slane %v25, %v29
    %v32 = vmul.f32 %v24, %v30
    %v33 = vld [vmem:[%s3] sm:$0x1]
    %v35 = vlaneseq
    %v36 = vshrl.u32 %v35, 7
    %v37 = vsub.s32 0, %v36
    %v38 = vrot.slane %v33, %v37
    %v40 = vadd.f32 %v32, %v38
    %v41 = vmax.f32 %v40, 0.0
    %v42 = vld [vmem:[%s1] sm:$0x3]
    %vm43 = vcmask 64512
    %v45 = vsel %vm43, %v42, 0
    %47 = vmatprep.subr.mxu0 0.0
    %48 = vmatpush1.msra.mxu0 %v41
    %49 = vmatprep.subr.mxu0 0.0
    %50 = vmatpush1.msra.mxu0 0.0
    %51 = vmatprep.subr.mxu0 0.0
    %52 = vmatpush1.msra.mxu0 0.0
    %53 = vmatprep.subr.mxu0 0.0
    %54 = vmatpush1.msra.mxu0 0.0
    %55 = vmatprep.subr.mxu0 0.0
    %56 = vmatpush1.msra.mxu0 0.0
    %57 = vmatprep.subr.mxu0 0.0
    %58 = vmatpush1.msra.mxu0 0.0
    %59 = vmatprep.subr.mxu0 0.0
    %60 = vmatpush1.msra.mxu0 0.0
    %61 = vmatprep.subr.mxu0 0.0
    %62 = vmatpush1.msra.mxu0 0.0
    %63 = vmatprep.subr.mxu0 0.0
    %64 = vmatpush1.msra.mxu0 0.0
    %65 = vmatprep.subr.mxu0 0.0
    %66 = vmatpush1.msra.mxu0 0.0
    %67 = vmatprep.subr.mxu0 0.0
    %68 = vmatpush1.msra.mxu0 0.0
    %69 = vmatprep.subr.mxu0 0.0
    %70 = vmatpush1.msra.mxu0 0.0
    %71 = vmatprep.subr.mxu0 0.0
    %72 = vmatpush1.msra.mxu0 0.0
    %73 = vmatprep.subr.mxu0 0.0
    %74 = vmatpush1.msra.mxu0 0.0
    %75 = vmatprep.subr.mxu0 0.0
    %76 = vmatpush1.msra.mxu0 0.0
    %77 = vmatprep.subr.mxu0 0.0
    %78 = vmatpush1.msra.mxu0 0.0
    %79 = vmatprep.subr.mxu0 0.0
    %80 = vmatpush1.msra.mxu0 0.0
    %81 = vmatprep.subr.mxu0 0.0
    %82 = vmatpush1.msra.mxu0 0.0
    %83 = vmatprep.subr.mxu0 0.0
    %84 = vmatpush1.msra.mxu0 0.0
    %85 = vmatprep.subr.mxu0 0.0
    %86 = vmatpush1.msra.mxu0 0.0
    %87 = vmatprep.subr.mxu0 0.0
    %88 = vmatpush1.msra.mxu0 0.0
    %89 = vmatprep.subr.mxu0 0.0
    %90 = vmatpush1.msra.mxu0 0.0
    %91 = vmatprep.subr.mxu0 0.0
    %92 = vmatpush1.msra.mxu0 0.0
    %93 = vmatprep.subr.mxu0 0.0
    %94 = vmatpush1.msra.mxu0 0.0
    %95 = vmatprep.subr.mxu0 0.0
    %96 = vmatpush1.msra.mxu0 0.0
    %97 = vmatprep.subr.mxu0 0.0
    %98 = vmatpush1.msra.mxu0 0.0
    %99 = vmatprep.subr.mxu0 0.0
    %100 = vmatpush1.msra.mxu0 0.0
    %101 = vmatprep.subr.mxu0 0.0
    %102 = vmatpush1.msra.mxu0 0.0
    %103 = vmatprep.subr.mxu0 0.0
    %104 = vmatpush1.msra.mxu0 0.0
    %105 = vmatprep.subr.mxu0 0.0
    %106 = vmatpush1.msra.mxu0 0.0
    %107 = vmatprep.subr.mxu0 0.0
    %108 = vmatpush1.msra.mxu0 0.0
    %109 = vmatprep.subr.mxu0 0.0
    %110 = vmatpush1.msra.mxu0 0.0
    %111 = vmatprep.mubr.f32.mxu0 0.0
    %112 = vmatmul.mubr.f32.gmra.mrb[0].mxu0 %v45
    %v113 = vpop.f32.mrb[0].mxu0
    %v114 = vadd.f32 0.0, %v113
    %v115 = vpop.f32.mrb[0].mxu0
    %116 = vdwg.mxu0
    %v117 = vld [vmem:[%s4] sm:$0xff]
    %v118 = vld [vmem:[%s4 + $0x8] sm:$0xff]
    %v119 = vld [vmem:[%s4 + $0x10] sm:$0xff]
    %v120 = vld [vmem:[%s4 + $0x18] sm:$0xff]
    %v121 = vld [vmem:[%s4 + $0x20] sm:$0xff]
    %v122 = vld [vmem:[%s4 + $0x28] sm:$0xff]
    %v123 = vld [vmem:[%s4 + $0x30] sm:$0xff]
    %v124 = vld [vmem:[%s4 + $0x38] sm:$0xff]
    %v125 = vld [vmem:[%s4 + $0x40] sm:$0xff]
    %v126 = vld [vmem:[%s4 + $0x48] sm:$0xf]
    %v127 = vld [vmem:[%s5] sm:$0x1]
    %v129 = vlaneseq
    %v130 = vshrl.u32 %v129, 7
    %v131 = vsub.s32 0, %v130
    %v132 = vrot.slane %v127, %v131
    %vm134 = vcmask 621568
    %v136 = vsel %vm134, %v114, 0
    %vm138 = vcmask 1043456
    %v140 = vsel %vm138, %v126, 0
    %142 = vmatprep.subr.mxu0 0.0
    %143 = vmatpush1.msra.mxu0 %v117
    %144 = vmatprep.subr.mxu0 0.0
    %145 = vmatpush1.msra.mxu0 %v118
    %146 = vmatprep.subr.mxu0 0.0
    %147 = vmatpush1.msra.mxu0 %v119
    %148 = vmatprep.subr.mxu0 0.0
    %149 = vmatpush1.msra.mxu0 %v120
    %150 = vmatprep.subr.mxu0 0.0
    %151 = vmatpush1.msra.mxu0 %v121
    %152 = vmatprep.subr.mxu0 0.0
    %153 = vmatpush1.msra.mxu0 %v122
    %154 = vmatprep.subr.mxu0 0.0
    %155 = vmatpush1.msra.mxu0 %v123
    %156 = vmatprep.subr.mxu0 0.0
    %157 = vmatpush1.msra.mxu0 %v124
    %158 = vmatprep.subr.mxu0 0.0
    %159 = vmatpush1.msra.mxu0 %v125
    %160 = vmatprep.subr.mxu0 0.0
    %161 = vmatpush1.msra.mxu0 %v140
    %162 = vmatprep.subr.mxu0 0.0
    %163 = vmatpush1.msra.mxu0 0.0
    %164 = vmatprep.subr.mxu0 0.0
    %165 = vmatpush1.msra.mxu0 0.0
    %166 = vmatprep.subr.mxu0 0.0
    %167 = vmatpush1.msra.mxu0 0.0
    %168 = vmatprep.subr.mxu0 0.0
    %169 = vmatpush1.msra.mxu0 0.0
    %170 = vmatprep.subr.mxu0 0.0
    %171 = vmatpush1.msra.mxu0 0.0
    %172 = vmatprep.subr.mxu0 0.0
    %173 = vmatpush1.msra.mxu0 0.0
    %174 = vmatprep.subr.mxu0 0.0
    %175 = vmatpush1.msra.mxu0 0.0
    %176 = vmatprep.subr.mxu0 0.0
    %177 = vmatpush1.msra.mxu0 0.0
    %178 = vmatprep.subr.mxu0 0.0
    %179 = vmatpush1.msra.mxu0 0.0
    %180 = vmatprep.subr.mxu0 0.0
    %181 = vmatpush1.msra.mxu0 0.0
    %182 = vmatprep.subr.mxu0 0.0
    %183 = vmatpush1.msra.mxu0 0.0
    %184 = vmatprep.subr.mxu0 0.0
    %185 = vmatpush1.msra.mxu0 0.0
    %186 = vmatprep.subr.mxu0 0.0
    %187 = vmatpush1.msra.mxu0 0.0
    %188 = vmatprep.subr.mxu0 0.0
    %189 = vmatpush1.msra.mxu0 0.0
    %190 = vmatprep.subr.mxu0 0.0
    %191 = vmatpush1.msra.mxu0 0.0
    %192 = vmatprep.subr.mxu0 0.0
    %193 = vmatpush1.msra.mxu0 0.0
    %194 = vmatprep.subr.mxu0 0.0
    %195 = vmatpush1.msra.mxu0 0.0
    %196 = vmatprep.subr.mxu0 0.0
    %197 = vmatpush1.msra.mxu0 0.0
    %198 = vmatprep.subr.mxu0 0.0
    %199 = vmatpush1.msra.mxu0 0.0
    %200 = vmatprep.subr.mxu0 0.0
    %201 = vmatpush1.msra.mxu0 0.0
    %202 = vmatprep.subr.mxu0 0.0
    %203 = vmatpush1.msra.mxu0 0.0
    %204 = vmatprep.subr.mxu0 0.0
    %205 = vmatpush1.msra.mxu0 0.0
    %206 = vmatprep.mubr.f32.mxu0 0.0
    %207 = vmatmul.mubr.f32.gmra.mrb[0].mxu0 %v136
    %v208 = vpop.f32.mrb[0].mxu0
    %v209 = vadd.f32 %v132, %v208
    %v210 = vpop.f32.mrb[0].mxu0
    %211 = vdwg.mxu0
    %vm212 = vcmask 74752
    %213 = vst.msk [vmem:[#allocation2] sm:$0x3] %vm212, %v209
    // Predicated region
    $region26: #{swootnet_forward.44} parent=1 // pred_check
      _
    $region27: #{swootnet_forward.44} parent=1 // pred_check_branch
      %215 = sbr.rel (0) target = $region29
    $region28: #{swootnet_forward.44} parent=1 // pred_region
      %s217 = ssub.s32 32, 32
      %218 = vsyncadd [#allocation3], %s217
      %s220 = sshll.u32 [#allocation2], 4
      %s221 = int_to_ptr.vmem [resolvable:$true] %s220
      %223 = dma.vmem_to_hbm [thread:$0]  %s221, 32, %s6, [#allocation3]
    $region29: #{swootnet_forward.44} parent=1 // pred_fallthru
      _
    // Predicated region
    $region30: #{swootnet_forward.44} parent=1 // pred_check
      _
    $region31: #{swootnet_forward.44} parent=1 // pred_check_branch
      %225 = sbr.rel (0) target = $region33
    $region32: #{swootnet_forward.44} parent=1 // pred_region
      %226 = dma.done [#allocation3], 32
    $region33: #{swootnet_forward.44} parent=1 // pred_fallthru
      _
    %227 = vsyncpa [#allocation3], 1

</llo_original>
